<compile_context>
chip_gen: v7x
topology: tpu7x:2x2x1
jax: 0.10.0
libtpu: 0.0.40
codegen_flags: <defaults>
</compile_context>

<pallas_src>
import functools

import numpy as np

import jax
import jax.numpy as jnp
from jax.experimental import pallas as pl
from jax.experimental.pallas import tpu as pltpu


_LANE = 128                        # channel padding target (lane-dense)
_CHUNK_M = 256                     # conv rows accumulated per local accumulator
_TILE_N = 256                      # FC batch-row tile
_VMEM_LIMIT = 48 * 1024 * 1024     # safe on v5e/v6e and under v7x's 64 MiB


def _round_up(v, m):
    return ((v + m - 1) // m) * m


def _pool_out(size, k, s):
    return (size - k) // s + 1


def _chunks(total, target=_CHUNK_M):
    out, c0 = [], 0
    while c0 < total:
        sz = min(target, total - c0)
        out.append((c0, sz))
        c0 += sz
    return tuple(out)


def _layer_geom(h, w, kh, kw, pad, pk, ps):
    """Static geometry for one conv(+BN+ReLU)+maxpool block."""
    hp, wp = h + 2 * pad, w + 2 * pad
    ho, wo = hp - kh + 1, wp - kw + 1              # valid conv output extent
    halo = (kh - 1) * wp + (kw - 1)
    m_valid = hp * wp                              # rows on the padded grid
    m_cmp = _round_up(m_valid, 16)                 # conv rows computed (bf16 aligned)
    r_in = m_cmp + _round_up(halo, 16)             # per-image input slab rows
    offs = tuple(i * wp + j for i in range(kh) for j in range(kw))
    po_n, pw_n = _pool_out(ho, pk, ps), _pool_out(wo, pk, ps)
    big_len = (po_n - 1) * ps * wp + ps * (pw_n - 1) + 1
    pool_offs = tuple(i * wp + j for i in range(pk) for j in range(pk))
    return dict(hp=hp, wp=wp, ho=ho, wo=wo, m_valid=m_valid, m_cmp=m_cmp,
                r_in=r_in, offs=offs, po_n=po_n, pw_n=pw_n, ps=ps,
                big_len=big_len, pool_offs=pool_offs)


# ---------------------------------------------------------------------------
# Pallas kernels
# ---------------------------------------------------------------------------
def _conv_bn_relu_kernel(x_ref, w_ref, scale_ref, shift_ref, o_ref, *,
                         offs, chunks):
    """Fused conv + folded-BN + ReLU for one image's padded-grid rows.

    x_ref : (1, r_in, Cp) bf16 per-image input slab (padded rows + halo tail).
    w_ref : (KH*KW, Cp, Cp) bf16 per-tap weights, VMEM-resident.
    o_ref : (1, m_cmp, Cp) bf16 conv output rows on the padded grid.

    out[r] = relu( (sum_t X[r + offs[t]] @ W[t]) * scale + shift )
    The accumulator is a local f32 value per row-chunk (no VMEM RMW).
    """
    scale = scale_ref[...]
    shift = shift_ref[...]
    for c0, sz in chunks:                                   # static chunk loop
        acc = None
        for t, off in enumerate(offs):                      # static tap loop
            xt = x_ref[0, pl.ds(c0 + off, sz), :]
            p = jnp.dot(xt, w_ref[t], preferred_element_type=jnp.float32)
            acc = p if acc is None else acc + p
        y = jnp.maximum(acc * scale + shift, 0.0)
        o_ref[0, pl.ds(c0, sz), :] = y.astype(o_ref.dtype)


def _maxpool_kernel(x_ref, sel_ref, o_ref, *, offs, big_len):
    """Vectorized maxpool + scatter into the next layer's row layout.

    x_ref   : (1, m_cmp, Cp) bf16 conv output on the padded grid.
    sel_ref : (out_rows, big_len) bf16 0/1 matrix that subsamples the strided
              pooling positions and scatters them (with exact zero padding)
              into the next conv's flattened padded-grid rows.
    o_ref   : (1, out_rows, Cp) bf16.

    big[y] = max over pk*pk taps of x[y + tap_off]; pooled values are
    big[po*stride*wp + pw*stride]; one matmul with `sel` picks & places them.
    """
    big = None
    for off in offs:                                        # pk*pk static maxes
        t = x_ref[0, pl.ds(off, big_len), :]
        big = t if big is None else jnp.maximum(big, t)
    out = jnp.dot(sel_ref[...], big, preferred_element_type=jnp.float32)
    o_ref[0] = out.astype(o_ref.dtype)


def _fc_head_kernel(x_ref, w1_ref, b1_ref, w2_ref, b2_ref, o_ref):
    """Fused fc1 + ReLU + fc2 for a tile of batch rows (bf16 operands)."""
    h = jnp.dot(x_ref[...], w1_ref[...], preferred_element_type=jnp.float32)
    h = jnp.maximum(h + b1_ref[...], 0.0)
    # TODO(synk): nn.Dropout(0.3) is identity in inference mode; training-mode
    # random masking is intentionally not reproduced.
    y = jnp.dot(h.astype(jnp.bfloat16), w2_ref[...],
                preferred_element_type=jnp.float32)
    o_ref[...] = y + b2_ref[...]


# ---------------------------------------------------------------------------
# Wrappers
# ---------------------------------------------------------------------------
def _conv_pool_block(a_in, w3d, scale, shift, g, *, out_rows, next_wp,
                     next_pad):
    """conv(+BN+ReLU) then maxpool; pool writes the next layer's input slab."""
    n = a_in.shape[0]
    taps = w3d.shape[0]

    conv_out = pl.pallas_call(
        functools.partial(_conv_bn_relu_kernel, offs=g["offs"],
                          chunks=_chunks(g["m_cmp"])),
        out_shape=jax.ShapeDtypeStruct((n, g["m_cmp"], _LANE), jnp.bfloat16),
        grid_spec=pltpu.PrefetchScalarGridSpec(
            num_scalar_prefetch=0,
            grid=(n,),
            in_specs=[
                pl.BlockSpec((1, g["r_in"], _LANE), lambda b: (b, 0, 0)),
                pl.BlockSpec((taps, _LANE, _LANE), lambda b: (0, 0, 0)),
                pl.BlockSpec((1, _LANE), lambda b: (0, 0)),
                pl.BlockSpec((1, _LANE), lambda b: (0, 0)),
            ],
            out_specs=pl.BlockSpec((1, g["m_cmp"], _LANE),
                                   lambda b: (b, 0, 0))),
        compiler_params=pltpu.CompilerParams(
            dimension_semantics=("parallel",),
            vmem_limit_bytes=_VMEM_LIMIT),
    )(a_in, w3d, scale, shift)

    # 0/1 selection matrix: strided subsample of the window-max rows, scattered
    # straight into the next layer's flattened padded-grid rows (zeros at pad
    # positions and in the halo tail).  Built with numpy -> jit-time constant.
    sel = np.zeros((out_rows, g["big_len"]), dtype=np.float32)
    for po in range(g["po_n"]):
        for pw in range(g["pw_n"]):
            if next_wp is None:                    # last pool: FC flatten rows
                r = po * g["pw_n"] + pw
            else:                                  # next conv padded-grid rows
                r = (po + next_pad) * next_wp + (next_pad + pw)
            sel[r, po * g["ps"] * g["wp"] + pw * g["ps"]] = 1.0
    sel = jnp.asarray(sel, dtype=jnp.bfloat16)

    pooled = pl.pallas_call(
        functools.partial(_maxpool_kernel, offs=g["pool_offs"],
                          big_len=g["big_len"]),
        out_shape=jax.ShapeDtypeStruct((n, out_rows, _LANE), jnp.bfloat16),
        grid_spec=pltpu.PrefetchScalarGridSpec(
            num_scalar_prefetch=0,
            grid=(n,),
            in_specs=[
                pl.BlockSpec((1, g["m_cmp"], _LANE), lambda b: (b, 0, 0)),
                pl.BlockSpec((out_rows, g["big_len"]), lambda b: (0, 0)),
            ],
            out_specs=pl.BlockSpec((1, out_rows, _LANE), lambda b: (b, 0, 0))),
        compiler_params=pltpu.CompilerParams(
            dimension_semantics=("parallel",),
            vmem_limit_bytes=_VMEM_LIMIT),
    )(conv_out, sel)
    return pooled


def _fc_head(xflat, w1, b1, w2, b2):
    n, k1 = xflat.shape
    f1 = w1.shape[1]
    f2 = w2.shape[1]
    if n <= _TILE_N:
        tile_n, n_pad = n, n
    else:
        tile_n = _TILE_N
        n_pad = _round_up(n, tile_n)
        if n_pad != n:
            xflat = jnp.pad(xflat, ((0, n_pad - n), (0, 0)))
    ntiles = n_pad // tile_n
    out = pl.pallas_call(
        _fc_head_kernel,
        out_shape=jax.ShapeDtypeStruct((n_pad, f2), jnp.float32),
        grid_spec=pltpu.PrefetchScalarGridSpec(
            num_scalar_prefetch=0,
            grid=(ntiles,),
            in_specs=[
                pl.BlockSpec((tile_n, k1), lambda i: (i, 0)),
                pl.BlockSpec((k1, f1), lambda i: (0, 0)),
                pl.BlockSpec((1, f1), lambda i: (0, 0)),
                pl.BlockSpec((f1, f2), lambda i: (0, 0)),
                pl.BlockSpec((1, f2), lambda i: (0, 0)),
            ],
            out_specs=pl.BlockSpec((tile_n, f2), lambda i: (i, 0))),
        compiler_params=pltpu.CompilerParams(
            dimension_semantics=("parallel",),
            vmem_limit_bytes=_VMEM_LIMIT),
    )(xflat, w1, b1, w2, b2)
    return out[:n]


def cnn_forward(x_nchw, params, *, num_classes):
    n, cin, h, w = x_nchw.shape
    g1 = _layer_geom(h, w, 3, 3, 1, 3, 2)
    g2 = _layer_geom(g1["po_n"], g1["pw_n"], 3, 3, 1, 3, 2)
    g3 = _layer_geom(g2["po_n"], g2["pw_n"], 2, 2, 1, 2, 2)

    # Build the layer-1 input slab once (NCHW->NHWC, channel pad to 128,
    # spatial pad, flatten to per-image padded-grid rows, cast to bf16).
    x = jnp.transpose(x_nchw, (0, 2, 3, 1)).astype(jnp.float32)
    x = jnp.pad(x, ((0, 0), (1, 1), (1, 1), (0, _LANE - cin)))
    x = x.reshape(n, g1["m_valid"], _LANE)
    x = jnp.pad(x, ((0, 0), (0, g1["r_in"] - g1["m_valid"]), (0, 0)))
    a = x.astype(jnp.bfloat16)

    a = _conv_pool_block(a, params["w1"], params["s1"], params["t1"], g1,
                         out_rows=g2["r_in"], next_wp=g2["wp"], next_pad=1)
    a = _conv_pool_block(a, params["w2"], params["s2"], params["t2"], g2,
                         out_rows=g3["r_in"], next_wp=g3["wp"], next_pad=1)
    a = _conv_pool_block(a, params["w3"], params["s3"], params["t3"], g3,
                         out_rows=g3["po_n"] * g3["pw_n"],
                         next_wp=None, next_pad=None)

    xflat = a.reshape(n, -1)          # NHWC flatten; fc1 columns pre-permuted
    logits = _fc_head(xflat, params["fw1"], params["fb1"],
                      params["fw2"], params["fb2"])
    return logits[:, :num_classes]


# ---------------------------------------------------------------------------
# Parameter init (torch layouts) and one-time kernel-ready preparation
# ---------------------------------------------------------------------------
def init_torch_params(key, in_channels, height, width, num_classes):
    ks = jax.random.split(key, 16)
    flatten_size = 120 * (height // 8) * (width // 8)

    def nrm(k, shape, s=0.05):
        return s * jax.random.normal(k, shape, dtype=jnp.float32)

    def bn(k, c):
        k1, k2, k3, k4 = jax.random.split(k, 4)
        return dict(
            gamma=1.0 + 0.1 * jax.random.normal(k1, (c,), dtype=jnp.float32),
            beta=0.1 * jax.random.normal(k2, (c,), dtype=jnp.float32),
            rmean=0.1 * jax.random.normal(k3, (c,), dtype=jnp.float32),
            rvar=jax.random.uniform(k4, (c,), minval=0.5, maxval=1.5,
                                    dtype=jnp.float32))

    return dict(
        w1=nrm(ks[0], (32, in_channels, 3, 3)), b1=nrm(ks[6], (32,)),
        w2=nrm(ks[1], (64, 32, 3, 3)), b2=nrm(ks[7], (64,)),
        w3=nrm(ks[2], (120, 64, 2, 2)), b3=nrm(ks[8], (120,)),
        bn1=bn(ks[3], 32), bn2=bn(ks[4], 64), bn3=bn(ks[5], 120),
        fw1=nrm(ks[9], (64, flatten_size)), fb1=nrm(ks[10], (64,)),
        fw2=nrm(ks[11], (num_classes, 64)), fb2=nrm(ks[12], (num_classes,)),
    )


def _prep_conv(w_oihw, bias, bn, cin_pad, cout_pad, eps=1e-5):
    cout, cin, kh, kw = w_oihw.shape
    scale = bn["gamma"] / jnp.sqrt(bn["rvar"] + eps)
    shift = bn["beta"] - bn["rmean"] * scale + bias * scale   # bias folded in
    w = jnp.transpose(w_oihw, (2, 3, 1, 0)).reshape(kh * kw, cin, cout)
    w = jnp.pad(w, ((0, 0), (0, cin_pad - cin), (0, cout_pad - cout)))
    scale = jnp.pad(scale, (0, cout_pad - cout)).reshape(1, cout_pad)
    shift = jnp.pad(shift, (0, cout_pad - cout)).reshape(1, cout_pad)
    return (w.astype(jnp.bfloat16), scale.astype(jnp.float32),
            shift.astype(jnp.float32))


def prepare_params(tp, height, width):
    w1, s1, t1 = _prep_conv(tp["w1"], tp["b1"], tp["bn1"], _LANE, _LANE)
    w2, s2, t2 = _prep_conv(tp["w2"], tp["b2"], tp["bn2"], _LANE, _LANE)
    w3, s3, t3 = _prep_conv(tp["w3"], tp["b3"], tp["bn3"], _LANE, _LANE)

    # final pooled spatial extent (mirrors the forward pipeline)
    h1, w1s = _pool_out(height, 3, 2), _pool_out(width, 3, 2)
    h2, w2s = _pool_out(h1, 3, 2), _pool_out(w1s, 3, 2)
    h3, w3s = _pool_out(h2 + 1, 2, 2), _pool_out(w2s + 1, 2, 2)

    c3 = tp["w3"].shape[0]            # 120
    f1 = tp["fw1"].shape[0]           # 64
    ncls = tp["fw2"].shape[0]

    # fc1: torch flatten order is (c, h, w); our flatten is (h, w, c_pad)
    fw1 = tp["fw1"].reshape(f1, c3, h3, w3s)
    fw1 = jnp.transpose(fw1, (2, 3, 1, 0))                    # (h, w, c, f1)
    fw1 = jnp.pad(fw1, ((0, 0), (0, 0), (0, _LANE - c3), (0, _LANE - f1)))
    fw1 = fw1.reshape(h3 * w3s * _LANE, _LANE)
    fb1 = jnp.pad(tp["fb1"], (0, _LANE - f1)).reshape(1, _LANE)

    fw2 = jnp.transpose(tp["fw2"])                            # (64, ncls)
    fw2 = jnp.pad(fw2, ((0, _LANE - f1), (0, _LANE - ncls)))
    fb2 = jnp.pad(tp["fb2"], (0, _LANE - ncls)).reshape(1, _LANE)

    return dict(
        w1=w1, s1=s1, t1=t1,
        w2=w2, s2=s2, t2=t2,
        w3=w3, s3=s3, t3=t3,
        fw1=fw1.astype(jnp.bfloat16), fb1=fb1.astype(jnp.float32),
        fw2=fw2.astype(jnp.bfloat16), fb2=fb2.astype(jnp.float32),
    )


if __name__ == "__main__":
    batch, in_channels, height, width, num_classes = 2, 4, 16, 16, 10
    key = jax.random.PRNGKey(0)
    kx, kp = jax.random.split(key)

    torch_params = init_torch_params(kp, in_channels, height, width, num_classes)
    params = prepare_params(torch_params, height, width)

    x = jax.random.normal(kx, (batch, in_channels, height, width),
                          dtype=jnp.float32)

    fwd = jax.jit(functools.partial(cnn_forward, num_classes=num_classes))
    out = fwd(x, params)
    out = jax.block_until_ready(out)
    assert out.shape == (batch, num_classes), out.shape
    print("KERNEL_OK")
</pallas_src>

<mosaic_0001>
module attributes {stable_mosaic.version = 11 : i64} {
  func.func @_conv_bn_relu_kernel(%arg0: i32, %arg1: memref<1x384x128xbf16, #tpu.memory_space<vmem>>, %arg2: memref<9x128x128xbf16, #tpu.memory_space<vmem>>, %arg3: memref<1x128xf32, #tpu.memory_space<vmem>>, %arg4: memref<1x128xf32, #tpu.memory_space<vmem>>, %arg5: memref<1x336x128xbf16, #tpu.memory_space<vmem>>) attributes {dimension_semantics = [#tpu.dimension_semantics<parallel>], iteration_bounds = array<i64: 2>, scalar_prefetch = 0 : i64, scratch_operands = 0 : i64, tpu.core_type = #tpu.core_type<tc>, window_params = [{transform_indices = @transform_0, window_bounds = array<i64: 1, 384, 128>}, {pipeline_mode = #tpu.pipeline_mode<synchronous>, transform_indices = @transform_1, window_bounds = array<i64: 9, 128, 128>}, {pipeline_mode = #tpu.pipeline_mode<synchronous>, transform_indices = @transform_2, window_bounds = array<i64: 1, 128>}, {pipeline_mode = #tpu.pipeline_mode<synchronous>, transform_indices = @transform_3, window_bounds = array<i64: 1, 128>}, {transform_indices = @transform_4, window_bounds = array<i64: 1, 336, 128>}]} {
    %c0 = arith.constant 0 : index
    %c0_0 = arith.constant 0 : index
    %0 = vector.load %arg3[%c0, %c0_0] : memref<1x128xf32, #tpu.memory_space<vmem>>, vector<1x128xf32>
    %c0_1 = arith.constant 0 : index
    %c0_2 = arith.constant 0 : index
    %1 = vector.load %arg4[%c0_1, %c0_2] : memref<1x128xf32, #tpu.memory_space<vmem>>, vector<1x128xf32>
    %c0_3 = arith.constant 0 : index
    %c0_4 = arith.constant 0 : index
    %c0_5 = arith.constant 0 : index
    %2 = vector.load %arg1[%c0_3, %c0_4, %c0_5] : memref<1x384x128xbf16, #tpu.memory_space<vmem>>, vector<1x256x128xbf16>
    %3 = vector.shape_cast %2 : vector<1x256x128xbf16> to vector<256x128xbf16>
    %c0_6 = arith.constant 0 : index
    %c0_7 = arith.constant 0 : index
    %c0_8 = arith.constant 0 : index
    %4 = vector.load %arg2[%c0_6, %c0_7, %c0_8] : memref<9x128x128xbf16, #tpu.memory_space<vmem>>, vector<1x128x128xbf16>
    %5 = vector.shape_cast %4 : vector<1x128x128xbf16> to vector<128x128xbf16>
    %cst = arith.constant dense<0.000000e+00> : vector<256x128xf32>
    %6 = tpu.matmul %3, %5, %cst {dimension_numbers = #tpu.dot_dimension_numbers<[1], [0], [0], [1], [0, 0, 1, 1], [], []>} : vector<256x128xbf16>, vector<128x128xbf16>, vector<256x128xf32> -> vector<256x128xf32>
    %c0_9 = arith.constant 0 : index
    %c1 = arith.constant 1 : index
    %c0_10 = arith.constant 0 : index
    %7 = vector.load %arg1[%c0_9, %c1, %c0_10] : memref<1x384x128xbf16, #tpu.memory_space<vmem>>, vector<1x256x128xbf16>
    %8 = vector.shape_cast %7 : vector<1x256x128xbf16> to vector<256x128xbf16>
    %c1_11 = arith.constant 1 : index
    %c0_12 = arith.constant 0 : index
    %c0_13 = arith.constant 0 : index
    %9 = vector.load %arg2[%c1_11, %c0_12, %c0_13] : memref<9x128x128xbf16, #tpu.memory_space<vmem>>, vector<1x128x128xbf16>
    %10 = vector.shape_cast %9 : vector<1x128x128xbf16> to vector<128x128xbf16>
    %cst_14 = arith.constant dense<0.000000e+00> : vector<256x128xf32>
    %11 = tpu.matmul %8, %10, %cst_14 {dimension_numbers = #tpu.dot_dimension_numbers<[1], [0], [0], [1], [0, 0, 1, 1], [], []>} : vector<256x128xbf16>, vector<128x128xbf16>, vector<256x128xf32> -> vector<256x128xf32>
    %12 = arith.addf %6, %11 : vector<256x128xf32>
    %c0_15 = arith.constant 0 : index
    %c2 = arith.constant 2 : index
    %c0_16 = arith.constant 0 : index
    %13 = vector.load %arg1[%c0_15, %c2, %c0_16] : memref<1x384x128xbf16, #tpu.memory_space<vmem>>, vector<1x256x128xbf16>
    %14 = vector.shape_cast %13 : vector<1x256x128xbf16> to vector<256x128xbf16>
    %c2_17 = arith.constant 2 : index
    %c0_18 = arith.constant 0 : index
    %c0_19 = arith.constant 0 : index
    %15 = vector.load %arg2[%c2_17, %c0_18, %c0_19] : memref<9x128x128xbf16, #tpu.memory_space<vmem>>, vector<1x128x128xbf16>
    %16 = vector.shape_cast %15 : vector<1x128x128xbf16> to vector<128x128xbf16>
    %cst_20 = arith.constant dense<0.000000e+00> : vector<256x128xf32>
    %17 = tpu.matmul %14, %16, %cst_20 {dimension_numbers = #tpu.dot_dimension_numbers<[1], [0], [0], [1], [0, 0, 1, 1], [], []>} : vector<256x128xbf16>, vector<128x128xbf16>, vector<256x128xf32> -> vector<256x128xf32>
    %18 = arith.addf %12, %17 : vector<256x128xf32>
    %c0_21 = arith.constant 0 : index
    %c18 = arith.constant 18 : index
    %c0_22 = arith.constant 0 : index
    %19 = vector.load %arg1[%c0_21, %c18, %c0_22] : memref<1x384x128xbf16, #tpu.memory_space<vmem>>, vector<1x256x128xbf16>
    %20 = vector.shape_cast %19 : vector<1x256x128xbf16> to vector<256x128xbf16>
    %c3 = arith.constant 3 : index
    %c0_23 = arith.constant 0 : index
    %c0_24 = arith.constant 0 : index
    %21 = vector.load %arg2[%c3, %c0_23, %c0_24] : memref<9x128x128xbf16, #tpu.memory_space<vmem>>, vector<1x128x128xbf16>
    %22 = vector.shape_cast %21 : vector<1x128x128xbf16> to vector<128x128xbf16>
    %cst_25 = arith.constant dense<0.000000e+00> : vector<256x128xf32>
    %23 = tpu.matmul %20, %22, %cst_25 {dimension_numbers = #tpu.dot_dimension_numbers<[1], [0], [0], [1], [0, 0, 1, 1], [], []>} : vector<256x128xbf16>, vector<128x128xbf16>, vector<256x128xf32> -> vector<256x128xf32>
    %24 = arith.addf %18, %23 : vector<256x128xf32>
    %c0_26 = arith.constant 0 : index
    %c19 = arith.constant 19 : index
    %c0_27 = arith.constant 0 : index
    %25 = vector.load %arg1[%c0_26, %c19, %c0_27] : memref<1x384x128xbf16, #tpu.memory_space<vmem>>, vector<1x256x128xbf16>
    %26 = vector.shape_cast %25 : vector<1x256x128xbf16> to vector<256x128xbf16>
    %c4 = arith.constant 4 : index
    %c0_28 = arith.constant 0 : index
    %c0_29 = arith.constant 0 : index
    %27 = vector.load %arg2[%c4, %c0_28, %c0_29] : memref<9x128x128xbf16, #tpu.memory_space<vmem>>, vector<1x128x128xbf16>
    %28 = vector.shape_cast %27 : vector<1x128x128xbf16> to vector<128x128xbf16>
    %cst_30 = arith.constant dense<0.000000e+00> : vector<256x128xf32>
    %29 = tpu.matmul %26, %28, %cst_30 {dimension_numbers = #tpu.dot_dimension_numbers<[1], [0], [0], [1], [0, 0, 1, 1], [], []>} : vector<256x128xbf16>, vector<128x128xbf16>, vector<256x128xf32> -> vector<256x128xf32>
    %30 = arith.addf %24, %29 : vector<256x128xf32>
    %c0_31 = arith.constant 0 : index
    %c20 = arith.constant 20 : index
    %c0_32 = arith.constant 0 : index
    %31 = vector.load %arg1[%c0_31, %c20, %c0_32] : memref<1x384x128xbf16, #tpu.memory_space<vmem>>, vector<1x256x128xbf16>
    %32 = vector.shape_cast %31 : vector<1x256x128xbf16> to vector<256x128xbf16>
    %c5 = arith.constant 5 : index
    %c0_33 = arith.constant 0 : index
    %c0_34 = arith.constant 0 : index
    %33 = vector.load %arg2[%c5, %c0_33, %c0_34] : memref<9x128x128xbf16, #tpu.memory_space<vmem>>, vector<1x128x128xbf16>
    %34 = vector.shape_cast %33 : vector<1x128x128xbf16> to vector<128x128xbf16>
    %cst_35 = arith.constant dense<0.000000e+00> : vector<256x128xf32>
    %35 = tpu.matmul %32, %34, %cst_35 {dimension_numbers = #tpu.dot_dimension_numbers<[1], [0], [0], [1], [0, 0, 1, 1], [], []>} : vector<256x128xbf16>, vector<128x128xbf16>, vector<256x128xf32> -> vector<256x128xf32>
    %36 = arith.addf %30, %35 : vector<256x128xf32>
    %c0_36 = arith.constant 0 : index
    %c36 = arith.constant 36 : index
    %c0_37 = arith.constant 0 : index
    %37 = vector.load %arg1[%c0_36, %c36, %c0_37] : memref<1x384x128xbf16, #tpu.memory_space<vmem>>, vector<1x256x128xbf16>
    %38 = vector.shape_cast %37 : vector<1x256x128xbf16> to vector<256x128xbf16>
    %c6 = arith.constant 6 : index
    %c0_38 = arith.constant 0 : index
    %c0_39 = arith.constant 0 : index
    %39 = vector.load %arg2[%c6, %c0_38, %c0_39] : memref<9x128x128xbf16, #tpu.memory_space<vmem>>, vector<1x128x128xbf16>
    %40 = vector.shape_cast %39 : vector<1x128x128xbf16> to vector<128x128xbf16>
    %cst_40 = arith.constant dense<0.000000e+00> : vector<256x128xf32>
    %41 = tpu.matmul %38, %40, %cst_40 {dimension_numbers = #tpu.dot_dimension_numbers<[1], [0], [0], [1], [0, 0, 1, 1], [], []>} : vector<256x128xbf16>, vector<128x128xbf16>, vector<256x128xf32> -> vector<256x128xf32>
    %42 = arith.addf %36, %41 : vector<256x128xf32>
    %c0_41 = arith.constant 0 : index
    %c37 = arith.constant 37 : index
    %c0_42 = arith.constant 0 : index
    %43 = vector.load %arg1[%c0_41, %c37, %c0_42] : memref<1x384x128xbf16, #tpu.memory_space<vmem>>, vector<1x256x128xbf16>
    %44 = vector.shape_cast %43 : vector<1x256x128xbf16> to vector<256x128xbf16>
    %c7 = arith.constant 7 : index
    %c0_43 = arith.constant 0 : index
    %c0_44 = arith.constant 0 : index
    %45 = vector.load %arg2[%c7, %c0_43, %c0_44] : memref<9x128x128xbf16, #tpu.memory_space<vmem>>, vector<1x128x128xbf16>
    %46 = vector.shape_cast %45 : vector<1x128x128xbf16> to vector<128x128xbf16>
    %cst_45 = arith.constant dense<0.000000e+00> : vector<256x128xf32>
    %47 = tpu.matmul %44, %46, %cst_45 {dimension_numbers = #tpu.dot_dimension_numbers<[1], [0], [0], [1], [0, 0, 1, 1], [], []>} : vector<256x128xbf16>, vector<128x128xbf16>, vector<256x128xf32> -> vector<256x128xf32>
    %48 = arith.addf %42, %47 : vector<256x128xf32>
    %c0_46 = arith.constant 0 : index
    %c38 = arith.constant 38 : index
    %c0_47 = arith.constant 0 : index
    %49 = vector.load %arg1[%c0_46, %c38, %c0_47] : memref<1x384x128xbf16, #tpu.memory_space<vmem>>, vector<1x256x128xbf16>
    %50 = vector.shape_cast %49 : vector<1x256x128xbf16> to vector<256x128xbf16>
    %c8 = arith.constant 8 : index
    %c0_48 = arith.constant 0 : index
    %c0_49 = arith.constant 0 : index
    %51 = vector.load %arg2[%c8, %c0_48, %c0_49] : memref<9x128x128xbf16, #tpu.memory_space<vmem>>, vector<1x128x128xbf16>
    %52 = vector.shape_cast %51 : vector<1x128x128xbf16> to vector<128x128xbf16>
    %cst_50 = arith.constant dense<0.000000e+00> : vector<256x128xf32>
    %53 = tpu.matmul %50, %52, %cst_50 {dimension_numbers = #tpu.dot_dimension_numbers<[1], [0], [0], [1], [0, 0, 1, 1], [], []>} : vector<256x128xbf16>, vector<128x128xbf16>, vector<256x128xf32> -> vector<256x128xf32>
    %54 = arith.addf %48, %53 : vector<256x128xf32>
    %55 = vector.broadcast %0 : vector<1x128xf32> to vector<256x128xf32>
    %56 = arith.mulf %54, %55 : vector<256x128xf32>
    %57 = vector.broadcast %1 : vector<1x128xf32> to vector<256x128xf32>
    %58 = arith.addf %56, %57 : vector<256x128xf32>
    %cst_51 = arith.constant 0.000000e+00 : f32
    %59 = vector.broadcast %cst_51 : f32 to vector<256x128xf32>
    %60 = arith.maximumf %58, %59 : vector<256x128xf32>
    %61 = arith.truncf %60 : vector<256x128xf32> to vector<256x128xbf16>
    %c0_52 = arith.constant 0 : index
    %c0_53 = arith.constant 0 : index
    %c0_54 = arith.constant 0 : index
    %62 = vector.load %arg5[%c0_52, %c0_53, %c0_54] : memref<1x336x128xbf16, #tpu.memory_space<vmem>>, vector<1x256x128xbf16>
    %63 = vector.shape_cast %62 : vector<1x256x128xbf16> to vector<256x128xbf16>
    %64 = vector.shape_cast %61 : vector<256x128xbf16> to vector<1x256x128xbf16>
    tpu.vector_store %arg5[%c0_52, %c0_53, %c0_54], %64 {strides = array<i32>} : memref<1x336x128xbf16, #tpu.memory_space<vmem>>, vector<1x256x128xbf16>,
    %c0_55 = arith.constant 0 : index
    %c256 = arith.constant 256 : index
    %c0_56 = arith.constant 0 : index
    %65 = vector.load %arg1[%c0_55, %c256, %c0_56] : memref<1x384x128xbf16, #tpu.memory_space<vmem>>, vector<1x80x128xbf16>
    %66 = vector.shape_cast %65 : vector<1x80x128xbf16> to vector<80x128xbf16>
    %c0_57 = arith.constant 0 : index
    %c0_58 = arith.constant 0 : index
    %c0_59 = arith.constant 0 : index
    %67 = vector.load %arg2[%c0_57, %c0_58, %c0_59] : memref<9x128x128xbf16, #tpu.memory_space<vmem>>, vector<1x128x128xbf16>
    %68 = vector.shape_cast %67 : vector<1x128x128xbf16> to vector<128x128xbf16>
    %cst_60 = arith.constant dense<0.000000e+00> : vector<80x128xf32>
    %69 = tpu.matmul %66, %68, %cst_60 {dimension_numbers = #tpu.dot_dimension_numbers<[1], [0], [0], [1], [0, 0, 1, 1], [], []>} : vector<80x128xbf16>, vector<128x128xbf16>, vector<80x128xf32> -> vector<80x128xf32>
    %c0_61 = arith.constant 0 : index
    %c257 = arith.constant 257 : index
    %c0_62 = arith.constant 0 : index
    %70 = vector.load %arg1[%c0_61, %c257, %c0_62] : memref<1x384x128xbf16, #tpu.memory_space<vmem>>, vector<1x80x128xbf16>
    %71 = vector.shape_cast %70 : vector<1x80x128xbf16> to vector<80x128xbf16>
    %c1_63 = arith.constant 1 : index
    %c0_64 = arith.constant 0 : index
    %c0_65 = arith.constant 0 : index
    %72 = vector.load %arg2[%c1_63, %c0_64, %c0_65] : memref<9x128x128xbf16, #tpu.memory_space<vmem>>, vector<1x128x128xbf16>
    %73 = vector.shape_cast %72 : vector<1x128x128xbf16> to vector<128x128xbf16>
    %cst_66 = arith.constant dense<0.000000e+00> : vector<80x128xf32>
    %74 = tpu.matmul %71, %73, %cst_66 {dimension_numbers = #tpu.dot_dimension_numbers<[1], [0], [0], [1], [0, 0, 1, 1], [], []>} : vector<80x128xbf16>, vector<128x128xbf16>, vector<80x128xf32> -> vector<80x128xf32>
    %75 = arith.addf %69, %74 : vector<80x128xf32>
    %c0_67 = arith.constant 0 : index
    %c258 = arith.constant 258 : index
    %c0_68 = arith.constant 0 : index
    %76 = vector.load %arg1[%c0_67, %c258, %c0_68] : memref<1x384x128xbf16, #tpu.memory_space<vmem>>, vector<1x80x128xbf16>
    %77 = vector.shape_cast %76 : vector<1x80x128xbf16> to vector<80x128xbf16>
    %c2_69 = arith.constant 2 : index
    %c0_70 = arith.constant 0 : index
    %c0_71 = arith.constant 0 : index
    %78 = vector.load %arg2[%c2_69, %c0_70, %c0_71] : memref<9x128x128xbf16, #tpu.memory_space<vmem>>, vector<1x128x128xbf16>
    %79 = vector.shape_cast %78 : vector<1x128x128xbf16> to vector<128x128xbf16>
    %cst_72 = arith.constant dense<0.000000e+00> : vector<80x128xf32>
    %80 = tpu.matmul %77, %79, %cst_72 {dimension_numbers = #tpu.dot_dimension_numbers<[1], [0], [0], [1], [0, 0, 1, 1], [], []>} : vector<80x128xbf16>, vector<128x128xbf16>, vector<80x128xf32> -> vector<80x128xf32>
    %81 = arith.addf %75, %80 : vector<80x128xf32>
    %c0_73 = arith.constant 0 : index
    %c274 = arith.constant 274 : index
    %c0_74 = arith.constant 0 : index
    %82 = vector.load %arg1[%c0_73, %c274, %c0_74] : memref<1x384x128xbf16, #tpu.memory_space<vmem>>, vector<1x80x128xbf16>
    %83 = vector.shape_cast %82 : vector<1x80x128xbf16> to vector<80x128xbf16>
    %c3_75 = arith.constant 3 : index
    %c0_76 = arith.constant 0 : index
    %c0_77 = arith.constant 0 : index
    %84 = vector.load %arg2[%c3_75, %c0_76, %c0_77] : memref<9x128x128xbf16, #tpu.memory_space<vmem>>, vector<1x128x128xbf16>
    %85 = vector.shape_cast %84 : vector<1x128x128xbf16> to vector<128x128xbf16>
    %cst_78 = arith.constant dense<0.000000e+00> : vector<80x128xf32>
    %86 = tpu.matmul %83, %85, %cst_78 {dimension_numbers = #tpu.dot_dimension_numbers<[1], [0], [0], [1], [0, 0, 1, 1], [], []>} : vector<80x128xbf16>, vector<128x128xbf16>, vector<80x128xf32> -> vector<80x128xf32>
    %87 = arith.addf %81, %86 : vector<80x128xf32>
    %c0_79 = arith.constant 0 : index
    %c275 = arith.constant 275 : index
    %c0_80 = arith.constant 0 : index
    %88 = vector.load %arg1[%c0_79, %c275, %c0_80] : memref<1x384x128xbf16, #tpu.memory_space<vmem>>, vector<1x80x128xbf16>
    %89 = vector.shape_cast %88 : vector<1x80x128xbf16> to vector<80x128xbf16>
    %c4_81 = arith.constant 4 : index
    %c0_82 = arith.constant 0 : index
    %c0_83 = arith.constant 0 : index
    %90 = vector.load %arg2[%c4_81, %c0_82, %c0_83] : memref<9x128x128xbf16, #tpu.memory_space<vmem>>, vector<1x128x128xbf16>
    %91 = vector.shape_cast %90 : vector<1x128x128xbf16> to vector<128x128xbf16>
    %cst_84 = arith.constant dense<0.000000e+00> : vector<80x128xf32>
    %92 = tpu.matmul %89, %91, %cst_84 {dimension_numbers = #tpu.dot_dimension_numbers<[1], [0], [0], [1], [0, 0, 1, 1], [], []>} : vector<80x128xbf16>, vector<128x128xbf16>, vector<80x128xf32> -> vector<80x128xf32>
    %93 = arith.addf %87, %92 : vector<80x128xf32>
    %c0_85 = arith.constant 0 : index
    %c276 = arith.constant 276 : index
    %c0_86 = arith.constant 0 : index
    %94 = vector.load %arg1[%c0_85, %c276, %c0_86] : memref<1x384x128xbf16, #tpu.memory_space<vmem>>, vector<1x80x128xbf16>
    %95 = vector.shape_cast %94 : vector<1x80x128xbf16> to vector<80x128xbf16>
    %c5_87 = arith.constant 5 : index
    %c0_88 = arith.constant 0 : index
    %c0_89 = arith.constant 0 : index
    %96 = vector.load %arg2[%c5_87, %c0_88, %c0_89] : memref<9x128x128xbf16, #tpu.memory_space<vmem>>, vector<1x128x128xbf16>
    %97 = vector.shape_cast %96 : vector<1x128x128xbf16> to vector<128x128xbf16>
    %cst_90 = arith.constant dense<0.000000e+00> : vector<80x128xf32>
    %98 = tpu.matmul %95, %97, %cst_90 {dimension_numbers = #tpu.dot_dimension_numbers<[1], [0], [0], [1], [0, 0, 1, 1], [], []>} : vector<80x128xbf16>, vector<128x128xbf16>, vector<80x128xf32> -> vector<80x128xf32>
    %99 = arith.addf %93, %98 : vector<80x128xf32>
    %c0_91 = arith.constant 0 : index
    %c292 = arith.constant 292 : index
    %c0_92 = arith.constant 0 : index
    %100 = vector.load %arg1[%c0_91, %c292, %c0_92] : memref<1x384x128xbf16, #tpu.memory_space<vmem>>, vector<1x80x128xbf16>
    %101 = vector.shape_cast %100 : vector<1x80x128xbf16> to vector<80x128xbf16>
    %c6_93 = arith.constant 6 : index
    %c0_94 = arith.constant 0 : index
    %c0_95 = arith.constant 0 : index
    %102 = vector.load %arg2[%c6_93, %c0_94, %c0_95] : memref<9x128x128xbf16, #tpu.memory_space<vmem>>, vector<1x128x128xbf16>
    %103 = vector.shape_cast %102 : vector<1x128x128xbf16> to vector<128x128xbf16>
    %cst_96 = arith.constant dense<0.000000e+00> : vector<80x128xf32>
    %104 = tpu.matmul %101, %103, %cst_96 {dimension_numbers = #tpu.dot_dimension_numbers<[1], [0], [0], [1], [0, 0, 1, 1], [], []>} : vector<80x128xbf16>, vector<128x128xbf16>, vector<80x128xf32> -> vector<80x128xf32>
    %105 = arith.addf %99, %104 : vector<80x128xf32>
    %c0_97 = arith.constant 0 : index
    %c293 = arith.constant 293 : index
    %c0_98 = arith.constant 0 : index
    %106 = vector.load %arg1[%c0_97, %c293, %c0_98] : memref<1x384x128xbf16, #tpu.memory_space<vmem>>, vector<1x80x128xbf16>
    %107 = vector.shape_cast %106 : vector<1x80x128xbf16> to vector<80x128xbf16>
    %c7_99 = arith.constant 7 : index
    %c0_100 = arith.constant 0 : index
    %c0_101 = arith.constant 0 : index
    %108 = vector.load %arg2[%c7_99, %c0_100, %c0_101] : memref<9x128x128xbf16, #tpu.memory_space<vmem>>, vector<1x128x128xbf16>
    %109 = vector.shape_cast %108 : vector<1x128x128xbf16> to vector<128x128xbf16>
    %cst_102 = arith.constant dense<0.000000e+00> : vector<80x128xf32>
    %110 = tpu.matmul %107, %109, %cst_102 {dimension_numbers = #tpu.dot_dimension_numbers<[1], [0], [0], [1], [0, 0, 1, 1], [], []>} : vector<80x128xbf16>, vector<128x128xbf16>, vector<80x128xf32> -> vector<80x128xf32>
    %111 = arith.addf %105, %110 : vector<80x128xf32>
    %c0_103 = arith.constant 0 : index
    %c294 = arith.constant 294 : index
    %c0_104 = arith.constant 0 : index
    %112 = vector.load %arg1[%c0_103, %c294, %c0_104] : memref<1x384x128xbf16, #tpu.memory_space<vmem>>, vector<1x80x128xbf16>
    %113 = vector.shape_cast %112 : vector<1x80x128xbf16> to vector<80x128xbf16>
    %c8_105 = arith.constant 8 : index
    %c0_106 = arith.constant 0 : index
    %c0_107 = arith.constant 0 : index
    %114 = vector.load %arg2[%c8_105, %c0_106, %c0_107] : memref<9x128x128xbf16, #tpu.memory_space<vmem>>, vector<1x128x128xbf16>
    %115 = vector.shape_cast %114 : vector<1x128x128xbf16> to vector<128x128xbf16>
    %cst_108 = arith.constant dense<0.000000e+00> : vector<80x128xf32>
    %116 = tpu.matmul %113, %115, %cst_108 {dimension_numbers = #tpu.dot_dimension_numbers<[1], [0], [0], [1], [0, 0, 1, 1], [], []>} : vector<80x128xbf16>, vector<128x128xbf16>, vector<80x128xf32> -> vector<80x128xf32>
    %117 = arith.addf %111, %116 : vector<80x128xf32>
    %118 = vector.broadcast %0 : vector<1x128xf32> to vector<80x128xf32>
    %119 = arith.mulf %117, %118 : vector<80x128xf32>
    %120 = vector.broadcast %1 : vector<1x128xf32> to vector<80x128xf32>
    %121 = arith.addf %119, %120 : vector<80x128xf32>
    %cst_109 = arith.constant 0.000000e+00 : f32
    %122 = vector.broadcast %cst_109 : f32 to vector<80x128xf32>
    %123 = arith.maximumf %121, %122 : vector<80x128xf32>
    %124 = arith.truncf %123 : vector<80x128xf32> to vector<80x128xbf16>
    %c0_110 = arith.constant 0 : index
    %c256_111 = arith.constant 256 : index
    %c0_112 = arith.constant 0 : index
    %125 = vector.load %arg5[%c0_110, %c256_111, %c0_112] : memref<1x336x128xbf16, #tpu.memory_space<vmem>>, vector<1x80x128xbf16>
    %126 = vector.shape_cast %125 : vector<1x80x128xbf16> to vector<80x128xbf16>
    %127 = vector.shape_cast %124 : vector<80x128xbf16> to vector<1x80x128xbf16>
    tpu.vector_store %arg5[%c0_110, %c256_111, %c0_112], %127 {strides = array<i32>} : memref<1x336x128xbf16, #tpu.memory_space<vmem>>, vector<1x80x128xbf16>,
    return
  }
  func.func @transform_0(%arg0: i32) -> (i32, i32, i32) {
    %c0_i32 = arith.constant 0 : i32
    %c0_i32_0 = arith.constant 0 : i32
    %c0_i32_1 = arith.constant 0 : i32
    return %arg0, %c0_i32, %c0_i32_0 : i32, i32, i32
  }
  func.func @transform_1(%arg0: i32) -> (i32, i32, i32) {
    %c0_i32 = arith.constant 0 : i32
    %c0_i32_0 = arith.constant 0 : i32
    %c0_i32_1 = arith.constant 0 : i32
    %c0_i32_2 = arith.constant 0 : i32
    return %c0_i32, %c0_i32_0, %c0_i32_1 : i32, i32, i32
  }
  func.func @transform_2(%arg0: i32) -> (i32, i32) {
    %c0_i32 = arith.constant 0 : i32
    %c0_i32_0 = arith.constant 0 : i32
    %c0_i32_1 = arith.constant 0 : i32
    return %c0_i32, %c0_i32_0 : i32, i32
  }
  func.func @transform_3(%arg0: i32) -> (i32, i32) {
    %c0_i32 = arith.constant 0 : i32
    %c0_i32_0 = arith.constant 0 : i32
    %c0_i32_1 = arith.constant 0 : i32
    return %c0_i32, %c0_i32_0 : i32, i32
  }
  func.func @transform_4(%arg0: i32) -> (i32, i32, i32) {
    %c0_i32 = arith.constant 0 : i32
    %c0_i32_0 = arith.constant 0 : i32
    %c0_i32_1 = arith.constant 0 : i32
    return %arg0, %c0_i32, %c0_i32_0 : i32, i32, i32
  }
}

module attributes {stable_mosaic.version = 11 : i64} {
  func.func @_maxpool_kernel(%arg0: i32, %arg1: memref<1x336x128xbf16, #tpu.memory_space<vmem>>, %arg2: memref<128x229xbf16, #tpu.memory_space<vmem>>, %arg3: memref<1x128x128xbf16, #tpu.memory_space<vmem>>) attributes {dimension_semantics = [#tpu.dimension_semantics<parallel>], iteration_bounds = array<i64: 2>, scalar_prefetch = 0 : i64, scratch_operands = 0 : i64, tpu.core_type = #tpu.core_type<tc>, window_params = [{transform_indices = @transform_0, window_bounds = array<i64: 1, 336, 128>}, {pipeline_mode = #tpu.pipeline_mode<synchronous>, transform_indices = @transform_1, window_bounds = array<i64: 128, 229>}, {transform_indices = @transform_2, window_bounds = array<i64: 1, 128, 128>}]} {
    %c0 = arith.constant 0 : index
    %c0_0 = arith.constant 0 : index
    %c0_1 = arith.constant 0 : index
    %0 = vector.load %arg1[%c0, %c0_0, %c0_1] : memref<1x336x128xbf16, #tpu.memory_space<vmem>>, vector<1x229x128xbf16>
    %1 = vector.shape_cast %0 : vector<1x229x128xbf16> to vector<229x128xbf16>
    %c0_2 = arith.constant 0 : index
    %c1 = arith.constant 1 : index
    %c0_3 = arith.constant 0 : index
    %2 = vector.load %arg1[%c0_2, %c1, %c0_3] : memref<1x336x128xbf16, #tpu.memory_space<vmem>>, vector<1x229x128xbf16>
    %3 = vector.shape_cast %2 : vector<1x229x128xbf16> to vector<229x128xbf16>
    %4 = arith.maximumf %1, %3 : vector<229x128xbf16>
    %c0_4 = arith.constant 0 : index
    %c2 = arith.constant 2 : index
    %c0_5 = arith.constant 0 : index
    %5 = vector.load %arg1[%c0_4, %c2, %c0_5] : memref<1x336x128xbf16, #tpu.memory_space<vmem>>, vector<1x229x128xbf16>
    %6 = vector.shape_cast %5 : vector<1x229x128xbf16> to vector<229x128xbf16>
    %7 = arith.maximumf %4, %6 : vector<229x128xbf16>
    %c0_6 = arith.constant 0 : index
    %c18 = arith.constant 18 : index
    %c0_7 = arith.constant 0 : index
    %8 = vector.load %arg1[%c0_6, %c18, %c0_7] : memref<1x336x128xbf16, #tpu.memory_space<vmem>>, vector<1x229x128xbf16>
    %9 = vector.shape_cast %8 : vector<1x229x128xbf16> to vector<229x128xbf16>
    %10 = arith.maximumf %7, %9 : vector<229x128xbf16>
    %c0_8 = arith.constant 0 : index
    %c19 = arith.constant 19 : index
    %c0_9 = arith.constant 0 : index
    %11 = vector.load %arg1[%c0_8, %c19, %c0_9] : memref<1x336x128xbf16, #tpu.memory_space<vmem>>, vector<1x229x128xbf16>
    %12 = vector.shape_cast %11 : vector<1x229x128xbf16> to vector<229x128xbf16>
    %13 = arith.maximumf %10, %12 : vector<229x128xbf16>
    %c0_10 = arith.constant 0 : index
    %c20 = arith.constant 20 : index
    %c0_11 = arith.constant 0 : index
    %14 = vector.load %arg1[%c0_10, %c20, %c0_11] : memref<1x336x128xbf16, #tpu.memory_space<vmem>>, vector<1x229x128xbf16>
    %15 = vector.shape_cast %14 : vector<1x229x128xbf16> to vector<229x128xbf16>
    %16 = arith.maximumf %13, %15 : vector<229x128xbf16>
    %c0_12 = arith.constant 0 : index
    %c36 = arith.constant 36 : index
    %c0_13 = arith.constant 0 : index
    %17 = vector.load %arg1[%c0_12, %c36, %c0_13] : memref<1x336x128xbf16, #tpu.memory_space<vmem>>, vector<1x229x128xbf16>
    %18 = vector.shape_cast %17 : vector<1x229x128xbf16> to vector<229x128xbf16>
    %19 = arith.maximumf %16, %18 : vector<229x128xbf16>
    %c0_14 = arith.constant 0 : index
    %c37 = arith.constant 37 : index
    %c0_15 = arith.constant 0 : index
    %20 = vector.load %arg1[%c0_14, %c37, %c0_15] : memref<1x336x128xbf16, #tpu.memory_space<vmem>>, vector<1x229x128xbf16>
    %21 = vector.shape_cast %20 : vector<1x229x128xbf16> to vector<229x128xbf16>
    %22 = arith.maximumf %19, %21 : vector<229x128xbf16>
    %c0_16 = arith.constant 0 : index
    %c38 = arith.constant 38 : index
    %c0_17 = arith.constant 0 : index
    %23 = vector.load %arg1[%c0_16, %c38, %c0_17] : memref<1x336x128xbf16, #tpu.memory_space<vmem>>, vector<1x229x128xbf16>
    %24 = vector.shape_cast %23 : vector<1x229x128xbf16> to vector<229x128xbf16>
    %25 = arith.maximumf %22, %24 : vector<229x128xbf16>
    %c0_18 = arith.constant 0 : index
    %c0_19 = arith.constant 0 : index
    %26 = vector.load %arg2[%c0_18, %c0_19] : memref<128x229xbf16, #tpu.memory_space<vmem>>, vector<128x229xbf16>
    %cst = arith.constant dense<0.000000e+00> : vector<128x128xf32>
    %27 = tpu.matmul %26, %25, %cst {dimension_numbers = #tpu.dot_dimension_numbers<[1], [0], [0], [1], [0, 0, 1, 1], [], []>} : vector<128x229xbf16>, vector<229x128xbf16>, vector<128x128xf32> -> vector<128x128xf32>
    %28 = arith.truncf %27 : vector<128x128xf32> to vector<128x128xbf16>
    %c0_20 = arith.constant 0 : index
    %c0_21 = arith.constant 0 : index
    %c0_22 = arith.constant 0 : index
    %29 = vector.load %arg3[%c0_20, %c0_21, %c0_22] : memref<1x128x128xbf16, #tpu.memory_space<vmem>>, vector<1x128x128xbf16>
    %30 = vector.shape_cast %29 : vector<1x128x128xbf16> to vector<128x128xbf16>
    %31 = vector.shape_cast %28 : vector<128x128xbf16> to vector<1x128x128xbf16>
    tpu.vector_store %arg3[%c0_20, %c0_21, %c0_22], %31 {strides = array<i32>} : memref<1x128x128xbf16, #tpu.memory_space<vmem>>, vector<1x128x128xbf16>,
    return
  }
  func.func @transform_0(%arg0: i32) -> (i32, i32, i32) {
    %c0_i32 = arith.constant 0 : i32
    %c0_i32_0 = arith.constant 0 : i32
    %c0_i32_1 = arith.constant 0 : i32
    return %arg0, %c0_i32, %c0_i32_0 : i32, i32, i32
  }
  func.func @transform_1(%arg0: i32) -> (i32, i32) {
    %c0_i32 = arith.constant 0 : i32
    %c0_i32_0 = arith.constant 0 : i32
    %c0_i32_1 = arith.constant 0 : i32
    return %c0_i32, %c0_i32_0 : i32, i32
  }
  func.func @transform_2(%arg0: i32) -> (i32, i32, i32) {
    %c0_i32 = arith.constant 0 : i32
    %c0_i32_0 = arith.constant 0 : i32
    %c0_i32_1 = arith.constant 0 : i32
    return %arg0, %c0_i32, %c0_i32_0 : i32, i32, i32
  }
}

module attributes {stable_mosaic.version = 11 : i64} {
  func.func @_conv_bn_relu_kernel(%arg0: i32, %arg1: memref<1x128x128xbf16, #tpu.memory_space<vmem>>, %arg2: memref<9x128x128xbf16, #tpu.memory_space<vmem>>, %arg3: memref<1x128xf32, #tpu.memory_space<vmem>>, %arg4: memref<1x128xf32, #tpu.memory_space<vmem>>, %arg5: memref<1x96x128xbf16, #tpu.memory_space<vmem>>) attributes {dimension_semantics = [#tpu.dimension_semantics<parallel>], iteration_bounds = array<i64: 2>, scalar_prefetch = 0 : i64, scratch_operands = 0 : i64, tpu.core_type = #tpu.core_type<tc>, window_params = [{transform_indices = @transform_0, window_bounds = array<i64: 1, 128, 128>}, {pipeline_mode = #tpu.pipeline_mode<synchronous>, transform_indices = @transform_1, window_bounds = array<i64: 9, 128, 128>}, {pipeline_mode = #tpu.pipeline_mode<synchronous>, transform_indices = @transform_2, window_bounds = array<i64: 1, 128>}, {pipeline_mode = #tpu.pipeline_mode<synchronous>, transform_indices = @transform_3, window_bounds = array<i64: 1, 128>}, {transform_indices = @transform_4, window_bounds = array<i64: 1, 96, 128>}]} {
    %c0 = arith.constant 0 : index
    %c0_0 = arith.constant 0 : index
    %0 = vector.load %arg3[%c0, %c0_0] : memref<1x128xf32, #tpu.memory_space<vmem>>, vector<1x128xf32>
    %c0_1 = arith.constant 0 : index
    %c0_2 = arith.constant 0 : index
    %1 = vector.load %arg4[%c0_1, %c0_2] : memref<1x128xf32, #tpu.memory_space<vmem>>, vector<1x128xf32>
    %c0_3 = arith.constant 0 : index
    %c0_4 = arith.constant 0 : index
    %c0_5 = arith.constant 0 : index
    %2 = vector.load %arg1[%c0_3, %c0_4, %c0_5] : memref<1x128x128xbf16, #tpu.memory_space<vmem>>, vector<1x96x128xbf16>
    %3 = vector.shape_cast %2 : vector<1x96x128xbf16> to vector<96x128xbf16>
    %c0_6 = arith.constant 0 : index
    %c0_7 = arith.constant 0 : index
    %c0_8 = arith.constant 0 : index
    %4 = vector.load %arg2[%c0_6, %c0_7, %c0_8] : memref<9x128x128xbf16, #tpu.memory_space<vmem>>, vector<1x128x128xbf16>
    %5 = vector.shape_cast %4 : vector<1x128x128xbf16> to vector<128x128xbf16>
    %cst = arith.constant dense<0.000000e+00> : vector<96x128xf32>
    %6 = tpu.matmul %3, %5, %cst {dimension_numbers = #tpu.dot_dimension_numbers<[1], [0], [0], [1], [0, 0, 1, 1], [], []>} : vector<96x128xbf16>, vector<128x128xbf16>, vector<96x128xf32> -> vector<96x128xf32>
    %c0_9 = arith.constant 0 : index
    %c1 = arith.constant 1 : index
    %c0_10 = arith.constant 0 : index
    %7 = vector.load %arg1[%c0_9, %c1, %c0_10] : memref<1x128x128xbf16, #tpu.memory_space<vmem>>, vector<1x96x128xbf16>
    %8 = vector.shape_cast %7 : vector<1x96x128xbf16> to vector<96x128xbf16>
    %c1_11 = arith.constant 1 : index
    %c0_12 = arith.constant 0 : index
    %c0_13 = arith.constant 0 : index
    %9 = vector.load %arg2[%c1_11, %c0_12, %c0_13] : memref<9x128x128xbf16, #tpu.memory_space<vmem>>, vector<1x128x128xbf16>
    %10 = vector.shape_cast %9 : vector<1x128x128xbf16> to vector<128x128xbf16>
    %cst_14 = arith.constant dense<0.000000e+00> : vector<96x128xf32>
    %11 = tpu.matmul %8, %10, %cst_14 {dimension_numbers = #tpu.dot_dimension_numbers<[1], [0], [0], [1], [0, 0, 1, 1], [], []>} : vector<96x128xbf16>, vector<128x128xbf16>, vector<96x128xf32> -> vector<96x128xf32>
    %12 = arith.addf %6, %11 : vector<96x128xf32>
    %c0_15 = arith.constant 0 : index
    %c2 = arith.constant 2 : index
    %c0_16 = arith.constant 0 : index
    %13 = vector.load %arg1[%c0_15, %c2, %c0_16] : memref<1x128x128xbf16, #tpu.memory_space<vmem>>, vector<1x96x128xbf16>
    %14 = vector.shape_cast %13 : vector<1x96x128xbf16> to vector<96x128xbf16>
    %c2_17 = arith.constant 2 : index
    %c0_18 = arith.constant 0 : index
    %c0_19 = arith.constant 0 : index
    %15 = vector.load %arg2[%c2_17, %c0_18, %c0_19] : memref<9x128x128xbf16, #tpu.memory_space<vmem>>, vector<1x128x128xbf16>
    %16 = vector.shape_cast %15 : vector<1x128x128xbf16> to vector<128x128xbf16>
    %cst_20 = arith.constant dense<0.000000e+00> : vector<96x128xf32>
    %17 = tpu.matmul %14, %16, %cst_20 {dimension_numbers = #tpu.dot_dimension_numbers<[1], [0], [0], [1], [0, 0, 1, 1], [], []>} : vector<96x128xbf16>, vector<128x128xbf16>, vector<96x128xf32> -> vector<96x128xf32>
    %18 = arith.addf %12, %17 : vector<96x128xf32>
    %c0_21 = arith.constant 0 : index
    %c9 = arith.constant 9 : index
    %c0_22 = arith.constant 0 : index
    %19 = vector.load %arg1[%c0_21, %c9, %c0_22] : memref<1x128x128xbf16, #tpu.memory_space<vmem>>, vector<1x96x128xbf16>
    %20 = vector.shape_cast %19 : vector<1x96x128xbf16> to vector<96x128xbf16>
    %c3 = arith.constant 3 : index
    %c0_23 = arith.constant 0 : index
    %c0_24 = arith.constant 0 : index
    %21 = vector.load %arg2[%c3, %c0_23, %c0_24] : memref<9x128x128xbf16, #tpu.memory_space<vmem>>, vector<1x128x128xbf16>
    %22 = vector.shape_cast %21 : vector<1x128x128xbf16> to vector<128x128xbf16>
    %cst_25 = arith.constant dense<0.000000e+00> : vector<96x128xf32>
    %23 = tpu.matmul %20, %22, %cst_25 {dimension_numbers = #tpu.dot_dimension_numbers<[1], [0], [0], [1], [0, 0, 1, 1], [], []>} : vector<96x128xbf16>, vector<128x128xbf16>, vector<96x128xf32> -> vector<96x128xf32>
    %24 = arith.addf %18, %23 : vector<96x128xf32>
    %c0_26 = arith.constant 0 : index
    %c10 = arith.constant 10 : index
    %c0_27 = arith.constant 0 : index
    %25 = vector.load %arg1[%c0_26, %c10, %c0_27] : memref<1x128x128xbf16, #tpu.memory_space<vmem>>, vector<1x96x128xbf16>
    %26 = vector.shape_cast %25 : vector<1x96x128xbf16> to vector<96x128xbf16>
    %c4 = arith.constant 4 : index
    %c0_28 = arith.constant 0 : index
    %c0_29 = arith.constant 0 : index
    %27 = vector.load %arg2[%c4, %c0_28, %c0_29] : memref<9x128x128xbf16, #tpu.memory_space<vmem>>, vector<1x128x128xbf16>
    %28 = vector.shape_cast %27 : vector<1x128x128xbf16> to vector<128x128xbf16>
    %cst_30 = arith.constant dense<0.000000e+00> : vector<96x128xf32>
    %29 = tpu.matmul %26, %28, %cst_30 {dimension_numbers = #tpu.dot_dimension_numbers<[1], [0], [0], [1], [0, 0, 1, 1], [], []>} : vector<96x128xbf16>, vector<128x128xbf16>, vector<96x128xf32> -> vector<96x128xf32>
    %30 = arith.addf %24, %29 : vector<96x128xf32>
    %c0_31 = arith.constant 0 : index
    %c11 = arith.constant 11 : index
    %c0_32 = arith.constant 0 : index
    %31 = vector.load %arg1[%c0_31, %c11, %c0_32] : memref<1x128x128xbf16, #tpu.memory_space<vmem>>, vector<1x96x128xbf16>
    %32 = vector.shape_cast %31 : vector<1x96x128xbf16> to vector<96x128xbf16>
    %c5 = arith.constant 5 : index
    %c0_33 = arith.constant 0 : index
    %c0_34 = arith.constant 0 : index
    %33 = vector.load %arg2[%c5, %c0_33, %c0_34] : memref<9x128x128xbf16, #tpu.memory_space<vmem>>, vector<1x128x128xbf16>
    %34 = vector.shape_cast %33 : vector<1x128x128xbf16> to vector<128x128xbf16>
    %cst_35 = arith.constant dense<0.000000e+00> : vector<96x128xf32>
    %35 = tpu.matmul %32, %34, %cst_35 {dimension_numbers = #tpu.dot_dimension_numbers<[1], [0], [0], [1], [0, 0, 1, 1], [], []>} : vector<96x128xbf16>, vector<128x128xbf16>, vector<96x128xf32> -> vector<96x128xf32>
    %36 = arith.addf %30, %35 : vector<96x128xf32>
    %c0_36 = arith.constant 0 : index
    %c18 = arith.constant 18 : index
    %c0_37 = arith.constant 0 : index
    %37 = vector.load %arg1[%c0_36, %c18, %c0_37] : memref<1x128x128xbf16, #tpu.memory_space<vmem>>, vector<1x96x128xbf16>
    %38 = vector.shape_cast %37 : vector<1x96x128xbf16> to vector<96x128xbf16>
    %c6 = arith.constant 6 : index
    %c0_38 = arith.constant 0 : index
    %c0_39 = arith.constant 0 : index
    %39 = vector.load %arg2[%c6, %c0_38, %c0_39] : memref<9x128x128xbf16, #tpu.memory_space<vmem>>, vector<1x128x128xbf16>
    %40 = vector.shape_cast %39 : vector<1x128x128xbf16> to vector<128x128xbf16>
    %cst_40 = arith.constant dense<0.000000e+00> : vector<96x128xf32>
    %41 = tpu.matmul %38, %40, %cst_40 {dimension_numbers = #tpu.dot_dimension_numbers<[1], [0], [0], [1], [0, 0, 1, 1], [], []>} : vector<96x128xbf16>, vector<128x128xbf16>, vector<96x128xf32> -> vector<96x128xf32>
    %42 = arith.addf %36, %41 : vector<96x128xf32>
    %c0_41 = arith.constant 0 : index
    %c19 = arith.constant 19 : index
    %c0_42 = arith.constant 0 : index
    %43 = vector.load %arg1[%c0_41, %c19, %c0_42] : memref<1x128x128xbf16, #tpu.memory_space<vmem>>, vector<1x96x128xbf16>
    %44 = vector.shape_cast %43 : vector<1x96x128xbf16> to vector<96x128xbf16>
    %c7 = arith.constant 7 : index
    %c0_43 = arith.constant 0 : index
    %c0_44 = arith.constant 0 : index
    %45 = vector.load %arg2[%c7, %c0_43, %c0_44] : memref<9x128x128xbf16, #tpu.memory_space<vmem>>, vector<1x128x128xbf16>
    %46 = vector.shape_cast %45 : vector<1x128x128xbf16> to vector<128x128xbf16>
    %cst_45 = arith.constant dense<0.000000e+00> : vector<96x128xf32>
    %47 = tpu.matmul %44, %46, %cst_45 {dimension_numbers = #tpu.dot_dimension_numbers<[1], [0], [0], [1], [0, 0, 1, 1], [], []>} : vector<96x128xbf16>, vector<128x128xbf16>, vector<96x128xf32> -> vector<96x128xf32>
    %48 = arith.addf %42, %47 : vector<96x128xf32>
    %c0_46 = arith.constant 0 : index
    %c20 = arith.constant 20 : index
    %c0_47 = arith.constant 0 : index
    %49 = vector.load %arg1[%c0_46, %c20, %c0_47] : memref<1x128x128xbf16, #tpu.memory_space<vmem>>, vector<1x96x128xbf16>
    %50 = vector.shape_cast %49 : vector<1x96x128xbf16> to vector<96x128xbf16>
    %c8 = arith.constant 8 : index
    %c0_48 = arith.constant 0 : index
    %c0_49 = arith.constant 0 : index
    %51 = vector.load %arg2[%c8, %c0_48, %c0_49] : memref<9x128x128xbf16, #tpu.memory_space<vmem>>, vector<1x128x128xbf16>
    %52 = vector.shape_cast %51 : vector<1x128x128xbf16> to vector<128x128xbf16>
    %cst_50 = arith.constant dense<0.000000e+00> : vector<96x128xf32>
    %53 = tpu.matmul %50, %52, %cst_50 {dimension_numbers = #tpu.dot_dimension_numbers<[1], [0], [0], [1], [0, 0, 1, 1], [], []>} : vector<96x128xbf16>, vector<128x128xbf16>, vector<96x128xf32> -> vector<96x128xf32>
    %54 = arith.addf %48, %53 : vector<96x128xf32>
    %55 = vector.broadcast %0 : vector<1x128xf32> to vector<96x128xf32>
    %56 = arith.mulf %54, %55 : vector<96x128xf32>
    %57 = vector.broadcast %1 : vector<1x128xf32> to vector<96x128xf32>
    %58 = arith.addf %56, %57 : vector<96x128xf32>
    %cst_51 = arith.constant 0.000000e+00 : f32
    %59 = vector.broadcast %cst_51 : f32 to vector<96x128xf32>
    %60 = arith.maximumf %58, %59 : vector<96x128xf32>
    %61 = arith.truncf %60 : vector<96x128xf32> to vector<96x128xbf16>
    %c0_52 = arith.constant 0 : index
    %c0_53 = arith.constant 0 : index
    %c0_54 = arith.constant 0 : index
    %62 = vector.load %arg5[%c0_52, %c0_53, %c0_54] : memref<1x96x128xbf16, #tpu.memory_space<vmem>>, vector<1x96x128xbf16>
    %63 = vector.shape_cast %62 : vector<1x96x128xbf16> to vector<96x128xbf16>
    %64 = vector.shape_cast %61 : vector<96x128xbf16> to vector<1x96x128xbf16>
    tpu.vector_store %arg5[%c0_52, %c0_53, %c0_54], %64 {strides = array<i32>} : memref<1x96x128xbf16, #tpu.memory_space<vmem>>, vector<1x96x128xbf16>,
    return
  }
  func.func @transform_0(%arg0: i32) -> (i32, i32, i32) {
    %c0_i32 = arith.constant 0 : i32
    %c0_i32_0 = arith.constant 0 : i32
    %c0_i32_1 = arith.constant 0 : i32
    return %arg0, %c0_i32, %c0_i32_0 : i32, i32, i32
  }
  func.func @transform_1(%arg0: i32) -> (i32, i32, i32) {
    %c0_i32 = arith.constant 0 : i32
    %c0_i32_0 = arith.constant 0 : i32
    %c0_i32_1 = arith.constant 0 : i32
    %c0_i32_2 = arith.constant 0 : i32
    return %c0_i32, %c0_i32_0, %c0_i32_1 : i32, i32, i32
  }
  func.func @transform_2(%arg0: i32) -> (i32, i32) {
    %c0_i32 = arith.constant 0 : i32
    %c0_i32_0 = arith.constant 0 : i32
    %c0_i32_1 = arith.constant 0 : i32
    return %c0_i32, %c0_i32_0 : i32, i32
  }
  func.func @transform_3(%arg0: i32) -> (i32, i32) {
    %c0_i32 = arith.constant 0 : i32
    %c0_i32_0 = arith.constant 0 : i32
    %c0_i32_1 = arith.constant 0 : i32
    return %c0_i32, %c0_i32_0 : i32, i32
  }
  func.func @transform_4(%arg0: i32) -> (i32, i32, i32) {
    %c0_i32 = arith.constant 0 : i32
    %c0_i32_0 = arith.constant 0 : i32
    %c0_i32_1 = arith.constant 0 : i32
    return %arg0, %c0_i32, %c0_i32_0 : i32, i32, i32
  }
}

module attributes {stable_mosaic.version = 11 : i64} {
  func.func @_maxpool_kernel(%arg0: i32, %arg1: memref<1x96x128xbf16, #tpu.memory_space<vmem>>, %arg2: memref<48x41xbf16, #tpu.memory_space<vmem>>, %arg3: memref<1x48x128xbf16, #tpu.memory_space<vmem>>) attributes {dimension_semantics = [#tpu.dimension_semantics<parallel>], iteration_bounds = array<i64: 2>, scalar_prefetch = 0 : i64, scratch_operands = 0 : i64, tpu.core_type = #tpu.core_type<tc>, window_params = [{transform_indices = @transform_0, window_bounds = array<i64: 1, 96, 128>}, {pipeline_mode = #tpu.pipeline_mode<synchronous>, transform_indices = @transform_1, window_bounds = array<i64: 48, 41>}, {transform_indices = @transform_2, window_bounds = array<i64: 1, 48, 128>}]} {
    %c0 = arith.constant 0 : index
    %c0_0 = arith.constant 0 : index
    %c0_1 = arith.constant 0 : index
    %0 = vector.load %arg1[%c0, %c0_0, %c0_1] : memref<1x96x128xbf16, #tpu.memory_space<vmem>>, vector<1x41x128xbf16>
    %1 = vector.shape_cast %0 : vector<1x41x128xbf16> to vector<41x128xbf16>
    %c0_2 = arith.constant 0 : index
    %c1 = arith.constant 1 : index
    %c0_3 = arith.constant 0 : index
    %2 = vector.load %arg1[%c0_2, %c1, %c0_3] : memref<1x96x128xbf16, #tpu.memory_space<vmem>>, vector<1x41x128xbf16>
    %3 = vector.shape_cast %2 : vector<1x41x128xbf16> to vector<41x128xbf16>
    %4 = arith.maximumf %1, %3 : vector<41x128xbf16>
    %c0_4 = arith.constant 0 : index
    %c2 = arith.constant 2 : index
    %c0_5 = arith.constant 0 : index
    %5 = vector.load %arg1[%c0_4, %c2, %c0_5] : memref<1x96x128xbf16, #tpu.memory_space<vmem>>, vector<1x41x128xbf16>
    %6 = vector.shape_cast %5 : vector<1x41x128xbf16> to vector<41x128xbf16>
    %7 = arith.maximumf %4, %6 : vector<41x128xbf16>
    %c0_6 = arith.constant 0 : index
    %c9 = arith.constant 9 : index
    %c0_7 = arith.constant 0 : index
    %8 = vector.load %arg1[%c0_6, %c9, %c0_7] : memref<1x96x128xbf16, #tpu.memory_space<vmem>>, vector<1x41x128xbf16>
    %9 = vector.shape_cast %8 : vector<1x41x128xbf16> to vector<41x128xbf16>
    %10 = arith.maximumf %7, %9 : vector<41x128xbf16>
    %c0_8 = arith.constant 0 : index
    %c10 = arith.constant 10 : index
    %c0_9 = arith.constant 0 : index
    %11 = vector.load %arg1[%c0_8, %c10, %c0_9] : memref<1x96x128xbf16, #tpu.memory_space<vmem>>, vector<1x41x128xbf16>
    %12 = vector.shape_cast %11 : vector<1x41x128xbf16> to vector<41x128xbf16>
    %13 = arith.maximumf %10, %12 : vector<41x128xbf16>
    %c0_10 = arith.constant 0 : index
    %c11 = arith.constant 11 : index
    %c0_11 = arith.constant 0 : index
    %14 = vector.load %arg1[%c0_10, %c11, %c0_11] : memref<1x96x128xbf16, #tpu.memory_space<vmem>>, vector<1x41x128xbf16>
    %15 = vector.shape_cast %14 : vector<1x41x128xbf16> to vector<41x128xbf16>
    %16 = arith.maximumf %13, %15 : vector<41x128xbf16>
    %c0_12 = arith.constant 0 : index
    %c18 = arith.constant 18 : index
    %c0_13 = arith.constant 0 : index
    %17 = vector.load %arg1[%c0_12, %c18, %c0_13] : memref<1x96x128xbf16, #tpu.memory_space<vmem>>, vector<1x41x128xbf16>
    %18 = vector.shape_cast %17 : vector<1x41x128xbf16> to vector<41x128xbf16>
    %19 = arith.maximumf %16, %18 : vector<41x128xbf16>
    %c0_14 = arith.constant 0 : index
    %c19 = arith.constant 19 : index
    %c0_15 = arith.constant 0 : index
    %20 = vector.load %arg1[%c0_14, %c19, %c0_15] : memref<1x96x128xbf16, #tpu.memory_space<vmem>>, vector<1x41x128xbf16>
    %21 = vector.shape_cast %20 : vector<1x41x128xbf16> to vector<41x128xbf16>
    %22 = arith.maximumf %19, %21 : vector<41x128xbf16>
    %c0_16 = arith.constant 0 : index
    %c20 = arith.constant 20 : index
    %c0_17 = arith.constant 0 : index
    %23 = vector.load %arg1[%c0_16, %c20, %c0_17] : memref<1x96x128xbf16, #tpu.memory_space<vmem>>, vector<1x41x128xbf16>
    %24 = vector.shape_cast %23 : vector<1x41x128xbf16> to vector<41x128xbf16>
    %25 = arith.maximumf %22, %24 : vector<41x128xbf16>
    %c0_18 = arith.constant 0 : index
    %c0_19 = arith.constant 0 : index
    %26 = vector.load %arg2[%c0_18, %c0_19] : memref<48x41xbf16, #tpu.memory_space<vmem>>, vector<48x41xbf16>
    %cst = arith.constant dense<0.000000e+00> : vector<48x128xf32>
    %27 = tpu.matmul %26, %25, %cst {dimension_numbers = #tpu.dot_dimension_numbers<[1], [0], [0], [1], [0, 0, 1, 1], [], []>} : vector<48x41xbf16>, vector<41x128xbf16>, vector<48x128xf32> -> vector<48x128xf32>
    %28 = arith.truncf %27 : vector<48x128xf32> to vector<48x128xbf16>
    %c0_20 = arith.constant 0 : index
    %c0_21 = arith.constant 0 : index
    %c0_22 = arith.constant 0 : index
    %29 = vector.load %arg3[%c0_20, %c0_21, %c0_22] : memref<1x48x128xbf16, #tpu.memory_space<vmem>>, vector<1x48x128xbf16>
    %30 = vector.shape_cast %29 : vector<1x48x128xbf16> to vector<48x128xbf16>
    %31 = vector.shape_cast %28 : vector<48x128xbf16> to vector<1x48x128xbf16>
    tpu.vector_store %arg3[%c0_20, %c0_21, %c0_22], %31 {strides = array<i32>} : memref<1x48x128xbf16, #tpu.memory_space<vmem>>, vector<1x48x128xbf16>,
    return
  }
  func.func @transform_0(%arg0: i32) -> (i32, i32, i32) {
    %c0_i32 = arith.constant 0 : i32
    %c0_i32_0 = arith.constant 0 : i32
    %c0_i32_1 = arith.constant 0 : i32
    return %arg0, %c0_i32, %c0_i32_0 : i32, i32, i32
  }
  func.func @transform_1(%arg0: i32) -> (i32, i32) {
    %c0_i32 = arith.constant 0 : i32
    %c0_i32_0 = arith.constant 0 : i32
    %c0_i32_1 = arith.constant 0 : i32
    return %c0_i32, %c0_i32_0 : i32, i32
  }
  func.func @transform_2(%arg0: i32) -> (i32, i32, i32) {
    %c0_i32 = arith.constant 0 : i32
    %c0_i32_0 = arith.constant 0 : i32
    %c0_i32_1 = arith.constant 0 : i32
    return %arg0, %c0_i32, %c0_i32_0 : i32, i32, i32
  }
}

module attributes {stable_mosaic.version = 11 : i64} {
  func.func @_maxpool_kernel(%arg0: i32, %arg1: memref<1x32x128xbf16, #tpu.memory_space<vmem>>, %arg2: memref<4x13xbf16, #tpu.memory_space<vmem>>, %arg3: memref<1x4x128xbf16, #tpu.memory_space<vmem>>) attributes {dimension_semantics = [#tpu.dimension_semantics<parallel>], iteration_bounds = array<i64: 2>, scalar_prefetch = 0 : i64, scratch_operands = 0 : i64, tpu.core_type = #tpu.core_type<tc>, window_params = [{transform_indices = @transform_0, window_bounds = array<i64: 1, 32, 128>}, {pipeline_mode = #tpu.pipeline_mode<synchronous>, transform_indices = @transform_1, window_bounds = array<i64: 4, 13>}, {transform_indices = @transform_2, window_bounds = array<i64: 1, 4, 128>}]} {
    %c0 = arith.constant 0 : index
    %c0_0 = arith.constant 0 : index
    %c0_1 = arith.constant 0 : index
    %0 = vector.load %arg1[%c0, %c0_0, %c0_1] : memref<1x32x128xbf16, #tpu.memory_space<vmem>>, vector<1x13x128xbf16>
    %1 = vector.shape_cast %0 : vector<1x13x128xbf16> to vector<13x128xbf16>
    %c0_2 = arith.constant 0 : index
    %c1 = arith.constant 1 : index
    %c0_3 = arith.constant 0 : index
    %2 = vector.load %arg1[%c0_2, %c1, %c0_3] : memref<1x32x128xbf16, #tpu.memory_space<vmem>>, vector<1x13x128xbf16>
    %3 = vector.shape_cast %2 : vector<1x13x128xbf16> to vector<13x128xbf16>
    %4 = arith.maximumf %1, %3 : vector<13x128xbf16>
    %c0_4 = arith.constant 0 : index
    %c5 = arith.constant 5 : index
    %c0_5 = arith.constant 0 : index
    %5 = vector.load %arg1[%c0_4, %c5, %c0_5] : memref<1x32x128xbf16, #tpu.memory_space<vmem>>, vector<1x13x128xbf16>
    %6 = vector.shape_cast %5 : vector<1x13x128xbf16> to vector<13x128xbf16>
    %7 = arith.maximumf %4, %6 : vector<13x128xbf16>
    %c0_6 = arith.constant 0 : index
    %c6 = arith.constant 6 : index
    %c0_7 = arith.constant 0 : index
    %8 = vector.load %arg1[%c0_6, %c6, %c0_7] : memref<1x32x128xbf16, #tpu.memory_space<vmem>>, vector<1x13x128xbf16>
    %9 = vector.shape_cast %8 : vector<1x13x128xbf16> to vector<13x128xbf16>
    %10 = arith.maximumf %7, %9 : vector<13x128xbf16>
    %c0_8 = arith.constant 0 : index
    %c0_9 = arith.constant 0 : index
    %11 = vector.load %arg2[%c0_8, %c0_9] : memref<4x13xbf16, #tpu.memory_space<vmem>>, vector<4x13xbf16>
    %cst = arith.constant dense<0.000000e+00> : vector<4x128xf32>
    %12 = tpu.matmul %11, %10, %cst {dimension_numbers = #tpu.dot_dimension_numbers<[1], [0], [0], [1], [0, 0, 1, 1], [], []>} : vector<4x13xbf16>, vector<13x128xbf16>, vector<4x128xf32> -> vector<4x128xf32>
    %13 = arith.truncf %12 : vector<4x128xf32> to vector<4x128xbf16>
    %c0_10 = arith.constant 0 : index
    %c0_11 = arith.constant 0 : index
    %c0_12 = arith.constant 0 : index
    %14 = vector.load %arg3[%c0_10, %c0_11, %c0_12] : memref<1x4x128xbf16, #tpu.memory_space<vmem>>, vector<1x4x128xbf16>
    %15 = vector.shape_cast %14 : vector<1x4x128xbf16> to vector<4x128xbf16>
    %16 = vector.shape_cast %13 : vector<4x128xbf16> to vector<1x4x128xbf16>
    tpu.vector_store %arg3[%c0_10, %c0_11, %c0_12], %16 {strides = array<i32>} : memref<1x4x128xbf16, #tpu.memory_space<vmem>>, vector<1x4x128xbf16>,
    return
  }
  func.func @transform_0(%arg0: i32) -> (i32, i32, i32) {
    %c0_i32 = arith.constant 0 : i32
    %c0_i32_0 = arith.constant 0 : i32
    %c0_i32_1 = arith.constant 0 : i32
    return %arg0, %c0_i32, %c0_i32_0 : i32, i32, i32
  }
  func.func @transform_1(%arg0: i32) -> (i32, i32) {
    %c0_i32 = arith.constant 0 : i32
    %c0_i32_0 = arith.constant 0 : i32
    %c0_i32_1 = arith.constant 0 : i32
    return %c0_i32, %c0_i32_0 : i32, i32
  }
  func.func @transform_2(%arg0: i32) -> (i32, i32, i32) {
    %c0_i32 = arith.constant 0 : i32
    %c0_i32_0 = arith.constant 0 : i32
    %c0_i32_1 = arith.constant 0 : i32
    return %arg0, %c0_i32, %c0_i32_0 : i32, i32, i32
  }
}

module attributes {stable_mosaic.version = 11 : i64} {
  func.func @_conv_bn_relu_kernel(%arg0: i32, %arg1: memref<1x48x128xbf16, #tpu.memory_space<vmem>>, %arg2: memref<4x128x128xbf16, #tpu.memory_space<vmem>>, %arg3: memref<1x128xf32, #tpu.memory_space<vmem>>, %arg4: memref<1x128xf32, #tpu.memory_space<vmem>>, %arg5: memref<1x32x128xbf16, #tpu.memory_space<vmem>>) attributes {dimension_semantics = [#tpu.dimension_semantics<parallel>], iteration_bounds = array<i64: 2>, scalar_prefetch = 0 : i64, scratch_operands = 0 : i64, tpu.core_type = #tpu.core_type<tc>, window_params = [{transform_indices = @transform_0, window_bounds = array<i64: 1, 48, 128>}, {pipeline_mode = #tpu.pipeline_mode<synchronous>, transform_indices = @transform_1, window_bounds = array<i64: 4, 128, 128>}, {pipeline_mode = #tpu.pipeline_mode<synchronous>, transform_indices = @transform_2, window_bounds = array<i64: 1, 128>}, {pipeline_mode = #tpu.pipeline_mode<synchronous>, transform_indices = @transform_3, window_bounds = array<i64: 1, 128>}, {transform_indices = @transform_4, window_bounds = array<i64: 1, 32, 128>}]} {
    %c0 = arith.constant 0 : index
    %c0_0 = arith.constant 0 : index
    %0 = vector.load %arg3[%c0, %c0_0] : memref<1x128xf32, #tpu.memory_space<vmem>>, vector<1x128xf32>
    %c0_1 = arith.constant 0 : index
    %c0_2 = arith.constant 0 : index
    %1 = vector.load %arg4[%c0_1, %c0_2] : memref<1x128xf32, #tpu.memory_space<vmem>>, vector<1x128xf32>
    %c0_3 = arith.constant 0 : index
    %c0_4 = arith.constant 0 : index
    %c0_5 = arith.constant 0 : index
    %2 = vector.load %arg1[%c0_3, %c0_4, %c0_5] : memref<1x48x128xbf16, #tpu.memory_space<vmem>>, vector<1x32x128xbf16>
    %3 = vector.shape_cast %2 : vector<1x32x128xbf16> to vector<32x128xbf16>
    %c0_6 = arith.constant 0 : index
    %c0_7 = arith.constant 0 : index
    %c0_8 = arith.constant 0 : index
    %4 = vector.load %arg2[%c0_6, %c0_7, %c0_8] : memref<4x128x128xbf16, #tpu.memory_space<vmem>>, vector<1x128x128xbf16>
    %5 = vector.shape_cast %4 : vector<1x128x128xbf16> to vector<128x128xbf16>
    %cst = arith.constant dense<0.000000e+00> : vector<32x128xf32>
    %6 = tpu.matmul %3, %5, %cst {dimension_numbers = #tpu.dot_dimension_numbers<[1], [0], [0], [1], [0, 0, 1, 1], [], []>} : vector<32x128xbf16>, vector<128x128xbf16>, vector<32x128xf32> -> vector<32x128xf32>
    %c0_9 = arith.constant 0 : index
    %c1 = arith.constant 1 : index
    %c0_10 = arith.constant 0 : index
    %7 = vector.load %arg1[%c0_9, %c1, %c0_10] : memref<1x48x128xbf16, #tpu.memory_space<vmem>>, vector<1x32x128xbf16>
    %8 = vector.shape_cast %7 : vector<1x32x128xbf16> to vector<32x128xbf16>
    %c1_11 = arith.constant 1 : index
    %c0_12 = arith.constant 0 : index
    %c0_13 = arith.constant 0 : index
    %9 = vector.load %arg2[%c1_11, %c0_12, %c0_13] : memref<4x128x128xbf16, #tpu.memory_space<vmem>>, vector<1x128x128xbf16>
    %10 = vector.shape_cast %9 : vector<1x128x128xbf16> to vector<128x128xbf16>
    %cst_14 = arith.constant dense<0.000000e+00> : vector<32x128xf32>
    %11 = tpu.matmul %8, %10, %cst_14 {dimension_numbers = #tpu.dot_dimension_numbers<[1], [0], [0], [1], [0, 0, 1, 1], [], []>} : vector<32x128xbf16>, vector<128x128xbf16>, vector<32x128xf32> -> vector<32x128xf32>
    %12 = arith.addf %6, %11 : vector<32x128xf32>
    %c0_15 = arith.constant 0 : index
    %c5 = arith.constant 5 : index
    %c0_16 = arith.constant 0 : index
    %13 = vector.load %arg1[%c0_15, %c5, %c0_16] : memref<1x48x128xbf16, #tpu.memory_space<vmem>>, vector<1x32x128xbf16>
    %14 = vector.shape_cast %13 : vector<1x32x128xbf16> to vector<32x128xbf16>
    %c2 = arith.constant 2 : index
    %c0_17 = arith.constant 0 : index
    %c0_18 = arith.constant 0 : index
    %15 = vector.load %arg2[%c2, %c0_17, %c0_18] : memref<4x128x128xbf16, #tpu.memory_space<vmem>>, vector<1x128x128xbf16>
    %16 = vector.shape_cast %15 : vector<1x128x128xbf16> to vector<128x128xbf16>
    %cst_19 = arith.constant dense<0.000000e+00> : vector<32x128xf32>
    %17 = tpu.matmul %14, %16, %cst_19 {dimension_numbers = #tpu.dot_dimension_numbers<[1], [0], [0], [1], [0, 0, 1, 1], [], []>} : vector<32x128xbf16>, vector<128x128xbf16>, vector<32x128xf32> -> vector<32x128xf32>
    %18 = arith.addf %12, %17 : vector<32x128xf32>
    %c0_20 = arith.constant 0 : index
    %c6 = arith.constant 6 : index
    %c0_21 = arith.constant 0 : index
    %19 = vector.load %arg1[%c0_20, %c6, %c0_21] : memref<1x48x128xbf16, #tpu.memory_space<vmem>>, vector<1x32x128xbf16>
    %20 = vector.shape_cast %19 : vector<1x32x128xbf16> to vector<32x128xbf16>
    %c3 = arith.constant 3 : index
    %c0_22 = arith.constant 0 : index
    %c0_23 = arith.constant 0 : index
    %21 = vector.load %arg2[%c3, %c0_22, %c0_23] : memref<4x128x128xbf16, #tpu.memory_space<vmem>>, vector<1x128x128xbf16>
    %22 = vector.shape_cast %21 : vector<1x128x128xbf16> to vector<128x128xbf16>
    %cst_24 = arith.constant dense<0.000000e+00> : vector<32x128xf32>
    %23 = tpu.matmul %20, %22, %cst_24 {dimension_numbers = #tpu.dot_dimension_numbers<[1], [0], [0], [1], [0, 0, 1, 1], [], []>} : vector<32x128xbf16>, vector<128x128xbf16>, vector<32x128xf32> -> vector<32x128xf32>
    %24 = arith.addf %18, %23 : vector<32x128xf32>
    %25 = vector.broadcast %0 : vector<1x128xf32> to vector<32x128xf32>
    %26 = arith.mulf %24, %25 : vector<32x128xf32>
    %27 = vector.broadcast %1 : vector<1x128xf32> to vector<32x128xf32>
    %28 = arith.addf %26, %27 : vector<32x128xf32>
    %cst_25 = arith.constant 0.000000e+00 : f32
    %29 = vector.broadcast %cst_25 : f32 to vector<32x128xf32>
    %30 = arith.maximumf %28, %29 : vector<32x128xf32>
    %31 = arith.truncf %30 : vector<32x128xf32> to vector<32x128xbf16>
    %c0_26 = arith.constant 0 : index
    %c0_27 = arith.constant 0 : index
    %c0_28 = arith.constant 0 : index
    %32 = vector.load %arg5[%c0_26, %c0_27, %c0_28] : memref<1x32x128xbf16, #tpu.memory_space<vmem>>, vector<1x32x128xbf16>
    %33 = vector.shape_cast %32 : vector<1x32x128xbf16> to vector<32x128xbf16>
    %34 = vector.shape_cast %31 : vector<32x128xbf16> to vector<1x32x128xbf16>
    tpu.vector_store %arg5[%c0_26, %c0_27, %c0_28], %34 {strides = array<i32>} : memref<1x32x128xbf16, #tpu.memory_space<vmem>>, vector<1x32x128xbf16>,
    return
  }
  func.func @transform_0(%arg0: i32) -> (i32, i32, i32) {
    %c0_i32 = arith.constant 0 : i32
    %c0_i32_0 = arith.constant 0 : i32
    %c0_i32_1 = arith.constant 0 : i32
    return %arg0, %c0_i32, %c0_i32_0 : i32, i32, i32
  }
  func.func @transform_1(%arg0: i32) -> (i32, i32, i32) {
    %c0_i32 = arith.constant 0 : i32
    %c0_i32_0 = arith.constant 0 : i32
    %c0_i32_1 = arith.constant 0 : i32
    %c0_i32_2 = arith.constant 0 : i32
    return %c0_i32, %c0_i32_0, %c0_i32_1 : i32, i32, i32
  }
  func.func @transform_2(%arg0: i32) -> (i32, i32) {
    %c0_i32 = arith.constant 0 : i32
    %c0_i32_0 = arith.constant 0 : i32
    %c0_i32_1 = arith.constant 0 : i32
    return %c0_i32, %c0_i32_0 : i32, i32
  }
  func.func @transform_3(%arg0: i32) -> (i32, i32) {
    %c0_i32 = arith.constant 0 : i32
    %c0_i32_0 = arith.constant 0 : i32
    %c0_i32_1 = arith.constant 0 : i32
    return %c0_i32, %c0_i32_0 : i32, i32
  }
  func.func @transform_4(%arg0: i32) -> (i32, i32, i32) {
    %c0_i32 = arith.constant 0 : i32
    %c0_i32_0 = arith.constant 0 : i32
    %c0_i32_1 = arith.constant 0 : i32
    return %arg0, %c0_i32, %c0_i32_0 : i32, i32, i32
  }
}

module attributes {stable_mosaic.version = 11 : i64} {
  func.func @_fc_head_kernel(%arg0: i32, %arg1: memref<2x512xbf16, #tpu.memory_space<vmem>>, %arg2: memref<512x128xbf16, #tpu.memory_space<vmem>>, %arg3: memref<1x128xf32, #tpu.memory_space<vmem>>, %arg4: memref<128x128xbf16, #tpu.memory_space<vmem>>, %arg5: memref<1x128xf32, #tpu.memory_space<vmem>>, %arg6: memref<2x128xf32, #tpu.memory_space<vmem>>) attributes {dimension_semantics = [#tpu.dimension_semantics<parallel>], iteration_bounds = array<i64: 1>, scalar_prefetch = 0 : i64, scratch_operands = 0 : i64, tpu.core_type = #tpu.core_type<tc>, window_params = [{transform_indices = @transform_0, window_bounds = array<i64: 2, 512>}, {pipeline_mode = #tpu.pipeline_mode<synchronous>, transform_indices = @transform_1, window_bounds = array<i64: 512, 128>}, {pipeline_mode = #tpu.pipeline_mode<synchronous>, transform_indices = @transform_2, window_bounds = array<i64: 1, 128>}, {pipeline_mode = #tpu.pipeline_mode<synchronous>, transform_indices = @transform_3, window_bounds = array<i64: 128, 128>}, {pipeline_mode = #tpu.pipeline_mode<synchronous>, transform_indices = @transform_4, window_bounds = array<i64: 1, 128>}, {transform_indices = @transform_5, window_bounds = array<i64: 2, 128>}]} {
    %c0 = arith.constant 0 : index
    %c0_0 = arith.constant 0 : index
    %0 = vector.load %arg1[%c0, %c0_0] : memref<2x512xbf16, #tpu.memory_space<vmem>>, vector<2x512xbf16>
    %c0_1 = arith.constant 0 : index
    %c0_2 = arith.constant 0 : index
    %1 = vector.load %arg2[%c0_1, %c0_2] : memref<512x128xbf16, #tpu.memory_space<vmem>>, vector<512x128xbf16>
    %cst = arith.constant dense<0.000000e+00> : vector<2x128xf32>
    %2 = tpu.matmul %0, %1, %cst {dimension_numbers = #tpu.dot_dimension_numbers<[1], [0], [0], [1], [0, 0, 1, 1], [], []>} : vector<2x512xbf16>, vector<512x128xbf16>, vector<2x128xf32> -> vector<2x128xf32>
    %c0_3 = arith.constant 0 : index
    %c0_4 = arith.constant 0 : index
    %3 = vector.load %arg3[%c0_3, %c0_4] : memref<1x128xf32, #tpu.memory_space<vmem>>, vector<1x128xf32>
    %4 = vector.broadcast %3 : vector<1x128xf32> to vector<2x128xf32>
    %5 = arith.addf %2, %4 : vector<2x128xf32>
    %cst_5 = arith.constant 0.000000e+00 : f32
    %6 = vector.broadcast %cst_5 : f32 to vector<2x128xf32>
    %7 = arith.maximumf %5, %6 : vector<2x128xf32>
    %8 = arith.truncf %7 : vector<2x128xf32> to vector<2x128xbf16>
    %c0_6 = arith.constant 0 : index
    %c0_7 = arith.constant 0 : index
    %9 = vector.load %arg4[%c0_6, %c0_7] : memref<128x128xbf16, #tpu.memory_space<vmem>>, vector<128x128xbf16>
    %cst_8 = arith.constant dense<0.000000e+00> : vector<2x128xf32>
    %10 = tpu.matmul %8, %9, %cst_8 {dimension_numbers = #tpu.dot_dimension_numbers<[1], [0], [0], [1], [0, 0, 1, 1], [], []>} : vector<2x128xbf16>, vector<128x128xbf16>, vector<2x128xf32> -> vector<2x128xf32>
    %c0_9 = arith.constant 0 : index
    %c0_10 = arith.constant 0 : index
    %11 = vector.load %arg5[%c0_9, %c0_10] : memref<1x128xf32, #tpu.memory_space<vmem>>, vector<1x128xf32>
    %12 = vector.broadcast %11 : vector<1x128xf32> to vector<2x128xf32>
    %13 = arith.addf %10, %12 : vector<2x128xf32>
    %c0_11 = arith.constant 0 : index
    %c0_12 = arith.constant 0 : index
    %14 = vector.load %arg6[%c0_11, %c0_12] : memref<2x128xf32, #tpu.memory_space<vmem>>, vector<2x128xf32>
    tpu.vector_store %arg6[%c0_11, %c0_12], %13 {strides = array<i32>} : memref<2x128xf32, #tpu.memory_space<vmem>>, vector<2x128xf32>,
    return
  }
  func.func @transform_0(%arg0: i32) -> (i32, i32) {
    %c0_i32 = arith.constant 0 : i32
    %c0_i32_0 = arith.constant 0 : i32
    return %arg0, %c0_i32 : i32, i32
  }
  func.func @transform_1(%arg0: i32) -> (i32, i32) {
    %c0_i32 = arith.constant 0 : i32
    %c0_i32_0 = arith.constant 0 : i32
    %c0_i32_1 = arith.constant 0 : i32
    return %c0_i32, %c0_i32_0 : i32, i32
  }
  func.func @transform_2(%arg0: i32) -> (i32, i32) {
    %c0_i32 = arith.constant 0 : i32
    %c0_i32_0 = arith.constant 0 : i32
    %c0_i32_1 = arith.constant 0 : i32
    return %c0_i32, %c0_i32_0 : i32, i32
  }
  func.func @transform_3(%arg0: i32) -> (i32, i32) {
    %c0_i32 = arith.constant 0 : i32
    %c0_i32_0 = arith.constant 0 : i32
    %c0_i32_1 = arith.constant 0 : i32
    return %c0_i32, %c0_i32_0 : i32, i32
  }
  func.func @transform_4(%arg0: i32) -> (i32, i32) {
    %c0_i32 = arith.constant 0 : i32
    %c0_i32_0 = arith.constant 0 : i32
    %c0_i32_1 = arith.constant 0 : i32
    return %c0_i32, %c0_i32_0 : i32, i32
  }
  func.func @transform_5(%arg0: i32) -> (i32, i32) {
    %c0_i32 = arith.constant 0 : i32
    %c0_i32_0 = arith.constant 0 : i32
    return %arg0, %c0_i32 : i32, i32
  }
}

</mosaic_0001>

<llo_original>
// kernel: cnn_forward.9
$region0: #{cnn_forward.9}
  #allocation0 [shape = 'u32[]', space=smem, size = 0x4, offset = 0x4, fixed_abs, tag = 'smem constant byte address 0x4 - core index']
  #allocation1 [shape = 'u32[144,128]{1,0:T(1,128)}', space=vmem, size = 0x12000, scoped, tag = 'internal scratch']
  %s0 = inlined_call_operand.vmem [shape: bf16[2,128,128], index: 0, kind: input, shape index: {}]
  %s1 = inlined_call_operand.vmem [shape: bf16[9,128,128], index: 1, kind: input, shape index: {}]
  %s2 = inlined_call_operand.vmem [shape: f32[1,128], index: 2, kind: input, shape index: {}]
  %s3 = inlined_call_operand.vmem [shape: f32[1,128], index: 3, kind: input, shape index: {}]
  %s4 = inlined_call_operand.vmem [shape: bf16[2,96,128], index: 4, kind: output, shape index: {}]
  %s5 = sld [smem:[#allocation0]]
  $region49: #{cnn_forward.9} parent=0
    _
  %s7 = ssub.s32 1, %s5
  %s8 = scalar_select 0, %s7, %s5
  loop: start=0, step=1, limit=4
  $region2: #{cnn_forward.9} parent=0 // loop_pre_header
    _
  $region3: #{cnn_forward.9} parent=0 // loop_header
    %s10 = sphi 0, %s14
    %p11 = scmp.ge.s32.totalorder %s10, 4
    %s20 = sphi 0, %s22
    %s23 = sphi 0, %s20
    %s24 = sphi 0, %s23
    %s40 = sphi 0, %s24
    %s44 = sphi 0, %s44
    %s46 = sphi 0, %s44
    %s47 = sphi 0, %s46
    %s61 = sphi 0, %s47
    %s65 = sphi 0, %s65
    %s67 = sphi 0, %s65
    %s68 = sphi 0, %s67
    %s82 = sphi 0, %s68
    %s86 = sphi 0, %s86
    %s88 = sphi 0, %s86
    %s89 = sphi 0, %s88
    %s103 = sphi 0, %s89
    %s109 = sphi 0, %s111
    %s112 = sphi 0, %s109
    %s113 = sphi 0, %s112
    %s129 = sphi 0, %s113
  $region4: #{cnn_forward.9} parent=0 // loop_header_branch
    %13 = sbr.rel (%p11) target = $region8
  $region5: #{cnn_forward.9} parent=0 // loop_body
    %s15 = ssub.s32 %s10, 1
    %s16 = ssub.s32 %s10, 2
    %s17 = sadd.s32 %s10, 1
    %s18 = ssub.s32 %s10, %s17
    %p19 = scmp.eq.s32.totalorder %s18, 0
    %s21 = sadd.s32 %s20, 1
    %s22 = scalar_select %p19, %s20, %s21
    %p25 = pneg %p19
    %p26 = scmp.eq.s32.totalorder %s10, 1
    %p27 = por %p25, %p26
    %p28 = scmp.ne.s32.totalorder %s20, %s23
    %p29 = scmp.eq.s32.totalorder %s10, 0
    %p30 = por %p28, %p29
    %p31 = scmp.ne.s32.totalorder %s20, %s23
    %p32 = scmp.eq.s32.totalorder %s15, 1
    %p33 = por %p31, %p32
    %p34 = scmp.ne.s32.totalorder %s23, %s24
    %p35 = scmp.eq.s32.totalorder %s15, 0
    %p36 = por %p34, %p35
    %p37 = scmp.ne.s32.totalorder %s23, %s24
    %p38 = scmp.eq.s32.totalorder %s16, 1
    %p39 = por %p37, %p38
    %p41 = scmp.ne.s32.totalorder %s24, %s40
    %p42 = scmp.eq.s32.totalorder %s16, 0
    %p43 = por %p41, %p42
    %s45 = sadd.s32 %s44, 1
    %p48 = scmp.eq.s32.totalorder %s10, 1
    %p49 = scmp.ne.s32.totalorder %s44, %s46
    %p50 = scmp.eq.s32.totalorder %s10, 0
    %p51 = por %p49, %p50
    %p52 = scmp.ne.s32.totalorder %s44, %s46
    %p53 = scmp.eq.s32.totalorder %s15, 1
    %p54 = por %p52, %p53
    %p55 = scmp.ne.s32.totalorder %s46, %s47
    %p56 = scmp.eq.s32.totalorder %s15, 0
    %p57 = por %p55, %p56
    %p58 = scmp.ne.s32.totalorder %s46, %s47
    %p59 = scmp.eq.s32.totalorder %s16, 1
    %p60 = por %p58, %p59
    %p62 = scmp.ne.s32.totalorder %s47, %s61
    %p63 = scmp.eq.s32.totalorder %s16, 0
    %p64 = por %p62, %p63
    %s66 = sadd.s32 %s65, 1
    %p69 = scmp.eq.s32.totalorder %s10, 1
    %p70 = scmp.ne.s32.totalorder %s65, %s67
    %p71 = scmp.eq.s32.totalorder %s10, 0
    %p72 = por %p70, %p71
    %p73 = scmp.ne.s32.totalorder %s65, %s67
    %p74 = scmp.eq.s32.totalorder %s15, 1
    %p75 = por %p73, %p74
    %p76 = scmp.ne.s32.totalorder %s67, %s68
    %p77 = scmp.eq.s32.totalorder %s15, 0
    %p78 = por %p76, %p77
    %p79 = scmp.ne.s32.totalorder %s67, %s68
    %p80 = scmp.eq.s32.totalorder %s16, 1
    %p81 = por %p79, %p80
    %p83 = scmp.ne.s32.totalorder %s68, %s82
    %p84 = scmp.eq.s32.totalorder %s16, 0
    %p85 = por %p83, %p84
    %s87 = sadd.s32 %s86, 1
    %p90 = scmp.eq.s32.totalorder %s10, 1
    %p91 = scmp.ne.s32.totalorder %s86, %s88
    %p92 = scmp.eq.s32.totalorder %s10, 0
    %p93 = por %p91, %p92
    %p94 = scmp.ne.s32.totalorder %s86, %s88
    %p95 = scmp.eq.s32.totalorder %s15, 1
    %p96 = por %p94, %p95
    %p97 = scmp.ne.s32.totalorder %s88, %s89
    %p98 = scmp.eq.s32.totalorder %s15, 0
    %p99 = por %p97, %p98
    %p100 = scmp.ne.s32.totalorder %s88, %s89
    %p101 = scmp.eq.s32.totalorder %s16, 1
    %p102 = por %p100, %p101
    %p104 = scmp.ne.s32.totalorder %s89, %s103
    %p105 = scmp.eq.s32.totalorder %s16, 0
    %p106 = por %p104, %p105
    %s107 = ssub.s32 %s10, %s17
    %p108 = scmp.eq.s32.totalorder %s107, 0
    %s110 = sadd.s32 %s109, 1
    %s111 = scalar_select %p108, %s109, %s110
    %p114 = pneg %p108
    %p115 = scmp.eq.s32.totalorder %s10, 1
    %p116 = por %p114, %p115
    %p117 = scmp.ne.s32.totalorder %s109, %s112
    %p118 = scmp.eq.s32.totalorder %s10, 0
    %p119 = por %p117, %p118
    %p120 = scmp.ne.s32.totalorder %s109, %s112
    %p121 = scmp.eq.s32.totalorder %s15, 1
    %p122 = por %p120, %p121
    %p123 = scmp.ne.s32.totalorder %s112, %s113
    %p124 = scmp.eq.s32.totalorder %s15, 0
    %p125 = por %p123, %p124
    %p126 = scmp.ne.s32.totalorder %s112, %s113
    %p127 = scmp.eq.s32.totalorder %s16, 1
    %p128 = por %p126, %p127
    %p130 = scmp.ne.s32.totalorder %s113, %s129
    %p131 = scmp.eq.s32.totalorder %s16, 0
    %p132 = por %p130, %p131
    %p133 = scmp.le.s32.totalorder 1, %s10
    %p134 = scmp.lt.s32.totalorder %s10, 3
    %p135 = pnand %p133, %p134
    %p136 = pneg %p135
    // Predicated region
    $region9: #{cnn_forward.9} parent=5 // pred_check
      _
    $region10: #{cnn_forward.9} parent=5 // pred_check_branch
      %138 = sbr.rel (%p135) target = $region12
    $region11: #{cnn_forward.9} parent=5 // pred_region
      %s139 = ssub.s32 %s10, 1
      // Predicated region
      $region13: #{cnn_forward.9} parent=11 // pred_check
        %p140 = pneg %p57
      $region14: #{cnn_forward.9} parent=11 // pred_check_branch
        %142 = sbr.rel (%p140) target = $region16
      $region15: #{cnn_forward.9} parent=11 // pred_region
        _
      $region16: #{cnn_forward.9} parent=11 // pred_fallthru
        _
      // Predicated region
      $region17: #{cnn_forward.9} parent=11 // pred_check
        %p143 = pneg %p78
      $region18: #{cnn_forward.9} parent=11 // pred_check_branch
        %145 = sbr.rel (%p143) target = $region20
      $region19: #{cnn_forward.9} parent=11 // pred_region
        _
      $region20: #{cnn_forward.9} parent=11 // pred_fallthru
        _
      // Predicated region
      $region21: #{cnn_forward.9} parent=11 // pred_check
        %p146 = pneg %p99
      $region22: #{cnn_forward.9} parent=11 // pred_check_branch
        %148 = sbr.rel (%p146) target = $region24
      $region23: #{cnn_forward.9} parent=11 // pred_region
        _
      $region24: #{cnn_forward.9} parent=11 // pred_fallthru
        _
    $region12: #{cnn_forward.9} parent=5 // pred_fallthru
      _
    %p149 = scmp.lt.s32.totalorder %s10, 2
    // Predicated region
    $region25: #{cnn_forward.9} parent=5 // pred_check
      %p150 = pneg %p149
    $region26: #{cnn_forward.9} parent=5 // pred_check_branch
      %152 = sbr.rel (%p150) target = $region28
    $region27: #{cnn_forward.9} parent=5 // pred_region
      // Predicated region
      $region29: #{cnn_forward.9} parent=27 // pred_check
        %p153 = pneg %p30
      $region30: #{cnn_forward.9} parent=27 // pred_check_branch
        %155 = sbr.rel (%p153) target = $region32
      $region31: #{cnn_forward.9} parent=27 // pred_region
        %p156 = scmp.lt.s32.totalorder %s10, 1
        %s157 = scalar_select %p156, %s10, 1
        %s158 = smul.addr %s157, 16
        %s159 = smul.addr %s158, 4
        %s160 = scalar_lea.vmem %s0, %s159
      $region32: #{cnn_forward.9} parent=27 // pred_fallthru
        _
    $region28: #{cnn_forward.9} parent=5 // pred_fallthru
      _
    %p161 = scmp.le.s32.totalorder 1, %s10
    %p162 = scmp.lt.s32.totalorder %s10, 3
    %p163 = pnand %p161, %p162
    %p164 = pneg %p163
    // Predicated region
    $region33: #{cnn_forward.9} parent=5 // pred_check
      _
    $region34: #{cnn_forward.9} parent=5 // pred_check_branch
      %166 = sbr.rel (%p163) target = $region36
    $region35: #{cnn_forward.9} parent=5 // pred_region
      %s167 = ssub.s32 %s10, 1
      %p168 = scmp.lt.s32.totalorder %s15, 1
      %s169 = scalar_select %p168, %s15, 1
      %s170 = smul.addr %s169, 16
      %s171 = smul.addr %s170, 4
      %s172 = scalar_lea.vmem %s0, %s171
      %p173 = pneg %p36
      %p174 = pneg %p33
      %p175 = pneg %p57
      %p176 = pneg %p54
      %p177 = pneg %p78
      %p178 = pneg %p75
      %p179 = pneg %p99
      %p180 = pneg %p96
      %p181 = pneg %p125
      %p182 = pneg %p122
      %p183 = scmp.lt.s32.totalorder %s15, 1
      %s184 = scalar_select %p183, %s15, 1
      %s185 = smul.addr %s184, 12
      %s186 = smul.addr %s185, 4
      %s187 = scalar_lea.vmem %s4, %s186
      %p188 = scmp.lt.s32.totalorder %s15, 1
      %s189 = scalar_select %p188, %s15, 1
      %s190 = smul.addr %s189, 16
      %s191 = smul.addr %s190, 4
      %s192 = scalar_lea.vmem %s0, %s191
      %p193 = scmp.lt.s32.totalorder %s15, 1
      %s194 = scalar_select %p193, %s15, 1
      %s195 = smul.addr %s194, 12
      %s196 = smul.addr %s195, 4
      %s197 = scalar_lea.vmem %s4, %s196
      %v199 = vld [vmem:[%s2] sm:$0x1]
      %v200 = vld [vmem:[%s3] sm:$0x1]
      %v201 = vld [vmem:[%s192] sm:$0xf]
      %v202 = vld [vmem:[%s192 + $0x4] sm:$0xf]
      %v203 = vld [vmem:[%s192 + $0x8] sm:$0xf]
      %v204 = vld [vmem:[%s192 + $0xc] sm:$0xf]
      %v205 = vld [vmem:[%s192 + $0x10] sm:$0xf]
      %v206 = vld [vmem:[%s192 + $0x14] sm:$0xf]
      %v207 = vld [vmem:[%s192 + $0x18] sm:$0xf]
      %v208 = vld [vmem:[%s192 + $0x1c] sm:$0xf]
      %v209 = vld [vmem:[%s192 + $0x20] sm:$0xf]
      %v210 = vld [vmem:[%s192 + $0x24] sm:$0xf]
      %v211 = vld [vmem:[%s192 + $0x28] sm:$0xf]
      %v212 = vld [vmem:[%s192 + $0x2c] sm:$0xf]
      %v213 = vld [vmem:[%s1] sm:$0xf]
      %v214 = vld [vmem:[%s1 + $0x4] sm:$0xf]
      %v215 = vld [vmem:[%s1 + $0x8] sm:$0xf]
      %v216 = vld [vmem:[%s1 + $0xc] sm:$0xf]
      %v217 = vld [vmem:[%s1 + $0x10] sm:$0xf]
      %v218 = vld [vmem:[%s1 + $0x14] sm:$0xf]
      %v219 = vld [vmem:[%s1 + $0x18] sm:$0xf]
      %v220 = vld [vmem:[%s1 + $0x1c] sm:$0xf]
      %v221 = vld [vmem:[%s1 + $0x20] sm:$0xf]
      %v222 = vld [vmem:[%s1 + $0x24] sm:$0xf]
      %v223 = vld [vmem:[%s1 + $0x28] sm:$0xf]
      %v224 = vld [vmem:[%s1 + $0x2c] sm:$0xf]
      %v225 = vld [vmem:[%s1 + $0x30] sm:$0xf]
      %v226 = vld [vmem:[%s1 + $0x34] sm:$0xf]
      %v227 = vld [vmem:[%s1 + $0x38] sm:$0xf]
      %v228 = vld [vmem:[%s1 + $0x3c] sm:$0xf]
      %v229 = vld [vmem:[%s192 + $0x30] sm:$0x1]
      %s230 = scalar_lea.vmem %s1, 64
      %v231 = vld [vmem:[%s230] sm:$0xf]
      %v232 = vld [vmem:[%s230 + $0x4] sm:$0xf]
      %v233 = vld [vmem:[%s230 + $0x8] sm:$0xf]
      %v234 = vld [vmem:[%s230 + $0xc] sm:$0xf]
      %v235 = vld [vmem:[%s230 + $0x10] sm:$0xf]
      %v236 = vld [vmem:[%s230 + $0x14] sm:$0xf]
      %v237 = vld [vmem:[%s230 + $0x18] sm:$0xf]
      %v238 = vld [vmem:[%s230 + $0x1c] sm:$0xf]
      %v239 = vld [vmem:[%s230 + $0x20] sm:$0xf]
      %v240 = vld [vmem:[%s230 + $0x24] sm:$0xf]
      %v241 = vld [vmem:[%s230 + $0x28] sm:$0xf]
      %v242 = vld [vmem:[%s230 + $0x2c] sm:$0xf]
      %v243 = vld [vmem:[%s230 + $0x30] sm:$0xf]
      %v244 = vld [vmem:[%s230 + $0x34] sm:$0xf]
      %v245 = vld [vmem:[%s230 + $0x38] sm:$0xf]
      %v246 = vld [vmem:[%s230 + $0x3c] sm:$0xf]
      %v260 = vunpack.c.l.b16 %v201
      %v261 = vunpack.c.l.b16 %v202
      %v262 = vunpack.c.l.b16 %v203
      %v263 = vunpack.c.l.b16 %v204
      %v264 = vunpack.c.l.b16 %v205
      %v265 = vunpack.c.l.b16 %v206
      %v266 = vunpack.c.l.b16 %v207
      %v267 = vunpack.c.l.b16 %v208
      %v268 = vunpack.c.l.b16 %v209
      %v269 = vunpack.c.l.b16 %v210
      %v270 = vunpack.c.l.b16 %v211
      %v271 = vunpack.c.l.b16 %v212
      %v272 = vunpack.c.l.b16 %v229
      %v273 = vpack.c.b16 %v261, %v260
      %v274 = vpack.c.b16 %v263, %v262
      %v275 = vpack.c.b16 %v265, %v264
      %v276 = vpack.c.b16 %v267, %v266
      %v277 = vpack.c.b16 %v269, %v268
      %v278 = vpack.c.b16 %v271, %v270
      %v279 = vpack.c.b16 %v272, %v272
      %vm280 = vsmask.f32 7424
      %v282 = vshrl.u32 %v273, 16
      %v284 = vshll.u32 %v273, 16
      %v286 = vrot.slane %v284, 1
      %v287 = vor.u32 %v282, %v286
      %v289 = vshll.u32 %v274, 16
      %v291 = vrot.slane %v289, 1
      %v292 = vsel %vm280, %v287, %v291
      %v293 = vshrl.u32 %v274, 16
      %v295 = vor.u32 %v293, %v291
      %v297 = vshll.u32 %v275, 16
      %v299 = vrot.slane %v297, 1
      %v300 = vsel %vm280, %v295, %v299
      %v301 = vshrl.u32 %v275, 16
      %v303 = vor.u32 %v301, %v299
      %v305 = vshll.u32 %v276, 16
      %v307 = vrot.slane %v305, 1
      %v308 = vsel %vm280, %v303, %v307
      %v309 = vshrl.u32 %v276, 16
      %v311 = vor.u32 %v309, %v307
      %v313 = vshll.u32 %v277, 16
      %v315 = vrot.slane %v313, 1
      %v316 = vsel %vm280, %v311, %v315
      %v317 = vshrl.u32 %v277, 16
      %v319 = vor.u32 %v317, %v315
      %v321 = vshll.u32 %v278, 16
      %v323 = vrot.slane %v321, 1
      %v324 = vsel %vm280, %v319, %v323
      %v325 = vshrl.u32 %v278, 16
      %v327 = vor.u32 %v325, %v323
      %v329 = vshll.u32 %v279, 16
      %v331 = vrot.slane %v329, 1
      %v332 = vsel %vm280, %v327, %v331
      %v355 = vunpack.c.l.b16 %v231
      %v356 = vunpack.c.l.b16 %v232
      %v357 = vunpack.c.l.b16 %v233
      %v358 = vunpack.c.l.b16 %v234
      %v359 = vunpack.c.l.b16 %v235
      %v360 = vunpack.c.l.b16 %v236
      %v361 = vunpack.c.l.b16 %v237
      %v362 = vunpack.c.l.b16 %v238
      %v363 = vunpack.c.l.b16 %v239
      %v364 = vunpack.c.l.b16 %v240
      %v365 = vunpack.c.l.b16 %v241
      %v366 = vunpack.c.l.b16 %v242
      %v367 = vunpack.c.l.b16 %v243
      %v368 = vunpack.c.l.b16 %v244
      %v369 = vunpack.c.l.b16 %v245
      %v370 = vunpack.c.l.b16 %v246
      %v371 = vpack.c.b16 %v356, %v355
      %v372 = vpack.c.b16 %v358, %v357
      %v373 = vpack.c.b16 %v360, %v359
      %v374 = vpack.c.b16 %v362, %v361
      %v375 = vpack.c.b16 %v364, %v363
      %v376 = vpack.c.b16 %v366, %v365
      %v377 = vpack.c.b16 %v368, %v367
      %v378 = vpack.c.b16 %v370, %v369
      %387 = vmatprep.subr.bf16.mxu0 0
      %388 = vmatpush1.bf16.msra.mxu0 %v371
      %389 = vmatprep.subr.bf16.mxu0 0
      %390 = vmatpush1.bf16.msra.mxu0 %v372
      %391 = vmatprep.subr.bf16.mxu0 0
      %392 = vmatpush1.bf16.msra.mxu0 %v373
      %393 = vmatprep.subr.bf16.mxu0 0
      %394 = vmatpush1.bf16.msra.mxu0 %v374
      %395 = vmatprep.subr.bf16.mxu0 0
      %396 = vmatpush1.bf16.msra.mxu0 %v375
      %397 = vmatprep.subr.bf16.mxu0 0
      %398 = vmatpush1.bf16.msra.mxu0 %v376
      %399 = vmatprep.subr.bf16.mxu0 0
      %400 = vmatpush1.bf16.msra.mxu0 %v377
      %401 = vmatprep.subr.bf16.mxu0 0
      %402 = vmatpush1.bf16.msra.mxu0 %v378
      %403 = vmatprep.subr.bf16.mxu0 0
      %404 = vmatpush1.bf16.msra.mxu0 0
      %405 = vmatprep.subr.bf16.mxu0 0
      %406 = vmatpush1.bf16.msra.mxu0 0
      %407 = vmatprep.subr.bf16.mxu0 0
      %408 = vmatpush1.bf16.msra.mxu0 0
      %409 = vmatprep.subr.bf16.mxu0 0
      %410 = vmatpush1.bf16.msra.mxu0 0
      %411 = vmatprep.subr.bf16.mxu0 0
      %412 = vmatpush1.bf16.msra.mxu0 0
      %413 = vmatprep.subr.bf16.mxu0 0
      %414 = vmatpush1.bf16.msra.mxu0 0
      %415 = vmatprep.subr.bf16.mxu0 0
      %416 = vmatpush1.bf16.msra.mxu0 0
      %417 = vmatprep.subr.bf16.mxu0 0
      %418 = vmatpush1.bf16.msra.mxu0 0
      %419 = vmatprep.mubr.bf16.mxu0 0
      %420 = vmatmul.mubr.bf16.gmra.mrb[0].mxu0 %v292
      %v421 = vpop.f32.mrb[0].mxu0
      %v422 = vadd.f32 0.0, %v421
      %v423 = vpop.f32.mrb[0].mxu0
      %v424 = vpop.f32.mrb[0].mxu0
      %v425 = vadd.f32 0.0, %v424
      %v426 = vpop.f32.mrb[0].mxu0
      %427 = vmatprep.mubr.bf16.mxu0 0
      %428 = vmatmul.mubr.bf16.gmra.mrb[0].mxu0 %v300
      %v429 = vpop.f32.mrb[0].mxu0
      %v430 = vadd.f32 0.0, %v429
      %v431 = vpop.f32.mrb[0].mxu0
      %v432 = vpop.f32.mrb[0].mxu0
      %v433 = vadd.f32 0.0, %v432
      %v434 = vpop.f32.mrb[0].mxu0
      %435 = vmatprep.mubr.bf16.mxu0 0
      %436 = vmatmul.mubr.bf16.gmra.mrb[0].mxu0 %v308
      %v437 = vpop.f32.mrb[0].mxu0
      %v438 = vadd.f32 0.0, %v437
      %v439 = vpop.f32.mrb[0].mxu0
      %v440 = vpop.f32.mrb[0].mxu0
      %v441 = vadd.f32 0.0, %v440
      %v442 = vpop.f32.mrb[0].mxu0
      %443 = vmatprep.mubr.bf16.mxu0 0
      %444 = vmatmul.mubr.bf16.gmra.mrb[0].mxu0 %v316
      %v445 = vpop.f32.mrb[0].mxu0
      %v446 = vadd.f32 0.0, %v445
      %v447 = vpop.f32.mrb[0].mxu0
      %v448 = vpop.f32.mrb[0].mxu0
      %v449 = vadd.f32 0.0, %v448
      %v450 = vpop.f32.mrb[0].mxu0
      %451 = vmatprep.mubr.bf16.mxu0 0
      %452 = vmatmul.mubr.bf16.gmra.mrb[0].mxu0 %v324
      %v453 = vpop.f32.mrb[0].mxu0
      %v454 = vadd.f32 0.0, %v453
      %v455 = vpop.f32.mrb[0].mxu0
      %v456 = vpop.f32.mrb[0].mxu0
      %v457 = vadd.f32 0.0, %v456
      %v458 = vpop.f32.mrb[0].mxu0
      %459 = vmatprep.mubr.bf16.mxu0 0
      %460 = vmatmul.mubr.bf16.gmra.mrb[0].mxu0 %v332
      %v461 = vpop.f32.mrb[0].mxu0
      %v462 = vadd.f32 0.0, %v461
      %v463 = vpop.f32.mrb[0].mxu0
      %v464 = vpop.f32.mrb[0].mxu0
      %v465 = vadd.f32 0.0, %v464
      %v466 = vpop.f32.mrb[0].mxu0
      %467 = vdwg.mxu0
      %v490 = vunpack.c.l.b16 %v213
      %v491 = vunpack.c.l.b16 %v214
      %v492 = vunpack.c.l.b16 %v215
      %v493 = vunpack.c.l.b16 %v216
      %v494 = vunpack.c.l.b16 %v217
      %v495 = vunpack.c.l.b16 %v218
      %v496 = vunpack.c.l.b16 %v219
      %v497 = vunpack.c.l.b16 %v220
      %v498 = vunpack.c.l.b16 %v221
      %v499 = vunpack.c.l.b16 %v222
      %v500 = vunpack.c.l.b16 %v223
      %v501 = vunpack.c.l.b16 %v224
      %v502 = vunpack.c.l.b16 %v225
      %v503 = vunpack.c.l.b16 %v226
      %v504 = vunpack.c.l.b16 %v227
      %v505 = vunpack.c.l.b16 %v228
      %v506 = vpack.c.b16 %v491, %v490
      %v507 = vpack.c.b16 %v493, %v492
      %v508 = vpack.c.b16 %v495, %v494
      %v509 = vpack.c.b16 %v497, %v496
      %v510 = vpack.c.b16 %v499, %v498
      %v511 = vpack.c.b16 %v501, %v500
      %v512 = vpack.c.b16 %v503, %v502
      %v513 = vpack.c.b16 %v505, %v504
      %522 = vmatprep.subr.bf16.mxu0 0
      %523 = vmatpush1.bf16.msra.mxu0 %v506
      %524 = vmatprep.subr.bf16.mxu0 0
      %525 = vmatpush1.bf16.msra.mxu0 %v507
      %526 = vmatprep.subr.bf16.mxu0 0
      %527 = vmatpush1.bf16.msra.mxu0 %v508
      %528 = vmatprep.subr.bf16.mxu0 0
      %529 = vmatpush1.bf16.msra.mxu0 %v509
      %530 = vmatprep.subr.bf16.mxu0 0
      %531 = vmatpush1.bf16.msra.mxu0 %v510
      %532 = vmatprep.subr.bf16.mxu0 0
      %533 = vmatpush1.bf16.msra.mxu0 %v511
      %534 = vmatprep.subr.bf16.mxu0 0
      %535 = vmatpush1.bf16.msra.mxu0 %v512
      %536 = vmatprep.subr.bf16.mxu0 0
      %537 = vmatpush1.bf16.msra.mxu0 %v513
      %538 = vmatprep.subr.bf16.mxu0 0
      %539 = vmatpush1.bf16.msra.mxu0 0
      %540 = vmatprep.subr.bf16.mxu0 0
      %541 = vmatpush1.bf16.msra.mxu0 0
      %542 = vmatprep.subr.bf16.mxu0 0
      %543 = vmatpush1.bf16.msra.mxu0 0
      %544 = vmatprep.subr.bf16.mxu0 0
      %545 = vmatpush1.bf16.msra.mxu0 0
      %546 = vmatprep.subr.bf16.mxu0 0
      %547 = vmatpush1.bf16.msra.mxu0 0
      %548 = vmatprep.subr.bf16.mxu0 0
      %549 = vmatpush1.bf16.msra.mxu0 0
      %550 = vmatprep.subr.bf16.mxu0 0
      %551 = vmatpush1.bf16.msra.mxu0 0
      %552 = vmatprep.subr.bf16.mxu0 0
      %553 = vmatpush1.bf16.msra.mxu0 0
      %554 = vmatprep.mubr.bf16.mxu0 0
      %555 = vmatmul.mubr.bf16.gmra.mrb[0].mxu0 %v273
      %v556 = vpop.f32.mrb[0].mxu0
      %v557 = vadd.f32 %v422, %v556
      %v558 = vpop.f32.mrb[0].mxu0
      %v559 = vpop.f32.mrb[0].mxu0
      %v560 = vadd.f32 %v425, %v559
      %v561 = vpop.f32.mrb[0].mxu0
      %562 = vmatprep.mubr.bf16.mxu0 0
      %563 = vmatmul.mubr.bf16.gmra.mrb[0].mxu0 %v274
      %v564 = vpop.f32.mrb[0].mxu0
      %v565 = vadd.f32 %v430, %v564
      %v566 = vpop.f32.mrb[0].mxu0
      %v567 = vpop.f32.mrb[0].mxu0
      %v568 = vadd.f32 %v433, %v567
      %v569 = vpop.f32.mrb[0].mxu0
      %570 = vmatprep.mubr.bf16.mxu0 0
      %571 = vmatmul.mubr.bf16.gmra.mrb[0].mxu0 %v275
      %v572 = vpop.f32.mrb[0].mxu0
      %v573 = vadd.f32 %v438, %v572
      %v574 = vpop.f32.mrb[0].mxu0
      %v575 = vpop.f32.mrb[0].mxu0
      %v576 = vadd.f32 %v441, %v575
      %v577 = vpop.f32.mrb[0].mxu0
      %578 = vmatprep.mubr.bf16.mxu0 0
      %579 = vmatmul.mubr.bf16.gmra.mrb[0].mxu0 %v276
      %v580 = vpop.f32.mrb[0].mxu0
      %v581 = vadd.f32 %v446, %v580
      %v582 = vpop.f32.mrb[0].mxu0
      %v583 = vpop.f32.mrb[0].mxu0
      %v584 = vadd.f32 %v449, %v583
      %v585 = vpop.f32.mrb[0].mxu0
      %586 = vmatprep.mubr.bf16.mxu0 0
      %587 = vmatmul.mubr.bf16.gmra.mrb[0].mxu0 %v277
      %v588 = vpop.f32.mrb[0].mxu0
      %v589 = vadd.f32 %v454, %v588
      %v590 = vpop.f32.mrb[0].mxu0
      %v591 = vpop.f32.mrb[0].mxu0
      %v592 = vadd.f32 %v457, %v591
      %v593 = vpop.f32.mrb[0].mxu0
      %594 = vmatprep.mubr.bf16.mxu0 0
      %595 = vmatmul.mubr.bf16.gmra.mrb[0].mxu0 %v278
      %v596 = vpop.f32.mrb[0].mxu0
      %v597 = vadd.f32 %v462, %v596
      %v598 = vpop.f32.mrb[0].mxu0
      %v599 = vpop.f32.mrb[0].mxu0
      %v600 = vadd.f32 %v465, %v599
      %v601 = vpop.f32.mrb[0].mxu0
      %602 = vdwg.mxu0
      %v603 = vld [vmem:[%s192] sm:$0xe]
      %s604 = scalar_lea.vmem %s1, 128
      %v605 = vld [vmem:[%s604] sm:$0xf]
      %v606 = vld [vmem:[%s604 + $0x4] sm:$0xf]
      %v607 = vld [vmem:[%s604 + $0x8] sm:$0xf]
      %v608 = vld [vmem:[%s604 + $0xc] sm:$0xf]
      %v609 = vld [vmem:[%s604 + $0x10] sm:$0xf]
      %v610 = vld [vmem:[%s604 + $0x14] sm:$0xf]
      %v611 = vld [vmem:[%s604 + $0x18] sm:$0xf]
      %v612 = vld [vmem:[%s604 + $0x1c] sm:$0xf]
      %v613 = vld [vmem:[%s604 + $0x20] sm:$0xf]
      %v614 = vld [vmem:[%s604 + $0x24] sm:$0xf]
      %v615 = vld [vmem:[%s604 + $0x28] sm:$0xf]
      %v616 = vld [vmem:[%s604 + $0x2c] sm:$0xf]
      %v617 = vld [vmem:[%s604 + $0x30] sm:$0xf]
      %v618 = vld [vmem:[%s604 + $0x34] sm:$0xf]
      %v619 = vld [vmem:[%s604 + $0x38] sm:$0xf]
      %v620 = vld [vmem:[%s604 + $0x3c] sm:$0xf]
      %v622 = vunpack.c.l.b16 %v603
      %v623 = vpack.c.b16 %v261, %v622
      %vm624 = vcmask 1046528
      %v625 = vrot.slane %v623, 1
      %v626 = vrot.slane %v274, 1
      %v627 = vsel %vm624, %v625, %v626
      %v628 = vrot.slane %v275, 1
      %v629 = vsel %vm624, %v626, %v628
      %v630 = vrot.slane %v276, 1
      %v631 = vsel %vm624, %v628, %v630
      %v632 = vrot.slane %v277, 1
      %v633 = vsel %vm624, %v630, %v632
      %v634 = vrot.slane %v278, 1
      %v635 = vsel %vm624, %v632, %v634
      %v636 = vrot.slane %v279, 1
      %v637 = vsel %vm624, %v634, %v636
      %v660 = vunpack.c.l.b16 %v605
      %v661 = vunpack.c.l.b16 %v606
      %v662 = vunpack.c.l.b16 %v607
      %v663 = vunpack.c.l.b16 %v608
      %v664 = vunpack.c.l.b16 %v609
      %v665 = vunpack.c.l.b16 %v610
      %v666 = vunpack.c.l.b16 %v611
      %v667 = vunpack.c.l.b16 %v612
      %v668 = vunpack.c.l.b16 %v613
      %v669 = vunpack.c.l.b16 %v614
      %v670 = vunpack.c.l.b16 %v615
      %v671 = vunpack.c.l.b16 %v616
      %v672 = vunpack.c.l.b16 %v617
      %v673 = vunpack.c.l.b16 %v618
      %v674 = vunpack.c.l.b16 %v619
      %v675 = vunpack.c.l.b16 %v620
      %v676 = vpack.c.b16 %v661, %v660
      %v677 = vpack.c.b16 %v663, %v662
      %v678 = vpack.c.b16 %v665, %v664
      %v679 = vpack.c.b16 %v667, %v666
      %v680 = vpack.c.b16 %v669, %v668
      %v681 = vpack.c.b16 %v671, %v670
      %v682 = vpack.c.b16 %v673, %v672
      %v683 = vpack.c.b16 %v675, %v674
      %692 = vmatprep.subr.bf16.mxu0 0
      %693 = vmatpush1.bf16.msra.mxu0 %v676
      %694 = vmatprep.subr.bf16.mxu0 0
      %695 = vmatpush1.bf16.msra.mxu0 %v677
      %696 = vmatprep.subr.bf16.mxu0 0
      %697 = vmatpush1.bf16.msra.mxu0 %v678
      %698 = vmatprep.subr.bf16.mxu0 0
      %699 = vmatpush1.bf16.msra.mxu0 %v679
      %700 = vmatprep.subr.bf16.mxu0 0
      %701 = vmatpush1.bf16.msra.mxu0 %v680
      %702 = vmatprep.subr.bf16.mxu0 0
      %703 = vmatpush1.bf16.msra.mxu0 %v681
      %704 = vmatprep.subr.bf16.mxu0 0
      %705 = vmatpush1.bf16.msra.mxu0 %v682
      %706 = vmatprep.subr.bf16.mxu0 0
      %707 = vmatpush1.bf16.msra.mxu0 %v683
      %708 = vmatprep.subr.bf16.mxu0 0
      %709 = vmatpush1.bf16.msra.mxu0 0
      %710 = vmatprep.subr.bf16.mxu0 0
      %711 = vmatpush1.bf16.msra.mxu0 0
      %712 = vmatprep.subr.bf16.mxu0 0
      %713 = vmatpush1.bf16.msra.mxu0 0
      %714 = vmatprep.subr.bf16.mxu0 0
      %715 = vmatpush1.bf16.msra.mxu0 0
      %716 = vmatprep.subr.bf16.mxu0 0
      %717 = vmatpush1.bf16.msra.mxu0 0
      %718 = vmatprep.subr.bf16.mxu0 0
      %719 = vmatpush1.bf16.msra.mxu0 0
      %720 = vmatprep.subr.bf16.mxu0 0
      %721 = vmatpush1.bf16.msra.mxu0 0
      %722 = vmatprep.subr.bf16.mxu0 0
      %723 = vmatpush1.bf16.msra.mxu0 0
      %724 = vmatprep.mubr.bf16.mxu0 0
      %725 = vmatmul.mubr.bf16.gmra.mrb[0].mxu0 %v627
      %v726 = vpop.f32.mrb[0].mxu0
      %v727 = vadd.f32 0.0, %v726
      %v728 = vpop.f32.mrb[0].mxu0
      %v729 = vpop.f32.mrb[0].mxu0
      %v730 = vadd.f32 0.0, %v729
      %v731 = vpop.f32.mrb[0].mxu0
      %732 = vmatprep.mubr.bf16.mxu0 0
      %733 = vmatmul.mubr.bf16.gmra.mrb[0].mxu0 %v629
      %v734 = vpop.f32.mrb[0].mxu0
      %v735 = vadd.f32 0.0, %v734
      %v736 = vpop.f32.mrb[0].mxu0
      %v737 = vpop.f32.mrb[0].mxu0
      %v738 = vadd.f32 0.0, %v737
      %v739 = vpop.f32.mrb[0].mxu0
      %740 = vmatprep.mubr.bf16.mxu0 0
      %741 = vmatmul.mubr.bf16.gmra.mrb[0].mxu0 %v631
      %v742 = vpop.f32.mrb[0].mxu0
      %v743 = vadd.f32 0.0, %v742
      %v744 = vpop.f32.mrb[0].mxu0
      %v745 = vpop.f32.mrb[0].mxu0
      %v746 = vadd.f32 0.0, %v745
      %v747 = vpop.f32.mrb[0].mxu0
      %748 = vmatprep.mubr.bf16.mxu0 0
      %749 = vmatmul.mubr.bf16.gmra.mrb[0].mxu0 %v633
      %v750 = vpop.f32.mrb[0].mxu0
      %v751 = vadd.f32 0.0, %v750
      %v752 = vpop.f32.mrb[0].mxu0
      %v753 = vpop.f32.mrb[0].mxu0
      %v754 = vadd.f32 0.0, %v753
      %v755 = vpop.f32.mrb[0].mxu0
      %756 = vmatprep.mubr.bf16.mxu0 0
      %757 = vmatmul.mubr.bf16.gmra.mrb[0].mxu0 %v635
      %v758 = vpop.f32.mrb[0].mxu0
      %v759 = vadd.f32 0.0, %v758
      %v760 = vpop.f32.mrb[0].mxu0
      %v761 = vpop.f32.mrb[0].mxu0
      %v762 = vadd.f32 0.0, %v761
      %v763 = vpop.f32.mrb[0].mxu0
      %764 = vmatprep.mubr.bf16.mxu0 0
      %765 = vmatmul.mubr.bf16.gmra.mrb[0].mxu0 %v637
      %v766 = vpop.f32.mrb[0].mxu0
      %v767 = vadd.f32 0.0, %v766
      %v768 = vpop.f32.mrb[0].mxu0
      %v769 = vpop.f32.mrb[0].mxu0
      %v770 = vadd.f32 0.0, %v769
      %v771 = vpop.f32.mrb[0].mxu0
      %772 = vdwg.mxu0
      %v773 = vadd.f32 %v557, %v727
      %v774 = vadd.f32 %v560, %v730
      %v775 = vadd.f32 %v565, %v735
      %v776 = vadd.f32 %v568, %v738
      %v777 = vadd.f32 %v573, %v743
      %v778 = vadd.f32 %v576, %v746
      %v779 = vadd.f32 %v581, %v751
      %v780 = vadd.f32 %v584, %v754
      %v781 = vadd.f32 %v589, %v759
      %v782 = vadd.f32 %v592, %v762
      %v783 = vadd.f32 %v597, %v767
      %v784 = vadd.f32 %v600, %v770
      %v785 = vld [vmem:[%s192 + $0x4] sm:$0xf]
      %v786 = vld [vmem:[%s192 + $0x8] sm:$0xf]
      %v787 = vld [vmem:[%s192 + $0xc] sm:$0xf]
      %v788 = vld [vmem:[%s192 + $0x10] sm:$0xf]
      %v789 = vld [vmem:[%s192 + $0x14] sm:$0xf]
      %v790 = vld [vmem:[%s192 + $0x18] sm:$0xf]
      %v791 = vld [vmem:[%s192 + $0x1c] sm:$0xf]
      %v792 = vld [vmem:[%s192 + $0x20] sm:$0xf]
      %v793 = vld [vmem:[%s192 + $0x24] sm:$0xf]
      %v794 = vld [vmem:[%s192 + $0x28] sm:$0xf]
      %v795 = vld [vmem:[%s192 + $0x2c] sm:$0xf]
      %v796 = vld [vmem:[%s192 + $0x30] sm:$0xf]
      %v797 = vld [vmem:[%s192 + $0x34] sm:$0x1]
      %s798 = scalar_lea.vmem %s1, 192
      %v799 = vld [vmem:[%s798] sm:$0xf]
      %v800 = vld [vmem:[%s798 + $0x4] sm:$0xf]
      %v801 = vld [vmem:[%s798 + $0x8] sm:$0xf]
      %v802 = vld [vmem:[%s798 + $0xc] sm:$0xf]
      %v803 = vld [vmem:[%s798 + $0x10] sm:$0xf]
      %v804 = vld [vmem:[%s798 + $0x14] sm:$0xf]
      %v805 = vld [vmem:[%s798 + $0x18] sm:$0xf]
      %v806 = vld [vmem:[%s798 + $0x1c] sm:$0xf]
      %v807 = vld [vmem:[%s798 + $0x20] sm:$0xf]
      %v808 = vld [vmem:[%s798 + $0x24] sm:$0xf]
      %v809 = vld [vmem:[%s798 + $0x28] sm:$0xf]
      %v810 = vld [vmem:[%s798 + $0x2c] sm:$0xf]
      %v811 = vld [vmem:[%s798 + $0x30] sm:$0xf]
      %v812 = vld [vmem:[%s798 + $0x34] sm:$0xf]
      %v813 = vld [vmem:[%s798 + $0x38] sm:$0xf]
      %v814 = vld [vmem:[%s798 + $0x3c] sm:$0xf]
      %v828 = vunpack.c.l.b16 %v785
      %v829 = vunpack.c.l.b16 %v786
      %v830 = vunpack.c.l.b16 %v787
      %v831 = vunpack.c.l.b16 %v788
      %v832 = vunpack.c.l.b16 %v789
      %v833 = vunpack.c.l.b16 %v790
      %v834 = vunpack.c.l.b16 %v791
      %v835 = vunpack.c.l.b16 %v792
      %v836 = vunpack.c.l.b16 %v793
      %v837 = vunpack.c.l.b16 %v794
      %v838 = vunpack.c.l.b16 %v795
      %v839 = vunpack.c.l.b16 %v796
      %v840 = vunpack.c.l.b16 %v797
      %v841 = vpack.c.b16 %v829, %v828
      %v842 = vpack.c.b16 %v831, %v830
      %v843 = vpack.c.b16 %v833, %v832
      %v844 = vpack.c.b16 %v835, %v834
      %v845 = vpack.c.b16 %v837, %v836
      %v846 = vpack.c.b16 %v839, %v838
      %v847 = vpack.c.b16 %v840, %v840
      %v849 = vshrl.u32 %v841, 16
      %v851 = vshll.u32 %v841, 16
      %v853 = vrot.slane %v851, 1
      %v854 = vor.u32 %v849, %v853
      %v856 = vshll.u32 %v842, 16
      %v858 = vrot.slane %v856, 1
      %v859 = vsel %vm280, %v854, %v858
      %v860 = vshrl.u32 %v842, 16
      %v862 = vor.u32 %v860, %v858
      %v864 = vshll.u32 %v843, 16
      %v866 = vrot.slane %v864, 1
      %v867 = vsel %vm280, %v862, %v866
      %v868 = vshrl.u32 %v843, 16
      %v870 = vor.u32 %v868, %v866
      %v872 = vshll.u32 %v844, 16
      %v874 = vrot.slane %v872, 1
      %v875 = vsel %vm280, %v870, %v874
      %v876 = vshrl.u32 %v844, 16
      %v878 = vor.u32 %v876, %v874
      %v880 = vshll.u32 %v845, 16
      %v882 = vrot.slane %v880, 1
      %v883 = vsel %vm280, %v878, %v882
      %v884 = vshrl.u32 %v845, 16
      %v886 = vor.u32 %v884, %v882
      %v888 = vshll.u32 %v846, 16
      %v890 = vrot.slane %v888, 1
      %v891 = vsel %vm280, %v886, %v890
      %v892 = vshrl.u32 %v846, 16
      %v894 = vor.u32 %v892, %v890
      %v896 = vshll.u32 %v847, 16
      %v898 = vrot.slane %v896, 1
      %v899 = vsel %vm280, %v894, %v898
      %v922 = vunpack.c.l.b16 %v799
      %v923 = vunpack.c.l.b16 %v800
      %v924 = vunpack.c.l.b16 %v801
      %v925 = vunpack.c.l.b16 %v802
      %v926 = vunpack.c.l.b16 %v803
      %v927 = vunpack.c.l.b16 %v804
      %v928 = vunpack.c.l.b16 %v805
      %v929 = vunpack.c.l.b16 %v806
      %v930 = vunpack.c.l.b16 %v807
      %v931 = vunpack.c.l.b16 %v808
      %v932 = vunpack.c.l.b16 %v809
      %v933 = vunpack.c.l.b16 %v810
      %v934 = vunpack.c.l.b16 %v811
      %v935 = vunpack.c.l.b16 %v812
      %v936 = vunpack.c.l.b16 %v813
      %v937 = vunpack.c.l.b16 %v814
      %v938 = vpack.c.b16 %v923, %v922
      %v939 = vpack.c.b16 %v925, %v924
      %v940 = vpack.c.b16 %v927, %v926
      %v941 = vpack.c.b16 %v929, %v928
      %v942 = vpack.c.b16 %v931, %v930
      %v943 = vpack.c.b16 %v933, %v932
      %v944 = vpack.c.b16 %v935, %v934
      %v945 = vpack.c.b16 %v937, %v936
      %954 = vmatprep.subr.bf16.mxu0 0
      %955 = vmatpush1.bf16.msra.mxu0 %v938
      %956 = vmatprep.subr.bf16.mxu0 0
      %957 = vmatpush1.bf16.msra.mxu0 %v939
      %958 = vmatprep.subr.bf16.mxu0 0
      %959 = vmatpush1.bf16.msra.mxu0 %v940
      %960 = vmatprep.subr.bf16.mxu0 0
      %961 = vmatpush1.bf16.msra.mxu0 %v941
      %962 = vmatprep.subr.bf16.mxu0 0
      %963 = vmatpush1.bf16.msra.mxu0 %v942
      %964 = vmatprep.subr.bf16.mxu0 0
      %965 = vmatpush1.bf16.msra.mxu0 %v943
      %966 = vmatprep.subr.bf16.mxu0 0
      %967 = vmatpush1.bf16.msra.mxu0 %v944
      %968 = vmatprep.subr.bf16.mxu0 0
      %969 = vmatpush1.bf16.msra.mxu0 %v945
      %970 = vmatprep.subr.bf16.mxu0 0
      %971 = vmatpush1.bf16.msra.mxu0 0
      %972 = vmatprep.subr.bf16.mxu0 0
      %973 = vmatpush1.bf16.msra.mxu0 0
      %974 = vmatprep.subr.bf16.mxu0 0
      %975 = vmatpush1.bf16.msra.mxu0 0
      %976 = vmatprep.subr.bf16.mxu0 0
      %977 = vmatpush1.bf16.msra.mxu0 0
      %978 = vmatprep.subr.bf16.mxu0 0
      %979 = vmatpush1.bf16.msra.mxu0 0
      %980 = vmatprep.subr.bf16.mxu0 0
      %981 = vmatpush1.bf16.msra.mxu0 0
      %982 = vmatprep.subr.bf16.mxu0 0
      %983 = vmatpush1.bf16.msra.mxu0 0
      %984 = vmatprep.subr.bf16.mxu0 0
      %985 = vmatpush1.bf16.msra.mxu0 0
      %986 = vmatprep.mubr.bf16.mxu0 0
      %987 = vmatmul.mubr.bf16.gmra.mrb[0].mxu0 %v859
      %v988 = vpop.f32.mrb[0].mxu0
      %v989 = vadd.f32 0.0, %v988
      %v990 = vpop.f32.mrb[0].mxu0
      %v991 = vpop.f32.mrb[0].mxu0
      %v992 = vadd.f32 0.0, %v991
      %v993 = vpop.f32.mrb[0].mxu0
      %994 = vmatprep.mubr.bf16.mxu0 0
      %995 = vmatmul.mubr.bf16.gmra.mrb[0].mxu0 %v867
      %v996 = vpop.f32.mrb[0].mxu0
      %v997 = vadd.f32 0.0, %v996
      %v998 = vpop.f32.mrb[0].mxu0
      %v999 = vpop.f32.mrb[0].mxu0
      %v1000 = vadd.f32 0.0, %v999
      %v1001 = vpop.f32.mrb[0].mxu0
      %1002 = vmatprep.mubr.bf16.mxu0 0
      %1003 = vmatmul.mubr.bf16.gmra.mrb[0].mxu0 %v875
      %v1004 = vpop.f32.mrb[0].mxu0
      %v1005 = vadd.f32 0.0, %v1004
      %v1006 = vpop.f32.mrb[0].mxu0
      %v1007 = vpop.f32.mrb[0].mxu0
      %v1008 = vadd.f32 0.0, %v1007
      %v1009 = vpop.f32.mrb[0].mxu0
      %1010 = vmatprep.mubr.bf16.mxu0 0
      %1011 = vmatmul.mubr.bf16.gmra.mrb[0].mxu0 %v883
      %v1012 = vpop.f32.mrb[0].mxu0
      %v1013 = vadd.f32 0.0, %v1012
      %v1014 = vpop.f32.mrb[0].mxu0
      %v1015 = vpop.f32.mrb[0].mxu0
      %v1016 = vadd.f32 0.0, %v1015
      %v1017 = vpop.f32.mrb[0].mxu0
      %1018 = vmatprep.mubr.bf16.mxu0 0
      %1019 = vmatmul.mubr.bf16.gmra.mrb[0].mxu0 %v891
      %v1020 = vpop.f32.mrb[0].mxu0
      %v1021 = vadd.f32 0.0, %v1020
      %v1022 = vpop.f32.mrb[0].mxu0
      %v1023 = vpop.f32.mrb[0].mxu0
      %v1024 = vadd.f32 0.0, %v1023
      %v1025 = vpop.f32.mrb[0].mxu0
      %1026 = vmatprep.mubr.bf16.mxu0 0
      %1027 = vmatmul.mubr.bf16.gmra.mrb[0].mxu0 %v899
      %v1028 = vpop.f32.mrb[0].mxu0
      %v1029 = vadd.f32 0.0, %v1028
      %v1030 = vpop.f32.mrb[0].mxu0
      %v1031 = vpop.f32.mrb[0].mxu0
      %v1032 = vadd.f32 0.0, %v1031
      %v1033 = vpop.f32.mrb[0].mxu0
      %1034 = vdwg.mxu0
      %v1035 = vadd.f32 %v773, %v989
      %v1036 = vadd.f32 %v774, %v992
      %v1037 = vadd.f32 %v775, %v997
      %v1038 = vadd.f32 %v776, %v1000
      %v1039 = vadd.f32 %v777, %v1005
      %v1040 = vadd.f32 %v778, %v1008
      %v1041 = vadd.f32 %v779, %v1013
      %v1042 = vadd.f32 %v780, %v1016
      %v1043 = vadd.f32 %v781, %v1021
      %v1044 = vadd.f32 %v782, %v1024
      %v1045 = vadd.f32 %v783, %v1029
      %v1046 = vadd.f32 %v784, %v1032
      %v1047 = vld [vmem:[%s192 + $0x4] sm:$0xe]
      %s1048 = scalar_lea.vmem %s1, 256
      %v1049 = vld [vmem:[%s1048] sm:$0xf]
      %v1050 = vld [vmem:[%s1048 + $0x4] sm:$0xf]
      %v1051 = vld [vmem:[%s1048 + $0x8] sm:$0xf]
      %v1052 = vld [vmem:[%s1048 + $0xc] sm:$0xf]
      %v1053 = vld [vmem:[%s1048 + $0x10] sm:$0xf]
      %v1054 = vld [vmem:[%s1048 + $0x14] sm:$0xf]
      %v1055 = vld [vmem:[%s1048 + $0x18] sm:$0xf]
      %v1056 = vld [vmem:[%s1048 + $0x1c] sm:$0xf]
      %v1057 = vld [vmem:[%s1048 + $0x20] sm:$0xf]
      %v1058 = vld [vmem:[%s1048 + $0x24] sm:$0xf]
      %v1059 = vld [vmem:[%s1048 + $0x28] sm:$0xf]
      %v1060 = vld [vmem:[%s1048 + $0x2c] sm:$0xf]
      %v1061 = vld [vmem:[%s1048 + $0x30] sm:$0xf]
      %v1062 = vld [vmem:[%s1048 + $0x34] sm:$0xf]
      %v1063 = vld [vmem:[%s1048 + $0x38] sm:$0xf]
      %v1064 = vld [vmem:[%s1048 + $0x3c] sm:$0xf]
      %v1066 = vunpack.c.l.b16 %v1047
      %v1067 = vpack.c.b16 %v829, %v1066
      %v1068 = vrot.slane %v1067, 1
      %v1069 = vrot.slane %v842, 1
      %v1070 = vsel %vm624, %v1068, %v1069
      %v1071 = vrot.slane %v843, 1
      %v1072 = vsel %vm624, %v1069, %v1071
      %v1073 = vrot.slane %v844, 1
      %v1074 = vsel %vm624, %v1071, %v1073
      %v1075 = vrot.slane %v845, 1
      %v1076 = vsel %vm624, %v1073, %v1075
      %v1077 = vrot.slane %v846, 1
      %v1078 = vsel %vm624, %v1075, %v1077
      %v1079 = vrot.slane %v847, 1
      %v1080 = vsel %vm624, %v1077, %v1079
      %v1103 = vunpack.c.l.b16 %v1049
      %v1104 = vunpack.c.l.b16 %v1050
      %v1105 = vunpack.c.l.b16 %v1051
      %v1106 = vunpack.c.l.b16 %v1052
      %v1107 = vunpack.c.l.b16 %v1053
      %v1108 = vunpack.c.l.b16 %v1054
      %v1109 = vunpack.c.l.b16 %v1055
      %v1110 = vunpack.c.l.b16 %v1056
      %v1111 = vunpack.c.l.b16 %v1057
      %v1112 = vunpack.c.l.b16 %v1058
      %v1113 = vunpack.c.l.b16 %v1059
      %v1114 = vunpack.c.l.b16 %v1060
      %v1115 = vunpack.c.l.b16 %v1061
      %v1116 = vunpack.c.l.b16 %v1062
      %v1117 = vunpack.c.l.b16 %v1063
      %v1118 = vunpack.c.l.b16 %v1064
      %v1119 = vpack.c.b16 %v1104, %v1103
      %v1120 = vpack.c.b16 %v1106, %v1105
      %v1121 = vpack.c.b16 %v1108, %v1107
      %v1122 = vpack.c.b16 %v1110, %v1109
      %v1123 = vpack.c.b16 %v1112, %v1111
      %v1124 = vpack.c.b16 %v1114, %v1113
      %v1125 = vpack.c.b16 %v1116, %v1115
      %v1126 = vpack.c.b16 %v1118, %v1117
      %1135 = vmatprep.subr.bf16.mxu0 0
      %1136 = vmatpush1.bf16.msra.mxu0 %v1119
      %1137 = vmatprep.subr.bf16.mxu0 0
      %1138 = vmatpush1.bf16.msra.mxu0 %v1120
      %1139 = vmatprep.subr.bf16.mxu0 0
      %1140 = vmatpush1.bf16.msra.mxu0 %v1121
      %1141 = vmatprep.subr.bf16.mxu0 0
      %1142 = vmatpush1.bf16.msra.mxu0 %v1122
      %1143 = vmatprep.subr.bf16.mxu0 0
      %1144 = vmatpush1.bf16.msra.mxu0 %v1123
      %1145 = vmatprep.subr.bf16.mxu0 0
      %1146 = vmatpush1.bf16.msra.mxu0 %v1124
      %1147 = vmatprep.subr.bf16.mxu0 0
      %1148 = vmatpush1.bf16.msra.mxu0 %v1125
      %1149 = vmatprep.subr.bf16.mxu0 0
      %1150 = vmatpush1.bf16.msra.mxu0 %v1126
      %1151 = vmatprep.subr.bf16.mxu0 0
      %1152 = vmatpush1.bf16.msra.mxu0 0
      %1153 = vmatprep.subr.bf16.mxu0 0
      %1154 = vmatpush1.bf16.msra.mxu0 0
      %1155 = vmatprep.subr.bf16.mxu0 0
      %1156 = vmatpush1.bf16.msra.mxu0 0
      %1157 = vmatprep.subr.bf16.mxu0 0
      %1158 = vmatpush1.bf16.msra.mxu0 0
      %1159 = vmatprep.subr.bf16.mxu0 0
      %1160 = vmatpush1.bf16.msra.mxu0 0
      %1161 = vmatprep.subr.bf16.mxu0 0
      %1162 = vmatpush1.bf16.msra.mxu0 0
      %1163 = vmatprep.subr.bf16.mxu0 0
      %1164 = vmatpush1.bf16.msra.mxu0 0
      %1165 = vmatprep.subr.bf16.mxu0 0
      %1166 = vmatpush1.bf16.msra.mxu0 0
      %1167 = vmatprep.mubr.bf16.mxu0 0
      %1168 = vmatmul.mubr.bf16.gmra.mrb[0].mxu0 %v1070
      %v1169 = vpop.f32.mrb[0].mxu0
      %v1170 = vadd.f32 0.0, %v1169
      %v1171 = vpop.f32.mrb[0].mxu0
      %v1172 = vpop.f32.mrb[0].mxu0
      %v1173 = vadd.f32 0.0, %v1172
      %v1174 = vpop.f32.mrb[0].mxu0
      %1175 = vmatprep.mubr.bf16.mxu0 0
      %1176 = vmatmul.mubr.bf16.gmra.mrb[0].mxu0 %v1072
      %v1177 = vpop.f32.mrb[0].mxu0
      %v1178 = vadd.f32 0.0, %v1177
      %v1179 = vpop.f32.mrb[0].mxu0
      %v1180 = vpop.f32.mrb[0].mxu0
      %v1181 = vadd.f32 0.0, %v1180
      %v1182 = vpop.f32.mrb[0].mxu0
      %1183 = vmatprep.mubr.bf16.mxu0 0
      %1184 = vmatmul.mubr.bf16.gmra.mrb[0].mxu0 %v1074
      %v1185 = vpop.f32.mrb[0].mxu0
      %v1186 = vadd.f32 0.0, %v1185
      %v1187 = vpop.f32.mrb[0].mxu0
      %v1188 = vpop.f32.mrb[0].mxu0
      %v1189 = vadd.f32 0.0, %v1188
      %v1190 = vpop.f32.mrb[0].mxu0
      %1191 = vmatprep.mubr.bf16.mxu0 0
      %1192 = vmatmul.mubr.bf16.gmra.mrb[0].mxu0 %v1076
      %v1193 = vpop.f32.mrb[0].mxu0
      %v1194 = vadd.f32 0.0, %v1193
      %v1195 = vpop.f32.mrb[0].mxu0
      %v1196 = vpop.f32.mrb[0].mxu0
      %v1197 = vadd.f32 0.0, %v1196
      %v1198 = vpop.f32.mrb[0].mxu0
      %1199 = vmatprep.mubr.bf16.mxu0 0
      %1200 = vmatmul.mubr.bf16.gmra.mrb[0].mxu0 %v1078
      %v1201 = vpop.f32.mrb[0].mxu0
      %v1202 = vadd.f32 0.0, %v1201
      %v1203 = vpop.f32.mrb[0].mxu0
      %v1204 = vpop.f32.mrb[0].mxu0
      %v1205 = vadd.f32 0.0, %v1204
      %v1206 = vpop.f32.mrb[0].mxu0
      %1207 = vmatprep.mubr.bf16.mxu0 0
      %1208 = vmatmul.mubr.bf16.gmra.mrb[0].mxu0 %v1080
      %v1209 = vpop.f32.mrb[0].mxu0
      %v1210 = vadd.f32 0.0, %v1209
      %v1211 = vpop.f32.mrb[0].mxu0
      %v1212 = vpop.f32.mrb[0].mxu0
      %v1213 = vadd.f32 0.0, %v1212
      %v1214 = vpop.f32.mrb[0].mxu0
      %1215 = vdwg.mxu0
      %v1216 = vadd.f32 %v1035, %v1170
      %v1217 = vadd.f32 %v1036, %v1173
      %v1218 = vadd.f32 %v1037, %v1178
      %v1219 = vadd.f32 %v1038, %v1181
      %v1220 = vadd.f32 %v1039, %v1186
      %v1221 = vadd.f32 %v1040, %v1189
      %v1222 = vadd.f32 %v1041, %v1194
      %v1223 = vadd.f32 %v1042, %v1197
      %v1224 = vadd.f32 %v1043, %v1202
      %v1225 = vadd.f32 %v1044, %v1205
      %v1226 = vadd.f32 %v1045, %v1210
      %v1227 = vadd.f32 %v1046, %v1213
      %v1228 = vld [vmem:[%s192 + $0x34] sm:$0x3]
      %s1229 = scalar_lea.vmem %s1, 320
      %v1230 = vld [vmem:[%s1229] sm:$0xf]
      %v1231 = vld [vmem:[%s1229 + $0x4] sm:$0xf]
      %v1232 = vld [vmem:[%s1229 + $0x8] sm:$0xf]
      %v1233 = vld [vmem:[%s1229 + $0xc] sm:$0xf]
      %v1234 = vld [vmem:[%s1229 + $0x10] sm:$0xf]
      %v1235 = vld [vmem:[%s1229 + $0x14] sm:$0xf]
      %v1236 = vld [vmem:[%s1229 + $0x18] sm:$0xf]
      %v1237 = vld [vmem:[%s1229 + $0x1c] sm:$0xf]
      %v1238 = vld [vmem:[%s1229 + $0x20] sm:$0xf]
      %v1239 = vld [vmem:[%s1229 + $0x24] sm:$0xf]
      %v1240 = vld [vmem:[%s1229 + $0x28] sm:$0xf]
      %v1241 = vld [vmem:[%s1229 + $0x2c] sm:$0xf]
      %v1242 = vld [vmem:[%s1229 + $0x30] sm:$0xf]
      %v1243 = vld [vmem:[%s1229 + $0x34] sm:$0xf]
      %v1244 = vld [vmem:[%s1229 + $0x38] sm:$0xf]
      %v1245 = vld [vmem:[%s1229 + $0x3c] sm:$0xf]
      %v1247 = vunpack.c.l.b16 %v1228
      %v1248 = vpack.c.b16 %v1247, %v1247
      %vm1249 = vsmask.f32 6400
      %v1251 = vshrl.u32 %v1067, 16
      %v1253 = vrot.slane %v1251, 1
      %v1254 = vshll.u32 %v1067, 16
      %v1256 = vrot.slane %v1254, 2
      %v1257 = vor.u32 %v1253, %v1256
      %v1258 = vrot.slane %v860, 1
      %v1259 = vrot.slane %v856, 2
      %v1260 = vor.u32 %v1258, %v1259
      %v1261 = vsel %vm1249, %v1257, %v1260
      %v1262 = vrot.slane %v868, 1
      %v1263 = vrot.slane %v864, 2
      %v1264 = vor.u32 %v1262, %v1263
      %v1265 = vsel %vm1249, %v1260, %v1264
      %v1266 = vrot.slane %v876, 1
      %v1267 = vrot.slane %v872, 2
      %v1268 = vor.u32 %v1266, %v1267
      %v1269 = vsel %vm1249, %v1264, %v1268
      %v1270 = vrot.slane %v884, 1
      %v1271 = vrot.slane %v880, 2
      %v1272 = vor.u32 %v1270, %v1271
      %v1273 = vsel %vm1249, %v1268, %v1272
      %v1274 = vrot.slane %v892, 1
      %v1275 = vrot.slane %v888, 2
      %v1276 = vor.u32 %v1274, %v1275
      %v1277 = vsel %vm1249, %v1272, %v1276
      %v1279 = vshrl.u32 %v1248, 16
      %v1281 = vrot.slane %v1279, 1
      %v1282 = vshll.u32 %v1248, 16
      %v1284 = vrot.slane %v1282, 2
      %v1285 = vor.u32 %v1281, %v1284
      %v1286 = vsel %vm1249, %v1276, %v1285
      %v1309 = vunpack.c.l.b16 %v1230
      %v1310 = vunpack.c.l.b16 %v1231
      %v1311 = vunpack.c.l.b16 %v1232
      %v1312 = vunpack.c.l.b16 %v1233
      %v1313 = vunpack.c.l.b16 %v1234
      %v1314 = vunpack.c.l.b16 %v1235
      %v1315 = vunpack.c.l.b16 %v1236
      %v1316 = vunpack.c.l.b16 %v1237
      %v1317 = vunpack.c.l.b16 %v1238
      %v1318 = vunpack.c.l.b16 %v1239
      %v1319 = vunpack.c.l.b16 %v1240
      %v1320 = vunpack.c.l.b16 %v1241
      %v1321 = vunpack.c.l.b16 %v1242
      %v1322 = vunpack.c.l.b16 %v1243
      %v1323 = vunpack.c.l.b16 %v1244
      %v1324 = vunpack.c.l.b16 %v1245
      %v1325 = vpack.c.b16 %v1310, %v1309
      %v1326 = vpack.c.b16 %v1312, %v1311
      %v1327 = vpack.c.b16 %v1314, %v1313
      %v1328 = vpack.c.b16 %v1316, %v1315
      %v1329 = vpack.c.b16 %v1318, %v1317
      %v1330 = vpack.c.b16 %v1320, %v1319
      %v1331 = vpack.c.b16 %v1322, %v1321
      %v1332 = vpack.c.b16 %v1324, %v1323
      %1341 = vmatprep.subr.bf16.mxu0 0
      %1342 = vmatpush1.bf16.msra.mxu0 %v1325
      %1343 = vmatprep.subr.bf16.mxu0 0
      %1344 = vmatpush1.bf16.msra.mxu0 %v1326
      %1345 = vmatprep.subr.bf16.mxu0 0
      %1346 = vmatpush1.bf16.msra.mxu0 %v1327
      %1347 = vmatprep.subr.bf16.mxu0 0
      %1348 = vmatpush1.bf16.msra.mxu0 %v1328
      %1349 = vmatprep.subr.bf16.mxu0 0
      %1350 = vmatpush1.bf16.msra.mxu0 %v1329
      %1351 = vmatprep.subr.bf16.mxu0 0
      %1352 = vmatpush1.bf16.msra.mxu0 %v1330
      %1353 = vmatprep.subr.bf16.mxu0 0
      %1354 = vmatpush1.bf16.msra.mxu0 %v1331
      %1355 = vmatprep.subr.bf16.mxu0 0
      %1356 = vmatpush1.bf16.msra.mxu0 %v1332
      %1357 = vmatprep.subr.bf16.mxu0 0
      %1358 = vmatpush1.bf16.msra.mxu0 0
      %1359 = vmatprep.subr.bf16.mxu0 0
      %1360 = vmatpush1.bf16.msra.mxu0 0
      %1361 = vmatprep.subr.bf16.mxu0 0
      %1362 = vmatpush1.bf16.msra.mxu0 0
      %1363 = vmatprep.subr.bf16.mxu0 0
      %1364 = vmatpush1.bf16.msra.mxu0 0
      %1365 = vmatprep.subr.bf16.mxu0 0
      %1366 = vmatpush1.bf16.msra.mxu0 0
      %1367 = vmatprep.subr.bf16.mxu0 0
      %1368 = vmatpush1.bf16.msra.mxu0 0
      %1369 = vmatprep.subr.bf16.mxu0 0
      %1370 = vmatpush1.bf16.msra.mxu0 0
      %1371 = vmatprep.subr.bf16.mxu0 0
      %1372 = vmatpush1.bf16.msra.mxu0 0
      %1373 = vmatprep.mubr.bf16.mxu0 0
      %1374 = vmatmul.mubr.bf16.gmra.mrb[0].mxu0 %v1261
      %v1375 = vpop.f32.mrb[0].mxu0
      %v1376 = vadd.f32 0.0, %v1375
      %v1377 = vpop.f32.mrb[0].mxu0
      %v1378 = vpop.f32.mrb[0].mxu0
      %v1379 = vadd.f32 0.0, %v1378
      %v1380 = vpop.f32.mrb[0].mxu0
      %1381 = vmatprep.mubr.bf16.mxu0 0
      %1382 = vmatmul.mubr.bf16.gmra.mrb[0].mxu0 %v1265
      %v1383 = vpop.f32.mrb[0].mxu0
      %v1384 = vadd.f32 0.0, %v1383
      %v1385 = vpop.f32.mrb[0].mxu0
      %v1386 = vpop.f32.mrb[0].mxu0
      %v1387 = vadd.f32 0.0, %v1386
      %v1388 = vpop.f32.mrb[0].mxu0
      %1389 = vmatprep.mubr.bf16.mxu0 0
      %1390 = vmatmul.mubr.bf16.gmra.mrb[0].mxu0 %v1269
      %v1391 = vpop.f32.mrb[0].mxu0
      %v1392 = vadd.f32 0.0, %v1391
      %v1393 = vpop.f32.mrb[0].mxu0
      %v1394 = vpop.f32.mrb[0].mxu0
      %v1395 = vadd.f32 0.0, %v1394
      %v1396 = vpop.f32.mrb[0].mxu0
      %1397 = vmatprep.mubr.bf16.mxu0 0
      %1398 = vmatmul.mubr.bf16.gmra.mrb[0].mxu0 %v1273
      %v1399 = vpop.f32.mrb[0].mxu0
      %v1400 = vadd.f32 0.0, %v1399
      %v1401 = vpop.f32.mrb[0].mxu0
      %v1402 = vpop.f32.mrb[0].mxu0
      %v1403 = vadd.f32 0.0, %v1402
      %v1404 = vpop.f32.mrb[0].mxu0
      %1405 = vmatprep.mubr.bf16.mxu0 0
      %1406 = vmatmul.mubr.bf16.gmra.mrb[0].mxu0 %v1277
      %v1407 = vpop.f32.mrb[0].mxu0
      %v1408 = vadd.f32 0.0, %v1407
      %v1409 = vpop.f32.mrb[0].mxu0
      %v1410 = vpop.f32.mrb[0].mxu0
      %v1411 = vadd.f32 0.0, %v1410
      %v1412 = vpop.f32.mrb[0].mxu0
      %1413 = vmatprep.mubr.bf16.mxu0 0
      %1414 = vmatmul.mubr.bf16.gmra.mrb[0].mxu0 %v1286
      %v1415 = vpop.f32.mrb[0].mxu0
      %v1416 = vadd.f32 0.0, %v1415
      %v1417 = vpop.f32.mrb[0].mxu0
      %v1418 = vpop.f32.mrb[0].mxu0
      %v1419 = vadd.f32 0.0, %v1418
      %v1420 = vpop.f32.mrb[0].mxu0
      %1421 = vdwg.mxu0
      %v1422 = vadd.f32 %v1216, %v1376
      %v1423 = vadd.f32 %v1217, %v1379
      %v1424 = vadd.f32 %v1218, %v1384
      %v1425 = vadd.f32 %v1219, %v1387
      %v1426 = vadd.f32 %v1220, %v1392
      %v1427 = vadd.f32 %v1221, %v1395
      %v1428 = vadd.f32 %v1222, %v1400
      %v1429 = vadd.f32 %v1223, %v1403
      %v1430 = vadd.f32 %v1224, %v1408
      %v1431 = vadd.f32 %v1225, %v1411
      %v1432 = vadd.f32 %v1226, %v1416
      %v1433 = vadd.f32 %v1227, %v1419
      %v1434 = vld [vmem:[%s192 + $0x8] sm:$0xe]
      %v1435 = vld [vmem:[%s192 + $0xc] sm:$0xf]
      %v1436 = vld [vmem:[%s192 + $0x10] sm:$0xf]
      %v1437 = vld [vmem:[%s192 + $0x14] sm:$0xf]
      %v1438 = vld [vmem:[%s192 + $0x18] sm:$0xf]
      %v1439 = vld [vmem:[%s192 + $0x1c] sm:$0xf]
      %v1440 = vld [vmem:[%s192 + $0x20] sm:$0xf]
      %v1441 = vld [vmem:[%s192 + $0x24] sm:$0xf]
      %v1442 = vld [vmem:[%s192 + $0x28] sm:$0xf]
      %v1443 = vld [vmem:[%s192 + $0x2c] sm:$0xf]
      %v1444 = vld [vmem:[%s192 + $0x30] sm:$0xf]
      %v1445 = vld [vmem:[%s192 + $0x34] sm:$0xf]
      %v1446 = vld [vmem:[%s192 + $0x38] sm:$0x1]
      %s1447 = scalar_lea.vmem %s1, 384
      %v1448 = vld [vmem:[%s1447] sm:$0xf]
      %v1449 = vld [vmem:[%s1447 + $0x4] sm:$0xf]
      %v1450 = vld [vmem:[%s1447 + $0x8] sm:$0xf]
      %v1451 = vld [vmem:[%s1447 + $0xc] sm:$0xf]
      %v1452 = vld [vmem:[%s1447 + $0x10] sm:$0xf]
      %v1453 = vld [vmem:[%s1447 + $0x14] sm:$0xf]
      %v1454 = vld [vmem:[%s1447 + $0x18] sm:$0xf]
      %v1455 = vld [vmem:[%s1447 + $0x1c] sm:$0xf]
      %v1456 = vld [vmem:[%s1447 + $0x20] sm:$0xf]
      %v1457 = vld [vmem:[%s1447 + $0x24] sm:$0xf]
      %v1458 = vld [vmem:[%s1447 + $0x28] sm:$0xf]
      %v1459 = vld [vmem:[%s1447 + $0x2c] sm:$0xf]
      %v1460 = vld [vmem:[%s1447 + $0x30] sm:$0xf]
      %v1461 = vld [vmem:[%s1447 + $0x34] sm:$0xf]
      %v1462 = vld [vmem:[%s1447 + $0x38] sm:$0xf]
      %v1463 = vld [vmem:[%s1447 + $0x3c] sm:$0xf]
      %v1477 = vunpack.c.l.b16 %v1434
      %v1478 = vunpack.c.l.b16 %v1435
      %v1479 = vunpack.c.l.b16 %v1436
      %v1480 = vunpack.c.l.b16 %v1437
      %v1481 = vunpack.c.l.b16 %v1438
      %v1482 = vunpack.c.l.b16 %v1439
      %v1483 = vunpack.c.l.b16 %v1440
      %v1484 = vunpack.c.l.b16 %v1441
      %v1485 = vunpack.c.l.b16 %v1442
      %v1486 = vunpack.c.l.b16 %v1443
      %v1487 = vunpack.c.l.b16 %v1444
      %v1488 = vunpack.c.l.b16 %v1445
      %v1489 = vunpack.c.l.b16 %v1446
      %v1490 = vpack.c.b16 %v1478, %v1477
      %v1491 = vpack.c.b16 %v1480, %v1479
      %v1492 = vpack.c.b16 %v1482, %v1481
      %v1493 = vpack.c.b16 %v1484, %v1483
      %v1494 = vpack.c.b16 %v1486, %v1485
      %v1495 = vpack.c.b16 %v1488, %v1487
      %v1496 = vpack.c.b16 %v1489, %v1489
      %v1497 = vrot.slane %v1490, 1
      %v1498 = vrot.slane %v1491, 1
      %v1499 = vsel %vm624, %v1497, %v1498
      %v1500 = vrot.slane %v1492, 1
      %v1501 = vsel %vm624, %v1498, %v1500
      %v1502 = vrot.slane %v1493, 1
      %v1503 = vsel %vm624, %v1500, %v1502
      %v1504 = vrot.slane %v1494, 1
      %v1505 = vsel %vm624, %v1502, %v1504
      %v1506 = vrot.slane %v1495, 1
      %v1507 = vsel %vm624, %v1504, %v1506
      %v1508 = vrot.slane %v1496, 1
      %v1509 = vsel %vm624, %v1506, %v1508
      %v1532 = vunpack.c.l.b16 %v1448
      %v1533 = vunpack.c.l.b16 %v1449
      %v1534 = vunpack.c.l.b16 %v1450
      %v1535 = vunpack.c.l.b16 %v1451
      %v1536 = vunpack.c.l.b16 %v1452
      %v1537 = vunpack.c.l.b16 %v1453
      %v1538 = vunpack.c.l.b16 %v1454
      %v1539 = vunpack.c.l.b16 %v1455
      %v1540 = vunpack.c.l.b16 %v1456
      %v1541 = vunpack.c.l.b16 %v1457
      %v1542 = vunpack.c.l.b16 %v1458
      %v1543 = vunpack.c.l.b16 %v1459
      %v1544 = vunpack.c.l.b16 %v1460
      %v1545 = vunpack.c.l.b16 %v1461
      %v1546 = vunpack.c.l.b16 %v1462
      %v1547 = vunpack.c.l.b16 %v1463
      %v1548 = vpack.c.b16 %v1533, %v1532
      %v1549 = vpack.c.b16 %v1535, %v1534
      %v1550 = vpack.c.b16 %v1537, %v1536
      %v1551 = vpack.c.b16 %v1539, %v1538
      %v1552 = vpack.c.b16 %v1541, %v1540
      %v1553 = vpack.c.b16 %v1543, %v1542
      %v1554 = vpack.c.b16 %v1545, %v1544
      %v1555 = vpack.c.b16 %v1547, %v1546
      %1564 = vmatprep.subr.bf16.mxu0 0
      %1565 = vmatpush1.bf16.msra.mxu0 %v1548
      %1566 = vmatprep.subr.bf16.mxu0 0
      %1567 = vmatpush1.bf16.msra.mxu0 %v1549
      %1568 = vmatprep.subr.bf16.mxu0 0
      %1569 = vmatpush1.bf16.msra.mxu0 %v1550
      %1570 = vmatprep.subr.bf16.mxu0 0
      %1571 = vmatpush1.bf16.msra.mxu0 %v1551
      %1572 = vmatprep.subr.bf16.mxu0 0
      %1573 = vmatpush1.bf16.msra.mxu0 %v1552
      %1574 = vmatprep.subr.bf16.mxu0 0
      %1575 = vmatpush1.bf16.msra.mxu0 %v1553
      %1576 = vmatprep.subr.bf16.mxu0 0
      %1577 = vmatpush1.bf16.msra.mxu0 %v1554
      %1578 = vmatprep.subr.bf16.mxu0 0
      %1579 = vmatpush1.bf16.msra.mxu0 %v1555
      %1580 = vmatprep.subr.bf16.mxu0 0
      %1581 = vmatpush1.bf16.msra.mxu0 0
      %1582 = vmatprep.subr.bf16.mxu0 0
      %1583 = vmatpush1.bf16.msra.mxu0 0
      %1584 = vmatprep.subr.bf16.mxu0 0
      %1585 = vmatpush1.bf16.msra.mxu0 0
      %1586 = vmatprep.subr.bf16.mxu0 0
      %1587 = vmatpush1.bf16.msra.mxu0 0
      %1588 = vmatprep.subr.bf16.mxu0 0
      %1589 = vmatpush1.bf16.msra.mxu0 0
      %1590 = vmatprep.subr.bf16.mxu0 0
      %1591 = vmatpush1.bf16.msra.mxu0 0
      %1592 = vmatprep.subr.bf16.mxu0 0
      %1593 = vmatpush1.bf16.msra.mxu0 0
      %1594 = vmatprep.subr.bf16.mxu0 0
      %1595 = vmatpush1.bf16.msra.mxu0 0
      %1596 = vmatprep.mubr.bf16.mxu0 0
      %1597 = vmatmul.mubr.bf16.gmra.mrb[0].mxu0 %v1499
      %v1598 = vpop.f32.mrb[0].mxu0
      %v1599 = vadd.f32 0.0, %v1598
      %v1600 = vpop.f32.mrb[0].mxu0
      %v1601 = vpop.f32.mrb[0].mxu0
      %v1602 = vadd.f32 0.0, %v1601
      %v1603 = vpop.f32.mrb[0].mxu0
      %1604 = vmatprep.mubr.bf16.mxu0 0
      %1605 = vmatmul.mubr.bf16.gmra.mrb[0].mxu0 %v1501
      %v1606 = vpop.f32.mrb[0].mxu0
      %v1607 = vadd.f32 0.0, %v1606
      %v1608 = vpop.f32.mrb[0].mxu0
      %v1609 = vpop.f32.mrb[0].mxu0
      %v1610 = vadd.f32 0.0, %v1609
      %v1611 = vpop.f32.mrb[0].mxu0
      %1612 = vmatprep.mubr.bf16.mxu0 0
      %1613 = vmatmul.mubr.bf16.gmra.mrb[0].mxu0 %v1503
      %v1614 = vpop.f32.mrb[0].mxu0
      %v1615 = vadd.f32 0.0, %v1614
      %v1616 = vpop.f32.mrb[0].mxu0
      %v1617 = vpop.f32.mrb[0].mxu0
      %v1618 = vadd.f32 0.0, %v1617
      %v1619 = vpop.f32.mrb[0].mxu0
      %1620 = vmatprep.mubr.bf16.mxu0 0
      %1621 = vmatmul.mubr.bf16.gmra.mrb[0].mxu0 %v1505
      %v1622 = vpop.f32.mrb[0].mxu0
      %v1623 = vadd.f32 0.0, %v1622
      %v1624 = vpop.f32.mrb[0].mxu0
      %v1625 = vpop.f32.mrb[0].mxu0
      %v1626 = vadd.f32 0.0, %v1625
      %v1627 = vpop.f32.mrb[0].mxu0
      %1628 = vmatprep.mubr.bf16.mxu0 0
      %1629 = vmatmul.mubr.bf16.gmra.mrb[0].mxu0 %v1507
      %v1630 = vpop.f32.mrb[0].mxu0
      %v1631 = vadd.f32 0.0, %v1630
      %v1632 = vpop.f32.mrb[0].mxu0
      %v1633 = vpop.f32.mrb[0].mxu0
      %v1634 = vadd.f32 0.0, %v1633
      %v1635 = vpop.f32.mrb[0].mxu0
      %1636 = vmatprep.mubr.bf16.mxu0 0
      %1637 = vmatmul.mubr.bf16.gmra.mrb[0].mxu0 %v1509
      %v1638 = vpop.f32.mrb[0].mxu0
      %v1639 = vadd.f32 0.0, %v1638
      %v1640 = vpop.f32.mrb[0].mxu0
      %v1641 = vpop.f32.mrb[0].mxu0
      %v1642 = vadd.f32 0.0, %v1641
      %v1643 = vpop.f32.mrb[0].mxu0
      %1644 = vdwg.mxu0
      %v1645 = vadd.f32 %v1422, %v1599
      %v1646 = vadd.f32 %v1423, %v1602
      %v1647 = vadd.f32 %v1424, %v1607
      %v1648 = vadd.f32 %v1425, %v1610
      %v1649 = vadd.f32 %v1426, %v1615
      %v1650 = vadd.f32 %v1427, %v1618
      %v1651 = vadd.f32 %v1428, %v1623
      %v1652 = vadd.f32 %v1429, %v1626
      %v1653 = vadd.f32 %v1430, %v1631
      %v1654 = vadd.f32 %v1431, %v1634
      %v1655 = vadd.f32 %v1432, %v1639
      %v1656 = vadd.f32 %v1433, %v1642
      %v1657 = vld [vmem:[%s192 + $0x38] sm:$0x3]
      %s1658 = scalar_lea.vmem %s1, 448
      %v1659 = vld [vmem:[%s1658] sm:$0xf]
      %v1660 = vld [vmem:[%s1658 + $0x4] sm:$0xf]
      %v1661 = vld [vmem:[%s1658 + $0x8] sm:$0xf]
      %v1662 = vld [vmem:[%s1658 + $0xc] sm:$0xf]
      %v1663 = vld [vmem:[%s1658 + $0x10] sm:$0xf]
      %v1664 = vld [vmem:[%s1658 + $0x14] sm:$0xf]
      %v1665 = vld [vmem:[%s1658 + $0x18] sm:$0xf]
      %v1666 = vld [vmem:[%s1658 + $0x1c] sm:$0xf]
      %v1667 = vld [vmem:[%s1658 + $0x20] sm:$0xf]
      %v1668 = vld [vmem:[%s1658 + $0x24] sm:$0xf]
      %v1669 = vld [vmem:[%s1658 + $0x28] sm:$0xf]
      %v1670 = vld [vmem:[%s1658 + $0x2c] sm:$0xf]
      %v1671 = vld [vmem:[%s1658 + $0x30] sm:$0xf]
      %v1672 = vld [vmem:[%s1658 + $0x34] sm:$0xf]
      %v1673 = vld [vmem:[%s1658 + $0x38] sm:$0xf]
      %v1674 = vld [vmem:[%s1658 + $0x3c] sm:$0xf]
      %v1676 = vunpack.c.l.b16 %v1657
      %v1677 = vpack.c.b16 %v1676, %v1676
      %v1679 = vshrl.u32 %v1490, 16
      %v1681 = vrot.slane %v1679, 1
      %v1682 = vshll.u32 %v1490, 16
      %v1684 = vrot.slane %v1682, 2
      %v1685 = vor.u32 %v1681, %v1684
      %v1687 = vshrl.u32 %v1491, 16
      %v1689 = vrot.slane %v1687, 1
      %v1690 = vshll.u32 %v1491, 16
      %v1692 = vrot.slane %v1690, 2
      %v1693 = vor.u32 %v1689, %v1692
      %v1694 = vsel %vm1249, %v1685, %v1693
      %v1696 = vshrl.u32 %v1492, 16
      %v1698 = vrot.slane %v1696, 1
      %v1699 = vshll.u32 %v1492, 16
      %v1701 = vrot.slane %v1699, 2
      %v1702 = vor.u32 %v1698, %v1701
      %v1703 = vsel %vm1249, %v1693, %v1702
      %v1705 = vshrl.u32 %v1493, 16
      %v1707 = vrot.slane %v1705, 1
      %v1708 = vshll.u32 %v1493, 16
      %v1710 = vrot.slane %v1708, 2
      %v1711 = vor.u32 %v1707, %v1710
      %v1712 = vsel %vm1249, %v1702, %v1711
      %v1714 = vshrl.u32 %v1494, 16
      %v1716 = vrot.slane %v1714, 1
      %v1717 = vshll.u32 %v1494, 16
      %v1719 = vrot.slane %v1717, 2
      %v1720 = vor.u32 %v1716, %v1719
      %v1721 = vsel %vm1249, %v1711, %v1720
      %v1723 = vshrl.u32 %v1495, 16
      %v1725 = vrot.slane %v1723, 1
      %v1726 = vshll.u32 %v1495, 16
      %v1728 = vrot.slane %v1726, 2
      %v1729 = vor.u32 %v1725, %v1728
      %v1730 = vsel %vm1249, %v1720, %v1729
      %v1732 = vshrl.u32 %v1677, 16
      %v1734 = vrot.slane %v1732, 1
      %v1735 = vshll.u32 %v1677, 16
      %v1737 = vrot.slane %v1735, 2
      %v1738 = vor.u32 %v1734, %v1737
      %v1739 = vsel %vm1249, %v1729, %v1738
      %v1762 = vunpack.c.l.b16 %v1659
      %v1763 = vunpack.c.l.b16 %v1660
      %v1764 = vunpack.c.l.b16 %v1661
      %v1765 = vunpack.c.l.b16 %v1662
      %v1766 = vunpack.c.l.b16 %v1663
      %v1767 = vunpack.c.l.b16 %v1664
      %v1768 = vunpack.c.l.b16 %v1665
      %v1769 = vunpack.c.l.b16 %v1666
      %v1770 = vunpack.c.l.b16 %v1667
      %v1771 = vunpack.c.l.b16 %v1668
      %v1772 = vunpack.c.l.b16 %v1669
      %v1773 = vunpack.c.l.b16 %v1670
      %v1774 = vunpack.c.l.b16 %v1671
      %v1775 = vunpack.c.l.b16 %v1672
      %v1776 = vunpack.c.l.b16 %v1673
      %v1777 = vunpack.c.l.b16 %v1674
      %v1778 = vpack.c.b16 %v1763, %v1762
      %v1779 = vpack.c.b16 %v1765, %v1764
      %v1780 = vpack.c.b16 %v1767, %v1766
      %v1781 = vpack.c.b16 %v1769, %v1768
      %v1782 = vpack.c.b16 %v1771, %v1770
      %v1783 = vpack.c.b16 %v1773, %v1772
      %v1784 = vpack.c.b16 %v1775, %v1774
      %v1785 = vpack.c.b16 %v1777, %v1776
      %1794 = vmatprep.subr.bf16.mxu0 0
      %1795 = vmatpush1.bf16.msra.mxu0 %v1778
      %1796 = vmatprep.subr.bf16.mxu0 0
      %1797 = vmatpush1.bf16.msra.mxu0 %v1779
      %1798 = vmatprep.subr.bf16.mxu0 0
      %1799 = vmatpush1.bf16.msra.mxu0 %v1780
      %1800 = vmatprep.subr.bf16.mxu0 0
      %1801 = vmatpush1.bf16.msra.mxu0 %v1781
      %1802 = vmatprep.subr.bf16.mxu0 0
      %1803 = vmatpush1.bf16.msra.mxu0 %v1782
      %1804 = vmatprep.subr.bf16.mxu0 0
      %1805 = vmatpush1.bf16.msra.mxu0 %v1783
      %1806 = vmatprep.subr.bf16.mxu0 0
      %1807 = vmatpush1.bf16.msra.mxu0 %v1784
      %1808 = vmatprep.subr.bf16.mxu0 0
      %1809 = vmatpush1.bf16.msra.mxu0 %v1785
      %1810 = vmatprep.subr.bf16.mxu0 0
      %1811 = vmatpush1.bf16.msra.mxu0 0
      %1812 = vmatprep.subr.bf16.mxu0 0
      %1813 = vmatpush1.bf16.msra.mxu0 0
      %1814 = vmatprep.subr.bf16.mxu0 0
      %1815 = vmatpush1.bf16.msra.mxu0 0
      %1816 = vmatprep.subr.bf16.mxu0 0
      %1817 = vmatpush1.bf16.msra.mxu0 0
      %1818 = vmatprep.subr.bf16.mxu0 0
      %1819 = vmatpush1.bf16.msra.mxu0 0
      %1820 = vmatprep.subr.bf16.mxu0 0
      %1821 = vmatpush1.bf16.msra.mxu0 0
      %1822 = vmatprep.subr.bf16.mxu0 0
      %1823 = vmatpush1.bf16.msra.mxu0 0
      %1824 = vmatprep.subr.bf16.mxu0 0
      %1825 = vmatpush1.bf16.msra.mxu0 0
      %1826 = vmatprep.mubr.bf16.mxu0 0
      %1827 = vmatmul.mubr.bf16.gmra.mrb[0].mxu0 %v1694
      %v1828 = vpop.f32.mrb[0].mxu0
      %v1829 = vadd.f32 0.0, %v1828
      %v1830 = vpop.f32.mrb[0].mxu0
      %v1831 = vpop.f32.mrb[0].mxu0
      %v1832 = vadd.f32 0.0, %v1831
      %v1833 = vpop.f32.mrb[0].mxu0
      %1834 = vmatprep.mubr.bf16.mxu0 0
      %1835 = vmatmul.mubr.bf16.gmra.mrb[0].mxu0 %v1703
      %v1836 = vpop.f32.mrb[0].mxu0
      %v1837 = vadd.f32 0.0, %v1836
      %v1838 = vpop.f32.mrb[0].mxu0
      %v1839 = vpop.f32.mrb[0].mxu0
      %v1840 = vadd.f32 0.0, %v1839
      %v1841 = vpop.f32.mrb[0].mxu0
      %1842 = vmatprep.mubr.bf16.mxu0 0
      %1843 = vmatmul.mubr.bf16.gmra.mrb[0].mxu0 %v1712
      %v1844 = vpop.f32.mrb[0].mxu0
      %v1845 = vadd.f32 0.0, %v1844
      %v1846 = vpop.f32.mrb[0].mxu0
      %v1847 = vpop.f32.mrb[0].mxu0
      %v1848 = vadd.f32 0.0, %v1847
      %v1849 = vpop.f32.mrb[0].mxu0
      %1850 = vmatprep.mubr.bf16.mxu0 0
      %1851 = vmatmul.mubr.bf16.gmra.mrb[0].mxu0 %v1721
      %v1852 = vpop.f32.mrb[0].mxu0
      %v1853 = vadd.f32 0.0, %v1852
      %v1854 = vpop.f32.mrb[0].mxu0
      %v1855 = vpop.f32.mrb[0].mxu0
      %v1856 = vadd.f32 0.0, %v1855
      %v1857 = vpop.f32.mrb[0].mxu0
      %1858 = vmatprep.mubr.bf16.mxu0 0
      %1859 = vmatmul.mubr.bf16.gmra.mrb[0].mxu0 %v1730
      %v1860 = vpop.f32.mrb[0].mxu0
      %v1861 = vadd.f32 0.0, %v1860
      %v1862 = vpop.f32.mrb[0].mxu0
      %v1863 = vpop.f32.mrb[0].mxu0
      %v1864 = vadd.f32 0.0, %v1863
      %v1865 = vpop.f32.mrb[0].mxu0
      %1866 = vmatprep.mubr.bf16.mxu0 0
      %1867 = vmatmul.mubr.bf16.gmra.mrb[0].mxu0 %v1739
      %v1868 = vpop.f32.mrb[0].mxu0
      %v1869 = vadd.f32 0.0, %v1868
      %v1870 = vpop.f32.mrb[0].mxu0
      %v1871 = vpop.f32.mrb[0].mxu0
      %v1872 = vadd.f32 0.0, %v1871
      %v1873 = vpop.f32.mrb[0].mxu0
      %1874 = vdwg.mxu0
      %v1875 = vadd.f32 %v1645, %v1829
      %v1876 = vadd.f32 %v1646, %v1832
      %v1877 = vadd.f32 %v1647, %v1837
      %v1878 = vadd.f32 %v1648, %v1840
      %v1879 = vadd.f32 %v1649, %v1845
      %v1880 = vadd.f32 %v1650, %v1848
      %v1881 = vadd.f32 %v1651, %v1853
      %v1882 = vadd.f32 %v1652, %v1856
      %v1883 = vadd.f32 %v1653, %v1861
      %v1884 = vadd.f32 %v1654, %v1864
      %v1885 = vadd.f32 %v1655, %v1869
      %v1886 = vadd.f32 %v1656, %v1872
      %v1887 = vld [vmem:[%s192 + $0x8] sm:$0xc]
      %s1888 = scalar_lea.vmem %s1, 512
      %v1889 = vld [vmem:[%s1888] sm:$0xf]
      %v1890 = vld [vmem:[%s1888 + $0x4] sm:$0xf]
      %v1891 = vld [vmem:[%s1888 + $0x8] sm:$0xf]
      %v1892 = vld [vmem:[%s1888 + $0xc] sm:$0xf]
      %v1893 = vld [vmem:[%s1888 + $0x10] sm:$0xf]
      %v1894 = vld [vmem:[%s1888 + $0x14] sm:$0xf]
      %v1895 = vld [vmem:[%s1888 + $0x18] sm:$0xf]
      %v1896 = vld [vmem:[%s1888 + $0x1c] sm:$0xf]
      %v1897 = vld [vmem:[%s1888 + $0x20] sm:$0xf]
      %v1898 = vld [vmem:[%s1888 + $0x24] sm:$0xf]
      %v1899 = vld [vmem:[%s1888 + $0x28] sm:$0xf]
      %v1900 = vld [vmem:[%s1888 + $0x2c] sm:$0xf]
      %v1901 = vld [vmem:[%s1888 + $0x30] sm:$0xf]
      %v1902 = vld [vmem:[%s1888 + $0x34] sm:$0xf]
      %v1903 = vld [vmem:[%s1888 + $0x38] sm:$0xf]
      %v1904 = vld [vmem:[%s1888 + $0x3c] sm:$0xf]
      %v1906 = vunpack.c.l.b16 %v1887
      %v1907 = vpack.c.b16 %v1478, %v1906
      %vm1908 = vcmask 1045504
      %v1909 = vrot.slane %v1907, 2
      %v1910 = vrot.slane %v1491, 2
      %v1911 = vsel %vm1908, %v1909, %v1910
      %v1912 = vrot.slane %v1492, 2
      %v1913 = vsel %vm1908, %v1910, %v1912
      %v1914 = vrot.slane %v1493, 2
      %v1915 = vsel %vm1908, %v1912, %v1914
      %v1916 = vrot.slane %v1494, 2
      %v1917 = vsel %vm1908, %v1914, %v1916
      %v1918 = vrot.slane %v1495, 2
      %v1919 = vsel %vm1908, %v1916, %v1918
      %v1920 = vrot.slane %v1677, 2
      %v1921 = vsel %vm1908, %v1918, %v1920
      %v1944 = vunpack.c.l.b16 %v1889
      %v1945 = vunpack.c.l.b16 %v1890
      %v1946 = vunpack.c.l.b16 %v1891
      %v1947 = vunpack.c.l.b16 %v1892
      %v1948 = vunpack.c.l.b16 %v1893
      %v1949 = vunpack.c.l.b16 %v1894
      %v1950 = vunpack.c.l.b16 %v1895
      %v1951 = vunpack.c.l.b16 %v1896
      %v1952 = vunpack.c.l.b16 %v1897
      %v1953 = vunpack.c.l.b16 %v1898
      %v1954 = vunpack.c.l.b16 %v1899
      %v1955 = vunpack.c.l.b16 %v1900
      %v1956 = vunpack.c.l.b16 %v1901
      %v1957 = vunpack.c.l.b16 %v1902
      %v1958 = vunpack.c.l.b16 %v1903
      %v1959 = vunpack.c.l.b16 %v1904
      %v1960 = vpack.c.b16 %v1945, %v1944
      %v1961 = vpack.c.b16 %v1947, %v1946
      %v1962 = vpack.c.b16 %v1949, %v1948
      %v1963 = vpack.c.b16 %v1951, %v1950
      %v1964 = vpack.c.b16 %v1953, %v1952
      %v1965 = vpack.c.b16 %v1955, %v1954
      %v1966 = vpack.c.b16 %v1957, %v1956
      %v1967 = vpack.c.b16 %v1959, %v1958
      %1976 = vmatprep.subr.bf16.mxu0 0
      %1977 = vmatpush1.bf16.msra.mxu0 %v1960
      %1978 = vmatprep.subr.bf16.mxu0 0
      %1979 = vmatpush1.bf16.msra.mxu0 %v1961
      %1980 = vmatprep.subr.bf16.mxu0 0
      %1981 = vmatpush1.bf16.msra.mxu0 %v1962
      %1982 = vmatprep.subr.bf16.mxu0 0
      %1983 = vmatpush1.bf16.msra.mxu0 %v1963
      %1984 = vmatprep.subr.bf16.mxu0 0
      %1985 = vmatpush1.bf16.msra.mxu0 %v1964
      %1986 = vmatprep.subr.bf16.mxu0 0
      %1987 = vmatpush1.bf16.msra.mxu0 %v1965
      %1988 = vmatprep.subr.bf16.mxu0 0
      %1989 = vmatpush1.bf16.msra.mxu0 %v1966
      %1990 = vmatprep.subr.bf16.mxu0 0
      %1991 = vmatpush1.bf16.msra.mxu0 %v1967
      %1992 = vmatprep.subr.bf16.mxu0 0
      %1993 = vmatpush1.bf16.msra.mxu0 0
      %1994 = vmatprep.subr.bf16.mxu0 0
      %1995 = vmatpush1.bf16.msra.mxu0 0
      %1996 = vmatprep.subr.bf16.mxu0 0
      %1997 = vmatpush1.bf16.msra.mxu0 0
      %1998 = vmatprep.subr.bf16.mxu0 0
      %1999 = vmatpush1.bf16.msra.mxu0 0
      %2000 = vmatprep.subr.bf16.mxu0 0
      %2001 = vmatpush1.bf16.msra.mxu0 0
      %2002 = vmatprep.subr.bf16.mxu0 0
      %2003 = vmatpush1.bf16.msra.mxu0 0
      %2004 = vmatprep.subr.bf16.mxu0 0
      %2005 = vmatpush1.bf16.msra.mxu0 0
      %2006 = vmatprep.subr.bf16.mxu0 0
      %2007 = vmatpush1.bf16.msra.mxu0 0
      %2008 = vmatprep.mubr.bf16.mxu0 0
      %2009 = vmatmul.mubr.bf16.gmra.mrb[0].mxu0 %v1911
      %v2010 = vpop.f32.mrb[0].mxu0
      %v2011 = vadd.f32 0.0, %v2010
      %v2012 = vpop.f32.mrb[0].mxu0
      %v2013 = vpop.f32.mrb[0].mxu0
      %v2014 = vadd.f32 0.0, %v2013
      %v2015 = vpop.f32.mrb[0].mxu0
      %2016 = vmatprep.mubr.bf16.mxu0 0
      %2017 = vmatmul.mubr.bf16.gmra.mrb[0].mxu0 %v1913
      %v2018 = vpop.f32.mrb[0].mxu0
      %v2019 = vadd.f32 0.0, %v2018
      %v2020 = vpop.f32.mrb[0].mxu0
      %v2021 = vpop.f32.mrb[0].mxu0
      %v2022 = vadd.f32 0.0, %v2021
      %v2023 = vpop.f32.mrb[0].mxu0
      %2024 = vmatprep.mubr.bf16.mxu0 0
      %2025 = vmatmul.mubr.bf16.gmra.mrb[0].mxu0 %v1915
      %v2026 = vpop.f32.mrb[0].mxu0
      %v2027 = vadd.f32 0.0, %v2026
      %v2028 = vpop.f32.mrb[0].mxu0
      %v2029 = vpop.f32.mrb[0].mxu0
      %v2030 = vadd.f32 0.0, %v2029
      %v2031 = vpop.f32.mrb[0].mxu0
      %2032 = vmatprep.mubr.bf16.mxu0 0
      %2033 = vmatmul.mubr.bf16.gmra.mrb[0].mxu0 %v1917
      %v2034 = vpop.f32.mrb[0].mxu0
      %v2035 = vadd.f32 0.0, %v2034
      %v2036 = vpop.f32.mrb[0].mxu0
      %v2037 = vpop.f32.mrb[0].mxu0
      %v2038 = vadd.f32 0.0, %v2037
      %v2039 = vpop.f32.mrb[0].mxu0
      %2040 = vmatprep.mubr.bf16.mxu0 0
      %2041 = vmatmul.mubr.bf16.gmra.mrb[0].mxu0 %v1919
      %v2042 = vpop.f32.mrb[0].mxu0
      %v2043 = vadd.f32 0.0, %v2042
      %v2044 = vpop.f32.mrb[0].mxu0
      %v2045 = vpop.f32.mrb[0].mxu0
      %v2046 = vadd.f32 0.0, %v2045
      %v2047 = vpop.f32.mrb[0].mxu0
      %2048 = vmatprep.mubr.bf16.mxu0 0
      %2049 = vmatmul.mubr.bf16.gmra.mrb[0].mxu0 %v1921
      %v2050 = vpop.f32.mrb[0].mxu0
      %v2051 = vadd.f32 0.0, %v2050
      %v2052 = vpop.f32.mrb[0].mxu0
      %v2053 = vpop.f32.mrb[0].mxu0
      %v2054 = vadd.f32 0.0, %v2053
      %v2055 = vpop.f32.mrb[0].mxu0
      %2056 = vdwg.mxu0
      %v2057 = vadd.f32 %v1875, %v2011
      %v2058 = vadd.f32 %v1876, %v2014
      %v2059 = vadd.f32 %v1877, %v2019
      %v2060 = vadd.f32 %v1878, %v2022
      %v2061 = vadd.f32 %v1879, %v2027
      %v2062 = vadd.f32 %v1880, %v2030
      %v2063 = vadd.f32 %v1881, %v2035
      %v2064 = vadd.f32 %v1882, %v2038
      %v2065 = vadd.f32 %v1883, %v2043
      %v2066 = vadd.f32 %v1884, %v2046
      %v2067 = vadd.f32 %v1885, %v2051
      %v2068 = vadd.f32 %v1886, %v2054
      %v2070 = vlaneseq
      %v2071 = vshrl.u32 %v2070, 7
      %v2072 = vsub.s32 0, %v2071
      %v2073 = vrot.slane %v199, %v2072
      %v2075 = vmul.f32 %v2057, %v2073
      %v2076 = vmul.f32 %v2058, %v2073
      %v2077 = vmul.f32 %v2059, %v2073
      %v2078 = vmul.f32 %v2060, %v2073
      %v2079 = vmul.f32 %v2061, %v2073
      %v2080 = vmul.f32 %v2062, %v2073
      %v2081 = vmul.f32 %v2063, %v2073
      %v2082 = vmul.f32 %v2064, %v2073
      %v2083 = vmul.f32 %v2065, %v2073
      %v2084 = vmul.f32 %v2066, %v2073
      %v2085 = vmul.f32 %v2067, %v2073
      %v2086 = vmul.f32 %v2068, %v2073
      %v2088 = vlaneseq
      %v2089 = vshrl.u32 %v2088, 7
      %v2090 = vsub.s32 0, %v2089
      %v2091 = vrot.slane %v200, %v2090
      %v2093 = vadd.f32 %v2075, %v2091
      %v2094 = vadd.f32 %v2076, %v2091
      %v2095 = vadd.f32 %v2077, %v2091
      %v2096 = vadd.f32 %v2078, %v2091
      %v2097 = vadd.f32 %v2079, %v2091
      %v2098 = vadd.f32 %v2080, %v2091
      %v2099 = vadd.f32 %v2081, %v2091
      %v2100 = vadd.f32 %v2082, %v2091
      %v2101 = vadd.f32 %v2083, %v2091
      %v2102 = vadd.f32 %v2084, %v2091
      %v2103 = vadd.f32 %v2085, %v2091
      %v2104 = vadd.f32 %v2086, %v2091
      %v2105 = vmax.f32 %v2093, 0.0
      %v2106 = vmax.f32 %v2094, 0.0
      %v2107 = vmax.f32 %v2095, 0.0
      %v2108 = vmax.f32 %v2096, 0.0
      %v2109 = vmax.f32 %v2097, 0.0
      %v2110 = vmax.f32 %v2098, 0.0
      %v2111 = vmax.f32 %v2099, 0.0
      %v2112 = vmax.f32 %v2100, 0.0
      %v2113 = vmax.f32 %v2101, 0.0
      %v2114 = vmax.f32 %v2102, 0.0
      %v2115 = vmax.f32 %v2103, 0.0
      %v2116 = vmax.f32 %v2104, 0.0
      %v2117 = vpack.c.bf16 %v2106, %v2105
      %v2118 = vpack.c.bf16 %v2108, %v2107
      %v2119 = vpack.c.bf16 %v2110, %v2109
      %v2120 = vpack.c.bf16 %v2112, %v2111
      %v2121 = vpack.c.bf16 %v2114, %v2113
      %v2122 = vpack.c.bf16 %v2116, %v2115
      %v2129 = vunpack.c.l.b16 %v2117
      %v2130 = vunpack.c.h.b16 %v2117
      %v2131 = vunpack.c.l.b16 %v2118
      %v2132 = vunpack.c.h.b16 %v2118
      %v2133 = vunpack.c.l.b16 %v2119
      %v2134 = vunpack.c.h.b16 %v2119
      %v2135 = vunpack.c.l.b16 %v2120
      %v2136 = vunpack.c.h.b16 %v2120
      %v2137 = vunpack.c.l.b16 %v2121
      %v2138 = vunpack.c.h.b16 %v2121
      %v2139 = vunpack.c.l.b16 %v2122
      %v2140 = vunpack.c.h.b16 %v2122
      %v2141 = vpack.c.b16 %v2129, %v2129
      %v2142 = vpack.c.b16 %v2130, %v2130
      %v2143 = vpack.c.b16 %v2131, %v2131
      %v2144 = vpack.c.b16 %v2132, %v2132
      %v2145 = vpack.c.b16 %v2133, %v2133
      %v2146 = vpack.c.b16 %v2134, %v2134
      %v2147 = vpack.c.b16 %v2135, %v2135
      %v2148 = vpack.c.b16 %v2136, %v2136
      %v2149 = vpack.c.b16 %v2137, %v2137
      %v2150 = vpack.c.b16 %v2138, %v2138
      %v2151 = vpack.c.b16 %v2139, %v2139
      %v2152 = vpack.c.b16 %v2140, %v2140
      %2165 = vst [vmem:[%s197] sm:$0xf] %v2141
      %2166 = vst [vmem:[%s197 + $0x4] sm:$0xf] %v2142
      %2167 = vst [vmem:[%s197 + $0x8] sm:$0xf] %v2143
      %2168 = vst [vmem:[%s197 + $0xc] sm:$0xf] %v2144
      %2169 = vst [vmem:[%s197 + $0x10] sm:$0xf] %v2145
      %2170 = vst [vmem:[%s197 + $0x14] sm:$0xf] %v2146
      %2171 = vst [vmem:[%s197 + $0x18] sm:$0xf] %v2147
      %2172 = vst [vmem:[%s197 + $0x1c] sm:$0xf] %v2148
      %2173 = vst [vmem:[%s197 + $0x20] sm:$0xf] %v2149
      %2174 = vst [vmem:[%s197 + $0x24] sm:$0xf] %v2150
      %2175 = vst [vmem:[%s197 + $0x28] sm:$0xf] %v2151
      %2176 = vst [vmem:[%s197 + $0x2c] sm:$0xf] %v2152
      %p2177 = scmp.lt.s32.totalorder %s15, 1
      %s2178 = scalar_select %p2177, %s15, 1
      %s2179 = smul.addr %s2178, 12
      %s2180 = smul.addr %s2179, 4
      %s2181 = scalar_lea.vmem %s4, %s2180
      // Predicated region
      $region37: #{cnn_forward.9} parent=35 // pred_check
        %p2182 = pneg %p122
      $region38: #{cnn_forward.9} parent=35 // pred_check_branch
        %2184 = sbr.rel (%p2182) target = $region40
      $region39: #{cnn_forward.9} parent=35 // pred_region
        _
      $region40: #{cnn_forward.9} parent=35 // pred_fallthru
        _
    $region36: #{cnn_forward.9} parent=5 // pred_fallthru
      _
    %p2185 = scmp.le.s32.totalorder 2, %s10
    // Predicated region
    $region41: #{cnn_forward.9} parent=5 // pred_check
      %p2186 = pneg %p2185
    $region42: #{cnn_forward.9} parent=5 // pred_check_branch
      %2188 = sbr.rel (%p2186) target = $region44
    $region43: #{cnn_forward.9} parent=5 // pred_region
      %s2189 = ssub.s32 %s10, 2
      // Predicated region
      $region45: #{cnn_forward.9} parent=43 // pred_check
        %p2190 = pneg %p128
      $region46: #{cnn_forward.9} parent=43 // pred_check_branch
        %2192 = sbr.rel (%p2190) target = $region48
      $region47: #{cnn_forward.9} parent=43 // pred_region
        %p2193 = scmp.lt.s32.totalorder %s16, 1
        %s2194 = scalar_select %p2193, %s16, 1
        %s2195 = smul.addr %s2194, 12
        %s2196 = smul.addr %s2195, 4
        %s2197 = scalar_lea.vmem %s4, %s2196
      $region48: #{cnn_forward.9} parent=43 // pred_fallthru
        _
    $region44: #{cnn_forward.9} parent=5 // pred_fallthru
      _
  $region6: #{cnn_forward.9} parent=0 // loop_footer
    %s14 = sadd.s32 1, %s10
  $region7: #{cnn_forward.9} parent=0 // loop_footer_branch
    %9 = sbr.rel target = $region3
  $region8: #{cnn_forward.9} parent=0 // loop_exit
    _

// kernel: cnn_forward.10
$region0: #{cnn_forward.10}
  #allocation0 [shape = 'u32[]', space=smem, size = 0x4, offset = 0x4, fixed_abs, tag = 'smem constant byte address 0x4 - core index']
  #allocation1 [shape = 'u32[144,128]{1,0:T(1,128)}', space=vmem, size = 0x12000, scoped, tag = 'internal scratch']
  %s0 = inlined_call_operand.vmem [shape: bf16[2,96,128], index: 0, kind: input, shape index: {}]
  %s1 = inlined_call_operand.vmem [shape: bf16[48,41], index: 1, kind: input, shape index: {}]
  %s2 = inlined_call_operand.vmem [shape: bf16[2,48,128], index: 2, kind: output, shape index: {}]
  %s3 = sld [smem:[#allocation0]]
  $region41: #{cnn_forward.10} parent=0
    _
  %s5 = ssub.s32 1, %s3
  %s6 = scalar_select 0, %s5, %s3
  loop: start=0, step=1, limit=4
  $region2: #{cnn_forward.10} parent=0 // loop_pre_header
    _
  $region3: #{cnn_forward.10} parent=0 // loop_header
    %s8 = sphi 0, %s12
    %p9 = scmp.ge.s32.totalorder %s8, 4
    %s18 = sphi 0, %s20
    %s21 = sphi 0, %s18
    %s22 = sphi 0, %s21
    %s38 = sphi 0, %s22
    %s42 = sphi 0, %s42
    %s44 = sphi 0, %s42
    %s45 = sphi 0, %s44
    %s59 = sphi 0, %s45
    %s65 = sphi 0, %s67
    %s68 = sphi 0, %s65
    %s69 = sphi 0, %s68
    %s85 = sphi 0, %s69
  $region4: #{cnn_forward.10} parent=0 // loop_header_branch
    %11 = sbr.rel (%p9) target = $region8
  $region5: #{cnn_forward.10} parent=0 // loop_body
    %s13 = ssub.s32 %s8, 1
    %s14 = ssub.s32 %s8, 2
    %s15 = sadd.s32 %s8, 1
    %s16 = ssub.s32 %s8, %s15
    %p17 = scmp.eq.s32.totalorder %s16, 0
    %s19 = sadd.s32 %s18, 1
    %s20 = scalar_select %p17, %s18, %s19
    %p23 = pneg %p17
    %p24 = scmp.eq.s32.totalorder %s8, 1
    %p25 = por %p23, %p24
    %p26 = scmp.ne.s32.totalorder %s18, %s21
    %p27 = scmp.eq.s32.totalorder %s8, 0
    %p28 = por %p26, %p27
    %p29 = scmp.ne.s32.totalorder %s18, %s21
    %p30 = scmp.eq.s32.totalorder %s13, 1
    %p31 = por %p29, %p30
    %p32 = scmp.ne.s32.totalorder %s21, %s22
    %p33 = scmp.eq.s32.totalorder %s13, 0
    %p34 = por %p32, %p33
    %p35 = scmp.ne.s32.totalorder %s21, %s22
    %p36 = scmp.eq.s32.totalorder %s14, 1
    %p37 = por %p35, %p36
    %p39 = scmp.ne.s32.totalorder %s22, %s38
    %p40 = scmp.eq.s32.totalorder %s14, 0
    %p41 = por %p39, %p40
    %s43 = sadd.s32 %s42, 1
    %p46 = scmp.eq.s32.totalorder %s8, 1
    %p47 = scmp.ne.s32.totalorder %s42, %s44
    %p48 = scmp.eq.s32.totalorder %s8, 0
    %p49 = por %p47, %p48
    %p50 = scmp.ne.s32.totalorder %s42, %s44
    %p51 = scmp.eq.s32.totalorder %s13, 1
    %p52 = por %p50, %p51
    %p53 = scmp.ne.s32.totalorder %s44, %s45
    %p54 = scmp.eq.s32.totalorder %s13, 0
    %p55 = por %p53, %p54
    %p56 = scmp.ne.s32.totalorder %s44, %s45
    %p57 = scmp.eq.s32.totalorder %s14, 1
    %p58 = por %p56, %p57
    %p60 = scmp.ne.s32.totalorder %s45, %s59
    %p61 = scmp.eq.s32.totalorder %s14, 0
    %p62 = por %p60, %p61
    %s63 = ssub.s32 %s8, %s15
    %p64 = scmp.eq.s32.totalorder %s63, 0
    %s66 = sadd.s32 %s65, 1
    %s67 = scalar_select %p64, %s65, %s66
    %p70 = pneg %p64
    %p71 = scmp.eq.s32.totalorder %s8, 1
    %p72 = por %p70, %p71
    %p73 = scmp.ne.s32.totalorder %s65, %s68
    %p74 = scmp.eq.s32.totalorder %s8, 0
    %p75 = por %p73, %p74
    %p76 = scmp.ne.s32.totalorder %s65, %s68
    %p77 = scmp.eq.s32.totalorder %s13, 1
    %p78 = por %p76, %p77
    %p79 = scmp.ne.s32.totalorder %s68, %s69
    %p80 = scmp.eq.s32.totalorder %s13, 0
    %p81 = por %p79, %p80
    %p82 = scmp.ne.s32.totalorder %s68, %s69
    %p83 = scmp.eq.s32.totalorder %s14, 1
    %p84 = por %p82, %p83
    %p86 = scmp.ne.s32.totalorder %s69, %s85
    %p87 = scmp.eq.s32.totalorder %s14, 0
    %p88 = por %p86, %p87
    %p89 = scmp.le.s32.totalorder 1, %s8
    %p90 = scmp.lt.s32.totalorder %s8, 3
    %p91 = pnand %p89, %p90
    %p92 = pneg %p91
    // Predicated region
    $region9: #{cnn_forward.10} parent=5 // pred_check
      _
    $region10: #{cnn_forward.10} parent=5 // pred_check_branch
      %94 = sbr.rel (%p91) target = $region12
    $region11: #{cnn_forward.10} parent=5 // pred_region
      %s95 = ssub.s32 %s8, 1
      // Predicated region
      $region13: #{cnn_forward.10} parent=11 // pred_check
        %p96 = pneg %p55
      $region14: #{cnn_forward.10} parent=11 // pred_check_branch
        %98 = sbr.rel (%p96) target = $region16
      $region15: #{cnn_forward.10} parent=11 // pred_region
        _
      $region16: #{cnn_forward.10} parent=11 // pred_fallthru
        _
    $region12: #{cnn_forward.10} parent=5 // pred_fallthru
      _
    %p99 = scmp.lt.s32.totalorder %s8, 2
    // Predicated region
    $region17: #{cnn_forward.10} parent=5 // pred_check
      %p100 = pneg %p99
    $region18: #{cnn_forward.10} parent=5 // pred_check_branch
      %102 = sbr.rel (%p100) target = $region20
    $region19: #{cnn_forward.10} parent=5 // pred_region
      // Predicated region
      $region21: #{cnn_forward.10} parent=19 // pred_check
        %p103 = pneg %p28
      $region22: #{cnn_forward.10} parent=19 // pred_check_branch
        %105 = sbr.rel (%p103) target = $region24
      $region23: #{cnn_forward.10} parent=19 // pred_region
        %p106 = scmp.lt.s32.totalorder %s8, 1
        %s107 = scalar_select %p106, %s8, 1
        %s108 = smul.addr %s107, 12
        %s109 = smul.addr %s108, 4
        %s110 = scalar_lea.vmem %s0, %s109
      $region24: #{cnn_forward.10} parent=19 // pred_fallthru
        _
    $region20: #{cnn_forward.10} parent=5 // pred_fallthru
      _
    %p111 = scmp.le.s32.totalorder 1, %s8
    %p112 = scmp.lt.s32.totalorder %s8, 3
    %p113 = pnand %p111, %p112
    %p114 = pneg %p113
    // Predicated region
    $region25: #{cnn_forward.10} parent=5 // pred_check
      _
    $region26: #{cnn_forward.10} parent=5 // pred_check_branch
      %116 = sbr.rel (%p113) target = $region28
    $region27: #{cnn_forward.10} parent=5 // pred_region
      %s117 = ssub.s32 %s8, 1
      %p118 = scmp.lt.s32.totalorder %s13, 1
      %s119 = scalar_select %p118, %s13, 1
      %s120 = smul.addr %s119, 12
      %s121 = smul.addr %s120, 4
      %s122 = scalar_lea.vmem %s0, %s121
      %p123 = pneg %p34
      %p124 = pneg %p31
      %p125 = pneg %p55
      %p126 = pneg %p52
      %p127 = pneg %p81
      %p128 = pneg %p78
      %p129 = scmp.lt.s32.totalorder %s13, 1
      %s130 = scalar_select %p129, %s13, 1
      %s131 = smul.addr %s130, 6
      %s132 = smul.addr %s131, 4
      %s133 = scalar_lea.vmem %s2, %s132
      %p134 = scmp.lt.s32.totalorder %s13, 1
      %s135 = scalar_select %p134, %s13, 1
      %s136 = smul.addr %s135, 12
      %s137 = smul.addr %s136, 4
      %s138 = scalar_lea.vmem %s0, %s137
      %p139 = scmp.lt.s32.totalorder %s13, 1
      %s140 = scalar_select %p139, %s13, 1
      %s141 = smul.addr %s140, 6
      %s142 = smul.addr %s141, 4
      %s143 = scalar_lea.vmem %s2, %s142
      %v145 = vld [vmem:[%s138] sm:$0xf]
      %v146 = vld [vmem:[%s138 + $0x4] sm:$0xf]
      %v147 = vld [vmem:[%s138 + $0x8] sm:$0xf]
      %v148 = vld [vmem:[%s138 + $0xc] sm:$0xf]
      %v149 = vld [vmem:[%s138 + $0x10] sm:$0xf]
      %v150 = vld [vmem:[%s138 + $0x14] sm:$0x1]
      %vm151 = vsmask.f32 3328
      %vm152 = vsmask.f32 7440
      %vm153 = vmor %vm151, %vm152
      %v155 = vshrl.u32 %v145, 16
      %v157 = vrot.slane %v155, 4
      %v158 = vshll.u32 %v145, 16
      %v160 = vrot.slane %v158, 5
      %v161 = vor.u32 %v157, %v160
      %v162 = vrot.slane %v161, 4
      %v164 = vshll.u32 %v146, 16
      %v166 = vrot.slane %v164, 5
      %v167 = vsel %vm153, %v162, %v166
      %v168 = vshrl.u32 %v146, 16
      %v170 = vrot.slane %v168, 4
      %v171 = vor.u32 %v170, %v166
      %v172 = vrot.slane %v171, 4
      %v174 = vshll.u32 %v147, 16
      %v176 = vrot.slane %v174, 5
      %v177 = vsel %vm153, %v172, %v176
      %v178 = vshrl.u32 %v147, 16
      %v180 = vrot.slane %v178, 4
      %v181 = vor.u32 %v180, %v176
      %v182 = vrot.slane %v181, 4
      %v184 = vshll.u32 %v148, 16
      %v186 = vrot.slane %v184, 5
      %v187 = vsel %vm153, %v182, %v186
      %v188 = vshrl.u32 %v148, 16
      %v190 = vrot.slane %v188, 4
      %v191 = vor.u32 %v190, %v186
      %v192 = vrot.slane %v191, 4
      %v194 = vshll.u32 %v149, 16
      %v196 = vrot.slane %v194, 5
      %v197 = vsel %vm153, %v192, %v196
      %v198 = vshrl.u32 %v149, 16
      %v200 = vrot.slane %v198, 4
      %v201 = vor.u32 %v200, %v196
      %v202 = vrot.slane %v201, 4
      %v204 = vshll.u32 %v150, 16
      %v206 = vrot.slane %v204, 5
      %v207 = vsel %vm153, %v202, %v206
      %v208 = vshrl.u32 %v150, 16
      %v210 = vrot.slane %v208, 4
      %v211 = vrot.slane %v210, 4
      %v218 = vmax.bf16 %v145, %v167
      %v219 = vmax.bf16 %v146, %v177
      %v220 = vmax.bf16 %v147, %v187
      %v221 = vmax.bf16 %v148, %v197
      %v222 = vmax.bf16 %v149, %v207
      %v223 = vmax.bf16 %v150, %v211
      %v224 = vld [vmem:[%s138] sm:$0xe]
      %v225 = vld [vmem:[%s138 + $0x14] sm:$0x3]
      %vm232 = vcmask 1042432
      %vm233 = vcmask 1046532
      %vm234 = vmor %vm232, %vm233
      %v235 = vrot.slane %v224, 5
      %v236 = vrot.slane %v235, 4
      %v237 = vrot.slane %v146, 5
      %v238 = vsel %vm234, %v236, %v237
      %v239 = vrot.slane %v237, 4
      %v240 = vrot.slane %v147, 5
      %v241 = vsel %vm234, %v239, %v240
      %v242 = vrot.slane %v240, 4
      %v243 = vrot.slane %v148, 5
      %v244 = vsel %vm234, %v242, %v243
      %v245 = vrot.slane %v243, 4
      %v246 = vrot.slane %v149, 5
      %v247 = vsel %vm234, %v245, %v246
      %v248 = vrot.slane %v246, 4
      %v249 = vrot.slane %v225, 5
      %v250 = vsel %vm234, %v248, %v249
      %v251 = vrot.slane %v249, 4
      %v258 = vmax.bf16 %v218, %v238
      %v259 = vmax.bf16 %v219, %v241
      %v260 = vmax.bf16 %v220, %v244
      %v261 = vmax.bf16 %v221, %v247
      %v262 = vmax.bf16 %v222, %v250
      %v263 = vmax.bf16 %v223, %v251
      %v264 = vld [vmem:[%s138 + $0x14] sm:$0xf]
      %v265 = vld [vmem:[%s138 + $0x18] sm:$0x1]
      %v267 = vshll.u32 %v264, 16
      %v269 = vrot.slane %v267, 5
      %v270 = vsel %vm153, %v202, %v269
      %v271 = vshrl.u32 %v264, 16
      %v273 = vrot.slane %v271, 4
      %v274 = vor.u32 %v273, %v269
      %v275 = vrot.slane %v274, 4
      %v277 = vshll.u32 %v265, 16
      %v279 = vrot.slane %v277, 5
      %v280 = vsel %vm153, %v275, %v279
      %v281 = vshrl.u32 %v265, 16
      %v283 = vrot.slane %v281, 4
      %v284 = vrot.slane %v283, 4
      %v288 = vmax.bf16 %v258, %v177
      %v289 = vmax.bf16 %v259, %v187
      %v290 = vmax.bf16 %v260, %v197
      %v291 = vmax.bf16 %v261, %v270
      %v292 = vmax.bf16 %v262, %v280
      %v293 = vmax.bf16 %v263, %v284
      %v294 = vld [vmem:[%s138 + $0x4] sm:$0xe]
      %v295 = vld [vmem:[%s138 + $0x18] sm:$0x3]
      %v299 = vrot.slane %v294, 5
      %v300 = vrot.slane %v299, 4
      %v301 = vsel %vm234, %v300, %v240
      %v302 = vrot.slane %v264, 5
      %v303 = vsel %vm234, %v248, %v302
      %v304 = vrot.slane %v302, 4
      %v305 = vrot.slane %v295, 5
      %v306 = vsel %vm234, %v304, %v305
      %v307 = vrot.slane %v305, 4
      %v312 = vmax.bf16 %v288, %v301
      %v313 = vmax.bf16 %v289, %v244
      %v314 = vmax.bf16 %v290, %v247
      %v315 = vmax.bf16 %v291, %v303
      %v316 = vmax.bf16 %v292, %v306
      %v317 = vmax.bf16 %v293, %v307
      %vm318 = vsmask.f32 2304
      %vm319 = vsmask.f32 6416
      %vm320 = vmor %vm318, %vm319
      %v322 = vshrl.u32 %v294, 16
      %v324 = vrot.slane %v322, 5
      %v325 = vshll.u32 %v294, 16
      %v327 = vrot.slane %v325, 6
      %v328 = vor.u32 %v324, %v327
      %v329 = vrot.slane %v328, 4
      %v330 = vrot.slane %v178, 5
      %v331 = vrot.slane %v174, 6
      %v332 = vor.u32 %v330, %v331
      %v333 = vsel %vm320, %v329, %v332
      %v334 = vrot.slane %v332, 4
      %v335 = vrot.slane %v188, 5
      %v336 = vrot.slane %v184, 6
      %v337 = vor.u32 %v335, %v336
      %v338 = vsel %vm320, %v334, %v337
      %v339 = vrot.slane %v337, 4
      %v340 = vrot.slane %v198, 5
      %v341 = vrot.slane %v194, 6
      %v342 = vor.u32 %v340, %v341
      %v343 = vsel %vm320, %v339, %v342
      %v344 = vrot.slane %v342, 4
      %v345 = vrot.slane %v271, 5
      %v346 = vrot.slane %v267, 6
      %v347 = vor.u32 %v345, %v346
      %v348 = vsel %vm320, %v344, %v347
      %v349 = vrot.slane %v347, 4
      %v351 = vshrl.u32 %v295, 16
      %v353 = vrot.slane %v351, 5
      %v354 = vshll.u32 %v295, 16
      %v356 = vrot.slane %v354, 6
      %v357 = vor.u32 %v353, %v356
      %v358 = vsel %vm320, %v349, %v357
      %v359 = vrot.slane %v353, 4
      %v366 = vmax.bf16 %v312, %v333
      %v367 = vmax.bf16 %v313, %v338
      %v368 = vmax.bf16 %v314, %v343
      %v369 = vmax.bf16 %v315, %v348
      %v370 = vmax.bf16 %v316, %v358
      %v371 = vmax.bf16 %v317, %v359
      %v372 = vld [vmem:[%s138 + $0x8] sm:$0xe]
      %v373 = vld [vmem:[%s138 + $0x18] sm:$0xf]
      %v374 = vld [vmem:[%s138 + $0x1c] sm:$0x3]
      %v378 = vrot.slane %v372, 5
      %v379 = vrot.slane %v378, 4
      %v380 = vsel %vm234, %v379, %v243
      %v381 = vrot.slane %v373, 5
      %v382 = vsel %vm234, %v304, %v381
      %v383 = vrot.slane %v381, 4
      %v384 = vrot.slane %v374, 5
      %v385 = vsel %vm234, %v383, %v384
      %v386 = vrot.slane %v384, 4
      %v391 = vmax.bf16 %v366, %v380
      %v392 = vmax.bf16 %v367, %v247
      %v393 = vmax.bf16 %v368, %v303
      %v394 = vmax.bf16 %v369, %v382
      %v395 = vmax.bf16 %v370, %v385
      %v396 = vmax.bf16 %v371, %v386
      %v398 = vshrl.u32 %v372, 16
      %v400 = vrot.slane %v398, 5
      %v401 = vshll.u32 %v372, 16
      %v403 = vrot.slane %v401, 6
      %v404 = vor.u32 %v400, %v403
      %v405 = vrot.slane %v404, 4
      %v406 = vsel %vm320, %v405, %v337
      %v408 = vshrl.u32 %v373, 16
      %v410 = vrot.slane %v408, 5
      %v411 = vshll.u32 %v373, 16
      %v413 = vrot.slane %v411, 6
      %v414 = vor.u32 %v410, %v413
      %v415 = vsel %vm320, %v349, %v414
      %v416 = vrot.slane %v414, 4
      %v418 = vshrl.u32 %v374, 16
      %v420 = vrot.slane %v418, 5
      %v421 = vshll.u32 %v374, 16
      %v423 = vrot.slane %v421, 6
      %v424 = vor.u32 %v420, %v423
      %v425 = vsel %vm320, %v416, %v424
      %v426 = vrot.slane %v420, 4
      %v431 = vmax.bf16 %v391, %v406
      %v432 = vmax.bf16 %v392, %v343
      %v433 = vmax.bf16 %v393, %v348
      %v434 = vmax.bf16 %v394, %v415
      %v435 = vmax.bf16 %v395, %v425
      %v436 = vmax.bf16 %v396, %v426
      %v437 = vld [vmem:[%s138 + $0x8] sm:$0xc]
      %v438 = vld [vmem:[%s138 + $0x1c] sm:$0x7]
      %vm441 = vcmask 1041408
      %vm442 = vcmask 1045508
      %vm443 = vmor %vm441, %vm442
      %v444 = vrot.slane %v437, 6
      %v445 = vrot.slane %v444, 4
      %v446 = vrot.slane %v148, 6
      %v447 = vsel %vm443, %v445, %v446
      %v448 = vrot.slane %v446, 4
      %v449 = vrot.slane %v149, 6
      %v450 = vsel %vm443, %v448, %v449
      %v451 = vrot.slane %v449, 4
      %v452 = vrot.slane %v264, 6
      %v453 = vsel %vm443, %v451, %v452
      %v454 = vrot.slane %v452, 4
      %v455 = vrot.slane %v373, 6
      %v456 = vsel %vm443, %v454, %v455
      %v457 = vrot.slane %v455, 4
      %v458 = vrot.slane %v438, 6
      %v459 = vsel %vm443, %v457, %v458
      %v460 = vrot.slane %v458, 4
      %v467 = vmax.bf16 %v431, %v447
      %v468 = vmax.bf16 %v432, %v450
      %v469 = vmax.bf16 %v433, %v453
      %v470 = vmax.bf16 %v434, %v456
      %v471 = vmax.bf16 %v435, %v459
      %v472 = vmax.bf16 %v436, %v460
      %v473 = vld [vmem:[%s1] sm:$0xf]
      %v474 = vld [vmem:[%s1 + $0x4] sm:$0xf]
      %v475 = vld [vmem:[%s1 + $0x8] sm:$0xf]
      %v476 = vld [vmem:[%s1 + $0xc] sm:$0xf]
      %v477 = vld [vmem:[%s1 + $0x10] sm:$0xf]
      %v478 = vld [vmem:[%s1 + $0x14] sm:$0xf]
      %v485 = vunpack.c.l.b16 %v473
      %v486 = vunpack.c.l.b16 %v474
      %v487 = vunpack.c.l.b16 %v475
      %v488 = vunpack.c.l.b16 %v476
      %v489 = vunpack.c.l.b16 %v477
      %v490 = vunpack.c.l.b16 %v478
      %v491 = vpack.c.b16 %v486, %v485
      %v492 = vpack.c.b16 %v488, %v487
      %v493 = vpack.c.b16 %v490, %v489
      %v500 = vunpack.c.l.b16 %v467
      %v501 = vunpack.c.l.b16 %v468
      %v502 = vunpack.c.l.b16 %v469
      %v503 = vunpack.c.l.b16 %v470
      %v504 = vunpack.c.l.b16 %v471
      %v505 = vunpack.c.l.b16 %v472
      %v506 = vpack.c.b16 %v501, %v500
      %v507 = vpack.c.b16 %v503, %v502
      %v508 = vpack.c.b16 %v505, %v504
      %vm511 = vcmask 334848
      %v513 = vsel %vm511, %v491, 0
      %v516 = vsel %vm511, %v492, 0
      %v519 = vsel %vm511, %v493, 0
      %vm521 = vcmask 1043456
      %vm522 = vcmask 1044480
      %v523 = vsel %vm521, 4294967295, 65535
      %v524 = vsel %vm522, %v523, 0
      %v526 = vand.u32 %v508, %v524
      %528 = vmatprep.subr.bf16.mxu0 0
      %529 = vmatpush1.bf16.msra.mxu0 %v506
      %530 = vmatprep.subr.bf16.mxu0 0
      %531 = vmatpush1.bf16.msra.mxu0 %v507
      %532 = vmatprep.subr.bf16.mxu0 0
      %533 = vmatpush1.bf16.msra.mxu0 %v526
      %534 = vmatprep.subr.bf16.mxu0 0
      %535 = vmatpush1.bf16.msra.mxu0 0
      %536 = vmatprep.subr.bf16.mxu0 0
      %537 = vmatpush1.bf16.msra.mxu0 0
      %538 = vmatprep.subr.bf16.mxu0 0
      %539 = vmatpush1.bf16.msra.mxu0 0
      %540 = vmatprep.subr.bf16.mxu0 0
      %541 = vmatpush1.bf16.msra.mxu0 0
      %542 = vmatprep.subr.bf16.mxu0 0
      %543 = vmatpush1.bf16.msra.mxu0 0
      %544 = vmatprep.subr.bf16.mxu0 0
      %545 = vmatpush1.bf16.msra.mxu0 0
      %546 = vmatprep.subr.bf16.mxu0 0
      %547 = vmatpush1.bf16.msra.mxu0 0
      %548 = vmatprep.subr.bf16.mxu0 0
      %549 = vmatpush1.bf16.msra.mxu0 0
      %550 = vmatprep.subr.bf16.mxu0 0
      %551 = vmatpush1.bf16.msra.mxu0 0
      %552 = vmatprep.subr.bf16.mxu0 0
      %553 = vmatpush1.bf16.msra.mxu0 0
      %554 = vmatprep.subr.bf16.mxu0 0
      %555 = vmatpush1.bf16.msra.mxu0 0
      %556 = vmatprep.subr.bf16.mxu0 0
      %557 = vmatpush1.bf16.msra.mxu0 0
      %558 = vmatprep.subr.bf16.mxu0 0
      %559 = vmatpush1.bf16.msra.mxu0 0
      %560 = vmatprep.mubr.bf16.mxu0 0
      %561 = vmatmul.mubr.bf16.gmra.mrb[0].mxu0 %v513
      %v562 = vpop.f32.mrb[0].mxu0
      %v563 = vadd.f32 0.0, %v562
      %v564 = vpop.f32.mrb[0].mxu0
      %v565 = vpop.f32.mrb[0].mxu0
      %v566 = vadd.f32 0.0, %v565
      %v567 = vpop.f32.mrb[0].mxu0
      %568 = vmatprep.mubr.bf16.mxu0 0
      %569 = vmatmul.mubr.bf16.gmra.mrb[0].mxu0 %v516
      %v570 = vpop.f32.mrb[0].mxu0
      %v571 = vadd.f32 0.0, %v570
      %v572 = vpop.f32.mrb[0].mxu0
      %v573 = vpop.f32.mrb[0].mxu0
      %v574 = vadd.f32 0.0, %v573
      %v575 = vpop.f32.mrb[0].mxu0
      %576 = vmatprep.mubr.bf16.mxu0 0
      %577 = vmatmul.mubr.bf16.gmra.mrb[0].mxu0 %v519
      %v578 = vpop.f32.mrb[0].mxu0
      %v579 = vadd.f32 0.0, %v578
      %v580 = vpop.f32.mrb[0].mxu0
      %v581 = vpop.f32.mrb[0].mxu0
      %v582 = vadd.f32 0.0, %v581
      %v583 = vpop.f32.mrb[0].mxu0
      %584 = vdwg.mxu0
      %v585 = vpack.c.bf16 %v566, %v563
      %v586 = vpack.c.bf16 %v574, %v571
      %v587 = vpack.c.bf16 %v582, %v579
      %v591 = vunpack.c.l.b16 %v585
      %v592 = vunpack.c.h.b16 %v585
      %v593 = vunpack.c.l.b16 %v586
      %v594 = vunpack.c.h.b16 %v586
      %v595 = vunpack.c.l.b16 %v587
      %v596 = vunpack.c.h.b16 %v587
      %v597 = vpack.c.b16 %v591, %v591
      %v598 = vpack.c.b16 %v592, %v592
      %v599 = vpack.c.b16 %v593, %v593
      %v600 = vpack.c.b16 %v594, %v594
      %v601 = vpack.c.b16 %v595, %v595
      %v602 = vpack.c.b16 %v596, %v596
      %609 = vst [vmem:[%s143] sm:$0xf] %v597
      %610 = vst [vmem:[%s143 + $0x4] sm:$0xf] %v598
      %611 = vst [vmem:[%s143 + $0x8] sm:$0xf] %v599
      %612 = vst [vmem:[%s143 + $0xc] sm:$0xf] %v600
      %613 = vst [vmem:[%s143 + $0x10] sm:$0xf] %v601
      %614 = vst [vmem:[%s143 + $0x14] sm:$0xf] %v602
      %p615 = scmp.lt.s32.totalorder %s13, 1
      %s616 = scalar_select %p615, %s13, 1
      %s617 = smul.addr %s616, 6
      %s618 = smul.addr %s617, 4
      %s619 = scalar_lea.vmem %s2, %s618
      // Predicated region
      $region29: #{cnn_forward.10} parent=27 // pred_check
        %p620 = pneg %p78
      $region30: #{cnn_forward.10} parent=27 // pred_check_branch
        %622 = sbr.rel (%p620) target = $region32
      $region31: #{cnn_forward.10} parent=27 // pred_region
        _
      $region32: #{cnn_forward.10} parent=27 // pred_fallthru
        _
    $region28: #{cnn_forward.10} parent=5 // pred_fallthru
      _
    %p623 = scmp.le.s32.totalorder 2, %s8
    // Predicated region
    $region33: #{cnn_forward.10} parent=5 // pred_check
      %p624 = pneg %p623
    $region34: #{cnn_forward.10} parent=5 // pred_check_branch
      %626 = sbr.rel (%p624) target = $region36
    $region35: #{cnn_forward.10} parent=5 // pred_region
      %s627 = ssub.s32 %s8, 2
      // Predicated region
      $region37: #{cnn_forward.10} parent=35 // pred_check
        %p628 = pneg %p84
      $region38: #{cnn_forward.10} parent=35 // pred_check_branch
        %630 = sbr.rel (%p628) target = $region40
      $region39: #{cnn_forward.10} parent=35 // pred_region
        %p631 = scmp.lt.s32.totalorder %s14, 1
        %s632 = scalar_select %p631, %s14, 1
        %s633 = smul.addr %s632, 6
        %s634 = smul.addr %s633, 4
        %s635 = scalar_lea.vmem %s2, %s634
      $region40: #{cnn_forward.10} parent=35 // pred_fallthru
        _
    $region36: #{cnn_forward.10} parent=5 // pred_fallthru
      _
  $region6: #{cnn_forward.10} parent=0 // loop_footer
    %s12 = sadd.s32 1, %s8
  $region7: #{cnn_forward.10} parent=0 // loop_footer_branch
    %7 = sbr.rel target = $region3
  $region8: #{cnn_forward.10} parent=0 // loop_exit
    _

// kernel: cnn_forward.8
$region0: #{cnn_forward.8}
  #allocation0 [shape = 'u32[]', space=smem, size = 0x4, offset = 0x4, fixed_abs, tag = 'smem constant byte address 0x4 - core index']
  #allocation1 [shape = 'u32[144,128]{1,0:T(1,128)}', space=vmem, size = 0x12000, scoped, tag = 'internal scratch']
  %s0 = inlined_call_operand.vmem [shape: bf16[2,336,128], index: 0, kind: input, shape index: {}]
  %s1 = inlined_call_operand.vmem [shape: bf16[128,229], index: 1, kind: input, shape index: {}]
  %s2 = inlined_call_operand.vmem [shape: bf16[2,128,128], index: 2, kind: output, shape index: {}]
  %s3 = sld [smem:[#allocation0]]
  $region41: #{cnn_forward.8} parent=0
    _
  %s5 = ssub.s32 1, %s3
  %s6 = scalar_select 0, %s5, %s3
  loop: start=0, step=1, limit=4
  $region2: #{cnn_forward.8} parent=0 // loop_pre_header
    _
  $region3: #{cnn_forward.8} parent=0 // loop_header
    %s8 = sphi 0, %s12
    %p9 = scmp.ge.s32.totalorder %s8, 4
    %s18 = sphi 0, %s20
    %s21 = sphi 0, %s18
    %s22 = sphi 0, %s21
    %s38 = sphi 0, %s22
    %s42 = sphi 0, %s42
    %s44 = sphi 0, %s42
    %s45 = sphi 0, %s44
    %s59 = sphi 0, %s45
    %s65 = sphi 0, %s67
    %s68 = sphi 0, %s65
    %s69 = sphi 0, %s68
    %s85 = sphi 0, %s69
  $region4: #{cnn_forward.8} parent=0 // loop_header_branch
    %11 = sbr.rel (%p9) target = $region8
  $region5: #{cnn_forward.8} parent=0 // loop_body
    %s13 = ssub.s32 %s8, 1
    %s14 = ssub.s32 %s8, 2
    %s15 = sadd.s32 %s8, 1
    %s16 = ssub.s32 %s8, %s15
    %p17 = scmp.eq.s32.totalorder %s16, 0
    %s19 = sadd.s32 %s18, 1
    %s20 = scalar_select %p17, %s18, %s19
    %p23 = pneg %p17
    %p24 = scmp.eq.s32.totalorder %s8, 1
    %p25 = por %p23, %p24
    %p26 = scmp.ne.s32.totalorder %s18, %s21
    %p27 = scmp.eq.s32.totalorder %s8, 0
    %p28 = por %p26, %p27
    %p29 = scmp.ne.s32.totalorder %s18, %s21
    %p30 = scmp.eq.s32.totalorder %s13, 1
    %p31 = por %p29, %p30
    %p32 = scmp.ne.s32.totalorder %s21, %s22
    %p33 = scmp.eq.s32.totalorder %s13, 0
    %p34 = por %p32, %p33
    %p35 = scmp.ne.s32.totalorder %s21, %s22
    %p36 = scmp.eq.s32.totalorder %s14, 1
    %p37 = por %p35, %p36
    %p39 = scmp.ne.s32.totalorder %s22, %s38
    %p40 = scmp.eq.s32.totalorder %s14, 0
    %p41 = por %p39, %p40
    %s43 = sadd.s32 %s42, 1
    %p46 = scmp.eq.s32.totalorder %s8, 1
    %p47 = scmp.ne.s32.totalorder %s42, %s44
    %p48 = scmp.eq.s32.totalorder %s8, 0
    %p49 = por %p47, %p48
    %p50 = scmp.ne.s32.totalorder %s42, %s44
    %p51 = scmp.eq.s32.totalorder %s13, 1
    %p52 = por %p50, %p51
    %p53 = scmp.ne.s32.totalorder %s44, %s45
    %p54 = scmp.eq.s32.totalorder %s13, 0
    %p55 = por %p53, %p54
    %p56 = scmp.ne.s32.totalorder %s44, %s45
    %p57 = scmp.eq.s32.totalorder %s14, 1
    %p58 = por %p56, %p57
    %p60 = scmp.ne.s32.totalorder %s45, %s59
    %p61 = scmp.eq.s32.totalorder %s14, 0
    %p62 = por %p60, %p61
    %s63 = ssub.s32 %s8, %s15
    %p64 = scmp.eq.s32.totalorder %s63, 0
    %s66 = sadd.s32 %s65, 1
    %s67 = scalar_select %p64, %s65, %s66
    %p70 = pneg %p64
    %p71 = scmp.eq.s32.totalorder %s8, 1
    %p72 = por %p70, %p71
    %p73 = scmp.ne.s32.totalorder %s65, %s68
    %p74 = scmp.eq.s32.totalorder %s8, 0
    %p75 = por %p73, %p74
    %p76 = scmp.ne.s32.totalorder %s65, %s68
    %p77 = scmp.eq.s32.totalorder %s13, 1
    %p78 = por %p76, %p77
    %p79 = scmp.ne.s32.totalorder %s68, %s69
    %p80 = scmp.eq.s32.totalorder %s13, 0
    %p81 = por %p79, %p80
    %p82 = scmp.ne.s32.totalorder %s68, %s69
    %p83 = scmp.eq.s32.totalorder %s14, 1
    %p84 = por %p82, %p83
    %p86 = scmp.ne.s32.totalorder %s69, %s85
    %p87 = scmp.eq.s32.totalorder %s14, 0
    %p88 = por %p86, %p87
    %p89 = scmp.le.s32.totalorder 1, %s8
    %p90 = scmp.lt.s32.totalorder %s8, 3
    %p91 = pnand %p89, %p90
    %p92 = pneg %p91
    // Predicated region
    $region9: #{cnn_forward.8} parent=5 // pred_check
      _
    $region10: #{cnn_forward.8} parent=5 // pred_check_branch
      %94 = sbr.rel (%p91) target = $region12
    $region11: #{cnn_forward.8} parent=5 // pred_region
      %s95 = ssub.s32 %s8, 1
      // Predicated region
      $region13: #{cnn_forward.8} parent=11 // pred_check
        %p96 = pneg %p55
      $region14: #{cnn_forward.8} parent=11 // pred_check_branch
        %98 = sbr.rel (%p96) target = $region16
      $region15: #{cnn_forward.8} parent=11 // pred_region
        _
      $region16: #{cnn_forward.8} parent=11 // pred_fallthru
        _
    $region12: #{cnn_forward.8} parent=5 // pred_fallthru
      _
    %p99 = scmp.lt.s32.totalorder %s8, 2
    // Predicated region
    $region17: #{cnn_forward.8} parent=5 // pred_check
      %p100 = pneg %p99
    $region18: #{cnn_forward.8} parent=5 // pred_check_branch
      %102 = sbr.rel (%p100) target = $region20
    $region19: #{cnn_forward.8} parent=5 // pred_region
      // Predicated region
      $region21: #{cnn_forward.8} parent=19 // pred_check
        %p103 = pneg %p28
      $region22: #{cnn_forward.8} parent=19 // pred_check_branch
        %105 = sbr.rel (%p103) target = $region24
      $region23: #{cnn_forward.8} parent=19 // pred_region
        %p106 = scmp.lt.s32.totalorder %s8, 1
        %s107 = scalar_select %p106, %s8, 1
        %s108 = smul.addr %s107, 42
        %s109 = smul.addr %s108, 4
        %s110 = scalar_lea.vmem %s0, %s109
      $region24: #{cnn_forward.8} parent=19 // pred_fallthru
        _
    $region20: #{cnn_forward.8} parent=5 // pred_fallthru
      _
    %p111 = scmp.le.s32.totalorder 1, %s8
    %p112 = scmp.lt.s32.totalorder %s8, 3
    %p113 = pnand %p111, %p112
    %p114 = pneg %p113
    // Predicated region
    $region25: #{cnn_forward.8} parent=5 // pred_check
      _
    $region26: #{cnn_forward.8} parent=5 // pred_check_branch
      %116 = sbr.rel (%p113) target = $region28
    $region27: #{cnn_forward.8} parent=5 // pred_region
      %s117 = ssub.s32 %s8, 1
      %p118 = scmp.lt.s32.totalorder %s13, 1
      %s119 = scalar_select %p118, %s13, 1
      %s120 = smul.addr %s119, 42
      %s121 = smul.addr %s120, 4
      %s122 = scalar_lea.vmem %s0, %s121
      %p123 = pneg %p34
      %p124 = pneg %p31
      %p125 = pneg %p55
      %p126 = pneg %p52
      %p127 = pneg %p81
      %p128 = pneg %p78
      %p129 = scmp.lt.s32.totalorder %s13, 1
      %s130 = scalar_select %p129, %s13, 1
      %s131 = smul.addr %s130, 16
      %s132 = smul.addr %s131, 4
      %s133 = scalar_lea.vmem %s2, %s132
      %p134 = scmp.lt.s32.totalorder %s13, 1
      %s135 = scalar_select %p134, %s13, 1
      %s136 = smul.addr %s135, 42
      %s137 = smul.addr %s136, 4
      %s138 = scalar_lea.vmem %s0, %s137
      %p139 = scmp.lt.s32.totalorder %s13, 1
      %s140 = scalar_select %p139, %s13, 1
      %s141 = smul.addr %s140, 16
      %s142 = smul.addr %s141, 4
      %s143 = scalar_lea.vmem %s2, %s142
      %v145 = vld [vmem:[%s138] sm:$0xf]
      %v146 = vld [vmem:[%s138 + $0x4] sm:$0xf]
      %v147 = vld [vmem:[%s138 + $0x8] sm:$0xf]
      %v148 = vld [vmem:[%s138 + $0xc] sm:$0xf]
      %v149 = vld [vmem:[%s138 + $0x10] sm:$0xf]
      %v150 = vld [vmem:[%s138 + $0x14] sm:$0xf]
      %v151 = vld [vmem:[%s138 + $0x18] sm:$0xf]
      %v152 = vld [vmem:[%s138 + $0x1c] sm:$0xf]
      %v153 = vld [vmem:[%s138 + $0x20] sm:$0xf]
      %v154 = vld [vmem:[%s138 + $0x24] sm:$0xf]
      %v155 = vld [vmem:[%s138 + $0x28] sm:$0xf]
      %v156 = vld [vmem:[%s138 + $0x2c] sm:$0xf]
      %v157 = vld [vmem:[%s138 + $0x30] sm:$0xf]
      %v158 = vld [vmem:[%s138 + $0x34] sm:$0xf]
      %v159 = vld [vmem:[%s138 + $0x38] sm:$0xf]
      %v160 = vld [vmem:[%s138 + $0x3c] sm:$0xf]
      %v161 = vld [vmem:[%s138 + $0x40] sm:$0xf]
      %v162 = vld [vmem:[%s138 + $0x44] sm:$0xf]
      %v163 = vld [vmem:[%s138 + $0x48] sm:$0xf]
      %v164 = vld [vmem:[%s138 + $0x4c] sm:$0xf]
      %v165 = vld [vmem:[%s138 + $0x50] sm:$0xf]
      %v166 = vld [vmem:[%s138 + $0x54] sm:$0xf]
      %v167 = vld [vmem:[%s138 + $0x58] sm:$0xf]
      %v168 = vld [vmem:[%s138 + $0x5c] sm:$0xf]
      %v169 = vld [vmem:[%s138 + $0x60] sm:$0xf]
      %v170 = vld [vmem:[%s138 + $0x64] sm:$0xf]
      %v171 = vld [vmem:[%s138 + $0x68] sm:$0xf]
      %v172 = vld [vmem:[%s138 + $0x6c] sm:$0xf]
      %v173 = vld [vmem:[%s138 + $0x70] sm:$0x7]
      %vm174 = vsmask.f32 3328
      %vm175 = vsmask.f32 7440
      %vm176 = vmor %vm174, %vm175
      %v178 = vshrl.u32 %v145, 16
      %v180 = vrot.slane %v178, 4
      %v181 = vshll.u32 %v145, 16
      %v183 = vrot.slane %v181, 5
      %v184 = vor.u32 %v180, %v183
      %v185 = vrot.slane %v184, 4
      %v187 = vshll.u32 %v146, 16
      %v189 = vrot.slane %v187, 5
      %v190 = vsel %vm176, %v185, %v189
      %v191 = vshrl.u32 %v146, 16
      %v193 = vrot.slane %v191, 4
      %v194 = vor.u32 %v193, %v189
      %v195 = vrot.slane %v194, 4
      %v197 = vshll.u32 %v147, 16
      %v199 = vrot.slane %v197, 5
      %v200 = vsel %vm176, %v195, %v199
      %v201 = vshrl.u32 %v147, 16
      %v203 = vrot.slane %v201, 4
      %v204 = vor.u32 %v203, %v199
      %v205 = vrot.slane %v204, 4
      %v207 = vshll.u32 %v148, 16
      %v209 = vrot.slane %v207, 5
      %v210 = vsel %vm176, %v205, %v209
      %v211 = vshrl.u32 %v148, 16
      %v213 = vrot.slane %v211, 4
      %v214 = vor.u32 %v213, %v209
      %v215 = vrot.slane %v214, 4
      %v217 = vshll.u32 %v149, 16
      %v219 = vrot.slane %v217, 5
      %v220 = vsel %vm176, %v215, %v219
      %v221 = vshrl.u32 %v149, 16
      %v223 = vrot.slane %v221, 4
      %v224 = vor.u32 %v223, %v219
      %v225 = vrot.slane %v224, 4
      %v227 = vshll.u32 %v150, 16
      %v229 = vrot.slane %v227, 5
      %v230 = vsel %vm176, %v225, %v229
      %v231 = vshrl.u32 %v150, 16
      %v233 = vrot.slane %v231, 4
      %v234 = vor.u32 %v233, %v229
      %v235 = vrot.slane %v234, 4
      %v237 = vshll.u32 %v151, 16
      %v239 = vrot.slane %v237, 5
      %v240 = vsel %vm176, %v235, %v239
      %v241 = vshrl.u32 %v151, 16
      %v243 = vrot.slane %v241, 4
      %v244 = vor.u32 %v243, %v239
      %v245 = vrot.slane %v244, 4
      %v247 = vshll.u32 %v152, 16
      %v249 = vrot.slane %v247, 5
      %v250 = vsel %vm176, %v245, %v249
      %v251 = vshrl.u32 %v152, 16
      %v253 = vrot.slane %v251, 4
      %v254 = vor.u32 %v253, %v249
      %v255 = vrot.slane %v254, 4
      %v257 = vshll.u32 %v153, 16
      %v259 = vrot.slane %v257, 5
      %v260 = vsel %vm176, %v255, %v259
      %v261 = vshrl.u32 %v153, 16
      %v263 = vrot.slane %v261, 4
      %v264 = vor.u32 %v263, %v259
      %v265 = vrot.slane %v264, 4
      %v267 = vshll.u32 %v154, 16
      %v269 = vrot.slane %v267, 5
      %v270 = vsel %vm176, %v265, %v269
      %v271 = vshrl.u32 %v154, 16
      %v273 = vrot.slane %v271, 4
      %v274 = vor.u32 %v273, %v269
      %v275 = vrot.slane %v274, 4
      %v277 = vshll.u32 %v155, 16
      %v279 = vrot.slane %v277, 5
      %v280 = vsel %vm176, %v275, %v279
      %v281 = vshrl.u32 %v155, 16
      %v283 = vrot.slane %v281, 4
      %v284 = vor.u32 %v283, %v279
      %v285 = vrot.slane %v284, 4
      %v287 = vshll.u32 %v156, 16
      %v289 = vrot.slane %v287, 5
      %v290 = vsel %vm176, %v285, %v289
      %v291 = vshrl.u32 %v156, 16
      %v293 = vrot.slane %v291, 4
      %v294 = vor.u32 %v293, %v289
      %v295 = vrot.slane %v294, 4
      %v297 = vshll.u32 %v157, 16
      %v299 = vrot.slane %v297, 5
      %v300 = vsel %vm176, %v295, %v299
      %v301 = vshrl.u32 %v157, 16
      %v303 = vrot.slane %v301, 4
      %v304 = vor.u32 %v303, %v299
      %v305 = vrot.slane %v304, 4
      %v307 = vshll.u32 %v158, 16
      %v309 = vrot.slane %v307, 5
      %v310 = vsel %vm176, %v305, %v309
      %v311 = vshrl.u32 %v158, 16
      %v313 = vrot.slane %v311, 4
      %v314 = vor.u32 %v313, %v309
      %v315 = vrot.slane %v314, 4
      %v317 = vshll.u32 %v159, 16
      %v319 = vrot.slane %v317, 5
      %v320 = vsel %vm176, %v315, %v319
      %v321 = vshrl.u32 %v159, 16
      %v323 = vrot.slane %v321, 4
      %v324 = vor.u32 %v323, %v319
      %v325 = vrot.slane %v324, 4
      %v327 = vshll.u32 %v160, 16
      %v329 = vrot.slane %v327, 5
      %v330 = vsel %vm176, %v325, %v329
      %v331 = vshrl.u32 %v160, 16
      %v333 = vrot.slane %v331, 4
      %v334 = vor.u32 %v333, %v329
      %v335 = vrot.slane %v334, 4
      %v337 = vshll.u32 %v161, 16
      %v339 = vrot.slane %v337, 5
      %v340 = vsel %vm176, %v335, %v339
      %v341 = vshrl.u32 %v161, 16
      %v343 = vrot.slane %v341, 4
      %v344 = vor.u32 %v343, %v339
      %v345 = vrot.slane %v344, 4
      %v347 = vshll.u32 %v162, 16
      %v349 = vrot.slane %v347, 5
      %v350 = vsel %vm176, %v345, %v349
      %v351 = vshrl.u32 %v162, 16
      %v353 = vrot.slane %v351, 4
      %v354 = vor.u32 %v353, %v349
      %v355 = vrot.slane %v354, 4
      %v357 = vshll.u32 %v163, 16
      %v359 = vrot.slane %v357, 5
      %v360 = vsel %vm176, %v355, %v359
      %v361 = vshrl.u32 %v163, 16
      %v363 = vrot.slane %v361, 4
      %v364 = vor.u32 %v363, %v359
      %v365 = vrot.slane %v364, 4
      %v367 = vshll.u32 %v164, 16
      %v369 = vrot.slane %v367, 5
      %v370 = vsel %vm176, %v365, %v369
      %v371 = vshrl.u32 %v164, 16
      %v373 = vrot.slane %v371, 4
      %v374 = vor.u32 %v373, %v369
      %v375 = vrot.slane %v374, 4
      %v377 = vshll.u32 %v165, 16
      %v379 = vrot.slane %v377, 5
      %v380 = vsel %vm176, %v375, %v379
      %v381 = vshrl.u32 %v165, 16
      %v383 = vrot.slane %v381, 4
      %v384 = vor.u32 %v383, %v379
      %v385 = vrot.slane %v384, 4
      %v387 = vshll.u32 %v166, 16
      %v389 = vrot.slane %v387, 5
      %v390 = vsel %vm176, %v385, %v389
      %v391 = vshrl.u32 %v166, 16
      %v393 = vrot.slane %v391, 4
      %v394 = vor.u32 %v393, %v389
      %v395 = vrot.slane %v394, 4
      %v397 = vshll.u32 %v167, 16
      %v399 = vrot.slane %v397, 5
      %v400 = vsel %vm176, %v395, %v399
      %v401 = vshrl.u32 %v167, 16
      %v403 = vrot.slane %v401, 4
      %v404 = vor.u32 %v403, %v399
      %v405 = vrot.slane %v404, 4
      %v407 = vshll.u32 %v168, 16
      %v409 = vrot.slane %v407, 5
      %v410 = vsel %vm176, %v405, %v409
      %v411 = vshrl.u32 %v168, 16
      %v413 = vrot.slane %v411, 4
      %v414 = vor.u32 %v413, %v409
      %v415 = vrot.slane %v414, 4
      %v417 = vshll.u32 %v169, 16
      %v419 = vrot.slane %v417, 5
      %v420 = vsel %vm176, %v415, %v419
      %v421 = vshrl.u32 %v169, 16
      %v423 = vrot.slane %v421, 4
      %v424 = vor.u32 %v423, %v419
      %v425 = vrot.slane %v424, 4
      %v427 = vshll.u32 %v170, 16
      %v429 = vrot.slane %v427, 5
      %v430 = vsel %vm176, %v425, %v429
      %v431 = vshrl.u32 %v170, 16
      %v433 = vrot.slane %v431, 4
      %v434 = vor.u32 %v433, %v429
      %v435 = vrot.slane %v434, 4
      %v437 = vshll.u32 %v171, 16
      %v439 = vrot.slane %v437, 5
      %v440 = vsel %vm176, %v435, %v439
      %v441 = vshrl.u32 %v171, 16
      %v443 = vrot.slane %v441, 4
      %v444 = vor.u32 %v443, %v439
      %v445 = vrot.slane %v444, 4
      %v447 = vshll.u32 %v172, 16
      %v449 = vrot.slane %v447, 5
      %v450 = vsel %vm176, %v445, %v449
      %v451 = vshrl.u32 %v172, 16
      %v453 = vrot.slane %v451, 4
      %v454 = vor.u32 %v453, %v449
      %v455 = vrot.slane %v454, 4
      %v457 = vshll.u32 %v173, 16
      %v459 = vrot.slane %v457, 5
      %v460 = vsel %vm176, %v455, %v459
      %v461 = vshrl.u32 %v173, 16
      %v463 = vrot.slane %v461, 4
      %v464 = vor.u32 %v463, %v459
      %v465 = vrot.slane %v464, 4
      %v495 = vmax.bf16 %v145, %v190
      %v496 = vmax.bf16 %v146, %v200
      %v497 = vmax.bf16 %v147, %v210
      %v498 = vmax.bf16 %v148, %v220
      %v499 = vmax.bf16 %v149, %v230
      %v500 = vmax.bf16 %v150, %v240
      %v501 = vmax.bf16 %v151, %v250
      %v502 = vmax.bf16 %v152, %v260
      %v503 = vmax.bf16 %v153, %v270
      %v504 = vmax.bf16 %v154, %v280
      %v505 = vmax.bf16 %v155, %v290
      %v506 = vmax.bf16 %v156, %v300
      %v507 = vmax.bf16 %v157, %v310
      %v508 = vmax.bf16 %v158, %v320
      %v509 = vmax.bf16 %v159, %v330
      %v510 = vmax.bf16 %v160, %v340
      %v511 = vmax.bf16 %v161, %v350
      %v512 = vmax.bf16 %v162, %v360
      %v513 = vmax.bf16 %v163, %v370
      %v514 = vmax.bf16 %v164, %v380
      %v515 = vmax.bf16 %v165, %v390
      %v516 = vmax.bf16 %v166, %v400
      %v517 = vmax.bf16 %v167, %v410
      %v518 = vmax.bf16 %v168, %v420
      %v519 = vmax.bf16 %v169, %v430
      %v520 = vmax.bf16 %v170, %v440
      %v521 = vmax.bf16 %v171, %v450
      %v522 = vmax.bf16 %v172, %v460
      %v523 = vmax.bf16 %v173, %v465
      %v524 = vld [vmem:[%s138] sm:$0xe]
      %v525 = vld [vmem:[%s138 + $0x70] sm:$0xf]
      %vm555 = vcmask 1042432
      %vm556 = vcmask 1046532
      %vm557 = vmor %vm555, %vm556
      %v558 = vrot.slane %v524, 5
      %v559 = vrot.slane %v558, 4
      %v560 = vrot.slane %v146, 5
      %v561 = vsel %vm557, %v559, %v560
      %v562 = vrot.slane %v560, 4
      %v563 = vrot.slane %v147, 5
      %v564 = vsel %vm557, %v562, %v563
      %v565 = vrot.slane %v563, 4
      %v566 = vrot.slane %v148, 5
      %v567 = vsel %vm557, %v565, %v566
      %v568 = vrot.slane %v566, 4
      %v569 = vrot.slane %v149, 5
      %v570 = vsel %vm557, %v568, %v569
      %v571 = vrot.slane %v569, 4
      %v572 = vrot.slane %v150, 5
      %v573 = vsel %vm557, %v571, %v572
      %v574 = vrot.slane %v572, 4
      %v575 = vrot.slane %v151, 5
      %v576 = vsel %vm557, %v574, %v575
      %v577 = vrot.slane %v575, 4
      %v578 = vrot.slane %v152, 5
      %v579 = vsel %vm557, %v577, %v578
      %v580 = vrot.slane %v578, 4
      %v581 = vrot.slane %v153, 5
      %v582 = vsel %vm557, %v580, %v581
      %v583 = vrot.slane %v581, 4
      %v584 = vrot.slane %v154, 5
      %v585 = vsel %vm557, %v583, %v584
      %v586 = vrot.slane %v584, 4
      %v587 = vrot.slane %v155, 5
      %v588 = vsel %vm557, %v586, %v587
      %v589 = vrot.slane %v587, 4
      %v590 = vrot.slane %v156, 5
      %v591 = vsel %vm557, %v589, %v590
      %v592 = vrot.slane %v590, 4
      %v593 = vrot.slane %v157, 5
      %v594 = vsel %vm557, %v592, %v593
      %v595 = vrot.slane %v593, 4
      %v596 = vrot.slane %v158, 5
      %v597 = vsel %vm557, %v595, %v596
      %v598 = vrot.slane %v596, 4
      %v599 = vrot.slane %v159, 5
      %v600 = vsel %vm557, %v598, %v599
      %v601 = vrot.slane %v599, 4
      %v602 = vrot.slane %v160, 5
      %v603 = vsel %vm557, %v601, %v602
      %v604 = vrot.slane %v602, 4
      %v605 = vrot.slane %v161, 5
      %v606 = vsel %vm557, %v604, %v605
      %v607 = vrot.slane %v605, 4
      %v608 = vrot.slane %v162, 5
      %v609 = vsel %vm557, %v607, %v608
      %v610 = vrot.slane %v608, 4
      %v611 = vrot.slane %v163, 5
      %v612 = vsel %vm557, %v610, %v611
      %v613 = vrot.slane %v611, 4
      %v614 = vrot.slane %v164, 5
      %v615 = vsel %vm557, %v613, %v614
      %v616 = vrot.slane %v614, 4
      %v617 = vrot.slane %v165, 5
      %v618 = vsel %vm557, %v616, %v617
      %v619 = vrot.slane %v617, 4
      %v620 = vrot.slane %v166, 5
      %v621 = vsel %vm557, %v619, %v620
      %v622 = vrot.slane %v620, 4
      %v623 = vrot.slane %v167, 5
      %v624 = vsel %vm557, %v622, %v623
      %v625 = vrot.slane %v623, 4
      %v626 = vrot.slane %v168, 5
      %v627 = vsel %vm557, %v625, %v626
      %v628 = vrot.slane %v626, 4
      %v629 = vrot.slane %v169, 5
      %v630 = vsel %vm557, %v628, %v629
      %v631 = vrot.slane %v629, 4
      %v632 = vrot.slane %v170, 5
      %v633 = vsel %vm557, %v631, %v632
      %v634 = vrot.slane %v632, 4
      %v635 = vrot.slane %v171, 5
      %v636 = vsel %vm557, %v634, %v635
      %v637 = vrot.slane %v635, 4
      %v638 = vrot.slane %v172, 5
      %v639 = vsel %vm557, %v637, %v638
      %v640 = vrot.slane %v638, 4
      %v641 = vrot.slane %v525, 5
      %v642 = vsel %vm557, %v640, %v641
      %v643 = vrot.slane %v641, 4
      %v673 = vmax.bf16 %v495, %v561
      %v674 = vmax.bf16 %v496, %v564
      %v675 = vmax.bf16 %v497, %v567
      %v676 = vmax.bf16 %v498, %v570
      %v677 = vmax.bf16 %v499, %v573
      %v678 = vmax.bf16 %v500, %v576
      %v679 = vmax.bf16 %v501, %v579
      %v680 = vmax.bf16 %v502, %v582
      %v681 = vmax.bf16 %v503, %v585
      %v682 = vmax.bf16 %v504, %v588
      %v683 = vmax.bf16 %v505, %v591
      %v684 = vmax.bf16 %v506, %v594
      %v685 = vmax.bf16 %v507, %v597
      %v686 = vmax.bf16 %v508, %v600
      %v687 = vmax.bf16 %v509, %v603
      %v688 = vmax.bf16 %v510, %v606
      %v689 = vmax.bf16 %v511, %v609
      %v690 = vmax.bf16 %v512, %v612
      %v691 = vmax.bf16 %v513, %v615
      %v692 = vmax.bf16 %v514, %v618
      %v693 = vmax.bf16 %v515, %v621
      %v694 = vmax.bf16 %v516, %v624
      %v695 = vmax.bf16 %v517, %v627
      %v696 = vmax.bf16 %v518, %v630
      %v697 = vmax.bf16 %v519, %v633
      %v698 = vmax.bf16 %v520, %v636
      %v699 = vmax.bf16 %v521, %v639
      %v700 = vmax.bf16 %v522, %v642
      %v701 = vmax.bf16 %v523, %v643
      %v702 = vld [vmem:[%s138 + $0x8] sm:$0xe]
      %v703 = vld [vmem:[%s138 + $0x74] sm:$0xf]
      %v704 = vld [vmem:[%s138 + $0x78] sm:$0xf]
      %v708 = vrot.slane %v702, 5
      %v709 = vrot.slane %v708, 4
      %v710 = vsel %vm557, %v709, %v566
      %v711 = vrot.slane %v703, 5
      %v712 = vsel %vm557, %v643, %v711
      %v713 = vrot.slane %v711, 4
      %v714 = vrot.slane %v704, 5
      %v715 = vsel %vm557, %v713, %v714
      %v716 = vrot.slane %v714, 4
      %v721 = vmax.bf16 %v673, %v710
      %v722 = vmax.bf16 %v674, %v570
      %v723 = vmax.bf16 %v675, %v573
      %v724 = vmax.bf16 %v676, %v576
      %v725 = vmax.bf16 %v677, %v579
      %v726 = vmax.bf16 %v678, %v582
      %v727 = vmax.bf16 %v679, %v585
      %v728 = vmax.bf16 %v680, %v588
      %v729 = vmax.bf16 %v681, %v591
      %v730 = vmax.bf16 %v682, %v594
      %v731 = vmax.bf16 %v683, %v597
      %v732 = vmax.bf16 %v684, %v600
      %v733 = vmax.bf16 %v685, %v603
      %v734 = vmax.bf16 %v686, %v606
      %v735 = vmax.bf16 %v687, %v609
      %v736 = vmax.bf16 %v688, %v612
      %v737 = vmax.bf16 %v689, %v615
      %v738 = vmax.bf16 %v690, %v618
      %v739 = vmax.bf16 %v691, %v621
      %v740 = vmax.bf16 %v692, %v624
      %v741 = vmax.bf16 %v693, %v627
      %v742 = vmax.bf16 %v694, %v630
      %v743 = vmax.bf16 %v695, %v633
      %v744 = vmax.bf16 %v696, %v636
      %v745 = vmax.bf16 %v697, %v639
      %v746 = vmax.bf16 %v698, %v642
      %v747 = vmax.bf16 %v699, %v712
      %v748 = vmax.bf16 %v700, %v715
      %v749 = vmax.bf16 %v701, %v716
      %vm750 = vsmask.f32 2304
      %vm751 = vsmask.f32 6416
      %vm752 = vmor %vm750, %vm751
      %v754 = vshrl.u32 %v702, 16
      %v756 = vrot.slane %v754, 5
      %v757 = vshll.u32 %v702, 16
      %v759 = vrot.slane %v757, 6
      %v760 = vor.u32 %v756, %v759
      %v761 = vrot.slane %v760, 4
      %v762 = vrot.slane %v211, 5
      %v763 = vrot.slane %v207, 6
      %v764 = vor.u32 %v762, %v763
      %v765 = vsel %vm752, %v761, %v764
      %v766 = vrot.slane %v764, 4
      %v767 = vrot.slane %v221, 5
      %v768 = vrot.slane %v217, 6
      %v769 = vor.u32 %v767, %v768
      %v770 = vsel %vm752, %v766, %v769
      %v771 = vrot.slane %v769, 4
      %v772 = vrot.slane %v231, 5
      %v773 = vrot.slane %v227, 6
      %v774 = vor.u32 %v772, %v773
      %v775 = vsel %vm752, %v771, %v774
      %v776 = vrot.slane %v774, 4
      %v777 = vrot.slane %v241, 5
      %v778 = vrot.slane %v237, 6
      %v779 = vor.u32 %v777, %v778
      %v780 = vsel %vm752, %v776, %v779
      %v781 = vrot.slane %v779, 4
      %v782 = vrot.slane %v251, 5
      %v783 = vrot.slane %v247, 6
      %v784 = vor.u32 %v782, %v783
      %v785 = vsel %vm752, %v781, %v784
      %v786 = vrot.slane %v784, 4
      %v787 = vrot.slane %v261, 5
      %v788 = vrot.slane %v257, 6
      %v789 = vor.u32 %v787, %v788
      %v790 = vsel %vm752, %v786, %v789
      %v791 = vrot.slane %v789, 4
      %v792 = vrot.slane %v271, 5
      %v793 = vrot.slane %v267, 6
      %v794 = vor.u32 %v792, %v793
      %v795 = vsel %vm752, %v791, %v794
      %v796 = vrot.slane %v794, 4
      %v797 = vrot.slane %v281, 5
      %v798 = vrot.slane %v277, 6
      %v799 = vor.u32 %v797, %v798
      %v800 = vsel %vm752, %v796, %v799
      %v801 = vrot.slane %v799, 4
      %v802 = vrot.slane %v291, 5
      %v803 = vrot.slane %v287, 6
      %v804 = vor.u32 %v802, %v803
      %v805 = vsel %vm752, %v801, %v804
      %v806 = vrot.slane %v804, 4
      %v807 = vrot.slane %v301, 5
      %v808 = vrot.slane %v297, 6
      %v809 = vor.u32 %v807, %v808
      %v810 = vsel %vm752, %v806, %v809
      %v811 = vrot.slane %v809, 4
      %v812 = vrot.slane %v311, 5
      %v813 = vrot.slane %v307, 6
      %v814 = vor.u32 %v812, %v813
      %v815 = vsel %vm752, %v811, %v814
      %v816 = vrot.slane %v814, 4
      %v817 = vrot.slane %v321, 5
      %v818 = vrot.slane %v317, 6
      %v819 = vor.u32 %v817, %v818
      %v820 = vsel %vm752, %v816, %v819
      %v821 = vrot.slane %v819, 4
      %v822 = vrot.slane %v331, 5
      %v823 = vrot.slane %v327, 6
      %v824 = vor.u32 %v822, %v823
      %v825 = vsel %vm752, %v821, %v824
      %v826 = vrot.slane %v824, 4
      %v827 = vrot.slane %v341, 5
      %v828 = vrot.slane %v337, 6
      %v829 = vor.u32 %v827, %v828
      %v830 = vsel %vm752, %v826, %v829
      %v831 = vrot.slane %v829, 4
      %v832 = vrot.slane %v351, 5
      %v833 = vrot.slane %v347, 6
      %v834 = vor.u32 %v832, %v833
      %v835 = vsel %vm752, %v831, %v834
      %v836 = vrot.slane %v834, 4
      %v837 = vrot.slane %v361, 5
      %v838 = vrot.slane %v357, 6
      %v839 = vor.u32 %v837, %v838
      %v840 = vsel %vm752, %v836, %v839
      %v841 = vrot.slane %v839, 4
      %v842 = vrot.slane %v371, 5
      %v843 = vrot.slane %v367, 6
      %v844 = vor.u32 %v842, %v843
      %v845 = vsel %vm752, %v841, %v844
      %v846 = vrot.slane %v844, 4
      %v847 = vrot.slane %v381, 5
      %v848 = vrot.slane %v377, 6
      %v849 = vor.u32 %v847, %v848
      %v850 = vsel %vm752, %v846, %v849
      %v851 = vrot.slane %v849, 4
      %v852 = vrot.slane %v391, 5
      %v853 = vrot.slane %v387, 6
      %v854 = vor.u32 %v852, %v853
      %v855 = vsel %vm752, %v851, %v854
      %v856 = vrot.slane %v854, 4
      %v857 = vrot.slane %v401, 5
      %v858 = vrot.slane %v397, 6
      %v859 = vor.u32 %v857, %v858
      %v860 = vsel %vm752, %v856, %v859
      %v861 = vrot.slane %v859, 4
      %v862 = vrot.slane %v411, 5
      %v863 = vrot.slane %v407, 6
      %v864 = vor.u32 %v862, %v863
      %v865 = vsel %vm752, %v861, %v864
      %v866 = vrot.slane %v864, 4
      %v867 = vrot.slane %v421, 5
      %v868 = vrot.slane %v417, 6
      %v869 = vor.u32 %v867, %v868
      %v870 = vsel %vm752, %v866, %v869
      %v871 = vrot.slane %v869, 4
      %v872 = vrot.slane %v431, 5
      %v873 = vrot.slane %v427, 6
      %v874 = vor.u32 %v872, %v873
      %v875 = vsel %vm752, %v871, %v874
      %v876 = vrot.slane %v874, 4
      %v877 = vrot.slane %v441, 5
      %v878 = vrot.slane %v437, 6
      %v879 = vor.u32 %v877, %v878
      %v880 = vsel %vm752, %v876, %v879
      %v881 = vrot.slane %v879, 4
      %v882 = vrot.slane %v451, 5
      %v883 = vrot.slane %v447, 6
      %v884 = vor.u32 %v882, %v883
      %v885 = vsel %vm752, %v881, %v884
      %v886 = vrot.slane %v884, 4
      %v888 = vshrl.u32 %v525, 16
      %v890 = vrot.slane %v888, 5
      %v891 = vshll.u32 %v525, 16
      %v893 = vrot.slane %v891, 6
      %v894 = vor.u32 %v890, %v893
      %v895 = vsel %vm752, %v886, %v894
      %v896 = vrot.slane %v894, 4
      %v898 = vshrl.u32 %v703, 16
      %v900 = vrot.slane %v898, 5
      %v901 = vshll.u32 %v703, 16
      %v903 = vrot.slane %v901, 6
      %v904 = vor.u32 %v900, %v903
      %v905 = vsel %vm752, %v896, %v904
      %v906 = vrot.slane %v904, 4
      %v908 = vshrl.u32 %v704, 16
      %v910 = vrot.slane %v908, 5
      %v911 = vshll.u32 %v704, 16
      %v913 = vrot.slane %v911, 6
      %v914 = vor.u32 %v910, %v913
      %v915 = vsel %vm752, %v906, %v914
      %v916 = vrot.slane %v914, 4
      %v946 = vmax.bf16 %v721, %v765
      %v947 = vmax.bf16 %v722, %v770
      %v948 = vmax.bf16 %v723, %v775
      %v949 = vmax.bf16 %v724, %v780
      %v950 = vmax.bf16 %v725, %v785
      %v951 = vmax.bf16 %v726, %v790
      %v952 = vmax.bf16 %v727, %v795
      %v953 = vmax.bf16 %v728, %v800
      %v954 = vmax.bf16 %v729, %v805
      %v955 = vmax.bf16 %v730, %v810
      %v956 = vmax.bf16 %v731, %v815
      %v957 = vmax.bf16 %v732, %v820
      %v958 = vmax.bf16 %v733, %v825
      %v959 = vmax.bf16 %v734, %v830
      %v960 = vmax.bf16 %v735, %v835
      %v961 = vmax.bf16 %v736, %v840
      %v962 = vmax.bf16 %v737, %v845
      %v963 = vmax.bf16 %v738, %v850
      %v964 = vmax.bf16 %v739, %v855
      %v965 = vmax.bf16 %v740, %v860
      %v966 = vmax.bf16 %v741, %v865
      %v967 = vmax.bf16 %v742, %v870
      %v968 = vmax.bf16 %v743, %v875
      %v969 = vmax.bf16 %v744, %v880
      %v970 = vmax.bf16 %v745, %v885
      %v971 = vmax.bf16 %v746, %v895
      %v972 = vmax.bf16 %v747, %v905
      %v973 = vmax.bf16 %v748, %v915
      %v974 = vmax.bf16 %v749, %v916
      %v975 = vld [vmem:[%s138 + $0x8] sm:$0xc]
      %v976 = vld [vmem:[%s138 + $0x7c] sm:$0x1]
      %vm979 = vcmask 1041408
      %vm980 = vcmask 1045508
      %vm981 = vmor %vm979, %vm980
      %v982 = vrot.slane %v975, 6
      %v983 = vrot.slane %v982, 4
      %v984 = vrot.slane %v148, 6
      %v985 = vsel %vm981, %v983, %v984
      %v986 = vrot.slane %v984, 4
      %v987 = vrot.slane %v149, 6
      %v988 = vsel %vm981, %v986, %v987
      %v989 = vrot.slane %v987, 4
      %v990 = vrot.slane %v150, 6
      %v991 = vsel %vm981, %v989, %v990
      %v992 = vrot.slane %v990, 4
      %v993 = vrot.slane %v151, 6
      %v994 = vsel %vm981, %v992, %v993
      %v995 = vrot.slane %v993, 4
      %v996 = vrot.slane %v152, 6
      %v997 = vsel %vm981, %v995, %v996
      %v998 = vrot.slane %v996, 4
      %v999 = vrot.slane %v153, 6
      %v1000 = vsel %vm981, %v998, %v999
      %v1001 = vrot.slane %v999, 4
      %v1002 = vrot.slane %v154, 6
      %v1003 = vsel %vm981, %v1001, %v1002
      %v1004 = vrot.slane %v1002, 4
      %v1005 = vrot.slane %v155, 6
      %v1006 = vsel %vm981, %v1004, %v1005
      %v1007 = vrot.slane %v1005, 4
      %v1008 = vrot.slane %v156, 6
      %v1009 = vsel %vm981, %v1007, %v1008
      %v1010 = vrot.slane %v1008, 4
      %v1011 = vrot.slane %v157, 6
      %v1012 = vsel %vm981, %v1010, %v1011
      %v1013 = vrot.slane %v1011, 4
      %v1014 = vrot.slane %v158, 6
      %v1015 = vsel %vm981, %v1013, %v1014
      %v1016 = vrot.slane %v1014, 4
      %v1017 = vrot.slane %v159, 6
      %v1018 = vsel %vm981, %v1016, %v1017
      %v1019 = vrot.slane %v1017, 4
      %v1020 = vrot.slane %v160, 6
      %v1021 = vsel %vm981, %v1019, %v1020
      %v1022 = vrot.slane %v1020, 4
      %v1023 = vrot.slane %v161, 6
      %v1024 = vsel %vm981, %v1022, %v1023
      %v1025 = vrot.slane %v1023, 4
      %v1026 = vrot.slane %v162, 6
      %v1027 = vsel %vm981, %v1025, %v1026
      %v1028 = vrot.slane %v1026, 4
      %v1029 = vrot.slane %v163, 6
      %v1030 = vsel %vm981, %v1028, %v1029
      %v1031 = vrot.slane %v1029, 4
      %v1032 = vrot.slane %v164, 6
      %v1033 = vsel %vm981, %v1031, %v1032
      %v1034 = vrot.slane %v1032, 4
      %v1035 = vrot.slane %v165, 6
      %v1036 = vsel %vm981, %v1034, %v1035
      %v1037 = vrot.slane %v1035, 4
      %v1038 = vrot.slane %v166, 6
      %v1039 = vsel %vm981, %v1037, %v1038
      %v1040 = vrot.slane %v1038, 4
      %v1041 = vrot.slane %v167, 6
      %v1042 = vsel %vm981, %v1040, %v1041
      %v1043 = vrot.slane %v1041, 4
      %v1044 = vrot.slane %v168, 6
      %v1045 = vsel %vm981, %v1043, %v1044
      %v1046 = vrot.slane %v1044, 4
      %v1047 = vrot.slane %v169, 6
      %v1048 = vsel %vm981, %v1046, %v1047
      %v1049 = vrot.slane %v1047, 4
      %v1050 = vrot.slane %v170, 6
      %v1051 = vsel %vm981, %v1049, %v1050
      %v1052 = vrot.slane %v1050, 4
      %v1053 = vrot.slane %v171, 6
      %v1054 = vsel %vm981, %v1052, %v1053
      %v1055 = vrot.slane %v1053, 4
      %v1056 = vrot.slane %v172, 6
      %v1057 = vsel %vm981, %v1055, %v1056
      %v1058 = vrot.slane %v1056, 4
      %v1059 = vrot.slane %v525, 6
      %v1060 = vsel %vm981, %v1058, %v1059
      %v1061 = vrot.slane %v1059, 4
      %v1062 = vrot.slane %v703, 6
      %v1063 = vsel %vm981, %v1061, %v1062
      %v1064 = vrot.slane %v1062, 4
      %v1065 = vrot.slane %v704, 6
      %v1066 = vsel %vm981, %v1064, %v1065
      %v1067 = vrot.slane %v1065, 4
      %v1068 = vrot.slane %v976, 6
      %v1069 = vsel %vm981, %v1067, %v1068
      %v1099 = vmax.bf16 %v946, %v985
      %v1100 = vmax.bf16 %v947, %v988
      %v1101 = vmax.bf16 %v948, %v991
      %v1102 = vmax.bf16 %v949, %v994
      %v1103 = vmax.bf16 %v950, %v997
      %v1104 = vmax.bf16 %v951, %v1000
      %v1105 = vmax.bf16 %v952, %v1003
      %v1106 = vmax.bf16 %v953, %v1006
      %v1107 = vmax.bf16 %v954, %v1009
      %v1108 = vmax.bf16 %v955, %v1012
      %v1109 = vmax.bf16 %v956, %v1015
      %v1110 = vmax.bf16 %v957, %v1018
      %v1111 = vmax.bf16 %v958, %v1021
      %v1112 = vmax.bf16 %v959, %v1024
      %v1113 = vmax.bf16 %v960, %v1027
      %v1114 = vmax.bf16 %v961, %v1030
      %v1115 = vmax.bf16 %v962, %v1033
      %v1116 = vmax.bf16 %v963, %v1036
      %v1117 = vmax.bf16 %v964, %v1039
      %v1118 = vmax.bf16 %v965, %v1042
      %v1119 = vmax.bf16 %v966, %v1045
      %v1120 = vmax.bf16 %v967, %v1048
      %v1121 = vmax.bf16 %v968, %v1051
      %v1122 = vmax.bf16 %v969, %v1054
      %v1123 = vmax.bf16 %v970, %v1057
      %v1124 = vmax.bf16 %v971, %v1060
      %v1125 = vmax.bf16 %v972, %v1063
      %v1126 = vmax.bf16 %v973, %v1066
      %v1127 = vmax.bf16 %v974, %v1069
      %v1128 = vld [vmem:[%s138 + $0x10] sm:$0xc]
      %v1129 = vld [vmem:[%s138 + $0x7c] sm:$0xf]
      %v1130 = vld [vmem:[%s138 + $0x80] sm:$0xf]
      %v1131 = vld [vmem:[%s138 + $0x84] sm:$0x1]
      %v1136 = vrot.slane %v1128, 6
      %v1137 = vrot.slane %v1136, 4
      %v1138 = vsel %vm981, %v1137, %v990
      %v1139 = vrot.slane %v1129, 6
      %v1140 = vsel %vm981, %v1067, %v1139
      %v1141 = vrot.slane %v1139, 4
      %v1142 = vrot.slane %v1130, 6
      %v1143 = vsel %vm981, %v1141, %v1142
      %v1144 = vrot.slane %v1142, 4
      %v1145 = vrot.slane %v1131, 6
      %v1146 = vsel %vm981, %v1144, %v1145
      %v1151 = vmax.bf16 %v1099, %v1138
      %v1152 = vmax.bf16 %v1100, %v994
      %v1153 = vmax.bf16 %v1101, %v997
      %v1154 = vmax.bf16 %v1102, %v1000
      %v1155 = vmax.bf16 %v1103, %v1003
      %v1156 = vmax.bf16 %v1104, %v1006
      %v1157 = vmax.bf16 %v1105, %v1009
      %v1158 = vmax.bf16 %v1106, %v1012
      %v1159 = vmax.bf16 %v1107, %v1015
      %v1160 = vmax.bf16 %v1108, %v1018
      %v1161 = vmax.bf16 %v1109, %v1021
      %v1162 = vmax.bf16 %v1110, %v1024
      %v1163 = vmax.bf16 %v1111, %v1027
      %v1164 = vmax.bf16 %v1112, %v1030
      %v1165 = vmax.bf16 %v1113, %v1033
      %v1166 = vmax.bf16 %v1114, %v1036
      %v1167 = vmax.bf16 %v1115, %v1039
      %v1168 = vmax.bf16 %v1116, %v1042
      %v1169 = vmax.bf16 %v1117, %v1045
      %v1170 = vmax.bf16 %v1118, %v1048
      %v1171 = vmax.bf16 %v1119, %v1051
      %v1172 = vmax.bf16 %v1120, %v1054
      %v1173 = vmax.bf16 %v1121, %v1057
      %v1174 = vmax.bf16 %v1122, %v1060
      %v1175 = vmax.bf16 %v1123, %v1063
      %v1176 = vmax.bf16 %v1124, %v1066
      %v1177 = vmax.bf16 %v1125, %v1140
      %v1178 = vmax.bf16 %v1126, %v1143
      %v1179 = vmax.bf16 %v1127, %v1146
      %vm1180 = vsmask.f32 1280
      %vm1181 = vsmask.f32 5392
      %vm1182 = vmor %vm1180, %vm1181
      %v1184 = vshrl.u32 %v1128, 16
      %v1186 = vrot.slane %v1184, 6
      %v1187 = vshll.u32 %v1128, 16
      %v1189 = vrot.slane %v1187, 7
      %v1190 = vor.u32 %v1186, %v1189
      %v1191 = vrot.slane %v1190, 4
      %v1192 = vrot.slane %v231, 6
      %v1193 = vrot.slane %v227, 7
      %v1194 = vor.u32 %v1192, %v1193
      %v1195 = vsel %vm1182, %v1191, %v1194
      %v1196 = vrot.slane %v1194, 4
      %v1197 = vrot.slane %v241, 6
      %v1198 = vrot.slane %v237, 7
      %v1199 = vor.u32 %v1197, %v1198
      %v1200 = vsel %vm1182, %v1196, %v1199
      %v1201 = vrot.slane %v1199, 4
      %v1202 = vrot.slane %v251, 6
      %v1203 = vrot.slane %v247, 7
      %v1204 = vor.u32 %v1202, %v1203
      %v1205 = vsel %vm1182, %v1201, %v1204
      %v1206 = vrot.slane %v1204, 4
      %v1207 = vrot.slane %v261, 6
      %v1208 = vrot.slane %v257, 7
      %v1209 = vor.u32 %v1207, %v1208
      %v1210 = vsel %vm1182, %v1206, %v1209
      %v1211 = vrot.slane %v1209, 4
      %v1212 = vrot.slane %v271, 6
      %v1213 = vrot.slane %v267, 7
      %v1214 = vor.u32 %v1212, %v1213
      %v1215 = vsel %vm1182, %v1211, %v1214
      %v1216 = vrot.slane %v1214, 4
      %v1217 = vrot.slane %v281, 6
      %v1218 = vrot.slane %v277, 7
      %v1219 = vor.u32 %v1217, %v1218
      %v1220 = vsel %vm1182, %v1216, %v1219
      %v1221 = vrot.slane %v1219, 4
      %v1222 = vrot.slane %v291, 6
      %v1223 = vrot.slane %v287, 7
      %v1224 = vor.u32 %v1222, %v1223
      %v1225 = vsel %vm1182, %v1221, %v1224
      %v1226 = vrot.slane %v1224, 4
      %v1227 = vrot.slane %v301, 6
      %v1228 = vrot.slane %v297, 7
      %v1229 = vor.u32 %v1227, %v1228
      %v1230 = vsel %vm1182, %v1226, %v1229
      %v1231 = vrot.slane %v1229, 4
      %v1232 = vrot.slane %v311, 6
      %v1233 = vrot.slane %v307, 7
      %v1234 = vor.u32 %v1232, %v1233
      %v1235 = vsel %vm1182, %v1231, %v1234
      %v1236 = vrot.slane %v1234, 4
      %v1237 = vrot.slane %v321, 6
      %v1238 = vrot.slane %v317, 7
      %v1239 = vor.u32 %v1237, %v1238
      %v1240 = vsel %vm1182, %v1236, %v1239
      %v1241 = vrot.slane %v1239, 4
      %v1242 = vrot.slane %v331, 6
      %v1243 = vrot.slane %v327, 7
      %v1244 = vor.u32 %v1242, %v1243
      %v1245 = vsel %vm1182, %v1241, %v1244
      %v1246 = vrot.slane %v1244, 4
      %v1247 = vrot.slane %v341, 6
      %v1248 = vrot.slane %v337, 7
      %v1249 = vor.u32 %v1247, %v1248
      %v1250 = vsel %vm1182, %v1246, %v1249
      %v1251 = vrot.slane %v1249, 4
      %v1252 = vrot.slane %v351, 6
      %v1253 = vrot.slane %v347, 7
      %v1254 = vor.u32 %v1252, %v1253
      %v1255 = vsel %vm1182, %v1251, %v1254
      %v1256 = vrot.slane %v1254, 4
      %v1257 = vrot.slane %v361, 6
      %v1258 = vrot.slane %v357, 7
      %v1259 = vor.u32 %v1257, %v1258
      %v1260 = vsel %vm1182, %v1256, %v1259
      %v1261 = vrot.slane %v1259, 4
      %v1262 = vrot.slane %v371, 6
      %v1263 = vrot.slane %v367, 7
      %v1264 = vor.u32 %v1262, %v1263
      %v1265 = vsel %vm1182, %v1261, %v1264
      %v1266 = vrot.slane %v1264, 4
      %v1267 = vrot.slane %v381, 6
      %v1268 = vrot.slane %v377, 7
      %v1269 = vor.u32 %v1267, %v1268
      %v1270 = vsel %vm1182, %v1266, %v1269
      %v1271 = vrot.slane %v1269, 4
      %v1272 = vrot.slane %v391, 6
      %v1273 = vrot.slane %v387, 7
      %v1274 = vor.u32 %v1272, %v1273
      %v1275 = vsel %vm1182, %v1271, %v1274
      %v1276 = vrot.slane %v1274, 4
      %v1277 = vrot.slane %v401, 6
      %v1278 = vrot.slane %v397, 7
      %v1279 = vor.u32 %v1277, %v1278
      %v1280 = vsel %vm1182, %v1276, %v1279
      %v1281 = vrot.slane %v1279, 4
      %v1282 = vrot.slane %v411, 6
      %v1283 = vrot.slane %v407, 7
      %v1284 = vor.u32 %v1282, %v1283
      %v1285 = vsel %vm1182, %v1281, %v1284
      %v1286 = vrot.slane %v1284, 4
      %v1287 = vrot.slane %v421, 6
      %v1288 = vrot.slane %v417, 7
      %v1289 = vor.u32 %v1287, %v1288
      %v1290 = vsel %vm1182, %v1286, %v1289
      %v1291 = vrot.slane %v1289, 4
      %v1292 = vrot.slane %v431, 6
      %v1293 = vrot.slane %v427, 7
      %v1294 = vor.u32 %v1292, %v1293
      %v1295 = vsel %vm1182, %v1291, %v1294
      %v1296 = vrot.slane %v1294, 4
      %v1297 = vrot.slane %v441, 6
      %v1298 = vrot.slane %v437, 7
      %v1299 = vor.u32 %v1297, %v1298
      %v1300 = vsel %vm1182, %v1296, %v1299
      %v1301 = vrot.slane %v1299, 4
      %v1302 = vrot.slane %v451, 6
      %v1303 = vrot.slane %v447, 7
      %v1304 = vor.u32 %v1302, %v1303
      %v1305 = vsel %vm1182, %v1301, %v1304
      %v1306 = vrot.slane %v1304, 4
      %v1307 = vrot.slane %v888, 6
      %v1308 = vrot.slane %v891, 7
      %v1309 = vor.u32 %v1307, %v1308
      %v1310 = vsel %vm1182, %v1306, %v1309
      %v1311 = vrot.slane %v1309, 4
      %v1312 = vrot.slane %v898, 6
      %v1313 = vrot.slane %v901, 7
      %v1314 = vor.u32 %v1312, %v1313
      %v1315 = vsel %vm1182, %v1311, %v1314
      %v1316 = vrot.slane %v1314, 4
      %v1317 = vrot.slane %v908, 6
      %v1318 = vrot.slane %v911, 7
      %v1319 = vor.u32 %v1317, %v1318
      %v1320 = vsel %vm1182, %v1316, %v1319
      %v1321 = vrot.slane %v1319, 4
      %v1323 = vshrl.u32 %v1129, 16
      %v1325 = vrot.slane %v1323, 6
      %v1326 = vshll.u32 %v1129, 16
      %v1328 = vrot.slane %v1326, 7
      %v1329 = vor.u32 %v1325, %v1328
      %v1330 = vsel %vm1182, %v1321, %v1329
      %v1331 = vrot.slane %v1329, 4
      %v1333 = vshrl.u32 %v1130, 16
      %v1335 = vrot.slane %v1333, 6
      %v1336 = vshll.u32 %v1130, 16
      %v1338 = vrot.slane %v1336, 7
      %v1339 = vor.u32 %v1335, %v1338
      %v1340 = vsel %vm1182, %v1331, %v1339
      %v1341 = vrot.slane %v1339, 4
      %v1343 = vshrl.u32 %v1131, 16
      %v1345 = vrot.slane %v1343, 6
      %v1346 = vshll.u32 %v1131, 16
      %v1348 = vrot.slane %v1346, 7
      %v1349 = vor.u32 %v1345, %v1348
      %v1350 = vsel %vm1182, %v1341, %v1349
      %v1380 = vmax.bf16 %v1151, %v1195
      %v1381 = vmax.bf16 %v1152, %v1200
      %v1382 = vmax.bf16 %v1153, %v1205
      %v1383 = vmax.bf16 %v1154, %v1210
      %v1384 = vmax.bf16 %v1155, %v1215
      %v1385 = vmax.bf16 %v1156, %v1220
      %v1386 = vmax.bf16 %v1157, %v1225
      %v1387 = vmax.bf16 %v1158, %v1230
      %v1388 = vmax.bf16 %v1159, %v1235
      %v1389 = vmax.bf16 %v1160, %v1240
      %v1390 = vmax.bf16 %v1161, %v1245
      %v1391 = vmax.bf16 %v1162, %v1250
      %v1392 = vmax.bf16 %v1163, %v1255
      %v1393 = vmax.bf16 %v1164, %v1260
      %v1394 = vmax.bf16 %v1165, %v1265
      %v1395 = vmax.bf16 %v1166, %v1270
      %v1396 = vmax.bf16 %v1167, %v1275
      %v1397 = vmax.bf16 %v1168, %v1280
      %v1398 = vmax.bf16 %v1169, %v1285
      %v1399 = vmax.bf16 %v1170, %v1290
      %v1400 = vmax.bf16 %v1171, %v1295
      %v1401 = vmax.bf16 %v1172, %v1300
      %v1402 = vmax.bf16 %v1173, %v1305
      %v1403 = vmax.bf16 %v1174, %v1310
      %v1404 = vmax.bf16 %v1175, %v1315
      %v1405 = vmax.bf16 %v1176, %v1320
      %v1406 = vmax.bf16 %v1177, %v1330
      %v1407 = vmax.bf16 %v1178, %v1340
      %v1408 = vmax.bf16 %v1179, %v1350
      %v1409 = vld [vmem:[%s138 + $0x10] sm:$0x8]
      %v1410 = vld [vmem:[%s138 + $0x84] sm:$0x3]
      %vm1413 = vcmask 1040384
      %vm1414 = vcmask 1044484
      %vm1415 = vmor %vm1413, %vm1414
      %v1416 = vrot.slane %v1409, 7
      %v1417 = vrot.slane %v1416, 4
      %v1418 = vrot.slane %v150, 7
      %v1419 = vsel %vm1415, %v1417, %v1418
      %v1420 = vrot.slane %v1418, 4
      %v1421 = vrot.slane %v151, 7
      %v1422 = vsel %vm1415, %v1420, %v1421
      %v1423 = vrot.slane %v1421, 4
      %v1424 = vrot.slane %v152, 7
      %v1425 = vsel %vm1415, %v1423, %v1424
      %v1426 = vrot.slane %v1424, 4
      %v1427 = vrot.slane %v153, 7
      %v1428 = vsel %vm1415, %v1426, %v1427
      %v1429 = vrot.slane %v1427, 4
      %v1430 = vrot.slane %v154, 7
      %v1431 = vsel %vm1415, %v1429, %v1430
      %v1432 = vrot.slane %v1430, 4
      %v1433 = vrot.slane %v155, 7
      %v1434 = vsel %vm1415, %v1432, %v1433
      %v1435 = vrot.slane %v1433, 4
      %v1436 = vrot.slane %v156, 7
      %v1437 = vsel %vm1415, %v1435, %v1436
      %v1438 = vrot.slane %v1436, 4
      %v1439 = vrot.slane %v157, 7
      %v1440 = vsel %vm1415, %v1438, %v1439
      %v1441 = vrot.slane %v1439, 4
      %v1442 = vrot.slane %v158, 7
      %v1443 = vsel %vm1415, %v1441, %v1442
      %v1444 = vrot.slane %v1442, 4
      %v1445 = vrot.slane %v159, 7
      %v1446 = vsel %vm1415, %v1444, %v1445
      %v1447 = vrot.slane %v1445, 4
      %v1448 = vrot.slane %v160, 7
      %v1449 = vsel %vm1415, %v1447, %v1448
      %v1450 = vrot.slane %v1448, 4
      %v1451 = vrot.slane %v161, 7
      %v1452 = vsel %vm1415, %v1450, %v1451
      %v1453 = vrot.slane %v1451, 4
      %v1454 = vrot.slane %v162, 7
      %v1455 = vsel %vm1415, %v1453, %v1454
      %v1456 = vrot.slane %v1454, 4
      %v1457 = vrot.slane %v163, 7
      %v1458 = vsel %vm1415, %v1456, %v1457
      %v1459 = vrot.slane %v1457, 4
      %v1460 = vrot.slane %v164, 7
      %v1461 = vsel %vm1415, %v1459, %v1460
      %v1462 = vrot.slane %v1460, 4
      %v1463 = vrot.slane %v165, 7
      %v1464 = vsel %vm1415, %v1462, %v1463
      %v1465 = vrot.slane %v1463, 4
      %v1466 = vrot.slane %v166, 7
      %v1467 = vsel %vm1415, %v1465, %v1466
      %v1468 = vrot.slane %v1466, 4
      %v1469 = vrot.slane %v167, 7
      %v1470 = vsel %vm1415, %v1468, %v1469
      %v1471 = vrot.slane %v1469, 4
      %v1472 = vrot.slane %v168, 7
      %v1473 = vsel %vm1415, %v1471, %v1472
      %v1474 = vrot.slane %v1472, 4
      %v1475 = vrot.slane %v169, 7
      %v1476 = vsel %vm1415, %v1474, %v1475
      %v1477 = vrot.slane %v1475, 4
      %v1478 = vrot.slane %v170, 7
      %v1479 = vsel %vm1415, %v1477, %v1478
      %v1480 = vrot.slane %v1478, 4
      %v1481 = vrot.slane %v171, 7
      %v1482 = vsel %vm1415, %v1480, %v1481
      %v1483 = vrot.slane %v1481, 4
      %v1484 = vrot.slane %v172, 7
      %v1485 = vsel %vm1415, %v1483, %v1484
      %v1486 = vrot.slane %v1484, 4
      %v1487 = vrot.slane %v525, 7
      %v1488 = vsel %vm1415, %v1486, %v1487
      %v1489 = vrot.slane %v1487, 4
      %v1490 = vrot.slane %v703, 7
      %v1491 = vsel %vm1415, %v1489, %v1490
      %v1492 = vrot.slane %v1490, 4
      %v1493 = vrot.slane %v704, 7
      %v1494 = vsel %vm1415, %v1492, %v1493
      %v1495 = vrot.slane %v1493, 4
      %v1496 = vrot.slane %v1129, 7
      %v1497 = vsel %vm1415, %v1495, %v1496
      %v1498 = vrot.slane %v1496, 4
      %v1499 = vrot.slane %v1130, 7
      %v1500 = vsel %vm1415, %v1498, %v1499
      %v1501 = vrot.slane %v1499, 4
      %v1502 = vrot.slane %v1410, 7
      %v1503 = vsel %vm1415, %v1501, %v1502
      %v1533 = vmax.bf16 %v1380, %v1419
      %v1534 = vmax.bf16 %v1381, %v1422
      %v1535 = vmax.bf16 %v1382, %v1425
      %v1536 = vmax.bf16 %v1383, %v1428
      %v1537 = vmax.bf16 %v1384, %v1431
      %v1538 = vmax.bf16 %v1385, %v1434
      %v1539 = vmax.bf16 %v1386, %v1437
      %v1540 = vmax.bf16 %v1387, %v1440
      %v1541 = vmax.bf16 %v1388, %v1443
      %v1542 = vmax.bf16 %v1389, %v1446
      %v1543 = vmax.bf16 %v1390, %v1449
      %v1544 = vmax.bf16 %v1391, %v1452
      %v1545 = vmax.bf16 %v1392, %v1455
      %v1546 = vmax.bf16 %v1393, %v1458
      %v1547 = vmax.bf16 %v1394, %v1461
      %v1548 = vmax.bf16 %v1395, %v1464
      %v1549 = vmax.bf16 %v1396, %v1467
      %v1550 = vmax.bf16 %v1397, %v1470
      %v1551 = vmax.bf16 %v1398, %v1473
      %v1552 = vmax.bf16 %v1399, %v1476
      %v1553 = vmax.bf16 %v1400, %v1479
      %v1554 = vmax.bf16 %v1401, %v1482
      %v1555 = vmax.bf16 %v1402, %v1485
      %v1556 = vmax.bf16 %v1403, %v1488
      %v1557 = vmax.bf16 %v1404, %v1491
      %v1558 = vmax.bf16 %v1405, %v1494
      %v1559 = vmax.bf16 %v1406, %v1497
      %v1560 = vmax.bf16 %v1407, %v1500
      %v1561 = vmax.bf16 %v1408, %v1503
      %v1562 = vld [vmem:[%s1] sm:$0xff]
      %v1563 = vld [vmem:[%s1 + $0x8] sm:$0xff]
      %v1564 = vld [vmem:[%s1 + $0x10] sm:$0xff]
      %v1565 = vld [vmem:[%s1 + $0x18] sm:$0xff]
      %v1566 = vld [vmem:[%s1 + $0x20] sm:$0xff]
      %v1567 = vld [vmem:[%s1 + $0x28] sm:$0xff]
      %v1568 = vld [vmem:[%s1 + $0x30] sm:$0xff]
      %v1569 = vld [vmem:[%s1 + $0x38] sm:$0xff]
      %v1570 = vld [vmem:[%s1 + $0x40] sm:$0xff]
      %v1571 = vld [vmem:[%s1 + $0x48] sm:$0xff]
      %v1572 = vld [vmem:[%s1 + $0x50] sm:$0xff]
      %v1573 = vld [vmem:[%s1 + $0x58] sm:$0xff]
      %v1574 = vld [vmem:[%s1 + $0x60] sm:$0xff]
      %v1575 = vld [vmem:[%s1 + $0x68] sm:$0xff]
      %v1576 = vld [vmem:[%s1 + $0x70] sm:$0xff]
      %v1577 = vld [vmem:[%s1 + $0x78] sm:$0xff]
      %v1594 = vunpack.c.l.b16 %v1562
      %v1595 = vunpack.c.h.b16 %v1562
      %v1596 = vunpack.c.l.b16 %v1563
      %v1597 = vunpack.c.h.b16 %v1563
      %v1598 = vunpack.c.l.b16 %v1564
      %v1599 = vunpack.c.h.b16 %v1564
      %v1600 = vunpack.c.l.b16 %v1565
      %v1601 = vunpack.c.h.b16 %v1565
      %v1602 = vunpack.c.l.b16 %v1566
      %v1603 = vunpack.c.h.b16 %v1566
      %v1604 = vunpack.c.l.b16 %v1567
      %v1605 = vunpack.c.h.b16 %v1567
      %v1606 = vunpack.c.l.b16 %v1568
      %v1607 = vunpack.c.h.b16 %v1568
      %v1608 = vunpack.c.l.b16 %v1569
      %v1609 = vunpack.c.h.b16 %v1569
      %v1610 = vunpack.c.l.b16 %v1570
      %v1611 = vunpack.c.h.b16 %v1570
      %v1612 = vunpack.c.l.b16 %v1571
      %v1613 = vunpack.c.h.b16 %v1571
      %v1614 = vunpack.c.l.b16 %v1572
      %v1615 = vunpack.c.h.b16 %v1572
      %v1616 = vunpack.c.l.b16 %v1573
      %v1617 = vunpack.c.h.b16 %v1573
      %v1618 = vunpack.c.l.b16 %v1574
      %v1619 = vunpack.c.h.b16 %v1574
      %v1620 = vunpack.c.l.b16 %v1575
      %v1621 = vunpack.c.h.b16 %v1575
      %v1622 = vunpack.c.l.b16 %v1576
      %v1623 = vunpack.c.h.b16 %v1576
      %v1624 = vunpack.c.l.b16 %v1577
      %v1625 = vunpack.c.h.b16 %v1577
      %v1626 = vpack.c.b16 %v1596, %v1594
      %v1627 = vpack.c.b16 %v1597, %v1595
      %v1628 = vpack.c.b16 %v1600, %v1598
      %v1629 = vpack.c.b16 %v1601, %v1599
      %v1630 = vpack.c.b16 %v1604, %v1602
      %v1631 = vpack.c.b16 %v1605, %v1603
      %v1632 = vpack.c.b16 %v1608, %v1606
      %v1633 = vpack.c.b16 %v1609, %v1607
      %v1634 = vpack.c.b16 %v1612, %v1610
      %v1635 = vpack.c.b16 %v1613, %v1611
      %v1636 = vpack.c.b16 %v1616, %v1614
      %v1637 = vpack.c.b16 %v1617, %v1615
      %v1638 = vpack.c.b16 %v1620, %v1618
      %v1639 = vpack.c.b16 %v1621, %v1619
      %v1640 = vpack.c.b16 %v1624, %v1622
      %v1641 = vpack.c.b16 %v1625, %v1623
      %v1679 = vunpack.c.l.b16 %v1533
      %v1680 = vunpack.c.l.b16 %v1534
      %v1681 = vunpack.c.l.b16 %v1535
      %v1682 = vunpack.c.l.b16 %v1536
      %v1683 = vunpack.c.l.b16 %v1537
      %v1684 = vunpack.c.l.b16 %v1538
      %v1685 = vunpack.c.l.b16 %v1539
      %v1686 = vunpack.c.l.b16 %v1540
      %v1687 = vunpack.c.l.b16 %v1541
      %v1688 = vunpack.c.l.b16 %v1542
      %v1689 = vunpack.c.l.b16 %v1543
      %v1690 = vunpack.c.l.b16 %v1544
      %v1691 = vunpack.c.l.b16 %v1545
      %v1692 = vunpack.c.l.b16 %v1546
      %v1693 = vunpack.c.l.b16 %v1547
      %v1694 = vunpack.c.l.b16 %v1548
      %v1695 = vunpack.c.l.b16 %v1549
      %v1696 = vunpack.c.l.b16 %v1550
      %v1697 = vunpack.c.l.b16 %v1551
      %v1698 = vunpack.c.l.b16 %v1552
      %v1699 = vunpack.c.l.b16 %v1553
      %v1700 = vunpack.c.l.b16 %v1554
      %v1701 = vunpack.c.l.b16 %v1555
      %v1702 = vunpack.c.l.b16 %v1556
      %v1703 = vunpack.c.l.b16 %v1557
      %v1704 = vunpack.c.l.b16 %v1558
      %v1705 = vunpack.c.l.b16 %v1559
      %v1706 = vunpack.c.l.b16 %v1560
      %v1707 = vunpack.c.l.b16 %v1561
      %v1708 = vpack.c.b16 %v1680, %v1679
      %v1709 = vpack.c.b16 %v1682, %v1681
      %v1710 = vpack.c.b16 %v1684, %v1683
      %v1711 = vpack.c.b16 %v1686, %v1685
      %v1712 = vpack.c.b16 %v1688, %v1687
      %v1713 = vpack.c.b16 %v1690, %v1689
      %v1714 = vpack.c.b16 %v1692, %v1691
      %v1715 = vpack.c.b16 %v1694, %v1693
      %v1716 = vpack.c.b16 %v1696, %v1695
      %v1717 = vpack.c.b16 %v1698, %v1697
      %v1718 = vpack.c.b16 %v1700, %v1699
      %v1719 = vpack.c.b16 %v1702, %v1701
      %v1720 = vpack.c.b16 %v1704, %v1703
      %v1721 = vpack.c.b16 %v1706, %v1705
      %v1722 = vpack.c.b16 %v1707, %v1707
      %vm1737 = vcmask 826368
      %v1739 = vsel %vm1737, %v1627, 0
      %v1742 = vsel %vm1737, %v1629, 0
      %v1745 = vsel %vm1737, %v1631, 0
      %v1748 = vsel %vm1737, %v1633, 0
      %v1751 = vsel %vm1737, %v1635, 0
      %v1754 = vsel %vm1737, %v1637, 0
      %v1757 = vsel %vm1737, %v1639, 0
      %v1760 = vsel %vm1737, %v1641, 0
      %vm1762 = vcmask 1041408
      %vm1763 = vcmask 1042432
      %v1764 = vsel %vm1762, 4294967295, 65535
      %v1765 = vsel %vm1763, %v1764, 0
      %v1767 = vand.u32 %v1722, %v1765
      %1769 = vmatprep.subr.bf16.mxu0 0
      %1770 = vmatpush1.bf16.msra.mxu0 %v1708
      %1771 = vmatprep.subr.bf16.mxu0 0
      %1772 = vmatpush1.bf16.msra.mxu0 %v1709
      %1773 = vmatprep.subr.bf16.mxu0 0
      %1774 = vmatpush1.bf16.msra.mxu0 %v1710
      %1775 = vmatprep.subr.bf16.mxu0 0
      %1776 = vmatpush1.bf16.msra.mxu0 %v1711
      %1777 = vmatprep.subr.bf16.mxu0 0
      %1778 = vmatpush1.bf16.msra.mxu0 %v1712
      %1779 = vmatprep.subr.bf16.mxu0 0
      %1780 = vmatpush1.bf16.msra.mxu0 %v1713
      %1781 = vmatprep.subr.bf16.mxu0 0
      %1782 = vmatpush1.bf16.msra.mxu0 %v1714
      %1783 = vmatprep.subr.bf16.mxu0 0
      %1784 = vmatpush1.bf16.msra.mxu0 %v1715
      %1785 = vmatprep.subr.bf16.mxu0 0
      %1786 = vmatpush1.bf16.msra.mxu0 %v1716
      %1787 = vmatprep.subr.bf16.mxu0 0
      %1788 = vmatpush1.bf16.msra.mxu0 %v1717
      %1789 = vmatprep.subr.bf16.mxu0 0
      %1790 = vmatpush1.bf16.msra.mxu0 %v1718
      %1791 = vmatprep.subr.bf16.mxu0 0
      %1792 = vmatpush1.bf16.msra.mxu0 %v1719
      %1793 = vmatprep.subr.bf16.mxu0 0
      %1794 = vmatpush1.bf16.msra.mxu0 %v1720
      %1795 = vmatprep.subr.bf16.mxu0 0
      %1796 = vmatpush1.bf16.msra.mxu0 %v1721
      %1797 = vmatprep.subr.bf16.mxu0 0
      %1798 = vmatpush1.bf16.msra.mxu0 %v1767
      %1799 = vmatprep.subr.bf16.mxu0 0
      %1800 = vmatpush1.bf16.msra.mxu0 0
      %1801 = vmatprep.mubr.bf16.mxu0 %v1739
      %1802 = vmatmul.mubr.bf16.gmra.mrb[0].mxu0 %v1626
      %v1803 = vpop.f32.mrb[0].mxu0
      %v1804 = vadd.f32 0.0, %v1803
      %v1805 = vpop.f32.mrb[0].mxu0
      %v1806 = vpop.f32.mrb[0].mxu0
      %v1807 = vadd.f32 0.0, %v1806
      %v1808 = vpop.f32.mrb[0].mxu0
      %1809 = vmatprep.mubr.bf16.mxu0 %v1742
      %1810 = vmatmul.mubr.bf16.gmra.mrb[0].mxu0 %v1628
      %v1811 = vpop.f32.mrb[0].mxu0
      %v1812 = vadd.f32 0.0, %v1811
      %v1813 = vpop.f32.mrb[0].mxu0
      %v1814 = vpop.f32.mrb[0].mxu0
      %v1815 = vadd.f32 0.0, %v1814
      %v1816 = vpop.f32.mrb[0].mxu0
      %1817 = vmatprep.mubr.bf16.mxu0 %v1745
      %1818 = vmatmul.mubr.bf16.gmra.mrb[0].mxu0 %v1630
      %v1819 = vpop.f32.mrb[0].mxu0
      %v1820 = vadd.f32 0.0, %v1819
      %v1821 = vpop.f32.mrb[0].mxu0
      %v1822 = vpop.f32.mrb[0].mxu0
      %v1823 = vadd.f32 0.0, %v1822
      %v1824 = vpop.f32.mrb[0].mxu0
      %1825 = vmatprep.mubr.bf16.mxu0 %v1748
      %1826 = vmatmul.mubr.bf16.gmra.mrb[0].mxu0 %v1632
      %v1827 = vpop.f32.mrb[0].mxu0
      %v1828 = vadd.f32 0.0, %v1827
      %v1829 = vpop.f32.mrb[0].mxu0
      %v1830 = vpop.f32.mrb[0].mxu0
      %v1831 = vadd.f32 0.0, %v1830
      %v1832 = vpop.f32.mrb[0].mxu0
      %1833 = vmatprep.mubr.bf16.mxu0 %v1751
      %1834 = vmatmul.mubr.bf16.gmra.mrb[0].mxu0 %v1634
      %v1835 = vpop.f32.mrb[0].mxu0
      %v1836 = vadd.f32 0.0, %v1835
      %v1837 = vpop.f32.mrb[0].mxu0
      %v1838 = vpop.f32.mrb[0].mxu0
      %v1839 = vadd.f32 0.0, %v1838
      %v1840 = vpop.f32.mrb[0].mxu0
      %1841 = vmatprep.mubr.bf16.mxu0 %v1754
      %1842 = vmatmul.mubr.bf16.gmra.mrb[0].mxu0 %v1636
      %v1843 = vpop.f32.mrb[0].mxu0
      %v1844 = vadd.f32 0.0, %v1843
      %v1845 = vpop.f32.mrb[0].mxu0
      %v1846 = vpop.f32.mrb[0].mxu0
      %v1847 = vadd.f32 0.0, %v1846
      %v1848 = vpop.f32.mrb[0].mxu0
      %1849 = vmatprep.mubr.bf16.mxu0 %v1757
      %1850 = vmatmul.mubr.bf16.gmra.mrb[0].mxu0 %v1638
      %v1851 = vpop.f32.mrb[0].mxu0
      %v1852 = vadd.f32 0.0, %v1851
      %v1853 = vpop.f32.mrb[0].mxu0
      %v1854 = vpop.f32.mrb[0].mxu0
      %v1855 = vadd.f32 0.0, %v1854
      %v1856 = vpop.f32.mrb[0].mxu0
      %1857 = vmatprep.mubr.bf16.mxu0 %v1760
      %1858 = vmatmul.mubr.bf16.gmra.mrb[0].mxu0 %v1640
      %v1859 = vpop.f32.mrb[0].mxu0
      %v1860 = vadd.f32 0.0, %v1859
      %v1861 = vpop.f32.mrb[0].mxu0
      %v1862 = vpop.f32.mrb[0].mxu0
      %v1863 = vadd.f32 0.0, %v1862
      %v1864 = vpop.f32.mrb[0].mxu0
      %1865 = vdwg.mxu0
      %v1866 = vpack.c.bf16 %v1807, %v1804
      %v1867 = vpack.c.bf16 %v1815, %v1812
      %v1868 = vpack.c.bf16 %v1823, %v1820
      %v1869 = vpack.c.bf16 %v1831, %v1828
      %v1870 = vpack.c.bf16 %v1839, %v1836
      %v1871 = vpack.c.bf16 %v1847, %v1844
      %v1872 = vpack.c.bf16 %v1855, %v1852
      %v1873 = vpack.c.bf16 %v1863, %v1860
      %v1882 = vunpack.c.l.b16 %v1866
      %v1883 = vunpack.c.h.b16 %v1866
      %v1884 = vunpack.c.l.b16 %v1867
      %v1885 = vunpack.c.h.b16 %v1867
      %v1886 = vunpack.c.l.b16 %v1868
      %v1887 = vunpack.c.h.b16 %v1868
      %v1888 = vunpack.c.l.b16 %v1869
      %v1889 = vunpack.c.h.b16 %v1869
      %v1890 = vunpack.c.l.b16 %v1870
      %v1891 = vunpack.c.h.b16 %v1870
      %v1892 = vunpack.c.l.b16 %v1871
      %v1893 = vunpack.c.h.b16 %v1871
      %v1894 = vunpack.c.l.b16 %v1872
      %v1895 = vunpack.c.h.b16 %v1872
      %v1896 = vunpack.c.l.b16 %v1873
      %v1897 = vunpack.c.h.b16 %v1873
      %v1898 = vpack.c.b16 %v1882, %v1882
      %v1899 = vpack.c.b16 %v1883, %v1883
      %v1900 = vpack.c.b16 %v1884, %v1884
      %v1901 = vpack.c.b16 %v1885, %v1885
      %v1902 = vpack.c.b16 %v1886, %v1886
      %v1903 = vpack.c.b16 %v1887, %v1887
      %v1904 = vpack.c.b16 %v1888, %v1888
      %v1905 = vpack.c.b16 %v1889, %v1889
      %v1906 = vpack.c.b16 %v1890, %v1890
      %v1907 = vpack.c.b16 %v1891, %v1891
      %v1908 = vpack.c.b16 %v1892, %v1892
      %v1909 = vpack.c.b16 %v1893, %v1893
      %v1910 = vpack.c.b16 %v1894, %v1894
      %v1911 = vpack.c.b16 %v1895, %v1895
      %v1912 = vpack.c.b16 %v1896, %v1896
      %v1913 = vpack.c.b16 %v1897, %v1897
      %1930 = vst [vmem:[%s143] sm:$0xf] %v1898
      %1931 = vst [vmem:[%s143 + $0x4] sm:$0xf] %v1899
      %1932 = vst [vmem:[%s143 + $0x8] sm:$0xf] %v1900
      %1933 = vst [vmem:[%s143 + $0xc] sm:$0xf] %v1901
      %1934 = vst [vmem:[%s143 + $0x10] sm:$0xf] %v1902
      %1935 = vst [vmem:[%s143 + $0x14] sm:$0xf] %v1903
      %1936 = vst [vmem:[%s143 + $0x18] sm:$0xf] %v1904
      %1937 = vst [vmem:[%s143 + $0x1c] sm:$0xf] %v1905
      %1938 = vst [vmem:[%s143 + $0x20] sm:$0xf] %v1906
      %1939 = vst [vmem:[%s143 + $0x24] sm:$0xf] %v1907
      %1940 = vst [vmem:[%s143 + $0x28] sm:$0xf] %v1908
      %1941 = vst [vmem:[%s143 + $0x2c] sm:$0xf] %v1909
      %1942 = vst [vmem:[%s143 + $0x30] sm:$0xf] %v1910
      %1943 = vst [vmem:[%s143 + $0x34] sm:$0xf] %v1911
      %1944 = vst [vmem:[%s143 + $0x38] sm:$0xf] %v1912
      %1945 = vst [vmem:[%s143 + $0x3c] sm:$0xf] %v1913
      %p1946 = scmp.lt.s32.totalorder %s13, 1
      %s1947 = scalar_select %p1946, %s13, 1
      %s1948 = smul.addr %s1947, 16
      %s1949 = smul.addr %s1948, 4
      %s1950 = scalar_lea.vmem %s2, %s1949
      // Predicated region
      $region29: #{cnn_forward.8} parent=27 // pred_check
        %p1951 = pneg %p78
      $region30: #{cnn_forward.8} parent=27 // pred_check_branch
        %1953 = sbr.rel (%p1951) target = $region32
      $region31: #{cnn_forward.8} parent=27 // pred_region
        _
      $region32: #{cnn_forward.8} parent=27 // pred_fallthru
        _
    $region28: #{cnn_forward.8} parent=5 // pred_fallthru
      _
    %p1954 = scmp.le.s32.totalorder 2, %s8
    // Predicated region
    $region33: #{cnn_forward.8} parent=5 // pred_check
      %p1955 = pneg %p1954
    $region34: #{cnn_forward.8} parent=5 // pred_check_branch
      %1957 = sbr.rel (%p1955) target = $region36
    $region35: #{cnn_forward.8} parent=5 // pred_region
      %s1958 = ssub.s32 %s8, 2
      // Predicated region
      $region37: #{cnn_forward.8} parent=35 // pred_check
        %p1959 = pneg %p84
      $region38: #{cnn_forward.8} parent=35 // pred_check_branch
        %1961 = sbr.rel (%p1959) target = $region40
      $region39: #{cnn_forward.8} parent=35 // pred_region
        %p1962 = scmp.lt.s32.totalorder %s14, 1
        %s1963 = scalar_select %p1962, %s14, 1
        %s1964 = smul.addr %s1963, 16
        %s1965 = smul.addr %s1964, 4
        %s1966 = scalar_lea.vmem %s2, %s1965
      $region40: #{cnn_forward.8} parent=35 // pred_fallthru
        _
    $region36: #{cnn_forward.8} parent=5 // pred_fallthru
      _
  $region6: #{cnn_forward.8} parent=0 // loop_footer
    %s12 = sadd.s32 1, %s8
  $region7: #{cnn_forward.8} parent=0 // loop_footer_branch
    %7 = sbr.rel target = $region3
  $region8: #{cnn_forward.8} parent=0 // loop_exit
    _

// kernel: cnn_forward.12
$region0: #{cnn_forward.12}
  #allocation0 [shape = 'u32[]', space=smem, size = 0x4, offset = 0x4, fixed_abs, tag = 'smem constant byte address 0x4 - core index']
  #allocation1 [shape = 'u32[144,128]{1,0:T(1,128)}', space=vmem, size = 0x12000, scoped, tag = 'internal scratch']
  %s0 = inlined_call_operand.vmem [shape: bf16[2,32,128], index: 0, kind: input, shape index: {}]
  %s1 = inlined_call_operand.vmem [shape: bf16[4,13], index: 1, kind: input, shape index: {}]
  %s2 = inlined_call_operand.vmem [shape: bf16[2,4,128], index: 2, kind: output, shape index: {}]
  %s3 = sld [smem:[#allocation0]]
  $region41: #{cnn_forward.12} parent=0
    _
  %s5 = ssub.s32 1, %s3
  %s6 = scalar_select 0, %s5, %s3
  loop: start=0, step=1, limit=4
  $region2: #{cnn_forward.12} parent=0 // loop_pre_header
    _
  $region3: #{cnn_forward.12} parent=0 // loop_header
    %s8 = sphi 0, %s12
    %p9 = scmp.ge.s32.totalorder %s8, 4
    %s18 = sphi 0, %s20
    %s21 = sphi 0, %s18
    %s22 = sphi 0, %s21
    %s38 = sphi 0, %s22
    %s42 = sphi 0, %s42
    %s44 = sphi 0, %s42
    %s45 = sphi 0, %s44
    %s59 = sphi 0, %s45
    %s65 = sphi 0, %s67
    %s68 = sphi 0, %s65
    %s69 = sphi 0, %s68
    %s85 = sphi 0, %s69
  $region4: #{cnn_forward.12} parent=0 // loop_header_branch
    %11 = sbr.rel (%p9) target = $region8
  $region5: #{cnn_forward.12} parent=0 // loop_body
    %s13 = ssub.s32 %s8, 1
    %s14 = ssub.s32 %s8, 2
    %s15 = sadd.s32 %s8, 1
    %s16 = ssub.s32 %s8, %s15
    %p17 = scmp.eq.s32.totalorder %s16, 0
    %s19 = sadd.s32 %s18, 1
    %s20 = scalar_select %p17, %s18, %s19
    %p23 = pneg %p17
    %p24 = scmp.eq.s32.totalorder %s8, 1
    %p25 = por %p23, %p24
    %p26 = scmp.ne.s32.totalorder %s18, %s21
    %p27 = scmp.eq.s32.totalorder %s8, 0
    %p28 = por %p26, %p27
    %p29 = scmp.ne.s32.totalorder %s18, %s21
    %p30 = scmp.eq.s32.totalorder %s13, 1
    %p31 = por %p29, %p30
    %p32 = scmp.ne.s32.totalorder %s21, %s22
    %p33 = scmp.eq.s32.totalorder %s13, 0
    %p34 = por %p32, %p33
    %p35 = scmp.ne.s32.totalorder %s21, %s22
    %p36 = scmp.eq.s32.totalorder %s14, 1
    %p37 = por %p35, %p36
    %p39 = scmp.ne.s32.totalorder %s22, %s38
    %p40 = scmp.eq.s32.totalorder %s14, 0
    %p41 = por %p39, %p40
    %s43 = sadd.s32 %s42, 1
    %p46 = scmp.eq.s32.totalorder %s8, 1
    %p47 = scmp.ne.s32.totalorder %s42, %s44
    %p48 = scmp.eq.s32.totalorder %s8, 0
    %p49 = por %p47, %p48
    %p50 = scmp.ne.s32.totalorder %s42, %s44
    %p51 = scmp.eq.s32.totalorder %s13, 1
    %p52 = por %p50, %p51
    %p53 = scmp.ne.s32.totalorder %s44, %s45
    %p54 = scmp.eq.s32.totalorder %s13, 0
    %p55 = por %p53, %p54
    %p56 = scmp.ne.s32.totalorder %s44, %s45
    %p57 = scmp.eq.s32.totalorder %s14, 1
    %p58 = por %p56, %p57
    %p60 = scmp.ne.s32.totalorder %s45, %s59
    %p61 = scmp.eq.s32.totalorder %s14, 0
    %p62 = por %p60, %p61
    %s63 = ssub.s32 %s8, %s15
    %p64 = scmp.eq.s32.totalorder %s63, 0
    %s66 = sadd.s32 %s65, 1
    %s67 = scalar_select %p64, %s65, %s66
    %p70 = pneg %p64
    %p71 = scmp.eq.s32.totalorder %s8, 1
    %p72 = por %p70, %p71
    %p73 = scmp.ne.s32.totalorder %s65, %s68
    %p74 = scmp.eq.s32.totalorder %s8, 0
    %p75 = por %p73, %p74
    %p76 = scmp.ne.s32.totalorder %s65, %s68
    %p77 = scmp.eq.s32.totalorder %s13, 1
    %p78 = por %p76, %p77
    %p79 = scmp.ne.s32.totalorder %s68, %s69
    %p80 = scmp.eq.s32.totalorder %s13, 0
    %p81 = por %p79, %p80
    %p82 = scmp.ne.s32.totalorder %s68, %s69
    %p83 = scmp.eq.s32.totalorder %s14, 1
    %p84 = por %p82, %p83
    %p86 = scmp.ne.s32.totalorder %s69, %s85
    %p87 = scmp.eq.s32.totalorder %s14, 0
    %p88 = por %p86, %p87
    %p89 = scmp.le.s32.totalorder 1, %s8
    %p90 = scmp.lt.s32.totalorder %s8, 3
    %p91 = pnand %p89, %p90
    %p92 = pneg %p91
    // Predicated region
    $region9: #{cnn_forward.12} parent=5 // pred_check
      _
    $region10: #{cnn_forward.12} parent=5 // pred_check_branch
      %94 = sbr.rel (%p91) target = $region12
    $region11: #{cnn_forward.12} parent=5 // pred_region
      %s95 = ssub.s32 %s8, 1
      // Predicated region
      $region13: #{cnn_forward.12} parent=11 // pred_check
        %p96 = pneg %p55
      $region14: #{cnn_forward.12} parent=11 // pred_check_branch
        %98 = sbr.rel (%p96) target = $region16
      $region15: #{cnn_forward.12} parent=11 // pred_region
        _
      $region16: #{cnn_forward.12} parent=11 // pred_fallthru
        _
    $region12: #{cnn_forward.12} parent=5 // pred_fallthru
      _
    %p99 = scmp.lt.s32.totalorder %s8, 2
    // Predicated region
    $region17: #{cnn_forward.12} parent=5 // pred_check
      %p100 = pneg %p99
    $region18: #{cnn_forward.12} parent=5 // pred_check_branch
      %102 = sbr.rel (%p100) target = $region20
    $region19: #{cnn_forward.12} parent=5 // pred_region
      // Predicated region
      $region21: #{cnn_forward.12} parent=19 // pred_check
        %p103 = pneg %p28
      $region22: #{cnn_forward.12} parent=19 // pred_check_branch
        %105 = sbr.rel (%p103) target = $region24
      $region23: #{cnn_forward.12} parent=19 // pred_region
        %p106 = scmp.lt.s32.totalorder %s8, 1
        %s107 = scalar_select %p106, %s8, 1
        %s108 = smul.addr %s107, 4
        %s109 = smul.addr %s108, 4
        %s110 = scalar_lea.vmem %s0, %s109
      $region24: #{cnn_forward.12} parent=19 // pred_fallthru
        _
    $region20: #{cnn_forward.12} parent=5 // pred_fallthru
      _
    %p111 = scmp.le.s32.totalorder 1, %s8
    %p112 = scmp.lt.s32.totalorder %s8, 3
    %p113 = pnand %p111, %p112
    %p114 = pneg %p113
    // Predicated region
    $region25: #{cnn_forward.12} parent=5 // pred_check
      _
    $region26: #{cnn_forward.12} parent=5 // pred_check_branch
      %116 = sbr.rel (%p113) target = $region28
    $region27: #{cnn_forward.12} parent=5 // pred_region
      %s117 = ssub.s32 %s8, 1
      %p118 = scmp.lt.s32.totalorder %s13, 1
      %s119 = scalar_select %p118, %s13, 1
      %s120 = smul.addr %s119, 4
      %s121 = smul.addr %s120, 4
      %s122 = scalar_lea.vmem %s0, %s121
      %p123 = pneg %p34
      %p124 = pneg %p31
      %p125 = pneg %p55
      %p126 = pneg %p52
      %p127 = pneg %p81
      %p128 = pneg %p78
      %p129 = scmp.lt.s32.totalorder %s13, 1
      %s130 = scalar_select %p129, %s13, 1
      %s131 = smul.addr %s130, 2
      %s132 = scalar_lea.vmem %s2, %s131
      %p133 = scmp.lt.s32.totalorder %s13, 1
      %s134 = scalar_select %p133, %s13, 1
      %s135 = smul.addr %s134, 4
      %s136 = smul.addr %s135, 4
      %s137 = scalar_lea.vmem %s0, %s136
      %p138 = scmp.lt.s32.totalorder %s13, 1
      %s139 = scalar_select %p138, %s13, 1
      %s140 = smul.addr %s139, 2
      %s141 = scalar_lea.vmem %s2, %s140
      %v143 = vld [vmem:[%s137] sm:$0xf]
      %v144 = vld [vmem:[%s137 + $0x4] sm:$0x7]
      %vm145 = vsmask.f32 3328
      %vm146 = vsmask.f32 7440
      %vm147 = vmor %vm145, %vm146
      %v149 = vshrl.u32 %v143, 16
      %v151 = vrot.slane %v149, 4
      %v152 = vshll.u32 %v143, 16
      %v154 = vrot.slane %v152, 5
      %v155 = vor.u32 %v151, %v154
      %v156 = vrot.slane %v155, 4
      %v158 = vshll.u32 %v144, 16
      %v160 = vrot.slane %v158, 5
      %v161 = vsel %vm147, %v156, %v160
      %v162 = vshrl.u32 %v144, 16
      %v164 = vrot.slane %v162, 4
      %v165 = vor.u32 %v164, %v160
      %v166 = vrot.slane %v165, 4
      %v169 = vmax.bf16 %v143, %v161
      %v170 = vmax.bf16 %v144, %v166
      %v171 = vld [vmem:[%s137] sm:$0xc]
      %v172 = vld [vmem:[%s137 + $0x4] sm:$0xf]
      %v173 = vld [vmem:[%s137 + $0x8] sm:$0x1]
      %vm174 = vsmask.f32 1280
      %vm175 = vsmask.f32 5392
      %vm176 = vmor %vm174, %vm175
      %v178 = vshrl.u32 %v171, 16
      %v180 = vrot.slane %v178, 6
      %v181 = vshll.u32 %v171, 16
      %v183 = vrot.slane %v181, 7
      %v184 = vor.u32 %v180, %v183
      %v185 = vrot.slane %v184, 4
      %v187 = vshrl.u32 %v172, 16
      %v189 = vrot.slane %v187, 6
      %v190 = vshll.u32 %v172, 16
      %v192 = vrot.slane %v190, 7
      %v193 = vor.u32 %v189, %v192
      %v194 = vsel %vm176, %v185, %v193
      %v195 = vrot.slane %v193, 4
      %v197 = vshrl.u32 %v173, 16
      %v199 = vrot.slane %v197, 6
      %v200 = vshll.u32 %v173, 16
      %v202 = vrot.slane %v200, 7
      %v203 = vor.u32 %v199, %v202
      %v204 = vsel %vm176, %v195, %v203
      %v207 = vmax.bf16 %v169, %v194
      %v208 = vmax.bf16 %v170, %v204
      %v209 = vld [vmem:[%s137] sm:$0x8]
      %v210 = vld [vmem:[%s137 + $0x8] sm:$0x3]
      %vm214 = vcmask 1040384
      %vm215 = vcmask 1044484
      %vm216 = vmor %vm214, %vm215
      %v217 = vrot.slane %v209, 7
      %v218 = vrot.slane %v217, 4
      %v219 = vrot.slane %v172, 7
      %v220 = vsel %vm216, %v218, %v219
      %v221 = vrot.slane %v219, 4
      %v222 = vrot.slane %v210, 7
      %v223 = vsel %vm216, %v221, %v222
      %v226 = vmax.bf16 %v207, %v220
      %v227 = vmax.bf16 %v208, %v223
      %v228 = vld [vmem:[%s1] sm:$0x3]
      %v231 = vunpack.c.l.b16 %v226
      %v232 = vunpack.c.l.b16 %v227
      %v233 = vpack.c.b16 %v232, %v231
      %vm234 = vcmask 105472
      %v236 = vsel %vm234, %v228, 0
      %vm238 = vcmask 1045504
      %vm239 = vcmask 1046528
      %v240 = vsel %vm238, 4294967295, 65535
      %v241 = vsel %vm239, %v240, 0
      %v243 = vand.u32 %v233, %v241
      %245 = vmatprep.subr.bf16.mxu0 0
      %246 = vmatpush1.bf16.msra.mxu0 %v243
      %247 = vmatprep.subr.bf16.mxu0 0
      %248 = vmatpush1.bf16.msra.mxu0 0
      %249 = vmatprep.subr.bf16.mxu0 0
      %250 = vmatpush1.bf16.msra.mxu0 0
      %251 = vmatprep.subr.bf16.mxu0 0
      %252 = vmatpush1.bf16.msra.mxu0 0
      %253 = vmatprep.subr.bf16.mxu0 0
      %254 = vmatpush1.bf16.msra.mxu0 0
      %255 = vmatprep.subr.bf16.mxu0 0
      %256 = vmatpush1.bf16.msra.mxu0 0
      %257 = vmatprep.subr.bf16.mxu0 0
      %258 = vmatpush1.bf16.msra.mxu0 0
      %259 = vmatprep.subr.bf16.mxu0 0
      %260 = vmatpush1.bf16.msra.mxu0 0
      %261 = vmatprep.subr.bf16.mxu0 0
      %262 = vmatpush1.bf16.msra.mxu0 0
      %263 = vmatprep.subr.bf16.mxu0 0
      %264 = vmatpush1.bf16.msra.mxu0 0
      %265 = vmatprep.subr.bf16.mxu0 0
      %266 = vmatpush1.bf16.msra.mxu0 0
      %267 = vmatprep.subr.bf16.mxu0 0
      %268 = vmatpush1.bf16.msra.mxu0 0
      %269 = vmatprep.subr.bf16.mxu0 0
      %270 = vmatpush1.bf16.msra.mxu0 0
      %271 = vmatprep.subr.bf16.mxu0 0
      %272 = vmatpush1.bf16.msra.mxu0 0
      %273 = vmatprep.subr.bf16.mxu0 0
      %274 = vmatpush1.bf16.msra.mxu0 0
      %275 = vmatprep.subr.bf16.mxu0 0
      %276 = vmatpush1.bf16.msra.mxu0 0
      %277 = vmatprep.mubr.bf16.mxu0 0
      %278 = vmatmul.mubr.bf16.gmra.mrb[0].mxu0 %v236
      %v279 = vpop.f32.mrb[0].mxu0
      %v280 = vadd.f32 0.0, %v279
      %v281 = vpop.f32.mrb[0].mxu0
      %v282 = vpop.f32.mrb[0].mxu0
      %v283 = vpop.f32.mrb[0].mxu0
      %284 = vdwg.mxu0
      %v285 = vpack.c.bf16 %v280, %v280
      %286 = vst [vmem:[%s141] sm:$0x3] %v285
      %p287 = scmp.lt.s32.totalorder %s13, 1
      %s288 = scalar_select %p287, %s13, 1
      %s289 = smul.addr %s288, 2
      %s290 = scalar_lea.vmem %s2, %s289
      // Predicated region
      $region29: #{cnn_forward.12} parent=27 // pred_check
        %p291 = pneg %p78
      $region30: #{cnn_forward.12} parent=27 // pred_check_branch
        %293 = sbr.rel (%p291) target = $region32
      $region31: #{cnn_forward.12} parent=27 // pred_region
        _
      $region32: #{cnn_forward.12} parent=27 // pred_fallthru
        _
    $region28: #{cnn_forward.12} parent=5 // pred_fallthru
      _
    %p294 = scmp.le.s32.totalorder 2, %s8
    // Predicated region
    $region33: #{cnn_forward.12} parent=5 // pred_check
      %p295 = pneg %p294
    $region34: #{cnn_forward.12} parent=5 // pred_check_branch
      %297 = sbr.rel (%p295) target = $region36
    $region35: #{cnn_forward.12} parent=5 // pred_region
      %s298 = ssub.s32 %s8, 2
      // Predicated region
      $region37: #{cnn_forward.12} parent=35 // pred_check
        %p299 = pneg %p84
      $region38: #{cnn_forward.12} parent=35 // pred_check_branch
        %301 = sbr.rel (%p299) target = $region40
      $region39: #{cnn_forward.12} parent=35 // pred_region
        %p302 = scmp.lt.s32.totalorder %s14, 1
        %s303 = scalar_select %p302, %s14, 1
        %s304 = smul.addr %s303, 2
        %s305 = scalar_lea.vmem %s2, %s304
      $region40: #{cnn_forward.12} parent=35 // pred_fallthru
        _
    $region36: #{cnn_forward.12} parent=5 // pred_fallthru
      _
  $region6: #{cnn_forward.12} parent=0 // loop_footer
    %s12 = sadd.s32 1, %s8
  $region7: #{cnn_forward.12} parent=0 // loop_footer_branch
    %7 = sbr.rel target = $region3
  $region8: #{cnn_forward.12} parent=0 // loop_exit
    _

// kernel: cnn_forward.13
$region0: #{cnn_forward.13}
  #allocation0 [shape = 'u32[]', space=smem, size = 0x4, offset = 0x4, fixed_abs, tag = 'smem constant byte address 0x4 - core index']
  #allocation1 [shape = 'u32[144,128]{1,0:T(1,128)}', space=vmem, size = 0x12000, scoped, tag = 'internal scratch']
  %s0 = inlined_call_operand.vmem [shape: bf16[2,512], index: 0, kind: input, shape index: {}]
  %s1 = inlined_call_operand.vmem [shape: bf16[512,128], index: 1, kind: input, shape index: {}]
  %s2 = inlined_call_operand.vmem [shape: f32[1,128], index: 2, kind: input, shape index: {}]
  %s3 = inlined_call_operand.vmem [shape: bf16[128,128], index: 3, kind: input, shape index: {}]
  %s4 = inlined_call_operand.vmem [shape: f32[1,128], index: 4, kind: input, shape index: {}]
  %s5 = inlined_call_operand.hbm [shape: f32[2,128], index: 5, kind: output, shape index: {}]
  %s6 = sld [smem:[#allocation0]]
  $region30: #{cnn_forward.13} parent=0
    _
  %s8 = ssub.s32 1, %s6
  %s9 = scalar_select 0, %s8, %s6
  $region1: #{cnn_forward.13} parent=0
    #allocation2 [shape = 'u8[1024]{0}', space=vmem, size = 0x400, scoped, tag = 'output window, operand 0, single buffered']
    #allocation3 [shape = 's32[1]{0}', space=sflag, size = 0x4, scoped, tag = 'scoped memory for cnn_forward.13']
    %10 = vsyncpa [#allocation3], 0
    // Predicated region
    $region2: #{cnn_forward.13} parent=1 // pred_check
      _
    $region3: #{cnn_forward.13} parent=1 // pred_check_branch
      %12 = sbr.rel (0) target = $region5
    $region4: #{cnn_forward.13} parent=1 // pred_region
      _
    $region5: #{cnn_forward.13} parent=1 // pred_fallthru
      _
    // Predicated region
    $region6: #{cnn_forward.13} parent=1 // pred_check
      _
    $region7: #{cnn_forward.13} parent=1 // pred_check_branch
      %14 = sbr.rel (0) target = $region9
    $region8: #{cnn_forward.13} parent=1 // pred_region
      _
    $region9: #{cnn_forward.13} parent=1 // pred_fallthru
      _
    // Predicated region
    $region10: #{cnn_forward.13} parent=1 // pred_check
      _
    $region11: #{cnn_forward.13} parent=1 // pred_check_branch
      %16 = sbr.rel (0) target = $region13
    $region12: #{cnn_forward.13} parent=1 // pred_region
      _
    $region13: #{cnn_forward.13} parent=1 // pred_fallthru
      _
    // Predicated region
    $region14: #{cnn_forward.13} parent=1 // pred_check
      _
    $region15: #{cnn_forward.13} parent=1 // pred_check_branch
      %18 = sbr.rel (0) target = $region17
    $region16: #{cnn_forward.13} parent=1 // pred_region
      _
    $region17: #{cnn_forward.13} parent=1 // pred_fallthru
      _
    // Predicated region
    $region18: #{cnn_forward.13} parent=1 // pred_check
      _
    $region19: #{cnn_forward.13} parent=1 // pred_check_branch
      %20 = sbr.rel (0) target = $region21
    $region20: #{cnn_forward.13} parent=1 // pred_region
      _
    $region21: #{cnn_forward.13} parent=1 // pred_fallthru
      _
    %v22 = vld [vmem:[%s0] sm:$0xf]
    %v23 = vld [vmem:[%s1] sm:$0xf]
    %v24 = vld [vmem:[%s1 + $0x4] sm:$0xf]
    %v25 = vld [vmem:[%s1 + $0x8] sm:$0xf]
    %v26 = vld [vmem:[%s1 + $0xc] sm:$0xf]
    %v27 = vld [vmem:[%s1 + $0x10] sm:$0xf]
    %v28 = vld [vmem:[%s1 + $0x14] sm:$0xf]
    %v29 = vld [vmem:[%s1 + $0x18] sm:$0xf]
    %v30 = vld [vmem:[%s1 + $0x1c] sm:$0xf]
    %v31 = vld [vmem:[%s1 + $0x20] sm:$0xf]
    %v32 = vld [vmem:[%s1 + $0x24] sm:$0xf]
    %v33 = vld [vmem:[%s1 + $0x28] sm:$0xf]
    %v34 = vld [vmem:[%s1 + $0x2c] sm:$0xf]
    %v35 = vld [vmem:[%s1 + $0x30] sm:$0xf]
    %v36 = vld [vmem:[%s1 + $0x34] sm:$0xf]
    %v37 = vld [vmem:[%s1 + $0x38] sm:$0xf]
    %v38 = vld [vmem:[%s1 + $0x3c] sm:$0xf]
    %v39 = vld [vmem:[%s1 + $0x40] sm:$0xf]
    %v40 = vld [vmem:[%s1 + $0x44] sm:$0xf]
    %v41 = vld [vmem:[%s1 + $0x48] sm:$0xf]
    %v42 = vld [vmem:[%s1 + $0x4c] sm:$0xf]
    %v43 = vld [vmem:[%s1 + $0x50] sm:$0xf]
    %v44 = vld [vmem:[%s1 + $0x54] sm:$0xf]
    %v45 = vld [vmem:[%s1 + $0x58] sm:$0xf]
    %v46 = vld [vmem:[%s1 + $0x5c] sm:$0xf]
    %v47 = vld [vmem:[%s1 + $0x60] sm:$0xf]
    %v48 = vld [vmem:[%s1 + $0x64] sm:$0xf]
    %v49 = vld [vmem:[%s1 + $0x68] sm:$0xf]
    %v50 = vld [vmem:[%s1 + $0x6c] sm:$0xf]
    %v51 = vld [vmem:[%s1 + $0x70] sm:$0xf]
    %v52 = vld [vmem:[%s1 + $0x74] sm:$0xf]
    %v53 = vld [vmem:[%s1 + $0x78] sm:$0xf]
    %v54 = vld [vmem:[%s1 + $0x7c] sm:$0xf]
    %v55 = vld [vmem:[%s1 + $0x80] sm:$0xf]
    %v56 = vld [vmem:[%s1 + $0x84] sm:$0xf]
    %v57 = vld [vmem:[%s1 + $0x88] sm:$0xf]
    %v58 = vld [vmem:[%s1 + $0x8c] sm:$0xf]
    %v59 = vld [vmem:[%s1 + $0x90] sm:$0xf]
    %v60 = vld [vmem:[%s1 + $0x94] sm:$0xf]
    %v61 = vld [vmem:[%s1 + $0x98] sm:$0xf]
    %v62 = vld [vmem:[%s1 + $0x9c] sm:$0xf]
    %v63 = vld [vmem:[%s1 + $0xa0] sm:$0xf]
    %v64 = vld [vmem:[%s1 + $0xa4] sm:$0xf]
    %v65 = vld [vmem:[%s1 + $0xa8] sm:$0xf]
    %v66 = vld [vmem:[%s1 + $0xac] sm:$0xf]
    %v67 = vld [vmem:[%s1 + $0xb0] sm:$0xf]
    %v68 = vld [vmem:[%s1 + $0xb4] sm:$0xf]
    %v69 = vld [vmem:[%s1 + $0xb8] sm:$0xf]
    %v70 = vld [vmem:[%s1 + $0xbc] sm:$0xf]
    %v71 = vld [vmem:[%s1 + $0xc0] sm:$0xf]
    %v72 = vld [vmem:[%s1 + $0xc4] sm:$0xf]
    %v73 = vld [vmem:[%s1 + $0xc8] sm:$0xf]
    %v74 = vld [vmem:[%s1 + $0xcc] sm:$0xf]
    %v75 = vld [vmem:[%s1 + $0xd0] sm:$0xf]
    %v76 = vld [vmem:[%s1 + $0xd4] sm:$0xf]
    %v77 = vld [vmem:[%s1 + $0xd8] sm:$0xf]
    %v78 = vld [vmem:[%s1 + $0xdc] sm:$0xf]
    %v79 = vld [vmem:[%s1 + $0xe0] sm:$0xf]
    %v80 = vld [vmem:[%s1 + $0xe4] sm:$0xf]
    %v81 = vld [vmem:[%s1 + $0xe8] sm:$0xf]
    %v82 = vld [vmem:[%s1 + $0xec] sm:$0xf]
    %v83 = vld [vmem:[%s1 + $0xf0] sm:$0xf]
    %v84 = vld [vmem:[%s1 + $0xf4] sm:$0xf]
    %v85 = vld [vmem:[%s1 + $0xf8] sm:$0xf]
    %v86 = vld [vmem:[%s1 + $0xfc] sm:$0xf]
    %v87 = vld [vmem:[%s2] sm:$0x1]
    %v89 = vlaneseq
    %v90 = vshrl.u32 %v89, 7
    %v91 = vsub.s32 0, %v90
    %v92 = vrot.slane %v87, %v91
    %v96 = vunpack.c.l.s4 1966171168
    %v97 = vunpack.c.0.s8 %v96
    %v98 = vlaneseq
    %v99 = vshrl.u32 %v98, 7
    %v100 = vsub.s32 %v97, %v99
    %v101 = vrot.slane %v22, %v100
    %v102 = vcombine.high %v101, %v101
    %v104 = vunpack.c.l.s4 1966171168
    %v105 = vunpack.c.0.s8 %v104
    %v106 = vlaneseq
    %v107 = vshrl.u32 %v106, 7
    %v108 = vsub.s32 %v105, %v107
    %v109 = vrot.slane %v101, %v108
    %v111 = vunpack.c.l.s4 1966171168
    %v112 = vunpack.c.0.s8 %v111
    %v113 = vlaneseq
    %v114 = vshrl.u32 %v113, 7
    %v115 = vsub.s32 %v112, %v114
    %v116 = vrot.slane %v102, %v115
    %v117 = vcombine.high %v109, %v109
    %v118 = vcombine.high %v116, %v116
    %v187 = vunpack.c.l.b16 %v23
    %v188 = vunpack.c.l.b16 %v24
    %v189 = vunpack.c.l.b16 %v25
    %v190 = vunpack.c.l.b16 %v26
    %v191 = vunpack.c.l.b16 %v27
    %v192 = vunpack.c.l.b16 %v28
    %v193 = vunpack.c.l.b16 %v29
    %v194 = vunpack.c.l.b16 %v30
    %v195 = vunpack.c.l.b16 %v31
    %v196 = vunpack.c.l.b16 %v32
    %v197 = vunpack.c.l.b16 %v33
    %v198 = vunpack.c.l.b16 %v34
    %v199 = vunpack.c.l.b16 %v35
    %v200 = vunpack.c.l.b16 %v36
    %v201 = vunpack.c.l.b16 %v37
    %v202 = vunpack.c.l.b16 %v38
    %v203 = vunpack.c.l.b16 %v39
    %v204 = vunpack.c.l.b16 %v40
    %v205 = vunpack.c.l.b16 %v41
    %v206 = vunpack.c.l.b16 %v42
    %v207 = vunpack.c.l.b16 %v43
    %v208 = vunpack.c.l.b16 %v44
    %v209 = vunpack.c.l.b16 %v45
    %v210 = vunpack.c.l.b16 %v46
    %v211 = vunpack.c.l.b16 %v47
    %v212 = vunpack.c.l.b16 %v48
    %v213 = vunpack.c.l.b16 %v49
    %v214 = vunpack.c.l.b16 %v50
    %v215 = vunpack.c.l.b16 %v51
    %v216 = vunpack.c.l.b16 %v52
    %v217 = vunpack.c.l.b16 %v53
    %v218 = vunpack.c.l.b16 %v54
    %v219 = vunpack.c.l.b16 %v55
    %v220 = vunpack.c.l.b16 %v56
    %v221 = vunpack.c.l.b16 %v57
    %v222 = vunpack.c.l.b16 %v58
    %v223 = vunpack.c.l.b16 %v59
    %v224 = vunpack.c.l.b16 %v60
    %v225 = vunpack.c.l.b16 %v61
    %v226 = vunpack.c.l.b16 %v62
    %v227 = vunpack.c.l.b16 %v63
    %v228 = vunpack.c.l.b16 %v64
    %v229 = vunpack.c.l.b16 %v65
    %v230 = vunpack.c.l.b16 %v66
    %v231 = vunpack.c.l.b16 %v67
    %v232 = vunpack.c.l.b16 %v68
    %v233 = vunpack.c.l.b16 %v69
    %v234 = vunpack.c.l.b16 %v70
    %v235 = vunpack.c.l.b16 %v71
    %v236 = vunpack.c.l.b16 %v72
    %v237 = vunpack.c.l.b16 %v73
    %v238 = vunpack.c.l.b16 %v74
    %v239 = vunpack.c.l.b16 %v75
    %v240 = vunpack.c.l.b16 %v76
    %v241 = vunpack.c.l.b16 %v77
    %v242 = vunpack.c.l.b16 %v78
    %v243 = vunpack.c.l.b16 %v79
    %v244 = vunpack.c.l.b16 %v80
    %v245 = vunpack.c.l.b16 %v81
    %v246 = vunpack.c.l.b16 %v82
    %v247 = vunpack.c.l.b16 %v83
    %v248 = vunpack.c.l.b16 %v84
    %v249 = vunpack.c.l.b16 %v85
    %v250 = vunpack.c.l.b16 %v86
    %v251 = vpack.c.b16 %v188, %v187
    %v252 = vpack.c.b16 %v190, %v189
    %v253 = vpack.c.b16 %v192, %v191
    %v254 = vpack.c.b16 %v194, %v193
    %v255 = vpack.c.b16 %v196, %v195
    %v256 = vpack.c.b16 %v198, %v197
    %v257 = vpack.c.b16 %v200, %v199
    %v258 = vpack.c.b16 %v202, %v201
    %v259 = vpack.c.b16 %v204, %v203
    %v260 = vpack.c.b16 %v206, %v205
    %v261 = vpack.c.b16 %v208, %v207
    %v262 = vpack.c.b16 %v210, %v209
    %v263 = vpack.c.b16 %v212, %v211
    %v264 = vpack.c.b16 %v214, %v213
    %v265 = vpack.c.b16 %v216, %v215
    %v266 = vpack.c.b16 %v218, %v217
    %v267 = vpack.c.b16 %v220, %v219
    %v268 = vpack.c.b16 %v222, %v221
    %v269 = vpack.c.b16 %v224, %v223
    %v270 = vpack.c.b16 %v226, %v225
    %v271 = vpack.c.b16 %v228, %v227
    %v272 = vpack.c.b16 %v230, %v229
    %v273 = vpack.c.b16 %v232, %v231
    %v274 = vpack.c.b16 %v234, %v233
    %v275 = vpack.c.b16 %v236, %v235
    %v276 = vpack.c.b16 %v238, %v237
    %v277 = vpack.c.b16 %v240, %v239
    %v278 = vpack.c.b16 %v242, %v241
    %v279 = vpack.c.b16 %v244, %v243
    %v280 = vpack.c.b16 %v246, %v245
    %v281 = vpack.c.b16 %v248, %v247
    %v282 = vpack.c.b16 %v250, %v249
    %315 = vmatprep.subr.bf16.mxu0 0
    %316 = vmatpush1.bf16.msra.mxu0 %v251
    %317 = vmatprep.subr.bf16.mxu0 0
    %318 = vmatpush1.bf16.msra.mxu0 %v252
    %319 = vmatprep.subr.bf16.mxu0 0
    %320 = vmatpush1.bf16.msra.mxu0 %v253
    %321 = vmatprep.subr.bf16.mxu0 0
    %322 = vmatpush1.bf16.msra.mxu0 %v254
    %323 = vmatprep.subr.bf16.mxu0 0
    %324 = vmatpush1.bf16.msra.mxu0 %v255
    %325 = vmatprep.subr.bf16.mxu0 0
    %326 = vmatpush1.bf16.msra.mxu0 %v256
    %327 = vmatprep.subr.bf16.mxu0 0
    %328 = vmatpush1.bf16.msra.mxu0 %v257
    %329 = vmatprep.subr.bf16.mxu0 0
    %330 = vmatpush1.bf16.msra.mxu0 %v258
    %331 = vmatprep.subr.bf16.mxu0 0
    %332 = vmatpush1.bf16.msra.mxu0 %v259
    %333 = vmatprep.subr.bf16.mxu0 0
    %334 = vmatpush1.bf16.msra.mxu0 %v260
    %335 = vmatprep.subr.bf16.mxu0 0
    %336 = vmatpush1.bf16.msra.mxu0 %v261
    %337 = vmatprep.subr.bf16.mxu0 0
    %338 = vmatpush1.bf16.msra.mxu0 %v262
    %339 = vmatprep.subr.bf16.mxu0 0
    %340 = vmatpush1.bf16.msra.mxu0 %v263
    %341 = vmatprep.subr.bf16.mxu0 0
    %342 = vmatpush1.bf16.msra.mxu0 %v264
    %343 = vmatprep.subr.bf16.mxu0 0
    %344 = vmatpush1.bf16.msra.mxu0 %v265
    %345 = vmatprep.subr.bf16.mxu0 0
    %346 = vmatpush1.bf16.msra.mxu0 %v266
    %347 = vmatprep.mubr.bf16.mxu0 %v116
    %348 = vmatmul.mubr.bf16.gmra.mrb[0].mxu0 %v109
    %v349 = vpop.f32.mrb[0].mxu0
    %v350 = vadd.f32 %v92, %v349
    %v351 = vpop.f32.mrb[0].mxu0
    %v352 = vpop.f32.mrb[0].mxu0
    %v353 = vpop.f32.mrb[0].mxu0
    %354 = vdwg.mxu0
    %355 = vmatprep.subr.bf16.mxu0 0
    %356 = vmatpush1.bf16.msra.mxu0 %v267
    %357 = vmatprep.subr.bf16.mxu0 0
    %358 = vmatpush1.bf16.msra.mxu0 %v268
    %359 = vmatprep.subr.bf16.mxu0 0
    %360 = vmatpush1.bf16.msra.mxu0 %v269
    %361 = vmatprep.subr.bf16.mxu0 0
    %362 = vmatpush1.bf16.msra.mxu0 %v270
    %363 = vmatprep.subr.bf16.mxu0 0
    %364 = vmatpush1.bf16.msra.mxu0 %v271
    %365 = vmatprep.subr.bf16.mxu0 0
    %366 = vmatpush1.bf16.msra.mxu0 %v272
    %367 = vmatprep.subr.bf16.mxu0 0
    %368 = vmatpush1.bf16.msra.mxu0 %v273
    %369 = vmatprep.subr.bf16.mxu0 0
    %370 = vmatpush1.bf16.msra.mxu0 %v274
    %371 = vmatprep.subr.bf16.mxu0 0
    %372 = vmatpush1.bf16.msra.mxu0 %v275
    %373 = vmatprep.subr.bf16.mxu0 0
    %374 = vmatpush1.bf16.msra.mxu0 %v276
    %375 = vmatprep.subr.bf16.mxu0 0
    %376 = vmatpush1.bf16.msra.mxu0 %v277
    %377 = vmatprep.subr.bf16.mxu0 0
    %378 = vmatpush1.bf16.msra.mxu0 %v278
    %379 = vmatprep.subr.bf16.mxu0 0
    %380 = vmatpush1.bf16.msra.mxu0 %v279
    %381 = vmatprep.subr.bf16.mxu0 0
    %382 = vmatpush1.bf16.msra.mxu0 %v280
    %383 = vmatprep.subr.bf16.mxu0 0
    %384 = vmatpush1.bf16.msra.mxu0 %v281
    %385 = vmatprep.subr.bf16.mxu0 0
    %386 = vmatpush1.bf16.msra.mxu0 %v282
    %387 = vmatprep.mubr.bf16.mxu0 %v118
    %388 = vmatmul.mubr.bf16.gmra.mrb[0].mxu0 %v117
    %v389 = vpop.f32.mrb[0].mxu0
    %v390 = vadd.f32 %v350, %v389
    %v391 = vpop.f32.mrb[0].mxu0
    %v392 = vpop.f32.mrb[0].mxu0
    %v393 = vpop.f32.mrb[0].mxu0
    %394 = vdwg.mxu0
    %v395 = vmax.f32 %v390, 0.0
    %v396 = vpack.c.bf16 %v395, %v395
    %v397 = vld [vmem:[%s3] sm:$0xf]
    %v398 = vld [vmem:[%s3 + $0x4] sm:$0xf]
    %v399 = vld [vmem:[%s3 + $0x8] sm:$0xf]
    %v400 = vld [vmem:[%s3 + $0xc] sm:$0xf]
    %v401 = vld [vmem:[%s3 + $0x10] sm:$0xf]
    %v402 = vld [vmem:[%s3 + $0x14] sm:$0xf]
    %v403 = vld [vmem:[%s3 + $0x18] sm:$0xf]
    %v404 = vld [vmem:[%s3 + $0x1c] sm:$0xf]
    %v405 = vld [vmem:[%s3 + $0x20] sm:$0xf]
    %v406 = vld [vmem:[%s3 + $0x24] sm:$0xf]
    %v407 = vld [vmem:[%s3 + $0x28] sm:$0xf]
    %v408 = vld [vmem:[%s3 + $0x2c] sm:$0xf]
    %v409 = vld [vmem:[%s3 + $0x30] sm:$0xf]
    %v410 = vld [vmem:[%s3 + $0x34] sm:$0xf]
    %v411 = vld [vmem:[%s3 + $0x38] sm:$0xf]
    %v412 = vld [vmem:[%s3 + $0x3c] sm:$0xf]
    %v413 = vld [vmem:[%s4] sm:$0x1]
    %v415 = vlaneseq
    %v416 = vshrl.u32 %v415, 7
    %v417 = vsub.s32 0, %v416
    %v418 = vrot.slane %v413, %v417
    %v436 = vunpack.c.l.b16 %v397
    %v437 = vunpack.c.l.b16 %v398
    %v438 = vunpack.c.l.b16 %v399
    %v439 = vunpack.c.l.b16 %v400
    %v440 = vunpack.c.l.b16 %v401
    %v441 = vunpack.c.l.b16 %v402
    %v442 = vunpack.c.l.b16 %v403
    %v443 = vunpack.c.l.b16 %v404
    %v444 = vunpack.c.l.b16 %v405
    %v445 = vunpack.c.l.b16 %v406
    %v446 = vunpack.c.l.b16 %v407
    %v447 = vunpack.c.l.b16 %v408
    %v448 = vunpack.c.l.b16 %v409
    %v449 = vunpack.c.l.b16 %v410
    %v450 = vunpack.c.l.b16 %v411
    %v451 = vunpack.c.l.b16 %v412
    %v452 = vpack.c.b16 %v437, %v436
    %v453 = vpack.c.b16 %v439, %v438
    %v454 = vpack.c.b16 %v441, %v440
    %v455 = vpack.c.b16 %v443, %v442
    %v456 = vpack.c.b16 %v445, %v444
    %v457 = vpack.c.b16 %v447, %v446
    %v458 = vpack.c.b16 %v449, %v448
    %v459 = vpack.c.b16 %v451, %v450
    %468 = vmatprep.subr.bf16.mxu0 0
    %469 = vmatpush1.bf16.msra.mxu0 %v452
    %470 = vmatprep.subr.bf16.mxu0 0
    %471 = vmatpush1.bf16.msra.mxu0 %v453
    %472 = vmatprep.subr.bf16.mxu0 0
    %473 = vmatpush1.bf16.msra.mxu0 %v454
    %474 = vmatprep.subr.bf16.mxu0 0
    %475 = vmatpush1.bf16.msra.mxu0 %v455
    %476 = vmatprep.subr.bf16.mxu0 0
    %477 = vmatpush1.bf16.msra.mxu0 %v456
    %478 = vmatprep.subr.bf16.mxu0 0
    %479 = vmatpush1.bf16.msra.mxu0 %v457
    %480 = vmatprep.subr.bf16.mxu0 0
    %481 = vmatpush1.bf16.msra.mxu0 %v458
    %482 = vmatprep.subr.bf16.mxu0 0
    %483 = vmatpush1.bf16.msra.mxu0 %v459
    %484 = vmatprep.subr.bf16.mxu0 0
    %485 = vmatpush1.bf16.msra.mxu0 0
    %486 = vmatprep.subr.bf16.mxu0 0
    %487 = vmatpush1.bf16.msra.mxu0 0
    %488 = vmatprep.subr.bf16.mxu0 0
    %489 = vmatpush1.bf16.msra.mxu0 0
    %490 = vmatprep.subr.bf16.mxu0 0
    %491 = vmatpush1.bf16.msra.mxu0 0
    %492 = vmatprep.subr.bf16.mxu0 0
    %493 = vmatpush1.bf16.msra.mxu0 0
    %494 = vmatprep.subr.bf16.mxu0 0
    %495 = vmatpush1.bf16.msra.mxu0 0
    %496 = vmatprep.subr.bf16.mxu0 0
    %497 = vmatpush1.bf16.msra.mxu0 0
    %498 = vmatprep.subr.bf16.mxu0 0
    %499 = vmatpush1.bf16.msra.mxu0 0
    %500 = vmatprep.mubr.bf16.mxu0 0
    %501 = vmatmul.mubr.bf16.gmra.mrb[0].mxu0 %v396
    %v502 = vpop.f32.mrb[0].mxu0
    %v503 = vadd.f32 %v418, %v502
    %v504 = vpop.f32.mrb[0].mxu0
    %v505 = vpop.f32.mrb[0].mxu0
    %v506 = vpop.f32.mrb[0].mxu0
    %507 = vdwg.mxu0
    %508 = vst [vmem:[#allocation2] sm:$0x3] %v503
    // Predicated region
    $region22: #{cnn_forward.13} parent=1 // pred_check
      _
    $region23: #{cnn_forward.13} parent=1 // pred_check_branch
      %510 = sbr.rel (0) target = $region25
    $region24: #{cnn_forward.13} parent=1 // pred_region
      %s512 = ssub.s32 32, 32
      %513 = vsyncadd [#allocation3], %s512
      %s515 = sshll.u32 [#allocation2], 4
      %s516 = int_to_ptr.vmem [resolvable:$true] %s515
      %518 = dma.vmem_to_hbm [thread:$0]  %s516, 32, %s5, [#allocation3]
    $region25: #{cnn_forward.13} parent=1 // pred_fallthru
      _
    // Predicated region
    $region26: #{cnn_forward.13} parent=1 // pred_check
      _
    $region27: #{cnn_forward.13} parent=1 // pred_check_branch
      %520 = sbr.rel (0) target = $region29
    $region28: #{cnn_forward.13} parent=1 // pred_region
      %521 = dma.done [#allocation3], 32
    $region29: #{cnn_forward.13} parent=1 // pred_fallthru
      _
    %522 = vsyncpa [#allocation3], 1

// kernel: cnn_forward.11
$region0: #{cnn_forward.11}
  #allocation0 [shape = 'u32[]', space=smem, size = 0x4, offset = 0x4, fixed_abs, tag = 'smem constant byte address 0x4 - core index']
  #allocation1 [shape = 'u32[144,128]{1,0:T(1,128)}', space=vmem, size = 0x12000, scoped, tag = 'internal scratch']
  %s0 = inlined_call_operand.vmem [shape: bf16[2,48,128], index: 0, kind: input, shape index: {}]
  %s1 = inlined_call_operand.vmem [shape: bf16[4,128,128], index: 1, kind: input, shape index: {}]
  %s2 = inlined_call_operand.vmem [shape: f32[1,128], index: 2, kind: input, shape index: {}]
  %s3 = inlined_call_operand.vmem [shape: f32[1,128], index: 3, kind: input, shape index: {}]
  %s4 = inlined_call_operand.vmem [shape: bf16[2,32,128], index: 4, kind: output, shape index: {}]
  %s5 = sld [smem:[#allocation0]]
  $region49: #{cnn_forward.11} parent=0
    _
  %s7 = ssub.s32 1, %s5
  %s8 = scalar_select 0, %s7, %s5
  loop: start=0, step=1, limit=4
  $region2: #{cnn_forward.11} parent=0 // loop_pre_header
    _
  $region3: #{cnn_forward.11} parent=0 // loop_header
    %s10 = sphi 0, %s14
    %p11 = scmp.ge.s32.totalorder %s10, 4
    %s20 = sphi 0, %s22
    %s23 = sphi 0, %s20
    %s24 = sphi 0, %s23
    %s40 = sphi 0, %s24
    %s44 = sphi 0, %s44
    %s46 = sphi 0, %s44
    %s47 = sphi 0, %s46
    %s61 = sphi 0, %s47
    %s65 = sphi 0, %s65
    %s67 = sphi 0, %s65
    %s68 = sphi 0, %s67
    %s82 = sphi 0, %s68
    %s86 = sphi 0, %s86
    %s88 = sphi 0, %s86
    %s89 = sphi 0, %s88
    %s103 = sphi 0, %s89
    %s109 = sphi 0, %s111
    %s112 = sphi 0, %s109
    %s113 = sphi 0, %s112
    %s129 = sphi 0, %s113
  $region4: #{cnn_forward.11} parent=0 // loop_header_branch
    %13 = sbr.rel (%p11) target = $region8
  $region5: #{cnn_forward.11} parent=0 // loop_body
    %s15 = ssub.s32 %s10, 1
    %s16 = ssub.s32 %s10, 2
    %s17 = sadd.s32 %s10, 1
    %s18 = ssub.s32 %s10, %s17
    %p19 = scmp.eq.s32.totalorder %s18, 0
    %s21 = sadd.s32 %s20, 1
    %s22 = scalar_select %p19, %s20, %s21
    %p25 = pneg %p19
    %p26 = scmp.eq.s32.totalorder %s10, 1
    %p27 = por %p25, %p26
    %p28 = scmp.ne.s32.totalorder %s20, %s23
    %p29 = scmp.eq.s32.totalorder %s10, 0
    %p30 = por %p28, %p29
    %p31 = scmp.ne.s32.totalorder %s20, %s23
    %p32 = scmp.eq.s32.totalorder %s15, 1
    %p33 = por %p31, %p32
    %p34 = scmp.ne.s32.totalorder %s23, %s24
    %p35 = scmp.eq.s32.totalorder %s15, 0
    %p36 = por %p34, %p35
    %p37 = scmp.ne.s32.totalorder %s23, %s24
    %p38 = scmp.eq.s32.totalorder %s16, 1
    %p39 = por %p37, %p38
    %p41 = scmp.ne.s32.totalorder %s24, %s40
    %p42 = scmp.eq.s32.totalorder %s16, 0
    %p43 = por %p41, %p42
    %s45 = sadd.s32 %s44, 1
    %p48 = scmp.eq.s32.totalorder %s10, 1
    %p49 = scmp.ne.s32.totalorder %s44, %s46
    %p50 = scmp.eq.s32.totalorder %s10, 0
    %p51 = por %p49, %p50
    %p52 = scmp.ne.s32.totalorder %s44, %s46
    %p53 = scmp.eq.s32.totalorder %s15, 1
    %p54 = por %p52, %p53
    %p55 = scmp.ne.s32.totalorder %s46, %s47
    %p56 = scmp.eq.s32.totalorder %s15, 0
    %p57 = por %p55, %p56
    %p58 = scmp.ne.s32.totalorder %s46, %s47
    %p59 = scmp.eq.s32.totalorder %s16, 1
    %p60 = por %p58, %p59
    %p62 = scmp.ne.s32.totalorder %s47, %s61
    %p63 = scmp.eq.s32.totalorder %s16, 0
    %p64 = por %p62, %p63
    %s66 = sadd.s32 %s65, 1
    %p69 = scmp.eq.s32.totalorder %s10, 1
    %p70 = scmp.ne.s32.totalorder %s65, %s67
    %p71 = scmp.eq.s32.totalorder %s10, 0
    %p72 = por %p70, %p71
    %p73 = scmp.ne.s32.totalorder %s65, %s67
    %p74 = scmp.eq.s32.totalorder %s15, 1
    %p75 = por %p73, %p74
    %p76 = scmp.ne.s32.totalorder %s67, %s68
    %p77 = scmp.eq.s32.totalorder %s15, 0
    %p78 = por %p76, %p77
    %p79 = scmp.ne.s32.totalorder %s67, %s68
    %p80 = scmp.eq.s32.totalorder %s16, 1
    %p81 = por %p79, %p80
    %p83 = scmp.ne.s32.totalorder %s68, %s82
    %p84 = scmp.eq.s32.totalorder %s16, 0
    %p85 = por %p83, %p84
    %s87 = sadd.s32 %s86, 1
    %p90 = scmp.eq.s32.totalorder %s10, 1
    %p91 = scmp.ne.s32.totalorder %s86, %s88
    %p92 = scmp.eq.s32.totalorder %s10, 0
    %p93 = por %p91, %p92
    %p94 = scmp.ne.s32.totalorder %s86, %s88
    %p95 = scmp.eq.s32.totalorder %s15, 1
    %p96 = por %p94, %p95
    %p97 = scmp.ne.s32.totalorder %s88, %s89
    %p98 = scmp.eq.s32.totalorder %s15, 0
    %p99 = por %p97, %p98
    %p100 = scmp.ne.s32.totalorder %s88, %s89
    %p101 = scmp.eq.s32.totalorder %s16, 1
    %p102 = por %p100, %p101
    %p104 = scmp.ne.s32.totalorder %s89, %s103
    %p105 = scmp.eq.s32.totalorder %s16, 0
    %p106 = por %p104, %p105
    %s107 = ssub.s32 %s10, %s17
    %p108 = scmp.eq.s32.totalorder %s107, 0
    %s110 = sadd.s32 %s109, 1
    %s111 = scalar_select %p108, %s109, %s110
    %p114 = pneg %p108
    %p115 = scmp.eq.s32.totalorder %s10, 1
    %p116 = por %p114, %p115
    %p117 = scmp.ne.s32.totalorder %s109, %s112
    %p118 = scmp.eq.s32.totalorder %s10, 0
    %p119 = por %p117, %p118
    %p120 = scmp.ne.s32.totalorder %s109, %s112
    %p121 = scmp.eq.s32.totalorder %s15, 1
    %p122 = por %p120, %p121
    %p123 = scmp.ne.s32.totalorder %s112, %s113
    %p124 = scmp.eq.s32.totalorder %s15, 0
    %p125 = por %p123, %p124
    %p126 = scmp.ne.s32.totalorder %s112, %s113
    %p127 = scmp.eq.s32.totalorder %s16, 1
    %p128 = por %p126, %p127
    %p130 = scmp.ne.s32.totalorder %s113, %s129
    %p131 = scmp.eq.s32.totalorder %s16, 0
    %p132 = por %p130, %p131
    %p133 = scmp.le.s32.totalorder 1, %s10
    %p134 = scmp.lt.s32.totalorder %s10, 3
    %p135 = pnand %p133, %p134
    %p136 = pneg %p135
    // Predicated region
    $region9: #{cnn_forward.11} parent=5 // pred_check
      _
    $region10: #{cnn_forward.11} parent=5 // pred_check_branch
      %138 = sbr.rel (%p135) target = $region12
    $region11: #{cnn_forward.11} parent=5 // pred_region
      %s139 = ssub.s32 %s10, 1
      // Predicated region
      $region13: #{cnn_forward.11} parent=11 // pred_check
        %p140 = pneg %p57
      $region14: #{cnn_forward.11} parent=11 // pred_check_branch
        %142 = sbr.rel (%p140) target = $region16
      $region15: #{cnn_forward.11} parent=11 // pred_region
        _
      $region16: #{cnn_forward.11} parent=11 // pred_fallthru
        _
      // Predicated region
      $region17: #{cnn_forward.11} parent=11 // pred_check
        %p143 = pneg %p78
      $region18: #{cnn_forward.11} parent=11 // pred_check_branch
        %145 = sbr.rel (%p143) target = $region20
      $region19: #{cnn_forward.11} parent=11 // pred_region
        _
      $region20: #{cnn_forward.11} parent=11 // pred_fallthru
        _
      // Predicated region
      $region21: #{cnn_forward.11} parent=11 // pred_check
        %p146 = pneg %p99
      $region22: #{cnn_forward.11} parent=11 // pred_check_branch
        %148 = sbr.rel (%p146) target = $region24
      $region23: #{cnn_forward.11} parent=11 // pred_region
        _
      $region24: #{cnn_forward.11} parent=11 // pred_fallthru
        _
    $region12: #{cnn_forward.11} parent=5 // pred_fallthru
      _
    %p149 = scmp.lt.s32.totalorder %s10, 2
    // Predicated region
    $region25: #{cnn_forward.11} parent=5 // pred_check
      %p150 = pneg %p149
    $region26: #{cnn_forward.11} parent=5 // pred_check_branch
      %152 = sbr.rel (%p150) target = $region28
    $region27: #{cnn_forward.11} parent=5 // pred_region
      // Predicated region
      $region29: #{cnn_forward.11} parent=27 // pred_check
        %p153 = pneg %p30
      $region30: #{cnn_forward.11} parent=27 // pred_check_branch
        %155 = sbr.rel (%p153) target = $region32
      $region31: #{cnn_forward.11} parent=27 // pred_region
        %p156 = scmp.lt.s32.totalorder %s10, 1
        %s157 = scalar_select %p156, %s10, 1
        %s158 = smul.addr %s157, 6
        %s159 = smul.addr %s158, 4
        %s160 = scalar_lea.vmem %s0, %s159
      $region32: #{cnn_forward.11} parent=27 // pred_fallthru
        _
    $region28: #{cnn_forward.11} parent=5 // pred_fallthru
      _
    %p161 = scmp.le.s32.totalorder 1, %s10
    %p162 = scmp.lt.s32.totalorder %s10, 3
    %p163 = pnand %p161, %p162
    %p164 = pneg %p163
    // Predicated region
    $region33: #{cnn_forward.11} parent=5 // pred_check
      _
    $region34: #{cnn_forward.11} parent=5 // pred_check_branch
      %166 = sbr.rel (%p163) target = $region36
    $region35: #{cnn_forward.11} parent=5 // pred_region
      %s167 = ssub.s32 %s10, 1
      %p168 = scmp.lt.s32.totalorder %s15, 1
      %s169 = scalar_select %p168, %s15, 1
      %s170 = smul.addr %s169, 6
      %s171 = smul.addr %s170, 4
      %s172 = scalar_lea.vmem %s0, %s171
      %p173 = pneg %p36
      %p174 = pneg %p33
      %p175 = pneg %p57
      %p176 = pneg %p54
      %p177 = pneg %p78
      %p178 = pneg %p75
      %p179 = pneg %p99
      %p180 = pneg %p96
      %p181 = pneg %p125
      %p182 = pneg %p122
      %p183 = scmp.lt.s32.totalorder %s15, 1
      %s184 = scalar_select %p183, %s15, 1
      %s185 = smul.addr %s184, 4
      %s186 = smul.addr %s185, 4
      %s187 = scalar_lea.vmem %s4, %s186
      %p188 = scmp.lt.s32.totalorder %s15, 1
      %s189 = scalar_select %p188, %s15, 1
      %s190 = smul.addr %s189, 6
      %s191 = smul.addr %s190, 4
      %s192 = scalar_lea.vmem %s0, %s191
      %p193 = scmp.lt.s32.totalorder %s15, 1
      %s194 = scalar_select %p193, %s15, 1
      %s195 = smul.addr %s194, 4
      %s196 = smul.addr %s195, 4
      %s197 = scalar_lea.vmem %s4, %s196
      %v199 = vld [vmem:[%s2] sm:$0x1]
      %v200 = vld [vmem:[%s3] sm:$0x1]
      %v201 = vld [vmem:[%s192] sm:$0xf]
      %v202 = vld [vmem:[%s192 + $0x4] sm:$0xf]
      %v203 = vld [vmem:[%s192 + $0x8] sm:$0xf]
      %v204 = vld [vmem:[%s192 + $0xc] sm:$0xf]
      %v205 = vld [vmem:[%s1] sm:$0xf]
      %v206 = vld [vmem:[%s1 + $0x4] sm:$0xf]
      %v207 = vld [vmem:[%s1 + $0x8] sm:$0xf]
      %v208 = vld [vmem:[%s1 + $0xc] sm:$0xf]
      %v209 = vld [vmem:[%s1 + $0x10] sm:$0xf]
      %v210 = vld [vmem:[%s1 + $0x14] sm:$0xf]
      %v211 = vld [vmem:[%s1 + $0x18] sm:$0xf]
      %v212 = vld [vmem:[%s1 + $0x1c] sm:$0xf]
      %v213 = vld [vmem:[%s1 + $0x20] sm:$0xf]
      %v214 = vld [vmem:[%s1 + $0x24] sm:$0xf]
      %v215 = vld [vmem:[%s1 + $0x28] sm:$0xf]
      %v216 = vld [vmem:[%s1 + $0x2c] sm:$0xf]
      %v217 = vld [vmem:[%s1 + $0x30] sm:$0xf]
      %v218 = vld [vmem:[%s1 + $0x34] sm:$0xf]
      %v219 = vld [vmem:[%s1 + $0x38] sm:$0xf]
      %v220 = vld [vmem:[%s1 + $0x3c] sm:$0xf]
      %v221 = vld [vmem:[%s192 + $0x10] sm:$0x1]
      %s222 = scalar_lea.vmem %s1, 64
      %v223 = vld [vmem:[%s222] sm:$0xf]
      %v224 = vld [vmem:[%s222 + $0x4] sm:$0xf]
      %v225 = vld [vmem:[%s222 + $0x8] sm:$0xf]
      %v226 = vld [vmem:[%s222 + $0xc] sm:$0xf]
      %v227 = vld [vmem:[%s222 + $0x10] sm:$0xf]
      %v228 = vld [vmem:[%s222 + $0x14] sm:$0xf]
      %v229 = vld [vmem:[%s222 + $0x18] sm:$0xf]
      %v230 = vld [vmem:[%s222 + $0x1c] sm:$0xf]
      %v231 = vld [vmem:[%s222 + $0x20] sm:$0xf]
      %v232 = vld [vmem:[%s222 + $0x24] sm:$0xf]
      %v233 = vld [vmem:[%s222 + $0x28] sm:$0xf]
      %v234 = vld [vmem:[%s222 + $0x2c] sm:$0xf]
      %v235 = vld [vmem:[%s222 + $0x30] sm:$0xf]
      %v236 = vld [vmem:[%s222 + $0x34] sm:$0xf]
      %v237 = vld [vmem:[%s222 + $0x38] sm:$0xf]
      %v238 = vld [vmem:[%s222 + $0x3c] sm:$0xf]
      %v244 = vunpack.c.l.b16 %v201
      %v245 = vunpack.c.l.b16 %v202
      %v246 = vunpack.c.l.b16 %v203
      %v247 = vunpack.c.l.b16 %v204
      %v248 = vunpack.c.l.b16 %v221
      %v249 = vpack.c.b16 %v245, %v244
      %v250 = vpack.c.b16 %v247, %v246
      %v251 = vpack.c.b16 %v248, %v248
      %vm252 = vsmask.f32 7424
      %v254 = vshrl.u32 %v249, 16
      %v256 = vshll.u32 %v249, 16
      %v258 = vrot.slane %v256, 1
      %v259 = vor.u32 %v254, %v258
      %v261 = vshll.u32 %v250, 16
      %v263 = vrot.slane %v261, 1
      %v264 = vsel %vm252, %v259, %v263
      %v265 = vshrl.u32 %v250, 16
      %v267 = vor.u32 %v265, %v263
      %v269 = vshll.u32 %v251, 16
      %v271 = vrot.slane %v269, 1
      %v272 = vsel %vm252, %v267, %v271
      %v291 = vunpack.c.l.b16 %v223
      %v292 = vunpack.c.l.b16 %v224
      %v293 = vunpack.c.l.b16 %v225
      %v294 = vunpack.c.l.b16 %v226
      %v295 = vunpack.c.l.b16 %v227
      %v296 = vunpack.c.l.b16 %v228
      %v297 = vunpack.c.l.b16 %v229
      %v298 = vunpack.c.l.b16 %v230
      %v299 = vunpack.c.l.b16 %v231
      %v300 = vunpack.c.l.b16 %v232
      %v301 = vunpack.c.l.b16 %v233
      %v302 = vunpack.c.l.b16 %v234
      %v303 = vunpack.c.l.b16 %v235
      %v304 = vunpack.c.l.b16 %v236
      %v305 = vunpack.c.l.b16 %v237
      %v306 = vunpack.c.l.b16 %v238
      %v307 = vpack.c.b16 %v292, %v291
      %v308 = vpack.c.b16 %v294, %v293
      %v309 = vpack.c.b16 %v296, %v295
      %v310 = vpack.c.b16 %v298, %v297
      %v311 = vpack.c.b16 %v300, %v299
      %v312 = vpack.c.b16 %v302, %v301
      %v313 = vpack.c.b16 %v304, %v303
      %v314 = vpack.c.b16 %v306, %v305
      %323 = vmatprep.subr.bf16.mxu0 0
      %324 = vmatpush1.bf16.msra.mxu0 %v307
      %325 = vmatprep.subr.bf16.mxu0 0
      %326 = vmatpush1.bf16.msra.mxu0 %v308
      %327 = vmatprep.subr.bf16.mxu0 0
      %328 = vmatpush1.bf16.msra.mxu0 %v309
      %329 = vmatprep.subr.bf16.mxu0 0
      %330 = vmatpush1.bf16.msra.mxu0 %v310
      %331 = vmatprep.subr.bf16.mxu0 0
      %332 = vmatpush1.bf16.msra.mxu0 %v311
      %333 = vmatprep.subr.bf16.mxu0 0
      %334 = vmatpush1.bf16.msra.mxu0 %v312
      %335 = vmatprep.subr.bf16.mxu0 0
      %336 = vmatpush1.bf16.msra.mxu0 %v313
      %337 = vmatprep.subr.bf16.mxu0 0
      %338 = vmatpush1.bf16.msra.mxu0 %v314
      %339 = vmatprep.subr.bf16.mxu0 0
      %340 = vmatpush1.bf16.msra.mxu0 0
      %341 = vmatprep.subr.bf16.mxu0 0
      %342 = vmatpush1.bf16.msra.mxu0 0
      %343 = vmatprep.subr.bf16.mxu0 0
      %344 = vmatpush1.bf16.msra.mxu0 0
      %345 = vmatprep.subr.bf16.mxu0 0
      %346 = vmatpush1.bf16.msra.mxu0 0
      %347 = vmatprep.subr.bf16.mxu0 0
      %348 = vmatpush1.bf16.msra.mxu0 0
      %349 = vmatprep.subr.bf16.mxu0 0
      %350 = vmatpush1.bf16.msra.mxu0 0
      %351 = vmatprep.subr.bf16.mxu0 0
      %352 = vmatpush1.bf16.msra.mxu0 0
      %353 = vmatprep.subr.bf16.mxu0 0
      %354 = vmatpush1.bf16.msra.mxu0 0
      %355 = vmatprep.mubr.bf16.mxu0 0
      %356 = vmatmul.mubr.bf16.gmra.mrb[0].mxu0 %v264
      %v357 = vpop.f32.mrb[0].mxu0
      %v358 = vadd.f32 0.0, %v357
      %v359 = vpop.f32.mrb[0].mxu0
      %v360 = vpop.f32.mrb[0].mxu0
      %v361 = vadd.f32 0.0, %v360
      %v362 = vpop.f32.mrb[0].mxu0
      %363 = vmatprep.mubr.bf16.mxu0 0
      %364 = vmatmul.mubr.bf16.gmra.mrb[0].mxu0 %v272
      %v365 = vpop.f32.mrb[0].mxu0
      %v366 = vadd.f32 0.0, %v365
      %v367 = vpop.f32.mrb[0].mxu0
      %v368 = vpop.f32.mrb[0].mxu0
      %v369 = vadd.f32 0.0, %v368
      %v370 = vpop.f32.mrb[0].mxu0
      %371 = vdwg.mxu0
      %v390 = vunpack.c.l.b16 %v205
      %v391 = vunpack.c.l.b16 %v206
      %v392 = vunpack.c.l.b16 %v207
      %v393 = vunpack.c.l.b16 %v208
      %v394 = vunpack.c.l.b16 %v209
      %v395 = vunpack.c.l.b16 %v210
      %v396 = vunpack.c.l.b16 %v211
      %v397 = vunpack.c.l.b16 %v212
      %v398 = vunpack.c.l.b16 %v213
      %v399 = vunpack.c.l.b16 %v214
      %v400 = vunpack.c.l.b16 %v215
      %v401 = vunpack.c.l.b16 %v216
      %v402 = vunpack.c.l.b16 %v217
      %v403 = vunpack.c.l.b16 %v218
      %v404 = vunpack.c.l.b16 %v219
      %v405 = vunpack.c.l.b16 %v220
      %v406 = vpack.c.b16 %v391, %v390
      %v407 = vpack.c.b16 %v393, %v392
      %v408 = vpack.c.b16 %v395, %v394
      %v409 = vpack.c.b16 %v397, %v396
      %v410 = vpack.c.b16 %v399, %v398
      %v411 = vpack.c.b16 %v401, %v400
      %v412 = vpack.c.b16 %v403, %v402
      %v413 = vpack.c.b16 %v405, %v404
      %422 = vmatprep.subr.bf16.mxu0 0
      %423 = vmatpush1.bf16.msra.mxu0 %v406
      %424 = vmatprep.subr.bf16.mxu0 0
      %425 = vmatpush1.bf16.msra.mxu0 %v407
      %426 = vmatprep.subr.bf16.mxu0 0
      %427 = vmatpush1.bf16.msra.mxu0 %v408
      %428 = vmatprep.subr.bf16.mxu0 0
      %429 = vmatpush1.bf16.msra.mxu0 %v409
      %430 = vmatprep.subr.bf16.mxu0 0
      %431 = vmatpush1.bf16.msra.mxu0 %v410
      %432 = vmatprep.subr.bf16.mxu0 0
      %433 = vmatpush1.bf16.msra.mxu0 %v411
      %434 = vmatprep.subr.bf16.mxu0 0
      %435 = vmatpush1.bf16.msra.mxu0 %v412
      %436 = vmatprep.subr.bf16.mxu0 0
      %437 = vmatpush1.bf16.msra.mxu0 %v413
      %438 = vmatprep.subr.bf16.mxu0 0
      %439 = vmatpush1.bf16.msra.mxu0 0
      %440 = vmatprep.subr.bf16.mxu0 0
      %441 = vmatpush1.bf16.msra.mxu0 0
      %442 = vmatprep.subr.bf16.mxu0 0
      %443 = vmatpush1.bf16.msra.mxu0 0
      %444 = vmatprep.subr.bf16.mxu0 0
      %445 = vmatpush1.bf16.msra.mxu0 0
      %446 = vmatprep.subr.bf16.mxu0 0
      %447 = vmatpush1.bf16.msra.mxu0 0
      %448 = vmatprep.subr.bf16.mxu0 0
      %449 = vmatpush1.bf16.msra.mxu0 0
      %450 = vmatprep.subr.bf16.mxu0 0
      %451 = vmatpush1.bf16.msra.mxu0 0
      %452 = vmatprep.subr.bf16.mxu0 0
      %453 = vmatpush1.bf16.msra.mxu0 0
      %454 = vmatprep.mubr.bf16.mxu0 0
      %455 = vmatmul.mubr.bf16.gmra.mrb[0].mxu0 %v249
      %v456 = vpop.f32.mrb[0].mxu0
      %v457 = vadd.f32 %v358, %v456
      %v458 = vpop.f32.mrb[0].mxu0
      %v459 = vpop.f32.mrb[0].mxu0
      %v460 = vadd.f32 %v361, %v459
      %v461 = vpop.f32.mrb[0].mxu0
      %462 = vmatprep.mubr.bf16.mxu0 0
      %463 = vmatmul.mubr.bf16.gmra.mrb[0].mxu0 %v250
      %v464 = vpop.f32.mrb[0].mxu0
      %v465 = vadd.f32 %v366, %v464
      %v466 = vpop.f32.mrb[0].mxu0
      %v467 = vpop.f32.mrb[0].mxu0
      %v468 = vadd.f32 %v369, %v467
      %v469 = vpop.f32.mrb[0].mxu0
      %470 = vdwg.mxu0
      %v471 = vld [vmem:[%s192] sm:$0xc]
      %v472 = vld [vmem:[%s192 + $0x10] sm:$0x7]
      %s473 = scalar_lea.vmem %s1, 128
      %v474 = vld [vmem:[%s473] sm:$0xf]
      %v475 = vld [vmem:[%s473 + $0x4] sm:$0xf]
      %v476 = vld [vmem:[%s473 + $0x8] sm:$0xf]
      %v477 = vld [vmem:[%s473 + $0xc] sm:$0xf]
      %v478 = vld [vmem:[%s473 + $0x10] sm:$0xf]
      %v479 = vld [vmem:[%s473 + $0x14] sm:$0xf]
      %v480 = vld [vmem:[%s473 + $0x18] sm:$0xf]
      %v481 = vld [vmem:[%s473 + $0x1c] sm:$0xf]
      %v482 = vld [vmem:[%s473 + $0x20] sm:$0xf]
      %v483 = vld [vmem:[%s473 + $0x24] sm:$0xf]
      %v484 = vld [vmem:[%s473 + $0x28] sm:$0xf]
      %v485 = vld [vmem:[%s473 + $0x2c] sm:$0xf]
      %v486 = vld [vmem:[%s473 + $0x30] sm:$0xf]
      %v487 = vld [vmem:[%s473 + $0x34] sm:$0xf]
      %v488 = vld [vmem:[%s473 + $0x38] sm:$0xf]
      %v489 = vld [vmem:[%s473 + $0x3c] sm:$0xf]
      %v492 = vunpack.c.l.b16 %v471
      %v493 = vunpack.c.l.b16 %v472
      %v494 = vpack.c.b16 %v245, %v492
      %v495 = vpack.c.b16 %v493, %v493
      %vm496 = vsmask.f32 5376
      %v498 = vshrl.u32 %v494, 16
      %v500 = vrot.slane %v498, 2
      %v501 = vshll.u32 %v494, 16
      %v503 = vrot.slane %v501, 3
      %v504 = vor.u32 %v500, %v503
      %v505 = vrot.slane %v265, 2
      %v506 = vrot.slane %v261, 3
      %v507 = vor.u32 %v505, %v506
      %v508 = vsel %vm496, %v504, %v507
      %v510 = vshrl.u32 %v495, 16
      %v512 = vrot.slane %v510, 2
      %v513 = vshll.u32 %v495, 16
      %v515 = vrot.slane %v513, 3
      %v516 = vor.u32 %v512, %v515
      %v517 = vsel %vm496, %v507, %v516
      %v536 = vunpack.c.l.b16 %v474
      %v537 = vunpack.c.l.b16 %v475
      %v538 = vunpack.c.l.b16 %v476
      %v539 = vunpack.c.l.b16 %v477
      %v540 = vunpack.c.l.b16 %v478
      %v541 = vunpack.c.l.b16 %v479
      %v542 = vunpack.c.l.b16 %v480
      %v543 = vunpack.c.l.b16 %v481
      %v544 = vunpack.c.l.b16 %v482
      %v545 = vunpack.c.l.b16 %v483
      %v546 = vunpack.c.l.b16 %v484
      %v547 = vunpack.c.l.b16 %v485
      %v548 = vunpack.c.l.b16 %v486
      %v549 = vunpack.c.l.b16 %v487
      %v550 = vunpack.c.l.b16 %v488
      %v551 = vunpack.c.l.b16 %v489
      %v552 = vpack.c.b16 %v537, %v536
      %v553 = vpack.c.b16 %v539, %v538
      %v554 = vpack.c.b16 %v541, %v540
      %v555 = vpack.c.b16 %v543, %v542
      %v556 = vpack.c.b16 %v545, %v544
      %v557 = vpack.c.b16 %v547, %v546
      %v558 = vpack.c.b16 %v549, %v548
      %v559 = vpack.c.b16 %v551, %v550
      %568 = vmatprep.subr.bf16.mxu0 0
      %569 = vmatpush1.bf16.msra.mxu0 %v552
      %570 = vmatprep.subr.bf16.mxu0 0
      %571 = vmatpush1.bf16.msra.mxu0 %v553
      %572 = vmatprep.subr.bf16.mxu0 0
      %573 = vmatpush1.bf16.msra.mxu0 %v554
      %574 = vmatprep.subr.bf16.mxu0 0
      %575 = vmatpush1.bf16.msra.mxu0 %v555
      %576 = vmatprep.subr.bf16.mxu0 0
      %577 = vmatpush1.bf16.msra.mxu0 %v556
      %578 = vmatprep.subr.bf16.mxu0 0
      %579 = vmatpush1.bf16.msra.mxu0 %v557
      %580 = vmatprep.subr.bf16.mxu0 0
      %581 = vmatpush1.bf16.msra.mxu0 %v558
      %582 = vmatprep.subr.bf16.mxu0 0
      %583 = vmatpush1.bf16.msra.mxu0 %v559
      %584 = vmatprep.subr.bf16.mxu0 0
      %585 = vmatpush1.bf16.msra.mxu0 0
      %586 = vmatprep.subr.bf16.mxu0 0
      %587 = vmatpush1.bf16.msra.mxu0 0
      %588 = vmatprep.subr.bf16.mxu0 0
      %589 = vmatpush1.bf16.msra.mxu0 0
      %590 = vmatprep.subr.bf16.mxu0 0
      %591 = vmatpush1.bf16.msra.mxu0 0
      %592 = vmatprep.subr.bf16.mxu0 0
      %593 = vmatpush1.bf16.msra.mxu0 0
      %594 = vmatprep.subr.bf16.mxu0 0
      %595 = vmatpush1.bf16.msra.mxu0 0
      %596 = vmatprep.subr.bf16.mxu0 0
      %597 = vmatpush1.bf16.msra.mxu0 0
      %598 = vmatprep.subr.bf16.mxu0 0
      %599 = vmatpush1.bf16.msra.mxu0 0
      %600 = vmatprep.mubr.bf16.mxu0 0
      %601 = vmatmul.mubr.bf16.gmra.mrb[0].mxu0 %v508
      %v602 = vpop.f32.mrb[0].mxu0
      %v603 = vadd.f32 0.0, %v602
      %v604 = vpop.f32.mrb[0].mxu0
      %v605 = vpop.f32.mrb[0].mxu0
      %v606 = vadd.f32 0.0, %v605
      %v607 = vpop.f32.mrb[0].mxu0
      %608 = vmatprep.mubr.bf16.mxu0 0
      %609 = vmatmul.mubr.bf16.gmra.mrb[0].mxu0 %v517
      %v610 = vpop.f32.mrb[0].mxu0
      %v611 = vadd.f32 0.0, %v610
      %v612 = vpop.f32.mrb[0].mxu0
      %v613 = vpop.f32.mrb[0].mxu0
      %v614 = vadd.f32 0.0, %v613
      %v615 = vpop.f32.mrb[0].mxu0
      %616 = vdwg.mxu0
      %v617 = vadd.f32 %v457, %v603
      %v618 = vadd.f32 %v460, %v606
      %v619 = vadd.f32 %v465, %v611
      %v620 = vadd.f32 %v468, %v614
      %v621 = vld [vmem:[%s192] sm:$0x8]
      %s622 = scalar_lea.vmem %s1, 192
      %v623 = vld [vmem:[%s622] sm:$0xf]
      %v624 = vld [vmem:[%s622 + $0x4] sm:$0xf]
      %v625 = vld [vmem:[%s622 + $0x8] sm:$0xf]
      %v626 = vld [vmem:[%s622 + $0xc] sm:$0xf]
      %v627 = vld [vmem:[%s622 + $0x10] sm:$0xf]
      %v628 = vld [vmem:[%s622 + $0x14] sm:$0xf]
      %v629 = vld [vmem:[%s622 + $0x18] sm:$0xf]
      %v630 = vld [vmem:[%s622 + $0x1c] sm:$0xf]
      %v631 = vld [vmem:[%s622 + $0x20] sm:$0xf]
      %v632 = vld [vmem:[%s622 + $0x24] sm:$0xf]
      %v633 = vld [vmem:[%s622 + $0x28] sm:$0xf]
      %v634 = vld [vmem:[%s622 + $0x2c] sm:$0xf]
      %v635 = vld [vmem:[%s622 + $0x30] sm:$0xf]
      %v636 = vld [vmem:[%s622 + $0x34] sm:$0xf]
      %v637 = vld [vmem:[%s622 + $0x38] sm:$0xf]
      %v638 = vld [vmem:[%s622 + $0x3c] sm:$0xf]
      %v640 = vunpack.c.l.b16 %v621
      %v641 = vpack.c.b16 %v245, %v640
      %vm642 = vcmask 1044480
      %v643 = vrot.slane %v641, 3
      %v644 = vrot.slane %v250, 3
      %v645 = vsel %vm642, %v643, %v644
      %v646 = vrot.slane %v495, 3
      %v647 = vsel %vm642, %v644, %v646
      %v666 = vunpack.c.l.b16 %v623
      %v667 = vunpack.c.l.b16 %v624
      %v668 = vunpack.c.l.b16 %v625
      %v669 = vunpack.c.l.b16 %v626
      %v670 = vunpack.c.l.b16 %v627
      %v671 = vunpack.c.l.b16 %v628
      %v672 = vunpack.c.l.b16 %v629
      %v673 = vunpack.c.l.b16 %v630
      %v674 = vunpack.c.l.b16 %v631
      %v675 = vunpack.c.l.b16 %v632
      %v676 = vunpack.c.l.b16 %v633
      %v677 = vunpack.c.l.b16 %v634
      %v678 = vunpack.c.l.b16 %v635
      %v679 = vunpack.c.l.b16 %v636
      %v680 = vunpack.c.l.b16 %v637
      %v681 = vunpack.c.l.b16 %v638
      %v682 = vpack.c.b16 %v667, %v666
      %v683 = vpack.c.b16 %v669, %v668
      %v684 = vpack.c.b16 %v671, %v670
      %v685 = vpack.c.b16 %v673, %v672
      %v686 = vpack.c.b16 %v675, %v674
      %v687 = vpack.c.b16 %v677, %v676
      %v688 = vpack.c.b16 %v679, %v678
      %v689 = vpack.c.b16 %v681, %v680
      %698 = vmatprep.subr.bf16.mxu0 0
      %699 = vmatpush1.bf16.msra.mxu0 %v682
      %700 = vmatprep.subr.bf16.mxu0 0
      %701 = vmatpush1.bf16.msra.mxu0 %v683
      %702 = vmatprep.subr.bf16.mxu0 0
      %703 = vmatpush1.bf16.msra.mxu0 %v684
      %704 = vmatprep.subr.bf16.mxu0 0
      %705 = vmatpush1.bf16.msra.mxu0 %v685
      %706 = vmatprep.subr.bf16.mxu0 0
      %707 = vmatpush1.bf16.msra.mxu0 %v686
      %708 = vmatprep.subr.bf16.mxu0 0
      %709 = vmatpush1.bf16.msra.mxu0 %v687
      %710 = vmatprep.subr.bf16.mxu0 0
      %711 = vmatpush1.bf16.msra.mxu0 %v688
      %712 = vmatprep.subr.bf16.mxu0 0
      %713 = vmatpush1.bf16.msra.mxu0 %v689
      %714 = vmatprep.subr.bf16.mxu0 0
      %715 = vmatpush1.bf16.msra.mxu0 0
      %716 = vmatprep.subr.bf16.mxu0 0
      %717 = vmatpush1.bf16.msra.mxu0 0
      %718 = vmatprep.subr.bf16.mxu0 0
      %719 = vmatpush1.bf16.msra.mxu0 0
      %720 = vmatprep.subr.bf16.mxu0 0
      %721 = vmatpush1.bf16.msra.mxu0 0
      %722 = vmatprep.subr.bf16.mxu0 0
      %723 = vmatpush1.bf16.msra.mxu0 0
      %724 = vmatprep.subr.bf16.mxu0 0
      %725 = vmatpush1.bf16.msra.mxu0 0
      %726 = vmatprep.subr.bf16.mxu0 0
      %727 = vmatpush1.bf16.msra.mxu0 0
      %728 = vmatprep.subr.bf16.mxu0 0
      %729 = vmatpush1.bf16.msra.mxu0 0
      %730 = vmatprep.mubr.bf16.mxu0 0
      %731 = vmatmul.mubr.bf16.gmra.mrb[0].mxu0 %v645
      %v732 = vpop.f32.mrb[0].mxu0
      %v733 = vadd.f32 0.0, %v732
      %v734 = vpop.f32.mrb[0].mxu0
      %v735 = vpop.f32.mrb[0].mxu0
      %v736 = vadd.f32 0.0, %v735
      %v737 = vpop.f32.mrb[0].mxu0
      %738 = vmatprep.mubr.bf16.mxu0 0
      %739 = vmatmul.mubr.bf16.gmra.mrb[0].mxu0 %v647
      %v740 = vpop.f32.mrb[0].mxu0
      %v741 = vadd.f32 0.0, %v740
      %v742 = vpop.f32.mrb[0].mxu0
      %v743 = vpop.f32.mrb[0].mxu0
      %v744 = vadd.f32 0.0, %v743
      %v745 = vpop.f32.mrb[0].mxu0
      %746 = vdwg.mxu0
      %v747 = vadd.f32 %v617, %v733
      %v748 = vadd.f32 %v618, %v736
      %v749 = vadd.f32 %v619, %v741
      %v750 = vadd.f32 %v620, %v744
      %v752 = vlaneseq
      %v753 = vshrl.u32 %v752, 7
      %v754 = vsub.s32 0, %v753
      %v755 = vrot.slane %v199, %v754
      %v757 = vmul.f32 %v747, %v755
      %v758 = vmul.f32 %v748, %v755
      %v759 = vmul.f32 %v749, %v755
      %v760 = vmul.f32 %v750, %v755
      %v762 = vlaneseq
      %v763 = vshrl.u32 %v762, 7
      %v764 = vsub.s32 0, %v763
      %v765 = vrot.slane %v200, %v764
      %v767 = vadd.f32 %v757, %v765
      %v768 = vadd.f32 %v758, %v765
      %v769 = vadd.f32 %v759, %v765
      %v770 = vadd.f32 %v760, %v765
      %v771 = vmax.f32 %v767, 0.0
      %v772 = vmax.f32 %v768, 0.0
      %v773 = vmax.f32 %v769, 0.0
      %v774 = vmax.f32 %v770, 0.0
      %v775 = vpack.c.bf16 %v772, %v771
      %v776 = vpack.c.bf16 %v774, %v773
      %v779 = vunpack.c.l.b16 %v775
      %v780 = vunpack.c.h.b16 %v775
      %v781 = vunpack.c.l.b16 %v776
      %v782 = vunpack.c.h.b16 %v776
      %v783 = vpack.c.b16 %v779, %v779
      %v784 = vpack.c.b16 %v780, %v780
      %v785 = vpack.c.b16 %v781, %v781
      %v786 = vpack.c.b16 %v782, %v782
      %791 = vst [vmem:[%s197] sm:$0xf] %v783
      %792 = vst [vmem:[%s197 + $0x4] sm:$0xf] %v784
      %793 = vst [vmem:[%s197 + $0x8] sm:$0xf] %v785
      %794 = vst [vmem:[%s197 + $0xc] sm:$0xf] %v786
      %p795 = scmp.lt.s32.totalorder %s15, 1
      %s796 = scalar_select %p795, %s15, 1
      %s797 = smul.addr %s796, 4
      %s798 = smul.addr %s797, 4
      %s799 = scalar_lea.vmem %s4, %s798
      // Predicated region
      $region37: #{cnn_forward.11} parent=35 // pred_check
        %p800 = pneg %p122
      $region38: #{cnn_forward.11} parent=35 // pred_check_branch
        %802 = sbr.rel (%p800) target = $region40
      $region39: #{cnn_forward.11} parent=35 // pred_region
        _
      $region40: #{cnn_forward.11} parent=35 // pred_fallthru
        _
    $region36: #{cnn_forward.11} parent=5 // pred_fallthru
      _
    %p803 = scmp.le.s32.totalorder 2, %s10
    // Predicated region
    $region41: #{cnn_forward.11} parent=5 // pred_check
      %p804 = pneg %p803
    $region42: #{cnn_forward.11} parent=5 // pred_check_branch
      %806 = sbr.rel (%p804) target = $region44
    $region43: #{cnn_forward.11} parent=5 // pred_region
      %s807 = ssub.s32 %s10, 2
      // Predicated region
      $region45: #{cnn_forward.11} parent=43 // pred_check
        %p808 = pneg %p128
      $region46: #{cnn_forward.11} parent=43 // pred_check_branch
        %810 = sbr.rel (%p808) target = $region48
      $region47: #{cnn_forward.11} parent=43 // pred_region
        %p811 = scmp.lt.s32.totalorder %s16, 1
        %s812 = scalar_select %p811, %s16, 1
        %s813 = smul.addr %s812, 4
        %s814 = smul.addr %s813, 4
        %s815 = scalar_lea.vmem %s4, %s814
      $region48: #{cnn_forward.11} parent=43 // pred_fallthru
        _
    $region44: #{cnn_forward.11} parent=5 // pred_fallthru
      _
  $region6: #{cnn_forward.11} parent=0 // loop_footer
    %s14 = sadd.s32 1, %s10
  $region7: #{cnn_forward.11} parent=0 // loop_footer_branch
    %9 = sbr.rel target = $region3
  $region8: #{cnn_forward.11} parent=0 // loop_exit
    _

// kernel: cnn_forward.7
$region0: #{cnn_forward.7}
  #allocation0 [shape = 'u32[]', space=smem, size = 0x4, offset = 0x4, fixed_abs, tag = 'smem constant byte address 0x4 - core index']
  #allocation1 [shape = 'u32[144,128]{1,0:T(1,128)}', space=vmem, size = 0x12000, scoped, tag = 'internal scratch']
  %s0 = inlined_call_operand.vmem [shape: bf16[2,384,128], index: 0, kind: input, shape index: {}]
  %s1 = inlined_call_operand.vmem [shape: bf16[9,128,128], index: 1, kind: input, shape index: {}]
  %s2 = inlined_call_operand.vmem [shape: f32[1,128], index: 2, kind: input, shape index: {}]
  %s3 = inlined_call_operand.vmem [shape: f32[1,128], index: 3, kind: input, shape index: {}]
  %s4 = inlined_call_operand.vmem [shape: bf16[2,336,128], index: 4, kind: output, shape index: {}]
  %s5 = sld [smem:[#allocation0]]
  $region49: #{cnn_forward.7} parent=0
    _
  %s7 = ssub.s32 1, %s5
  %s8 = scalar_select 0, %s7, %s5
  loop: start=0, step=1, limit=4
  $region2: #{cnn_forward.7} parent=0 // loop_pre_header
    _
  $region3: #{cnn_forward.7} parent=0 // loop_header
    %s10 = sphi 0, %s14
    %p11 = scmp.ge.s32.totalorder %s10, 4
    %s20 = sphi 0, %s22
    %s23 = sphi 0, %s20
    %s24 = sphi 0, %s23
    %s40 = sphi 0, %s24
    %s44 = sphi 0, %s44
    %s46 = sphi 0, %s44
    %s47 = sphi 0, %s46
    %s61 = sphi 0, %s47
    %s65 = sphi 0, %s65
    %s67 = sphi 0, %s65
    %s68 = sphi 0, %s67
    %s82 = sphi 0, %s68
    %s86 = sphi 0, %s86
    %s88 = sphi 0, %s86
    %s89 = sphi 0, %s88
    %s103 = sphi 0, %s89
    %s109 = sphi 0, %s111
    %s112 = sphi 0, %s109
    %s113 = sphi 0, %s112
    %s129 = sphi 0, %s113
  $region4: #{cnn_forward.7} parent=0 // loop_header_branch
    %13 = sbr.rel (%p11) target = $region8
  $region5: #{cnn_forward.7} parent=0 // loop_body
    %s15 = ssub.s32 %s10, 1
    %s16 = ssub.s32 %s10, 2
    %s17 = sadd.s32 %s10, 1
    %s18 = ssub.s32 %s10, %s17
    %p19 = scmp.eq.s32.totalorder %s18, 0
    %s21 = sadd.s32 %s20, 1
    %s22 = scalar_select %p19, %s20, %s21
    %p25 = pneg %p19
    %p26 = scmp.eq.s32.totalorder %s10, 1
    %p27 = por %p25, %p26
    %p28 = scmp.ne.s32.totalorder %s20, %s23
    %p29 = scmp.eq.s32.totalorder %s10, 0
    %p30 = por %p28, %p29
    %p31 = scmp.ne.s32.totalorder %s20, %s23
    %p32 = scmp.eq.s32.totalorder %s15, 1
    %p33 = por %p31, %p32
    %p34 = scmp.ne.s32.totalorder %s23, %s24
    %p35 = scmp.eq.s32.totalorder %s15, 0
    %p36 = por %p34, %p35
    %p37 = scmp.ne.s32.totalorder %s23, %s24
    %p38 = scmp.eq.s32.totalorder %s16, 1
    %p39 = por %p37, %p38
    %p41 = scmp.ne.s32.totalorder %s24, %s40
    %p42 = scmp.eq.s32.totalorder %s16, 0
    %p43 = por %p41, %p42
    %s45 = sadd.s32 %s44, 1
    %p48 = scmp.eq.s32.totalorder %s10, 1
    %p49 = scmp.ne.s32.totalorder %s44, %s46
    %p50 = scmp.eq.s32.totalorder %s10, 0
    %p51 = por %p49, %p50
    %p52 = scmp.ne.s32.totalorder %s44, %s46
    %p53 = scmp.eq.s32.totalorder %s15, 1
    %p54 = por %p52, %p53
    %p55 = scmp.ne.s32.totalorder %s46, %s47
    %p56 = scmp.eq.s32.totalorder %s15, 0
    %p57 = por %p55, %p56
    %p58 = scmp.ne.s32.totalorder %s46, %s47
    %p59 = scmp.eq.s32.totalorder %s16, 1
    %p60 = por %p58, %p59
    %p62 = scmp.ne.s32.totalorder %s47, %s61
    %p63 = scmp.eq.s32.totalorder %s16, 0
    %p64 = por %p62, %p63
    %s66 = sadd.s32 %s65, 1
    %p69 = scmp.eq.s32.totalorder %s10, 1
    %p70 = scmp.ne.s32.totalorder %s65, %s67
    %p71 = scmp.eq.s32.totalorder %s10, 0
    %p72 = por %p70, %p71
    %p73 = scmp.ne.s32.totalorder %s65, %s67
    %p74 = scmp.eq.s32.totalorder %s15, 1
    %p75 = por %p73, %p74
    %p76 = scmp.ne.s32.totalorder %s67, %s68
    %p77 = scmp.eq.s32.totalorder %s15, 0
    %p78 = por %p76, %p77
    %p79 = scmp.ne.s32.totalorder %s67, %s68
    %p80 = scmp.eq.s32.totalorder %s16, 1
    %p81 = por %p79, %p80
    %p83 = scmp.ne.s32.totalorder %s68, %s82
    %p84 = scmp.eq.s32.totalorder %s16, 0
    %p85 = por %p83, %p84
    %s87 = sadd.s32 %s86, 1
    %p90 = scmp.eq.s32.totalorder %s10, 1
    %p91 = scmp.ne.s32.totalorder %s86, %s88
    %p92 = scmp.eq.s32.totalorder %s10, 0
    %p93 = por %p91, %p92
    %p94 = scmp.ne.s32.totalorder %s86, %s88
    %p95 = scmp.eq.s32.totalorder %s15, 1
    %p96 = por %p94, %p95
    %p97 = scmp.ne.s32.totalorder %s88, %s89
    %p98 = scmp.eq.s32.totalorder %s15, 0
    %p99 = por %p97, %p98
    %p100 = scmp.ne.s32.totalorder %s88, %s89
    %p101 = scmp.eq.s32.totalorder %s16, 1
    %p102 = por %p100, %p101
    %p104 = scmp.ne.s32.totalorder %s89, %s103
    %p105 = scmp.eq.s32.totalorder %s16, 0
    %p106 = por %p104, %p105
    %s107 = ssub.s32 %s10, %s17
    %p108 = scmp.eq.s32.totalorder %s107, 0
    %s110 = sadd.s32 %s109, 1
    %s111 = scalar_select %p108, %s109, %s110
    %p114 = pneg %p108
    %p115 = scmp.eq.s32.totalorder %s10, 1
    %p116 = por %p114, %p115
    %p117 = scmp.ne.s32.totalorder %s109, %s112
    %p118 = scmp.eq.s32.totalorder %s10, 0
    %p119 = por %p117, %p118
    %p120 = scmp.ne.s32.totalorder %s109, %s112
    %p121 = scmp.eq.s32.totalorder %s15, 1
    %p122 = por %p120, %p121
    %p123 = scmp.ne.s32.totalorder %s112, %s113
    %p124 = scmp.eq.s32.totalorder %s15, 0
    %p125 = por %p123, %p124
    %p126 = scmp.ne.s32.totalorder %s112, %s113
    %p127 = scmp.eq.s32.totalorder %s16, 1
    %p128 = por %p126, %p127
    %p130 = scmp.ne.s32.totalorder %s113, %s129
    %p131 = scmp.eq.s32.totalorder %s16, 0
    %p132 = por %p130, %p131
    %p133 = scmp.le.s32.totalorder 1, %s10
    %p134 = scmp.lt.s32.totalorder %s10, 3
    %p135 = pnand %p133, %p134
    %p136 = pneg %p135
    // Predicated region
    $region9: #{cnn_forward.7} parent=5 // pred_check
      _
    $region10: #{cnn_forward.7} parent=5 // pred_check_branch
      %138 = sbr.rel (%p135) target = $region12
    $region11: #{cnn_forward.7} parent=5 // pred_region
      %s139 = ssub.s32 %s10, 1
      // Predicated region
      $region13: #{cnn_forward.7} parent=11 // pred_check
        %p140 = pneg %p57
      $region14: #{cnn_forward.7} parent=11 // pred_check_branch
        %142 = sbr.rel (%p140) target = $region16
      $region15: #{cnn_forward.7} parent=11 // pred_region
        _
      $region16: #{cnn_forward.7} parent=11 // pred_fallthru
        _
      // Predicated region
      $region17: #{cnn_forward.7} parent=11 // pred_check
        %p143 = pneg %p78
      $region18: #{cnn_forward.7} parent=11 // pred_check_branch
        %145 = sbr.rel (%p143) target = $region20
      $region19: #{cnn_forward.7} parent=11 // pred_region
        _
      $region20: #{cnn_forward.7} parent=11 // pred_fallthru
        _
      // Predicated region
      $region21: #{cnn_forward.7} parent=11 // pred_check
        %p146 = pneg %p99
      $region22: #{cnn_forward.7} parent=11 // pred_check_branch
        %148 = sbr.rel (%p146) target = $region24
      $region23: #{cnn_forward.7} parent=11 // pred_region
        _
      $region24: #{cnn_forward.7} parent=11 // pred_fallthru
        _
    $region12: #{cnn_forward.7} parent=5 // pred_fallthru
      _
    %p149 = scmp.lt.s32.totalorder %s10, 2
    // Predicated region
    $region25: #{cnn_forward.7} parent=5 // pred_check
      %p150 = pneg %p149
    $region26: #{cnn_forward.7} parent=5 // pred_check_branch
      %152 = sbr.rel (%p150) target = $region28
    $region27: #{cnn_forward.7} parent=5 // pred_region
      // Predicated region
      $region29: #{cnn_forward.7} parent=27 // pred_check
        %p153 = pneg %p30
      $region30: #{cnn_forward.7} parent=27 // pred_check_branch
        %155 = sbr.rel (%p153) target = $region32
      $region31: #{cnn_forward.7} parent=27 // pred_region
        %p156 = scmp.lt.s32.totalorder %s10, 1
        %s157 = scalar_select %p156, %s10, 1
        %s158 = smul.addr %s157, 48
        %s159 = smul.addr %s158, 4
        %s160 = scalar_lea.vmem %s0, %s159
      $region32: #{cnn_forward.7} parent=27 // pred_fallthru
        _
    $region28: #{cnn_forward.7} parent=5 // pred_fallthru
      _
    %p161 = scmp.le.s32.totalorder 1, %s10
    %p162 = scmp.lt.s32.totalorder %s10, 3
    %p163 = pnand %p161, %p162
    %p164 = pneg %p163
    // Predicated region
    $region33: #{cnn_forward.7} parent=5 // pred_check
      _
    $region34: #{cnn_forward.7} parent=5 // pred_check_branch
      %166 = sbr.rel (%p163) target = $region36
    $region35: #{cnn_forward.7} parent=5 // pred_region
      %s167 = ssub.s32 %s10, 1
      %p168 = scmp.lt.s32.totalorder %s15, 1
      %s169 = scalar_select %p168, %s15, 1
      %s170 = smul.addr %s169, 48
      %s171 = smul.addr %s170, 4
      %s172 = scalar_lea.vmem %s0, %s171
      %p173 = pneg %p36
      %p174 = pneg %p33
      %p175 = pneg %p57
      %p176 = pneg %p54
      %p177 = pneg %p78
      %p178 = pneg %p75
      %p179 = pneg %p99
      %p180 = pneg %p96
      %p181 = pneg %p125
      %p182 = pneg %p122
      %p183 = scmp.lt.s32.totalorder %s15, 1
      %s184 = scalar_select %p183, %s15, 1
      %s185 = smul.addr %s184, 42
      %s186 = smul.addr %s185, 4
      %s187 = scalar_lea.vmem %s4, %s186
      %p188 = scmp.lt.s32.totalorder %s15, 1
      %s189 = scalar_select %p188, %s15, 1
      %s190 = smul.addr %s189, 48
      %s191 = smul.addr %s190, 4
      %s192 = scalar_lea.vmem %s0, %s191
      %p193 = scmp.lt.s32.totalorder %s15, 1
      %s194 = scalar_select %p193, %s15, 1
      %s195 = smul.addr %s194, 42
      %s196 = smul.addr %s195, 4
      %s197 = scalar_lea.vmem %s4, %s196
      %v199 = vld [vmem:[%s2] sm:$0x1]
      %v200 = vld [vmem:[%s3] sm:$0x1]
      %v201 = vld [vmem:[%s192] sm:$0xf]
      %v202 = vld [vmem:[%s192 + $0x4] sm:$0xf]
      %v203 = vld [vmem:[%s192 + $0x8] sm:$0xf]
      %v204 = vld [vmem:[%s192 + $0xc] sm:$0xf]
      %v205 = vld [vmem:[%s192 + $0x10] sm:$0xf]
      %v206 = vld [vmem:[%s192 + $0x14] sm:$0xf]
      %v207 = vld [vmem:[%s192 + $0x18] sm:$0xf]
      %v208 = vld [vmem:[%s192 + $0x1c] sm:$0xf]
      %v209 = vld [vmem:[%s192 + $0x20] sm:$0xf]
      %v210 = vld [vmem:[%s192 + $0x24] sm:$0xf]
      %v211 = vld [vmem:[%s192 + $0x28] sm:$0xf]
      %v212 = vld [vmem:[%s192 + $0x2c] sm:$0xf]
      %v213 = vld [vmem:[%s192 + $0x30] sm:$0xf]
      %v214 = vld [vmem:[%s192 + $0x34] sm:$0xf]
      %v215 = vld [vmem:[%s192 + $0x38] sm:$0xf]
      %v216 = vld [vmem:[%s192 + $0x3c] sm:$0xf]
      %v217 = vld [vmem:[%s192 + $0x40] sm:$0xf]
      %v218 = vld [vmem:[%s192 + $0x44] sm:$0xf]
      %v219 = vld [vmem:[%s192 + $0x48] sm:$0xf]
      %v220 = vld [vmem:[%s192 + $0x4c] sm:$0xf]
      %v221 = vld [vmem:[%s192 + $0x50] sm:$0xf]
      %v222 = vld [vmem:[%s192 + $0x54] sm:$0xf]
      %v223 = vld [vmem:[%s192 + $0x58] sm:$0xf]
      %v224 = vld [vmem:[%s192 + $0x5c] sm:$0xf]
      %v225 = vld [vmem:[%s192 + $0x60] sm:$0xf]
      %v226 = vld [vmem:[%s192 + $0x64] sm:$0xf]
      %v227 = vld [vmem:[%s192 + $0x68] sm:$0xf]
      %v228 = vld [vmem:[%s192 + $0x6c] sm:$0xf]
      %v229 = vld [vmem:[%s192 + $0x70] sm:$0xf]
      %v230 = vld [vmem:[%s192 + $0x74] sm:$0xf]
      %v231 = vld [vmem:[%s192 + $0x78] sm:$0xf]
      %v232 = vld [vmem:[%s192 + $0x7c] sm:$0xf]
      %v233 = vld [vmem:[%s1] sm:$0xf]
      %v234 = vld [vmem:[%s1 + $0x4] sm:$0xf]
      %v235 = vld [vmem:[%s1 + $0x8] sm:$0xf]
      %v236 = vld [vmem:[%s1 + $0xc] sm:$0xf]
      %v237 = vld [vmem:[%s1 + $0x10] sm:$0xf]
      %v238 = vld [vmem:[%s1 + $0x14] sm:$0xf]
      %v239 = vld [vmem:[%s1 + $0x18] sm:$0xf]
      %v240 = vld [vmem:[%s1 + $0x1c] sm:$0xf]
      %v241 = vld [vmem:[%s1 + $0x20] sm:$0xf]
      %v242 = vld [vmem:[%s1 + $0x24] sm:$0xf]
      %v243 = vld [vmem:[%s1 + $0x28] sm:$0xf]
      %v244 = vld [vmem:[%s1 + $0x2c] sm:$0xf]
      %v245 = vld [vmem:[%s1 + $0x30] sm:$0xf]
      %v246 = vld [vmem:[%s1 + $0x34] sm:$0xf]
      %v247 = vld [vmem:[%s1 + $0x38] sm:$0xf]
      %v248 = vld [vmem:[%s1 + $0x3c] sm:$0xf]
      %v249 = vld [vmem:[%s192 + $0x80] sm:$0x1]
      %s250 = scalar_lea.vmem %s1, 64
      %v251 = vld [vmem:[%s250] sm:$0xf]
      %v252 = vld [vmem:[%s250 + $0x4] sm:$0xf]
      %v253 = vld [vmem:[%s250 + $0x8] sm:$0xf]
      %v254 = vld [vmem:[%s250 + $0xc] sm:$0xf]
      %v255 = vld [vmem:[%s250 + $0x10] sm:$0xf]
      %v256 = vld [vmem:[%s250 + $0x14] sm:$0xf]
      %v257 = vld [vmem:[%s250 + $0x18] sm:$0xf]
      %v258 = vld [vmem:[%s250 + $0x1c] sm:$0xf]
      %v259 = vld [vmem:[%s250 + $0x20] sm:$0xf]
      %v260 = vld [vmem:[%s250 + $0x24] sm:$0xf]
      %v261 = vld [vmem:[%s250 + $0x28] sm:$0xf]
      %v262 = vld [vmem:[%s250 + $0x2c] sm:$0xf]
      %v263 = vld [vmem:[%s250 + $0x30] sm:$0xf]
      %v264 = vld [vmem:[%s250 + $0x34] sm:$0xf]
      %v265 = vld [vmem:[%s250 + $0x38] sm:$0xf]
      %v266 = vld [vmem:[%s250 + $0x3c] sm:$0xf]
      %v300 = vunpack.c.l.b16 %v201
      %v301 = vunpack.c.l.b16 %v202
      %v302 = vunpack.c.l.b16 %v203
      %v303 = vunpack.c.l.b16 %v204
      %v304 = vunpack.c.l.b16 %v205
      %v305 = vunpack.c.l.b16 %v206
      %v306 = vunpack.c.l.b16 %v207
      %v307 = vunpack.c.l.b16 %v208
      %v308 = vunpack.c.l.b16 %v209
      %v309 = vunpack.c.l.b16 %v210
      %v310 = vunpack.c.l.b16 %v211
      %v311 = vunpack.c.l.b16 %v212
      %v312 = vunpack.c.l.b16 %v213
      %v313 = vunpack.c.l.b16 %v214
      %v314 = vunpack.c.l.b16 %v215
      %v315 = vunpack.c.l.b16 %v216
      %v316 = vunpack.c.l.b16 %v217
      %v317 = vunpack.c.l.b16 %v218
      %v318 = vunpack.c.l.b16 %v219
      %v319 = vunpack.c.l.b16 %v220
      %v320 = vunpack.c.l.b16 %v221
      %v321 = vunpack.c.l.b16 %v222
      %v322 = vunpack.c.l.b16 %v223
      %v323 = vunpack.c.l.b16 %v224
      %v324 = vunpack.c.l.b16 %v225
      %v325 = vunpack.c.l.b16 %v226
      %v326 = vunpack.c.l.b16 %v227
      %v327 = vunpack.c.l.b16 %v228
      %v328 = vunpack.c.l.b16 %v229
      %v329 = vunpack.c.l.b16 %v230
      %v330 = vunpack.c.l.b16 %v231
      %v331 = vunpack.c.l.b16 %v232
      %v332 = vunpack.c.l.b16 %v249
      %v333 = vpack.c.b16 %v301, %v300
      %v334 = vpack.c.b16 %v303, %v302
      %v335 = vpack.c.b16 %v305, %v304
      %v336 = vpack.c.b16 %v307, %v306
      %v337 = vpack.c.b16 %v309, %v308
      %v338 = vpack.c.b16 %v311, %v310
      %v339 = vpack.c.b16 %v313, %v312
      %v340 = vpack.c.b16 %v315, %v314
      %v341 = vpack.c.b16 %v317, %v316
      %v342 = vpack.c.b16 %v319, %v318
      %v343 = vpack.c.b16 %v321, %v320
      %v344 = vpack.c.b16 %v323, %v322
      %v345 = vpack.c.b16 %v325, %v324
      %v346 = vpack.c.b16 %v327, %v326
      %v347 = vpack.c.b16 %v329, %v328
      %v348 = vpack.c.b16 %v331, %v330
      %v349 = vpack.c.b16 %v332, %v332
      %vm350 = vsmask.f32 7424
      %v352 = vshrl.u32 %v333, 16
      %v354 = vshll.u32 %v333, 16
      %v356 = vrot.slane %v354, 1
      %v357 = vor.u32 %v352, %v356
      %v359 = vshll.u32 %v334, 16
      %v361 = vrot.slane %v359, 1
      %v362 = vsel %vm350, %v357, %v361
      %v363 = vshrl.u32 %v334, 16
      %v365 = vor.u32 %v363, %v361
      %v367 = vshll.u32 %v335, 16
      %v369 = vrot.slane %v367, 1
      %v370 = vsel %vm350, %v365, %v369
      %v371 = vshrl.u32 %v335, 16
      %v373 = vor.u32 %v371, %v369
      %v375 = vshll.u32 %v336, 16
      %v377 = vrot.slane %v375, 1
      %v378 = vsel %vm350, %v373, %v377
      %v379 = vshrl.u32 %v336, 16
      %v381 = vor.u32 %v379, %v377
      %v383 = vshll.u32 %v337, 16
      %v385 = vrot.slane %v383, 1
      %v386 = vsel %vm350, %v381, %v385
      %v387 = vshrl.u32 %v337, 16
      %v389 = vor.u32 %v387, %v385
      %v391 = vshll.u32 %v338, 16
      %v393 = vrot.slane %v391, 1
      %v394 = vsel %vm350, %v389, %v393
      %v395 = vshrl.u32 %v338, 16
      %v397 = vor.u32 %v395, %v393
      %v399 = vshll.u32 %v339, 16
      %v401 = vrot.slane %v399, 1
      %v402 = vsel %vm350, %v397, %v401
      %v403 = vshrl.u32 %v339, 16
      %v405 = vor.u32 %v403, %v401
      %v407 = vshll.u32 %v340, 16
      %v409 = vrot.slane %v407, 1
      %v410 = vsel %vm350, %v405, %v409
      %v411 = vshrl.u32 %v340, 16
      %v413 = vor.u32 %v411, %v409
      %v415 = vshll.u32 %v341, 16
      %v417 = vrot.slane %v415, 1
      %v418 = vsel %vm350, %v413, %v417
      %v419 = vshrl.u32 %v341, 16
      %v421 = vor.u32 %v419, %v417
      %v423 = vshll.u32 %v342, 16
      %v425 = vrot.slane %v423, 1
      %v426 = vsel %vm350, %v421, %v425
      %v427 = vshrl.u32 %v342, 16
      %v429 = vor.u32 %v427, %v425
      %v431 = vshll.u32 %v343, 16
      %v433 = vrot.slane %v431, 1
      %v434 = vsel %vm350, %v429, %v433
      %v435 = vshrl.u32 %v343, 16
      %v437 = vor.u32 %v435, %v433
      %v439 = vshll.u32 %v344, 16
      %v441 = vrot.slane %v439, 1
      %v442 = vsel %vm350, %v437, %v441
      %v443 = vshrl.u32 %v344, 16
      %v445 = vor.u32 %v443, %v441
      %v447 = vshll.u32 %v345, 16
      %v449 = vrot.slane %v447, 1
      %v450 = vsel %vm350, %v445, %v449
      %v451 = vshrl.u32 %v345, 16
      %v453 = vor.u32 %v451, %v449
      %v455 = vshll.u32 %v346, 16
      %v457 = vrot.slane %v455, 1
      %v458 = vsel %vm350, %v453, %v457
      %v459 = vshrl.u32 %v346, 16
      %v461 = vor.u32 %v459, %v457
      %v463 = vshll.u32 %v347, 16
      %v465 = vrot.slane %v463, 1
      %v466 = vsel %vm350, %v461, %v465
      %v467 = vshrl.u32 %v347, 16
      %v469 = vor.u32 %v467, %v465
      %v471 = vshll.u32 %v348, 16
      %v473 = vrot.slane %v471, 1
      %v474 = vsel %vm350, %v469, %v473
      %v475 = vshrl.u32 %v348, 16
      %v477 = vor.u32 %v475, %v473
      %v479 = vshll.u32 %v349, 16
      %v481 = vrot.slane %v479, 1
      %v482 = vsel %vm350, %v477, %v481
      %v515 = vunpack.c.l.b16 %v251
      %v516 = vunpack.c.l.b16 %v252
      %v517 = vunpack.c.l.b16 %v253
      %v518 = vunpack.c.l.b16 %v254
      %v519 = vunpack.c.l.b16 %v255
      %v520 = vunpack.c.l.b16 %v256
      %v521 = vunpack.c.l.b16 %v257
      %v522 = vunpack.c.l.b16 %v258
      %v523 = vunpack.c.l.b16 %v259
      %v524 = vunpack.c.l.b16 %v260
      %v525 = vunpack.c.l.b16 %v261
      %v526 = vunpack.c.l.b16 %v262
      %v527 = vunpack.c.l.b16 %v263
      %v528 = vunpack.c.l.b16 %v264
      %v529 = vunpack.c.l.b16 %v265
      %v530 = vunpack.c.l.b16 %v266
      %v531 = vpack.c.b16 %v516, %v515
      %v532 = vpack.c.b16 %v518, %v517
      %v533 = vpack.c.b16 %v520, %v519
      %v534 = vpack.c.b16 %v522, %v521
      %v535 = vpack.c.b16 %v524, %v523
      %v536 = vpack.c.b16 %v526, %v525
      %v537 = vpack.c.b16 %v528, %v527
      %v538 = vpack.c.b16 %v530, %v529
      %547 = vmatprep.subr.bf16.mxu0 0
      %548 = vmatpush1.bf16.msra.mxu0 %v531
      %549 = vmatprep.subr.bf16.mxu0 0
      %550 = vmatpush1.bf16.msra.mxu0 %v532
      %551 = vmatprep.subr.bf16.mxu0 0
      %552 = vmatpush1.bf16.msra.mxu0 %v533
      %553 = vmatprep.subr.bf16.mxu0 0
      %554 = vmatpush1.bf16.msra.mxu0 %v534
      %555 = vmatprep.subr.bf16.mxu0 0
      %556 = vmatpush1.bf16.msra.mxu0 %v535
      %557 = vmatprep.subr.bf16.mxu0 0
      %558 = vmatpush1.bf16.msra.mxu0 %v536
      %559 = vmatprep.subr.bf16.mxu0 0
      %560 = vmatpush1.bf16.msra.mxu0 %v537
      %561 = vmatprep.subr.bf16.mxu0 0
      %562 = vmatpush1.bf16.msra.mxu0 %v538
      %563 = vmatprep.subr.bf16.mxu0 0
      %564 = vmatpush1.bf16.msra.mxu0 0
      %565 = vmatprep.subr.bf16.mxu0 0
      %566 = vmatpush1.bf16.msra.mxu0 0
      %567 = vmatprep.subr.bf16.mxu0 0
      %568 = vmatpush1.bf16.msra.mxu0 0
      %569 = vmatprep.subr.bf16.mxu0 0
      %570 = vmatpush1.bf16.msra.mxu0 0
      %571 = vmatprep.subr.bf16.mxu0 0
      %572 = vmatpush1.bf16.msra.mxu0 0
      %573 = vmatprep.subr.bf16.mxu0 0
      %574 = vmatpush1.bf16.msra.mxu0 0
      %575 = vmatprep.subr.bf16.mxu0 0
      %576 = vmatpush1.bf16.msra.mxu0 0
      %577 = vmatprep.subr.bf16.mxu0 0
      %578 = vmatpush1.bf16.msra.mxu0 0
      %579 = vmatprep.mubr.bf16.mxu0 0
      %580 = vmatmul.mubr.bf16.gmra.mrb[0].mxu0 %v362
      %v581 = vpop.f32.mrb[0].mxu0
      %v582 = vadd.f32 0.0, %v581
      %v583 = vpop.f32.mrb[0].mxu0
      %v584 = vpop.f32.mrb[0].mxu0
      %v585 = vadd.f32 0.0, %v584
      %v586 = vpop.f32.mrb[0].mxu0
      %587 = vmatprep.mubr.bf16.mxu0 0
      %588 = vmatmul.mubr.bf16.gmra.mrb[0].mxu0 %v370
      %v589 = vpop.f32.mrb[0].mxu0
      %v590 = vadd.f32 0.0, %v589
      %v591 = vpop.f32.mrb[0].mxu0
      %v592 = vpop.f32.mrb[0].mxu0
      %v593 = vadd.f32 0.0, %v592
      %v594 = vpop.f32.mrb[0].mxu0
      %595 = vmatprep.mubr.bf16.mxu0 0
      %596 = vmatmul.mubr.bf16.gmra.mrb[0].mxu0 %v378
      %v597 = vpop.f32.mrb[0].mxu0
      %v598 = vadd.f32 0.0, %v597
      %v599 = vpop.f32.mrb[0].mxu0
      %v600 = vpop.f32.mrb[0].mxu0
      %v601 = vadd.f32 0.0, %v600
      %v602 = vpop.f32.mrb[0].mxu0
      %603 = vmatprep.mubr.bf16.mxu0 0
      %604 = vmatmul.mubr.bf16.gmra.mrb[0].mxu0 %v386
      %v605 = vpop.f32.mrb[0].mxu0
      %v606 = vadd.f32 0.0, %v605
      %v607 = vpop.f32.mrb[0].mxu0
      %v608 = vpop.f32.mrb[0].mxu0
      %v609 = vadd.f32 0.0, %v608
      %v610 = vpop.f32.mrb[0].mxu0
      %611 = vmatprep.mubr.bf16.mxu0 0
      %612 = vmatmul.mubr.bf16.gmra.mrb[0].mxu0 %v394
      %v613 = vpop.f32.mrb[0].mxu0
      %v614 = vadd.f32 0.0, %v613
      %v615 = vpop.f32.mrb[0].mxu0
      %v616 = vpop.f32.mrb[0].mxu0
      %v617 = vadd.f32 0.0, %v616
      %v618 = vpop.f32.mrb[0].mxu0
      %619 = vmatprep.mubr.bf16.mxu0 0
      %620 = vmatmul.mubr.bf16.gmra.mrb[0].mxu0 %v402
      %v621 = vpop.f32.mrb[0].mxu0
      %v622 = vadd.f32 0.0, %v621
      %v623 = vpop.f32.mrb[0].mxu0
      %v624 = vpop.f32.mrb[0].mxu0
      %v625 = vadd.f32 0.0, %v624
      %v626 = vpop.f32.mrb[0].mxu0
      %627 = vmatprep.mubr.bf16.mxu0 0
      %628 = vmatmul.mubr.bf16.gmra.mrb[0].mxu0 %v410
      %v629 = vpop.f32.mrb[0].mxu0
      %v630 = vadd.f32 0.0, %v629
      %v631 = vpop.f32.mrb[0].mxu0
      %v632 = vpop.f32.mrb[0].mxu0
      %v633 = vadd.f32 0.0, %v632
      %v634 = vpop.f32.mrb[0].mxu0
      %635 = vmatprep.mubr.bf16.mxu0 0
      %636 = vmatmul.mubr.bf16.gmra.mrb[0].mxu0 %v418
      %v637 = vpop.f32.mrb[0].mxu0
      %v638 = vadd.f32 0.0, %v637
      %v639 = vpop.f32.mrb[0].mxu0
      %v640 = vpop.f32.mrb[0].mxu0
      %v641 = vadd.f32 0.0, %v640
      %v642 = vpop.f32.mrb[0].mxu0
      %643 = vmatprep.mubr.bf16.mxu0 0
      %644 = vmatmul.mubr.bf16.gmra.mrb[0].mxu0 %v426
      %v645 = vpop.f32.mrb[0].mxu0
      %v646 = vadd.f32 0.0, %v645
      %v647 = vpop.f32.mrb[0].mxu0
      %v648 = vpop.f32.mrb[0].mxu0
      %v649 = vadd.f32 0.0, %v648
      %v650 = vpop.f32.mrb[0].mxu0
      %651 = vmatprep.mubr.bf16.mxu0 0
      %652 = vmatmul.mubr.bf16.gmra.mrb[0].mxu0 %v434
      %v653 = vpop.f32.mrb[0].mxu0
      %v654 = vadd.f32 0.0, %v653
      %v655 = vpop.f32.mrb[0].mxu0
      %v656 = vpop.f32.mrb[0].mxu0
      %v657 = vadd.f32 0.0, %v656
      %v658 = vpop.f32.mrb[0].mxu0
      %659 = vmatprep.mubr.bf16.mxu0 0
      %660 = vmatmul.mubr.bf16.gmra.mrb[0].mxu0 %v442
      %v661 = vpop.f32.mrb[0].mxu0
      %v662 = vadd.f32 0.0, %v661
      %v663 = vpop.f32.mrb[0].mxu0
      %v664 = vpop.f32.mrb[0].mxu0
      %v665 = vadd.f32 0.0, %v664
      %v666 = vpop.f32.mrb[0].mxu0
      %667 = vmatprep.mubr.bf16.mxu0 0
      %668 = vmatmul.mubr.bf16.gmra.mrb[0].mxu0 %v450
      %v669 = vpop.f32.mrb[0].mxu0
      %v670 = vadd.f32 0.0, %v669
      %v671 = vpop.f32.mrb[0].mxu0
      %v672 = vpop.f32.mrb[0].mxu0
      %v673 = vadd.f32 0.0, %v672
      %v674 = vpop.f32.mrb[0].mxu0
      %675 = vmatprep.mubr.bf16.mxu0 0
      %676 = vmatmul.mubr.bf16.gmra.mrb[0].mxu0 %v458
      %v677 = vpop.f32.mrb[0].mxu0
      %v678 = vadd.f32 0.0, %v677
      %v679 = vpop.f32.mrb[0].mxu0
      %v680 = vpop.f32.mrb[0].mxu0
      %v681 = vadd.f32 0.0, %v680
      %v682 = vpop.f32.mrb[0].mxu0
      %683 = vmatprep.mubr.bf16.mxu0 0
      %684 = vmatmul.mubr.bf16.gmra.mrb[0].mxu0 %v466
      %v685 = vpop.f32.mrb[0].mxu0
      %v686 = vadd.f32 0.0, %v685
      %v687 = vpop.f32.mrb[0].mxu0
      %v688 = vpop.f32.mrb[0].mxu0
      %v689 = vadd.f32 0.0, %v688
      %v690 = vpop.f32.mrb[0].mxu0
      %691 = vmatprep.mubr.bf16.mxu0 0
      %692 = vmatmul.mubr.bf16.gmra.mrb[0].mxu0 %v474
      %v693 = vpop.f32.mrb[0].mxu0
      %v694 = vadd.f32 0.0, %v693
      %v695 = vpop.f32.mrb[0].mxu0
      %v696 = vpop.f32.mrb[0].mxu0
      %v697 = vadd.f32 0.0, %v696
      %v698 = vpop.f32.mrb[0].mxu0
      %699 = vmatprep.mubr.bf16.mxu0 0
      %700 = vmatmul.mubr.bf16.gmra.mrb[0].mxu0 %v482
      %v701 = vpop.f32.mrb[0].mxu0
      %v702 = vadd.f32 0.0, %v701
      %v703 = vpop.f32.mrb[0].mxu0
      %v704 = vpop.f32.mrb[0].mxu0
      %v705 = vadd.f32 0.0, %v704
      %v706 = vpop.f32.mrb[0].mxu0
      %707 = vdwg.mxu0
      %v740 = vunpack.c.l.b16 %v233
      %v741 = vunpack.c.l.b16 %v234
      %v742 = vunpack.c.l.b16 %v235
      %v743 = vunpack.c.l.b16 %v236
      %v744 = vunpack.c.l.b16 %v237
      %v745 = vunpack.c.l.b16 %v238
      %v746 = vunpack.c.l.b16 %v239
      %v747 = vunpack.c.l.b16 %v240
      %v748 = vunpack.c.l.b16 %v241
      %v749 = vunpack.c.l.b16 %v242
      %v750 = vunpack.c.l.b16 %v243
      %v751 = vunpack.c.l.b16 %v244
      %v752 = vunpack.c.l.b16 %v245
      %v753 = vunpack.c.l.b16 %v246
      %v754 = vunpack.c.l.b16 %v247
      %v755 = vunpack.c.l.b16 %v248
      %v756 = vpack.c.b16 %v741, %v740
      %v757 = vpack.c.b16 %v743, %v742
      %v758 = vpack.c.b16 %v745, %v744
      %v759 = vpack.c.b16 %v747, %v746
      %v760 = vpack.c.b16 %v749, %v748
      %v761 = vpack.c.b16 %v751, %v750
      %v762 = vpack.c.b16 %v753, %v752
      %v763 = vpack.c.b16 %v755, %v754
      %772 = vmatprep.subr.bf16.mxu0 0
      %773 = vmatpush1.bf16.msra.mxu0 %v756
      %774 = vmatprep.subr.bf16.mxu0 0
      %775 = vmatpush1.bf16.msra.mxu0 %v757
      %776 = vmatprep.subr.bf16.mxu0 0
      %777 = vmatpush1.bf16.msra.mxu0 %v758
      %778 = vmatprep.subr.bf16.mxu0 0
      %779 = vmatpush1.bf16.msra.mxu0 %v759
      %780 = vmatprep.subr.bf16.mxu0 0
      %781 = vmatpush1.bf16.msra.mxu0 %v760
      %782 = vmatprep.subr.bf16.mxu0 0
      %783 = vmatpush1.bf16.msra.mxu0 %v761
      %784 = vmatprep.subr.bf16.mxu0 0
      %785 = vmatpush1.bf16.msra.mxu0 %v762
      %786 = vmatprep.subr.bf16.mxu0 0
      %787 = vmatpush1.bf16.msra.mxu0 %v763
      %788 = vmatprep.subr.bf16.mxu0 0
      %789 = vmatpush1.bf16.msra.mxu0 0
      %790 = vmatprep.subr.bf16.mxu0 0
      %791 = vmatpush1.bf16.msra.mxu0 0
      %792 = vmatprep.subr.bf16.mxu0 0
      %793 = vmatpush1.bf16.msra.mxu0 0
      %794 = vmatprep.subr.bf16.mxu0 0
      %795 = vmatpush1.bf16.msra.mxu0 0
      %796 = vmatprep.subr.bf16.mxu0 0
      %797 = vmatpush1.bf16.msra.mxu0 0
      %798 = vmatprep.subr.bf16.mxu0 0
      %799 = vmatpush1.bf16.msra.mxu0 0
      %800 = vmatprep.subr.bf16.mxu0 0
      %801 = vmatpush1.bf16.msra.mxu0 0
      %802 = vmatprep.subr.bf16.mxu0 0
      %803 = vmatpush1.bf16.msra.mxu0 0
      %804 = vmatprep.mubr.bf16.mxu0 0
      %805 = vmatmul.mubr.bf16.gmra.mrb[0].mxu0 %v333
      %v806 = vpop.f32.mrb[0].mxu0
      %v807 = vadd.f32 %v582, %v806
      %v808 = vpop.f32.mrb[0].mxu0
      %v809 = vpop.f32.mrb[0].mxu0
      %v810 = vadd.f32 %v585, %v809
      %v811 = vpop.f32.mrb[0].mxu0
      %812 = vmatprep.mubr.bf16.mxu0 0
      %813 = vmatmul.mubr.bf16.gmra.mrb[0].mxu0 %v334
      %v814 = vpop.f32.mrb[0].mxu0
      %v815 = vadd.f32 %v590, %v814
      %v816 = vpop.f32.mrb[0].mxu0
      %v817 = vpop.f32.mrb[0].mxu0
      %v818 = vadd.f32 %v593, %v817
      %v819 = vpop.f32.mrb[0].mxu0
      %820 = vmatprep.mubr.bf16.mxu0 0
      %821 = vmatmul.mubr.bf16.gmra.mrb[0].mxu0 %v335
      %v822 = vpop.f32.mrb[0].mxu0
      %v823 = vadd.f32 %v598, %v822
      %v824 = vpop.f32.mrb[0].mxu0
      %v825 = vpop.f32.mrb[0].mxu0
      %v826 = vadd.f32 %v601, %v825
      %v827 = vpop.f32.mrb[0].mxu0
      %828 = vmatprep.mubr.bf16.mxu0 0
      %829 = vmatmul.mubr.bf16.gmra.mrb[0].mxu0 %v336
      %v830 = vpop.f32.mrb[0].mxu0
      %v831 = vadd.f32 %v606, %v830
      %v832 = vpop.f32.mrb[0].mxu0
      %v833 = vpop.f32.mrb[0].mxu0
      %v834 = vadd.f32 %v609, %v833
      %v835 = vpop.f32.mrb[0].mxu0
      %836 = vmatprep.mubr.bf16.mxu0 0
      %837 = vmatmul.mubr.bf16.gmra.mrb[0].mxu0 %v337
      %v838 = vpop.f32.mrb[0].mxu0
      %v839 = vadd.f32 %v614, %v838
      %v840 = vpop.f32.mrb[0].mxu0
      %v841 = vpop.f32.mrb[0].mxu0
      %v842 = vadd.f32 %v617, %v841
      %v843 = vpop.f32.mrb[0].mxu0
      %844 = vmatprep.mubr.bf16.mxu0 0
      %845 = vmatmul.mubr.bf16.gmra.mrb[0].mxu0 %v338
      %v846 = vpop.f32.mrb[0].mxu0
      %v847 = vadd.f32 %v622, %v846
      %v848 = vpop.f32.mrb[0].mxu0
      %v849 = vpop.f32.mrb[0].mxu0
      %v850 = vadd.f32 %v625, %v849
      %v851 = vpop.f32.mrb[0].mxu0
      %852 = vmatprep.mubr.bf16.mxu0 0
      %853 = vmatmul.mubr.bf16.gmra.mrb[0].mxu0 %v339
      %v854 = vpop.f32.mrb[0].mxu0
      %v855 = vadd.f32 %v630, %v854
      %v856 = vpop.f32.mrb[0].mxu0
      %v857 = vpop.f32.mrb[0].mxu0
      %v858 = vadd.f32 %v633, %v857
      %v859 = vpop.f32.mrb[0].mxu0
      %860 = vmatprep.mubr.bf16.mxu0 0
      %861 = vmatmul.mubr.bf16.gmra.mrb[0].mxu0 %v340
      %v862 = vpop.f32.mrb[0].mxu0
      %v863 = vadd.f32 %v638, %v862
      %v864 = vpop.f32.mrb[0].mxu0
      %v865 = vpop.f32.mrb[0].mxu0
      %v866 = vadd.f32 %v641, %v865
      %v867 = vpop.f32.mrb[0].mxu0
      %868 = vmatprep.mubr.bf16.mxu0 0
      %869 = vmatmul.mubr.bf16.gmra.mrb[0].mxu0 %v341
      %v870 = vpop.f32.mrb[0].mxu0
      %v871 = vadd.f32 %v646, %v870
      %v872 = vpop.f32.mrb[0].mxu0
      %v873 = vpop.f32.mrb[0].mxu0
      %v874 = vadd.f32 %v649, %v873
      %v875 = vpop.f32.mrb[0].mxu0
      %876 = vmatprep.mubr.bf16.mxu0 0
      %877 = vmatmul.mubr.bf16.gmra.mrb[0].mxu0 %v342
      %v878 = vpop.f32.mrb[0].mxu0
      %v879 = vadd.f32 %v654, %v878
      %v880 = vpop.f32.mrb[0].mxu0
      %v881 = vpop.f32.mrb[0].mxu0
      %v882 = vadd.f32 %v657, %v881
      %v883 = vpop.f32.mrb[0].mxu0
      %884 = vmatprep.mubr.bf16.mxu0 0
      %885 = vmatmul.mubr.bf16.gmra.mrb[0].mxu0 %v343
      %v886 = vpop.f32.mrb[0].mxu0
      %v887 = vadd.f32 %v662, %v886
      %v888 = vpop.f32.mrb[0].mxu0
      %v889 = vpop.f32.mrb[0].mxu0
      %v890 = vadd.f32 %v665, %v889
      %v891 = vpop.f32.mrb[0].mxu0
      %892 = vmatprep.mubr.bf16.mxu0 0
      %893 = vmatmul.mubr.bf16.gmra.mrb[0].mxu0 %v344
      %v894 = vpop.f32.mrb[0].mxu0
      %v895 = vadd.f32 %v670, %v894
      %v896 = vpop.f32.mrb[0].mxu0
      %v897 = vpop.f32.mrb[0].mxu0
      %v898 = vadd.f32 %v673, %v897
      %v899 = vpop.f32.mrb[0].mxu0
      %900 = vmatprep.mubr.bf16.mxu0 0
      %901 = vmatmul.mubr.bf16.gmra.mrb[0].mxu0 %v345
      %v902 = vpop.f32.mrb[0].mxu0
      %v903 = vadd.f32 %v678, %v902
      %v904 = vpop.f32.mrb[0].mxu0
      %v905 = vpop.f32.mrb[0].mxu0
      %v906 = vadd.f32 %v681, %v905
      %v907 = vpop.f32.mrb[0].mxu0
      %908 = vmatprep.mubr.bf16.mxu0 0
      %909 = vmatmul.mubr.bf16.gmra.mrb[0].mxu0 %v346
      %v910 = vpop.f32.mrb[0].mxu0
      %v911 = vadd.f32 %v686, %v910
      %v912 = vpop.f32.mrb[0].mxu0
      %v913 = vpop.f32.mrb[0].mxu0
      %v914 = vadd.f32 %v689, %v913
      %v915 = vpop.f32.mrb[0].mxu0
      %916 = vmatprep.mubr.bf16.mxu0 0
      %917 = vmatmul.mubr.bf16.gmra.mrb[0].mxu0 %v347
      %v918 = vpop.f32.mrb[0].mxu0
      %v919 = vadd.f32 %v694, %v918
      %v920 = vpop.f32.mrb[0].mxu0
      %v921 = vpop.f32.mrb[0].mxu0
      %v922 = vadd.f32 %v697, %v921
      %v923 = vpop.f32.mrb[0].mxu0
      %924 = vmatprep.mubr.bf16.mxu0 0
      %925 = vmatmul.mubr.bf16.gmra.mrb[0].mxu0 %v348
      %v926 = vpop.f32.mrb[0].mxu0
      %v927 = vadd.f32 %v702, %v926
      %v928 = vpop.f32.mrb[0].mxu0
      %v929 = vpop.f32.mrb[0].mxu0
      %v930 = vadd.f32 %v705, %v929
      %v931 = vpop.f32.mrb[0].mxu0
      %932 = vdwg.mxu0
      %v933 = vld [vmem:[%s192] sm:$0xe]
      %s934 = scalar_lea.vmem %s1, 128
      %v935 = vld [vmem:[%s934] sm:$0xf]
      %v936 = vld [vmem:[%s934 + $0x4] sm:$0xf]
      %v937 = vld [vmem:[%s934 + $0x8] sm:$0xf]
      %v938 = vld [vmem:[%s934 + $0xc] sm:$0xf]
      %v939 = vld [vmem:[%s934 + $0x10] sm:$0xf]
      %v940 = vld [vmem:[%s934 + $0x14] sm:$0xf]
      %v941 = vld [vmem:[%s934 + $0x18] sm:$0xf]
      %v942 = vld [vmem:[%s934 + $0x1c] sm:$0xf]
      %v943 = vld [vmem:[%s934 + $0x20] sm:$0xf]
      %v944 = vld [vmem:[%s934 + $0x24] sm:$0xf]
      %v945 = vld [vmem:[%s934 + $0x28] sm:$0xf]
      %v946 = vld [vmem:[%s934 + $0x2c] sm:$0xf]
      %v947 = vld [vmem:[%s934 + $0x30] sm:$0xf]
      %v948 = vld [vmem:[%s934 + $0x34] sm:$0xf]
      %v949 = vld [vmem:[%s934 + $0x38] sm:$0xf]
      %v950 = vld [vmem:[%s934 + $0x3c] sm:$0xf]
      %v952 = vunpack.c.l.b16 %v933
      %v953 = vpack.c.b16 %v301, %v952
      %vm954 = vcmask 1046528
      %v955 = vrot.slane %v953, 1
      %v956 = vrot.slane %v334, 1
      %v957 = vsel %vm954, %v955, %v956
      %v958 = vrot.slane %v335, 1
      %v959 = vsel %vm954, %v956, %v958
      %v960 = vrot.slane %v336, 1
      %v961 = vsel %vm954, %v958, %v960
      %v962 = vrot.slane %v337, 1
      %v963 = vsel %vm954, %v960, %v962
      %v964 = vrot.slane %v338, 1
      %v965 = vsel %vm954, %v962, %v964
      %v966 = vrot.slane %v339, 1
      %v967 = vsel %vm954, %v964, %v966
      %v968 = vrot.slane %v340, 1
      %v969 = vsel %vm954, %v966, %v968
      %v970 = vrot.slane %v341, 1
      %v971 = vsel %vm954, %v968, %v970
      %v972 = vrot.slane %v342, 1
      %v973 = vsel %vm954, %v970, %v972
      %v974 = vrot.slane %v343, 1
      %v975 = vsel %vm954, %v972, %v974
      %v976 = vrot.slane %v344, 1
      %v977 = vsel %vm954, %v974, %v976
      %v978 = vrot.slane %v345, 1
      %v979 = vsel %vm954, %v976, %v978
      %v980 = vrot.slane %v346, 1
      %v981 = vsel %vm954, %v978, %v980
      %v982 = vrot.slane %v347, 1
      %v983 = vsel %vm954, %v980, %v982
      %v984 = vrot.slane %v348, 1
      %v985 = vsel %vm954, %v982, %v984
      %v986 = vrot.slane %v349, 1
      %v987 = vsel %vm954, %v984, %v986
      %v1020 = vunpack.c.l.b16 %v935
      %v1021 = vunpack.c.l.b16 %v936
      %v1022 = vunpack.c.l.b16 %v937
      %v1023 = vunpack.c.l.b16 %v938
      %v1024 = vunpack.c.l.b16 %v939
      %v1025 = vunpack.c.l.b16 %v940
      %v1026 = vunpack.c.l.b16 %v941
      %v1027 = vunpack.c.l.b16 %v942
      %v1028 = vunpack.c.l.b16 %v943
      %v1029 = vunpack.c.l.b16 %v944
      %v1030 = vunpack.c.l.b16 %v945
      %v1031 = vunpack.c.l.b16 %v946
      %v1032 = vunpack.c.l.b16 %v947
      %v1033 = vunpack.c.l.b16 %v948
      %v1034 = vunpack.c.l.b16 %v949
      %v1035 = vunpack.c.l.b16 %v950
      %v1036 = vpack.c.b16 %v1021, %v1020
      %v1037 = vpack.c.b16 %v1023, %v1022
      %v1038 = vpack.c.b16 %v1025, %v1024
      %v1039 = vpack.c.b16 %v1027, %v1026
      %v1040 = vpack.c.b16 %v1029, %v1028
      %v1041 = vpack.c.b16 %v1031, %v1030
      %v1042 = vpack.c.b16 %v1033, %v1032
      %v1043 = vpack.c.b16 %v1035, %v1034
      %1052 = vmatprep.subr.bf16.mxu0 0
      %1053 = vmatpush1.bf16.msra.mxu0 %v1036
      %1054 = vmatprep.subr.bf16.mxu0 0
      %1055 = vmatpush1.bf16.msra.mxu0 %v1037
      %1056 = vmatprep.subr.bf16.mxu0 0
      %1057 = vmatpush1.bf16.msra.mxu0 %v1038
      %1058 = vmatprep.subr.bf16.mxu0 0
      %1059 = vmatpush1.bf16.msra.mxu0 %v1039
      %1060 = vmatprep.subr.bf16.mxu0 0
      %1061 = vmatpush1.bf16.msra.mxu0 %v1040
      %1062 = vmatprep.subr.bf16.mxu0 0
      %1063 = vmatpush1.bf16.msra.mxu0 %v1041
      %1064 = vmatprep.subr.bf16.mxu0 0
      %1065 = vmatpush1.bf16.msra.mxu0 %v1042
      %1066 = vmatprep.subr.bf16.mxu0 0
      %1067 = vmatpush1.bf16.msra.mxu0 %v1043
      %1068 = vmatprep.subr.bf16.mxu0 0
      %1069 = vmatpush1.bf16.msra.mxu0 0
      %1070 = vmatprep.subr.bf16.mxu0 0
      %1071 = vmatpush1.bf16.msra.mxu0 0
      %1072 = vmatprep.subr.bf16.mxu0 0
      %1073 = vmatpush1.bf16.msra.mxu0 0
      %1074 = vmatprep.subr.bf16.mxu0 0
      %1075 = vmatpush1.bf16.msra.mxu0 0
      %1076 = vmatprep.subr.bf16.mxu0 0
      %1077 = vmatpush1.bf16.msra.mxu0 0
      %1078 = vmatprep.subr.bf16.mxu0 0
      %1079 = vmatpush1.bf16.msra.mxu0 0
      %1080 = vmatprep.subr.bf16.mxu0 0
      %1081 = vmatpush1.bf16.msra.mxu0 0
      %1082 = vmatprep.subr.bf16.mxu0 0
      %1083 = vmatpush1.bf16.msra.mxu0 0
      %1084 = vmatprep.mubr.bf16.mxu0 0
      %1085 = vmatmul.mubr.bf16.gmra.mrb[0].mxu0 %v957
      %v1086 = vpop.f32.mrb[0].mxu0
      %v1087 = vadd.f32 0.0, %v1086
      %v1088 = vpop.f32.mrb[0].mxu0
      %v1089 = vpop.f32.mrb[0].mxu0
      %v1090 = vadd.f32 0.0, %v1089
      %v1091 = vpop.f32.mrb[0].mxu0
      %1092 = vmatprep.mubr.bf16.mxu0 0
      %1093 = vmatmul.mubr.bf16.gmra.mrb[0].mxu0 %v959
      %v1094 = vpop.f32.mrb[0].mxu0
      %v1095 = vadd.f32 0.0, %v1094
      %v1096 = vpop.f32.mrb[0].mxu0
      %v1097 = vpop.f32.mrb[0].mxu0
      %v1098 = vadd.f32 0.0, %v1097
      %v1099 = vpop.f32.mrb[0].mxu0
      %1100 = vmatprep.mubr.bf16.mxu0 0
      %1101 = vmatmul.mubr.bf16.gmra.mrb[0].mxu0 %v961
      %v1102 = vpop.f32.mrb[0].mxu0
      %v1103 = vadd.f32 0.0, %v1102
      %v1104 = vpop.f32.mrb[0].mxu0
      %v1105 = vpop.f32.mrb[0].mxu0
      %v1106 = vadd.f32 0.0, %v1105
      %v1107 = vpop.f32.mrb[0].mxu0
      %1108 = vmatprep.mubr.bf16.mxu0 0
      %1109 = vmatmul.mubr.bf16.gmra.mrb[0].mxu0 %v963
      %v1110 = vpop.f32.mrb[0].mxu0
      %v1111 = vadd.f32 0.0, %v1110
      %v1112 = vpop.f32.mrb[0].mxu0
      %v1113 = vpop.f32.mrb[0].mxu0
      %v1114 = vadd.f32 0.0, %v1113
      %v1115 = vpop.f32.mrb[0].mxu0
      %1116 = vmatprep.mubr.bf16.mxu0 0
      %1117 = vmatmul.mubr.bf16.gmra.mrb[0].mxu0 %v965
      %v1118 = vpop.f32.mrb[0].mxu0
      %v1119 = vadd.f32 0.0, %v1118
      %v1120 = vpop.f32.mrb[0].mxu0
      %v1121 = vpop.f32.mrb[0].mxu0
      %v1122 = vadd.f32 0.0, %v1121
      %v1123 = vpop.f32.mrb[0].mxu0
      %1124 = vmatprep.mubr.bf16.mxu0 0
      %1125 = vmatmul.mubr.bf16.gmra.mrb[0].mxu0 %v967
      %v1126 = vpop.f32.mrb[0].mxu0
      %v1127 = vadd.f32 0.0, %v1126
      %v1128 = vpop.f32.mrb[0].mxu0
      %v1129 = vpop.f32.mrb[0].mxu0
      %v1130 = vadd.f32 0.0, %v1129
      %v1131 = vpop.f32.mrb[0].mxu0
      %1132 = vmatprep.mubr.bf16.mxu0 0
      %1133 = vmatmul.mubr.bf16.gmra.mrb[0].mxu0 %v969
      %v1134 = vpop.f32.mrb[0].mxu0
      %v1135 = vadd.f32 0.0, %v1134
      %v1136 = vpop.f32.mrb[0].mxu0
      %v1137 = vpop.f32.mrb[0].mxu0
      %v1138 = vadd.f32 0.0, %v1137
      %v1139 = vpop.f32.mrb[0].mxu0
      %1140 = vmatprep.mubr.bf16.mxu0 0
      %1141 = vmatmul.mubr.bf16.gmra.mrb[0].mxu0 %v971
      %v1142 = vpop.f32.mrb[0].mxu0
      %v1143 = vadd.f32 0.0, %v1142
      %v1144 = vpop.f32.mrb[0].mxu0
      %v1145 = vpop.f32.mrb[0].mxu0
      %v1146 = vadd.f32 0.0, %v1145
      %v1147 = vpop.f32.mrb[0].mxu0
      %1148 = vmatprep.mubr.bf16.mxu0 0
      %1149 = vmatmul.mubr.bf16.gmra.mrb[0].mxu0 %v973
      %v1150 = vpop.f32.mrb[0].mxu0
      %v1151 = vadd.f32 0.0, %v1150
      %v1152 = vpop.f32.mrb[0].mxu0
      %v1153 = vpop.f32.mrb[0].mxu0
      %v1154 = vadd.f32 0.0, %v1153
      %v1155 = vpop.f32.mrb[0].mxu0
      %1156 = vmatprep.mubr.bf16.mxu0 0
      %1157 = vmatmul.mubr.bf16.gmra.mrb[0].mxu0 %v975
      %v1158 = vpop.f32.mrb[0].mxu0
      %v1159 = vadd.f32 0.0, %v1158
      %v1160 = vpop.f32.mrb[0].mxu0
      %v1161 = vpop.f32.mrb[0].mxu0
      %v1162 = vadd.f32 0.0, %v1161
      %v1163 = vpop.f32.mrb[0].mxu0
      %1164 = vmatprep.mubr.bf16.mxu0 0
      %1165 = vmatmul.mubr.bf16.gmra.mrb[0].mxu0 %v977
      %v1166 = vpop.f32.mrb[0].mxu0
      %v1167 = vadd.f32 0.0, %v1166
      %v1168 = vpop.f32.mrb[0].mxu0
      %v1169 = vpop.f32.mrb[0].mxu0
      %v1170 = vadd.f32 0.0, %v1169
      %v1171 = vpop.f32.mrb[0].mxu0
      %1172 = vmatprep.mubr.bf16.mxu0 0
      %1173 = vmatmul.mubr.bf16.gmra.mrb[0].mxu0 %v979
      %v1174 = vpop.f32.mrb[0].mxu0
      %v1175 = vadd.f32 0.0, %v1174
      %v1176 = vpop.f32.mrb[0].mxu0
      %v1177 = vpop.f32.mrb[0].mxu0
      %v1178 = vadd.f32 0.0, %v1177
      %v1179 = vpop.f32.mrb[0].mxu0
      %1180 = vmatprep.mubr.bf16.mxu0 0
      %1181 = vmatmul.mubr.bf16.gmra.mrb[0].mxu0 %v981
      %v1182 = vpop.f32.mrb[0].mxu0
      %v1183 = vadd.f32 0.0, %v1182
      %v1184 = vpop.f32.mrb[0].mxu0
      %v1185 = vpop.f32.mrb[0].mxu0
      %v1186 = vadd.f32 0.0, %v1185
      %v1187 = vpop.f32.mrb[0].mxu0
      %1188 = vmatprep.mubr.bf16.mxu0 0
      %1189 = vmatmul.mubr.bf16.gmra.mrb[0].mxu0 %v983
      %v1190 = vpop.f32.mrb[0].mxu0
      %v1191 = vadd.f32 0.0, %v1190
      %v1192 = vpop.f32.mrb[0].mxu0
      %v1193 = vpop.f32.mrb[0].mxu0
      %v1194 = vadd.f32 0.0, %v1193
      %v1195 = vpop.f32.mrb[0].mxu0
      %1196 = vmatprep.mubr.bf16.mxu0 0
      %1197 = vmatmul.mubr.bf16.gmra.mrb[0].mxu0 %v985
      %v1198 = vpop.f32.mrb[0].mxu0
      %v1199 = vadd.f32 0.0, %v1198
      %v1200 = vpop.f32.mrb[0].mxu0
      %v1201 = vpop.f32.mrb[0].mxu0
      %v1202 = vadd.f32 0.0, %v1201
      %v1203 = vpop.f32.mrb[0].mxu0
      %1204 = vmatprep.mubr.bf16.mxu0 0
      %1205 = vmatmul.mubr.bf16.gmra.mrb[0].mxu0 %v987
      %v1206 = vpop.f32.mrb[0].mxu0
      %v1207 = vadd.f32 0.0, %v1206
      %v1208 = vpop.f32.mrb[0].mxu0
      %v1209 = vpop.f32.mrb[0].mxu0
      %v1210 = vadd.f32 0.0, %v1209
      %v1211 = vpop.f32.mrb[0].mxu0
      %1212 = vdwg.mxu0
      %v1213 = vadd.f32 %v807, %v1087
      %v1214 = vadd.f32 %v810, %v1090
      %v1215 = vadd.f32 %v815, %v1095
      %v1216 = vadd.f32 %v818, %v1098
      %v1217 = vadd.f32 %v823, %v1103
      %v1218 = vadd.f32 %v826, %v1106
      %v1219 = vadd.f32 %v831, %v1111
      %v1220 = vadd.f32 %v834, %v1114
      %v1221 = vadd.f32 %v839, %v1119
      %v1222 = vadd.f32 %v842, %v1122
      %v1223 = vadd.f32 %v847, %v1127
      %v1224 = vadd.f32 %v850, %v1130
      %v1225 = vadd.f32 %v855, %v1135
      %v1226 = vadd.f32 %v858, %v1138
      %v1227 = vadd.f32 %v863, %v1143
      %v1228 = vadd.f32 %v866, %v1146
      %v1229 = vadd.f32 %v871, %v1151
      %v1230 = vadd.f32 %v874, %v1154
      %v1231 = vadd.f32 %v879, %v1159
      %v1232 = vadd.f32 %v882, %v1162
      %v1233 = vadd.f32 %v887, %v1167
      %v1234 = vadd.f32 %v890, %v1170
      %v1235 = vadd.f32 %v895, %v1175
      %v1236 = vadd.f32 %v898, %v1178
      %v1237 = vadd.f32 %v903, %v1183
      %v1238 = vadd.f32 %v906, %v1186
      %v1239 = vadd.f32 %v911, %v1191
      %v1240 = vadd.f32 %v914, %v1194
      %v1241 = vadd.f32 %v919, %v1199
      %v1242 = vadd.f32 %v922, %v1202
      %v1243 = vadd.f32 %v927, %v1207
      %v1244 = vadd.f32 %v930, %v1210
      %v1245 = vld [vmem:[%s192 + $0x8] sm:$0xe]
      %v1246 = vld [vmem:[%s192 + $0xc] sm:$0xf]
      %v1247 = vld [vmem:[%s192 + $0x10] sm:$0xf]
      %v1248 = vld [vmem:[%s192 + $0x14] sm:$0xf]
      %v1249 = vld [vmem:[%s192 + $0x18] sm:$0xf]
      %v1250 = vld [vmem:[%s192 + $0x1c] sm:$0xf]
      %v1251 = vld [vmem:[%s192 + $0x20] sm:$0xf]
      %v1252 = vld [vmem:[%s192 + $0x24] sm:$0xf]
      %v1253 = vld [vmem:[%s192 + $0x28] sm:$0xf]
      %v1254 = vld [vmem:[%s192 + $0x2c] sm:$0xf]
      %v1255 = vld [vmem:[%s192 + $0x30] sm:$0xf]
      %v1256 = vld [vmem:[%s192 + $0x34] sm:$0xf]
      %v1257 = vld [vmem:[%s192 + $0x38] sm:$0xf]
      %v1258 = vld [vmem:[%s192 + $0x3c] sm:$0xf]
      %v1259 = vld [vmem:[%s192 + $0x40] sm:$0xf]
      %v1260 = vld [vmem:[%s192 + $0x44] sm:$0xf]
      %v1261 = vld [vmem:[%s192 + $0x48] sm:$0xf]
      %v1262 = vld [vmem:[%s192 + $0x4c] sm:$0xf]
      %v1263 = vld [vmem:[%s192 + $0x50] sm:$0xf]
      %v1264 = vld [vmem:[%s192 + $0x54] sm:$0xf]
      %v1265 = vld [vmem:[%s192 + $0x58] sm:$0xf]
      %v1266 = vld [vmem:[%s192 + $0x5c] sm:$0xf]
      %v1267 = vld [vmem:[%s192 + $0x60] sm:$0xf]
      %v1268 = vld [vmem:[%s192 + $0x64] sm:$0xf]
      %v1269 = vld [vmem:[%s192 + $0x68] sm:$0xf]
      %v1270 = vld [vmem:[%s192 + $0x6c] sm:$0xf]
      %v1271 = vld [vmem:[%s192 + $0x70] sm:$0xf]
      %v1272 = vld [vmem:[%s192 + $0x74] sm:$0xf]
      %v1273 = vld [vmem:[%s192 + $0x78] sm:$0xf]
      %v1274 = vld [vmem:[%s192 + $0x7c] sm:$0xf]
      %v1275 = vld [vmem:[%s192 + $0x80] sm:$0xf]
      %v1276 = vld [vmem:[%s192 + $0x84] sm:$0xf]
      %v1277 = vld [vmem:[%s192 + $0x88] sm:$0x1]
      %s1278 = scalar_lea.vmem %s1, 192
      %v1279 = vld [vmem:[%s1278] sm:$0xf]
      %v1280 = vld [vmem:[%s1278 + $0x4] sm:$0xf]
      %v1281 = vld [vmem:[%s1278 + $0x8] sm:$0xf]
      %v1282 = vld [vmem:[%s1278 + $0xc] sm:$0xf]
      %v1283 = vld [vmem:[%s1278 + $0x10] sm:$0xf]
      %v1284 = vld [vmem:[%s1278 + $0x14] sm:$0xf]
      %v1285 = vld [vmem:[%s1278 + $0x18] sm:$0xf]
      %v1286 = vld [vmem:[%s1278 + $0x1c] sm:$0xf]
      %v1287 = vld [vmem:[%s1278 + $0x20] sm:$0xf]
      %v1288 = vld [vmem:[%s1278 + $0x24] sm:$0xf]
      %v1289 = vld [vmem:[%s1278 + $0x28] sm:$0xf]
      %v1290 = vld [vmem:[%s1278 + $0x2c] sm:$0xf]
      %v1291 = vld [vmem:[%s1278 + $0x30] sm:$0xf]
      %v1292 = vld [vmem:[%s1278 + $0x34] sm:$0xf]
      %v1293 = vld [vmem:[%s1278 + $0x38] sm:$0xf]
      %v1294 = vld [vmem:[%s1278 + $0x3c] sm:$0xf]
      %v1328 = vunpack.c.l.b16 %v1245
      %v1329 = vunpack.c.l.b16 %v1246
      %v1330 = vunpack.c.l.b16 %v1247
      %v1331 = vunpack.c.l.b16 %v1248
      %v1332 = vunpack.c.l.b16 %v1249
      %v1333 = vunpack.c.l.b16 %v1250
      %v1334 = vunpack.c.l.b16 %v1251
      %v1335 = vunpack.c.l.b16 %v1252
      %v1336 = vunpack.c.l.b16 %v1253
      %v1337 = vunpack.c.l.b16 %v1254
      %v1338 = vunpack.c.l.b16 %v1255
      %v1339 = vunpack.c.l.b16 %v1256
      %v1340 = vunpack.c.l.b16 %v1257
      %v1341 = vunpack.c.l.b16 %v1258
      %v1342 = vunpack.c.l.b16 %v1259
      %v1343 = vunpack.c.l.b16 %v1260
      %v1344 = vunpack.c.l.b16 %v1261
      %v1345 = vunpack.c.l.b16 %v1262
      %v1346 = vunpack.c.l.b16 %v1263
      %v1347 = vunpack.c.l.b16 %v1264
      %v1348 = vunpack.c.l.b16 %v1265
      %v1349 = vunpack.c.l.b16 %v1266
      %v1350 = vunpack.c.l.b16 %v1267
      %v1351 = vunpack.c.l.b16 %v1268
      %v1352 = vunpack.c.l.b16 %v1269
      %v1353 = vunpack.c.l.b16 %v1270
      %v1354 = vunpack.c.l.b16 %v1271
      %v1355 = vunpack.c.l.b16 %v1272
      %v1356 = vunpack.c.l.b16 %v1273
      %v1357 = vunpack.c.l.b16 %v1274
      %v1358 = vunpack.c.l.b16 %v1275
      %v1359 = vunpack.c.l.b16 %v1276
      %v1360 = vunpack.c.l.b16 %v1277
      %v1361 = vpack.c.b16 %v1329, %v1328
      %v1362 = vpack.c.b16 %v1331, %v1330
      %v1363 = vpack.c.b16 %v1333, %v1332
      %v1364 = vpack.c.b16 %v1335, %v1334
      %v1365 = vpack.c.b16 %v1337, %v1336
      %v1366 = vpack.c.b16 %v1339, %v1338
      %v1367 = vpack.c.b16 %v1341, %v1340
      %v1368 = vpack.c.b16 %v1343, %v1342
      %v1369 = vpack.c.b16 %v1345, %v1344
      %v1370 = vpack.c.b16 %v1347, %v1346
      %v1371 = vpack.c.b16 %v1349, %v1348
      %v1372 = vpack.c.b16 %v1351, %v1350
      %v1373 = vpack.c.b16 %v1353, %v1352
      %v1374 = vpack.c.b16 %v1355, %v1354
      %v1375 = vpack.c.b16 %v1357, %v1356
      %v1376 = vpack.c.b16 %v1359, %v1358
      %v1377 = vpack.c.b16 %v1360, %v1360
      %v1378 = vrot.slane %v1361, 1
      %v1379 = vrot.slane %v1362, 1
      %v1380 = vsel %vm954, %v1378, %v1379
      %v1381 = vrot.slane %v1363, 1
      %v1382 = vsel %vm954, %v1379, %v1381
      %v1383 = vrot.slane %v1364, 1
      %v1384 = vsel %vm954, %v1381, %v1383
      %v1385 = vrot.slane %v1365, 1
      %v1386 = vsel %vm954, %v1383, %v1385
      %v1387 = vrot.slane %v1366, 1
      %v1388 = vsel %vm954, %v1385, %v1387
      %v1389 = vrot.slane %v1367, 1
      %v1390 = vsel %vm954, %v1387, %v1389
      %v1391 = vrot.slane %v1368, 1
      %v1392 = vsel %vm954, %v1389, %v1391
      %v1393 = vrot.slane %v1369, 1
      %v1394 = vsel %vm954, %v1391, %v1393
      %v1395 = vrot.slane %v1370, 1
      %v1396 = vsel %vm954, %v1393, %v1395
      %v1397 = vrot.slane %v1371, 1
      %v1398 = vsel %vm954, %v1395, %v1397
      %v1399 = vrot.slane %v1372, 1
      %v1400 = vsel %vm954, %v1397, %v1399
      %v1401 = vrot.slane %v1373, 1
      %v1402 = vsel %vm954, %v1399, %v1401
      %v1403 = vrot.slane %v1374, 1
      %v1404 = vsel %vm954, %v1401, %v1403
      %v1405 = vrot.slane %v1375, 1
      %v1406 = vsel %vm954, %v1403, %v1405
      %v1407 = vrot.slane %v1376, 1
      %v1408 = vsel %vm954, %v1405, %v1407
      %v1409 = vrot.slane %v1377, 1
      %v1410 = vsel %vm954, %v1407, %v1409
      %v1443 = vunpack.c.l.b16 %v1279
      %v1444 = vunpack.c.l.b16 %v1280
      %v1445 = vunpack.c.l.b16 %v1281
      %v1446 = vunpack.c.l.b16 %v1282
      %v1447 = vunpack.c.l.b16 %v1283
      %v1448 = vunpack.c.l.b16 %v1284
      %v1449 = vunpack.c.l.b16 %v1285
      %v1450 = vunpack.c.l.b16 %v1286
      %v1451 = vunpack.c.l.b16 %v1287
      %v1452 = vunpack.c.l.b16 %v1288
      %v1453 = vunpack.c.l.b16 %v1289
      %v1454 = vunpack.c.l.b16 %v1290
      %v1455 = vunpack.c.l.b16 %v1291
      %v1456 = vunpack.c.l.b16 %v1292
      %v1457 = vunpack.c.l.b16 %v1293
      %v1458 = vunpack.c.l.b16 %v1294
      %v1459 = vpack.c.b16 %v1444, %v1443
      %v1460 = vpack.c.b16 %v1446, %v1445
      %v1461 = vpack.c.b16 %v1448, %v1447
      %v1462 = vpack.c.b16 %v1450, %v1449
      %v1463 = vpack.c.b16 %v1452, %v1451
      %v1464 = vpack.c.b16 %v1454, %v1453
      %v1465 = vpack.c.b16 %v1456, %v1455
      %v1466 = vpack.c.b16 %v1458, %v1457
      %1475 = vmatprep.subr.bf16.mxu0 0
      %1476 = vmatpush1.bf16.msra.mxu0 %v1459
      %1477 = vmatprep.subr.bf16.mxu0 0
      %1478 = vmatpush1.bf16.msra.mxu0 %v1460
      %1479 = vmatprep.subr.bf16.mxu0 0
      %1480 = vmatpush1.bf16.msra.mxu0 %v1461
      %1481 = vmatprep.subr.bf16.mxu0 0
      %1482 = vmatpush1.bf16.msra.mxu0 %v1462
      %1483 = vmatprep.subr.bf16.mxu0 0
      %1484 = vmatpush1.bf16.msra.mxu0 %v1463
      %1485 = vmatprep.subr.bf16.mxu0 0
      %1486 = vmatpush1.bf16.msra.mxu0 %v1464
      %1487 = vmatprep.subr.bf16.mxu0 0
      %1488 = vmatpush1.bf16.msra.mxu0 %v1465
      %1489 = vmatprep.subr.bf16.mxu0 0
      %1490 = vmatpush1.bf16.msra.mxu0 %v1466
      %1491 = vmatprep.subr.bf16.mxu0 0
      %1492 = vmatpush1.bf16.msra.mxu0 0
      %1493 = vmatprep.subr.bf16.mxu0 0
      %1494 = vmatpush1.bf16.msra.mxu0 0
      %1495 = vmatprep.subr.bf16.mxu0 0
      %1496 = vmatpush1.bf16.msra.mxu0 0
      %1497 = vmatprep.subr.bf16.mxu0 0
      %1498 = vmatpush1.bf16.msra.mxu0 0
      %1499 = vmatprep.subr.bf16.mxu0 0
      %1500 = vmatpush1.bf16.msra.mxu0 0
      %1501 = vmatprep.subr.bf16.mxu0 0
      %1502 = vmatpush1.bf16.msra.mxu0 0
      %1503 = vmatprep.subr.bf16.mxu0 0
      %1504 = vmatpush1.bf16.msra.mxu0 0
      %1505 = vmatprep.subr.bf16.mxu0 0
      %1506 = vmatpush1.bf16.msra.mxu0 0
      %1507 = vmatprep.mubr.bf16.mxu0 0
      %1508 = vmatmul.mubr.bf16.gmra.mrb[0].mxu0 %v1380
      %v1509 = vpop.f32.mrb[0].mxu0
      %v1510 = vadd.f32 0.0, %v1509
      %v1511 = vpop.f32.mrb[0].mxu0
      %v1512 = vpop.f32.mrb[0].mxu0
      %v1513 = vadd.f32 0.0, %v1512
      %v1514 = vpop.f32.mrb[0].mxu0
      %1515 = vmatprep.mubr.bf16.mxu0 0
      %1516 = vmatmul.mubr.bf16.gmra.mrb[0].mxu0 %v1382
      %v1517 = vpop.f32.mrb[0].mxu0
      %v1518 = vadd.f32 0.0, %v1517
      %v1519 = vpop.f32.mrb[0].mxu0
      %v1520 = vpop.f32.mrb[0].mxu0
      %v1521 = vadd.f32 0.0, %v1520
      %v1522 = vpop.f32.mrb[0].mxu0
      %1523 = vmatprep.mubr.bf16.mxu0 0
      %1524 = vmatmul.mubr.bf16.gmra.mrb[0].mxu0 %v1384
      %v1525 = vpop.f32.mrb[0].mxu0
      %v1526 = vadd.f32 0.0, %v1525
      %v1527 = vpop.f32.mrb[0].mxu0
      %v1528 = vpop.f32.mrb[0].mxu0
      %v1529 = vadd.f32 0.0, %v1528
      %v1530 = vpop.f32.mrb[0].mxu0
      %1531 = vmatprep.mubr.bf16.mxu0 0
      %1532 = vmatmul.mubr.bf16.gmra.mrb[0].mxu0 %v1386
      %v1533 = vpop.f32.mrb[0].mxu0
      %v1534 = vadd.f32 0.0, %v1533
      %v1535 = vpop.f32.mrb[0].mxu0
      %v1536 = vpop.f32.mrb[0].mxu0
      %v1537 = vadd.f32 0.0, %v1536
      %v1538 = vpop.f32.mrb[0].mxu0
      %1539 = vmatprep.mubr.bf16.mxu0 0
      %1540 = vmatmul.mubr.bf16.gmra.mrb[0].mxu0 %v1388
      %v1541 = vpop.f32.mrb[0].mxu0
      %v1542 = vadd.f32 0.0, %v1541
      %v1543 = vpop.f32.mrb[0].mxu0
      %v1544 = vpop.f32.mrb[0].mxu0
      %v1545 = vadd.f32 0.0, %v1544
      %v1546 = vpop.f32.mrb[0].mxu0
      %1547 = vmatprep.mubr.bf16.mxu0 0
      %1548 = vmatmul.mubr.bf16.gmra.mrb[0].mxu0 %v1390
      %v1549 = vpop.f32.mrb[0].mxu0
      %v1550 = vadd.f32 0.0, %v1549
      %v1551 = vpop.f32.mrb[0].mxu0
      %v1552 = vpop.f32.mrb[0].mxu0
      %v1553 = vadd.f32 0.0, %v1552
      %v1554 = vpop.f32.mrb[0].mxu0
      %1555 = vmatprep.mubr.bf16.mxu0 0
      %1556 = vmatmul.mubr.bf16.gmra.mrb[0].mxu0 %v1392
      %v1557 = vpop.f32.mrb[0].mxu0
      %v1558 = vadd.f32 0.0, %v1557
      %v1559 = vpop.f32.mrb[0].mxu0
      %v1560 = vpop.f32.mrb[0].mxu0
      %v1561 = vadd.f32 0.0, %v1560
      %v1562 = vpop.f32.mrb[0].mxu0
      %1563 = vmatprep.mubr.bf16.mxu0 0
      %1564 = vmatmul.mubr.bf16.gmra.mrb[0].mxu0 %v1394
      %v1565 = vpop.f32.mrb[0].mxu0
      %v1566 = vadd.f32 0.0, %v1565
      %v1567 = vpop.f32.mrb[0].mxu0
      %v1568 = vpop.f32.mrb[0].mxu0
      %v1569 = vadd.f32 0.0, %v1568
      %v1570 = vpop.f32.mrb[0].mxu0
      %1571 = vmatprep.mubr.bf16.mxu0 0
      %1572 = vmatmul.mubr.bf16.gmra.mrb[0].mxu0 %v1396
      %v1573 = vpop.f32.mrb[0].mxu0
      %v1574 = vadd.f32 0.0, %v1573
      %v1575 = vpop.f32.mrb[0].mxu0
      %v1576 = vpop.f32.mrb[0].mxu0
      %v1577 = vadd.f32 0.0, %v1576
      %v1578 = vpop.f32.mrb[0].mxu0
      %1579 = vmatprep.mubr.bf16.mxu0 0
      %1580 = vmatmul.mubr.bf16.gmra.mrb[0].mxu0 %v1398
      %v1581 = vpop.f32.mrb[0].mxu0
      %v1582 = vadd.f32 0.0, %v1581
      %v1583 = vpop.f32.mrb[0].mxu0
      %v1584 = vpop.f32.mrb[0].mxu0
      %v1585 = vadd.f32 0.0, %v1584
      %v1586 = vpop.f32.mrb[0].mxu0
      %1587 = vmatprep.mubr.bf16.mxu0 0
      %1588 = vmatmul.mubr.bf16.gmra.mrb[0].mxu0 %v1400
      %v1589 = vpop.f32.mrb[0].mxu0
      %v1590 = vadd.f32 0.0, %v1589
      %v1591 = vpop.f32.mrb[0].mxu0
      %v1592 = vpop.f32.mrb[0].mxu0
      %v1593 = vadd.f32 0.0, %v1592
      %v1594 = vpop.f32.mrb[0].mxu0
      %1595 = vmatprep.mubr.bf16.mxu0 0
      %1596 = vmatmul.mubr.bf16.gmra.mrb[0].mxu0 %v1402
      %v1597 = vpop.f32.mrb[0].mxu0
      %v1598 = vadd.f32 0.0, %v1597
      %v1599 = vpop.f32.mrb[0].mxu0
      %v1600 = vpop.f32.mrb[0].mxu0
      %v1601 = vadd.f32 0.0, %v1600
      %v1602 = vpop.f32.mrb[0].mxu0
      %1603 = vmatprep.mubr.bf16.mxu0 0
      %1604 = vmatmul.mubr.bf16.gmra.mrb[0].mxu0 %v1404
      %v1605 = vpop.f32.mrb[0].mxu0
      %v1606 = vadd.f32 0.0, %v1605
      %v1607 = vpop.f32.mrb[0].mxu0
      %v1608 = vpop.f32.mrb[0].mxu0
      %v1609 = vadd.f32 0.0, %v1608
      %v1610 = vpop.f32.mrb[0].mxu0
      %1611 = vmatprep.mubr.bf16.mxu0 0
      %1612 = vmatmul.mubr.bf16.gmra.mrb[0].mxu0 %v1406
      %v1613 = vpop.f32.mrb[0].mxu0
      %v1614 = vadd.f32 0.0, %v1613
      %v1615 = vpop.f32.mrb[0].mxu0
      %v1616 = vpop.f32.mrb[0].mxu0
      %v1617 = vadd.f32 0.0, %v1616
      %v1618 = vpop.f32.mrb[0].mxu0
      %1619 = vmatprep.mubr.bf16.mxu0 0
      %1620 = vmatmul.mubr.bf16.gmra.mrb[0].mxu0 %v1408
      %v1621 = vpop.f32.mrb[0].mxu0
      %v1622 = vadd.f32 0.0, %v1621
      %v1623 = vpop.f32.mrb[0].mxu0
      %v1624 = vpop.f32.mrb[0].mxu0
      %v1625 = vadd.f32 0.0, %v1624
      %v1626 = vpop.f32.mrb[0].mxu0
      %1627 = vmatprep.mubr.bf16.mxu0 0
      %1628 = vmatmul.mubr.bf16.gmra.mrb[0].mxu0 %v1410
      %v1629 = vpop.f32.mrb[0].mxu0
      %v1630 = vadd.f32 0.0, %v1629
      %v1631 = vpop.f32.mrb[0].mxu0
      %v1632 = vpop.f32.mrb[0].mxu0
      %v1633 = vadd.f32 0.0, %v1632
      %v1634 = vpop.f32.mrb[0].mxu0
      %1635 = vdwg.mxu0
      %v1636 = vadd.f32 %v1213, %v1510
      %v1637 = vadd.f32 %v1214, %v1513
      %v1638 = vadd.f32 %v1215, %v1518
      %v1639 = vadd.f32 %v1216, %v1521
      %v1640 = vadd.f32 %v1217, %v1526
      %v1641 = vadd.f32 %v1218, %v1529
      %v1642 = vadd.f32 %v1219, %v1534
      %v1643 = vadd.f32 %v1220, %v1537
      %v1644 = vadd.f32 %v1221, %v1542
      %v1645 = vadd.f32 %v1222, %v1545
      %v1646 = vadd.f32 %v1223, %v1550
      %v1647 = vadd.f32 %v1224, %v1553
      %v1648 = vadd.f32 %v1225, %v1558
      %v1649 = vadd.f32 %v1226, %v1561
      %v1650 = vadd.f32 %v1227, %v1566
      %v1651 = vadd.f32 %v1228, %v1569
      %v1652 = vadd.f32 %v1229, %v1574
      %v1653 = vadd.f32 %v1230, %v1577
      %v1654 = vadd.f32 %v1231, %v1582
      %v1655 = vadd.f32 %v1232, %v1585
      %v1656 = vadd.f32 %v1233, %v1590
      %v1657 = vadd.f32 %v1234, %v1593
      %v1658 = vadd.f32 %v1235, %v1598
      %v1659 = vadd.f32 %v1236, %v1601
      %v1660 = vadd.f32 %v1237, %v1606
      %v1661 = vadd.f32 %v1238, %v1609
      %v1662 = vadd.f32 %v1239, %v1614
      %v1663 = vadd.f32 %v1240, %v1617
      %v1664 = vadd.f32 %v1241, %v1622
      %v1665 = vadd.f32 %v1242, %v1625
      %v1666 = vadd.f32 %v1243, %v1630
      %v1667 = vadd.f32 %v1244, %v1633
      %v1668 = vld [vmem:[%s192 + $0x88] sm:$0x3]
      %s1669 = scalar_lea.vmem %s1, 256
      %v1670 = vld [vmem:[%s1669] sm:$0xf]
      %v1671 = vld [vmem:[%s1669 + $0x4] sm:$0xf]
      %v1672 = vld [vmem:[%s1669 + $0x8] sm:$0xf]
      %v1673 = vld [vmem:[%s1669 + $0xc] sm:$0xf]
      %v1674 = vld [vmem:[%s1669 + $0x10] sm:$0xf]
      %v1675 = vld [vmem:[%s1669 + $0x14] sm:$0xf]
      %v1676 = vld [vmem:[%s1669 + $0x18] sm:$0xf]
      %v1677 = vld [vmem:[%s1669 + $0x1c] sm:$0xf]
      %v1678 = vld [vmem:[%s1669 + $0x20] sm:$0xf]
      %v1679 = vld [vmem:[%s1669 + $0x24] sm:$0xf]
      %v1680 = vld [vmem:[%s1669 + $0x28] sm:$0xf]
      %v1681 = vld [vmem:[%s1669 + $0x2c] sm:$0xf]
      %v1682 = vld [vmem:[%s1669 + $0x30] sm:$0xf]
      %v1683 = vld [vmem:[%s1669 + $0x34] sm:$0xf]
      %v1684 = vld [vmem:[%s1669 + $0x38] sm:$0xf]
      %v1685 = vld [vmem:[%s1669 + $0x3c] sm:$0xf]
      %v1687 = vunpack.c.l.b16 %v1668
      %v1688 = vpack.c.b16 %v1687, %v1687
      %vm1689 = vsmask.f32 6400
      %v1691 = vshrl.u32 %v1361, 16
      %v1693 = vrot.slane %v1691, 1
      %v1694 = vshll.u32 %v1361, 16
      %v1696 = vrot.slane %v1694, 2
      %v1697 = vor.u32 %v1693, %v1696
      %v1699 = vshrl.u32 %v1362, 16
      %v1701 = vrot.slane %v1699, 1
      %v1702 = vshll.u32 %v1362, 16
      %v1704 = vrot.slane %v1702, 2
      %v1705 = vor.u32 %v1701, %v1704
      %v1706 = vsel %vm1689, %v1697, %v1705
      %v1708 = vshrl.u32 %v1363, 16
      %v1710 = vrot.slane %v1708, 1
      %v1711 = vshll.u32 %v1363, 16
      %v1713 = vrot.slane %v1711, 2
      %v1714 = vor.u32 %v1710, %v1713
      %v1715 = vsel %vm1689, %v1705, %v1714
      %v1717 = vshrl.u32 %v1364, 16
      %v1719 = vrot.slane %v1717, 1
      %v1720 = vshll.u32 %v1364, 16
      %v1722 = vrot.slane %v1720, 2
      %v1723 = vor.u32 %v1719, %v1722
      %v1724 = vsel %vm1689, %v1714, %v1723
      %v1726 = vshrl.u32 %v1365, 16
      %v1728 = vrot.slane %v1726, 1
      %v1729 = vshll.u32 %v1365, 16
      %v1731 = vrot.slane %v1729, 2
      %v1732 = vor.u32 %v1728, %v1731
      %v1733 = vsel %vm1689, %v1723, %v1732
      %v1735 = vshrl.u32 %v1366, 16
      %v1737 = vrot.slane %v1735, 1
      %v1738 = vshll.u32 %v1366, 16
      %v1740 = vrot.slane %v1738, 2
      %v1741 = vor.u32 %v1737, %v1740
      %v1742 = vsel %vm1689, %v1732, %v1741
      %v1744 = vshrl.u32 %v1367, 16
      %v1746 = vrot.slane %v1744, 1
      %v1747 = vshll.u32 %v1367, 16
      %v1749 = vrot.slane %v1747, 2
      %v1750 = vor.u32 %v1746, %v1749
      %v1751 = vsel %vm1689, %v1741, %v1750
      %v1753 = vshrl.u32 %v1368, 16
      %v1755 = vrot.slane %v1753, 1
      %v1756 = vshll.u32 %v1368, 16
      %v1758 = vrot.slane %v1756, 2
      %v1759 = vor.u32 %v1755, %v1758
      %v1760 = vsel %vm1689, %v1750, %v1759
      %v1762 = vshrl.u32 %v1369, 16
      %v1764 = vrot.slane %v1762, 1
      %v1765 = vshll.u32 %v1369, 16
      %v1767 = vrot.slane %v1765, 2
      %v1768 = vor.u32 %v1764, %v1767
      %v1769 = vsel %vm1689, %v1759, %v1768
      %v1771 = vshrl.u32 %v1370, 16
      %v1773 = vrot.slane %v1771, 1
      %v1774 = vshll.u32 %v1370, 16
      %v1776 = vrot.slane %v1774, 2
      %v1777 = vor.u32 %v1773, %v1776
      %v1778 = vsel %vm1689, %v1768, %v1777
      %v1780 = vshrl.u32 %v1371, 16
      %v1782 = vrot.slane %v1780, 1
      %v1783 = vshll.u32 %v1371, 16
      %v1785 = vrot.slane %v1783, 2
      %v1786 = vor.u32 %v1782, %v1785
      %v1787 = vsel %vm1689, %v1777, %v1786
      %v1789 = vshrl.u32 %v1372, 16
      %v1791 = vrot.slane %v1789, 1
      %v1792 = vshll.u32 %v1372, 16
      %v1794 = vrot.slane %v1792, 2
      %v1795 = vor.u32 %v1791, %v1794
      %v1796 = vsel %vm1689, %v1786, %v1795
      %v1798 = vshrl.u32 %v1373, 16
      %v1800 = vrot.slane %v1798, 1
      %v1801 = vshll.u32 %v1373, 16
      %v1803 = vrot.slane %v1801, 2
      %v1804 = vor.u32 %v1800, %v1803
      %v1805 = vsel %vm1689, %v1795, %v1804
      %v1807 = vshrl.u32 %v1374, 16
      %v1809 = vrot.slane %v1807, 1
      %v1810 = vshll.u32 %v1374, 16
      %v1812 = vrot.slane %v1810, 2
      %v1813 = vor.u32 %v1809, %v1812
      %v1814 = vsel %vm1689, %v1804, %v1813
      %v1816 = vshrl.u32 %v1375, 16
      %v1818 = vrot.slane %v1816, 1
      %v1819 = vshll.u32 %v1375, 16
      %v1821 = vrot.slane %v1819, 2
      %v1822 = vor.u32 %v1818, %v1821
      %v1823 = vsel %vm1689, %v1813, %v1822
      %v1825 = vshrl.u32 %v1376, 16
      %v1827 = vrot.slane %v1825, 1
      %v1828 = vshll.u32 %v1376, 16
      %v1830 = vrot.slane %v1828, 2
      %v1831 = vor.u32 %v1827, %v1830
      %v1832 = vsel %vm1689, %v1822, %v1831
      %v1834 = vshrl.u32 %v1688, 16
      %v1836 = vrot.slane %v1834, 1
      %v1837 = vshll.u32 %v1688, 16
      %v1839 = vrot.slane %v1837, 2
      %v1840 = vor.u32 %v1836, %v1839
      %v1841 = vsel %vm1689, %v1831, %v1840
      %v1874 = vunpack.c.l.b16 %v1670
      %v1875 = vunpack.c.l.b16 %v1671
      %v1876 = vunpack.c.l.b16 %v1672
      %v1877 = vunpack.c.l.b16 %v1673
      %v1878 = vunpack.c.l.b16 %v1674
      %v1879 = vunpack.c.l.b16 %v1675
      %v1880 = vunpack.c.l.b16 %v1676
      %v1881 = vunpack.c.l.b16 %v1677
      %v1882 = vunpack.c.l.b16 %v1678
      %v1883 = vunpack.c.l.b16 %v1679
      %v1884 = vunpack.c.l.b16 %v1680
      %v1885 = vunpack.c.l.b16 %v1681
      %v1886 = vunpack.c.l.b16 %v1682
      %v1887 = vunpack.c.l.b16 %v1683
      %v1888 = vunpack.c.l.b16 %v1684
      %v1889 = vunpack.c.l.b16 %v1685
      %v1890 = vpack.c.b16 %v1875, %v1874
      %v1891 = vpack.c.b16 %v1877, %v1876
      %v1892 = vpack.c.b16 %v1879, %v1878
      %v1893 = vpack.c.b16 %v1881, %v1880
      %v1894 = vpack.c.b16 %v1883, %v1882
      %v1895 = vpack.c.b16 %v1885, %v1884
      %v1896 = vpack.c.b16 %v1887, %v1886
      %v1897 = vpack.c.b16 %v1889, %v1888
      %1906 = vmatprep.subr.bf16.mxu0 0
      %1907 = vmatpush1.bf16.msra.mxu0 %v1890
      %1908 = vmatprep.subr.bf16.mxu0 0
      %1909 = vmatpush1.bf16.msra.mxu0 %v1891
      %1910 = vmatprep.subr.bf16.mxu0 0
      %1911 = vmatpush1.bf16.msra.mxu0 %v1892
      %1912 = vmatprep.subr.bf16.mxu0 0
      %1913 = vmatpush1.bf16.msra.mxu0 %v1893
      %1914 = vmatprep.subr.bf16.mxu0 0
      %1915 = vmatpush1.bf16.msra.mxu0 %v1894
      %1916 = vmatprep.subr.bf16.mxu0 0
      %1917 = vmatpush1.bf16.msra.mxu0 %v1895
      %1918 = vmatprep.subr.bf16.mxu0 0
      %1919 = vmatpush1.bf16.msra.mxu0 %v1896
      %1920 = vmatprep.subr.bf16.mxu0 0
      %1921 = vmatpush1.bf16.msra.mxu0 %v1897
      %1922 = vmatprep.subr.bf16.mxu0 0
      %1923 = vmatpush1.bf16.msra.mxu0 0
      %1924 = vmatprep.subr.bf16.mxu0 0
      %1925 = vmatpush1.bf16.msra.mxu0 0
      %1926 = vmatprep.subr.bf16.mxu0 0
      %1927 = vmatpush1.bf16.msra.mxu0 0
      %1928 = vmatprep.subr.bf16.mxu0 0
      %1929 = vmatpush1.bf16.msra.mxu0 0
      %1930 = vmatprep.subr.bf16.mxu0 0
      %1931 = vmatpush1.bf16.msra.mxu0 0
      %1932 = vmatprep.subr.bf16.mxu0 0
      %1933 = vmatpush1.bf16.msra.mxu0 0
      %1934 = vmatprep.subr.bf16.mxu0 0
      %1935 = vmatpush1.bf16.msra.mxu0 0
      %1936 = vmatprep.subr.bf16.mxu0 0
      %1937 = vmatpush1.bf16.msra.mxu0 0
      %1938 = vmatprep.mubr.bf16.mxu0 0
      %1939 = vmatmul.mubr.bf16.gmra.mrb[0].mxu0 %v1706
      %v1940 = vpop.f32.mrb[0].mxu0
      %v1941 = vadd.f32 0.0, %v1940
      %v1942 = vpop.f32.mrb[0].mxu0
      %v1943 = vpop.f32.mrb[0].mxu0
      %v1944 = vadd.f32 0.0, %v1943
      %v1945 = vpop.f32.mrb[0].mxu0
      %1946 = vmatprep.mubr.bf16.mxu0 0
      %1947 = vmatmul.mubr.bf16.gmra.mrb[0].mxu0 %v1715
      %v1948 = vpop.f32.mrb[0].mxu0
      %v1949 = vadd.f32 0.0, %v1948
      %v1950 = vpop.f32.mrb[0].mxu0
      %v1951 = vpop.f32.mrb[0].mxu0
      %v1952 = vadd.f32 0.0, %v1951
      %v1953 = vpop.f32.mrb[0].mxu0
      %1954 = vmatprep.mubr.bf16.mxu0 0
      %1955 = vmatmul.mubr.bf16.gmra.mrb[0].mxu0 %v1724
      %v1956 = vpop.f32.mrb[0].mxu0
      %v1957 = vadd.f32 0.0, %v1956
      %v1958 = vpop.f32.mrb[0].mxu0
      %v1959 = vpop.f32.mrb[0].mxu0
      %v1960 = vadd.f32 0.0, %v1959
      %v1961 = vpop.f32.mrb[0].mxu0
      %1962 = vmatprep.mubr.bf16.mxu0 0
      %1963 = vmatmul.mubr.bf16.gmra.mrb[0].mxu0 %v1733
      %v1964 = vpop.f32.mrb[0].mxu0
      %v1965 = vadd.f32 0.0, %v1964
      %v1966 = vpop.f32.mrb[0].mxu0
      %v1967 = vpop.f32.mrb[0].mxu0
      %v1968 = vadd.f32 0.0, %v1967
      %v1969 = vpop.f32.mrb[0].mxu0
      %1970 = vmatprep.mubr.bf16.mxu0 0
      %1971 = vmatmul.mubr.bf16.gmra.mrb[0].mxu0 %v1742
      %v1972 = vpop.f32.mrb[0].mxu0
      %v1973 = vadd.f32 0.0, %v1972
      %v1974 = vpop.f32.mrb[0].mxu0
      %v1975 = vpop.f32.mrb[0].mxu0
      %v1976 = vadd.f32 0.0, %v1975
      %v1977 = vpop.f32.mrb[0].mxu0
      %1978 = vmatprep.mubr.bf16.mxu0 0
      %1979 = vmatmul.mubr.bf16.gmra.mrb[0].mxu0 %v1751
      %v1980 = vpop.f32.mrb[0].mxu0
      %v1981 = vadd.f32 0.0, %v1980
      %v1982 = vpop.f32.mrb[0].mxu0
      %v1983 = vpop.f32.mrb[0].mxu0
      %v1984 = vadd.f32 0.0, %v1983
      %v1985 = vpop.f32.mrb[0].mxu0
      %1986 = vmatprep.mubr.bf16.mxu0 0
      %1987 = vmatmul.mubr.bf16.gmra.mrb[0].mxu0 %v1760
      %v1988 = vpop.f32.mrb[0].mxu0
      %v1989 = vadd.f32 0.0, %v1988
      %v1990 = vpop.f32.mrb[0].mxu0
      %v1991 = vpop.f32.mrb[0].mxu0
      %v1992 = vadd.f32 0.0, %v1991
      %v1993 = vpop.f32.mrb[0].mxu0
      %1994 = vmatprep.mubr.bf16.mxu0 0
      %1995 = vmatmul.mubr.bf16.gmra.mrb[0].mxu0 %v1769
      %v1996 = vpop.f32.mrb[0].mxu0
      %v1997 = vadd.f32 0.0, %v1996
      %v1998 = vpop.f32.mrb[0].mxu0
      %v1999 = vpop.f32.mrb[0].mxu0
      %v2000 = vadd.f32 0.0, %v1999
      %v2001 = vpop.f32.mrb[0].mxu0
      %2002 = vmatprep.mubr.bf16.mxu0 0
      %2003 = vmatmul.mubr.bf16.gmra.mrb[0].mxu0 %v1778
      %v2004 = vpop.f32.mrb[0].mxu0
      %v2005 = vadd.f32 0.0, %v2004
      %v2006 = vpop.f32.mrb[0].mxu0
      %v2007 = vpop.f32.mrb[0].mxu0
      %v2008 = vadd.f32 0.0, %v2007
      %v2009 = vpop.f32.mrb[0].mxu0
      %2010 = vmatprep.mubr.bf16.mxu0 0
      %2011 = vmatmul.mubr.bf16.gmra.mrb[0].mxu0 %v1787
      %v2012 = vpop.f32.mrb[0].mxu0
      %v2013 = vadd.f32 0.0, %v2012
      %v2014 = vpop.f32.mrb[0].mxu0
      %v2015 = vpop.f32.mrb[0].mxu0
      %v2016 = vadd.f32 0.0, %v2015
      %v2017 = vpop.f32.mrb[0].mxu0
      %2018 = vmatprep.mubr.bf16.mxu0 0
      %2019 = vmatmul.mubr.bf16.gmra.mrb[0].mxu0 %v1796
      %v2020 = vpop.f32.mrb[0].mxu0
      %v2021 = vadd.f32 0.0, %v2020
      %v2022 = vpop.f32.mrb[0].mxu0
      %v2023 = vpop.f32.mrb[0].mxu0
      %v2024 = vadd.f32 0.0, %v2023
      %v2025 = vpop.f32.mrb[0].mxu0
      %2026 = vmatprep.mubr.bf16.mxu0 0
      %2027 = vmatmul.mubr.bf16.gmra.mrb[0].mxu0 %v1805
      %v2028 = vpop.f32.mrb[0].mxu0
      %v2029 = vadd.f32 0.0, %v2028
      %v2030 = vpop.f32.mrb[0].mxu0
      %v2031 = vpop.f32.mrb[0].mxu0
      %v2032 = vadd.f32 0.0, %v2031
      %v2033 = vpop.f32.mrb[0].mxu0
      %2034 = vmatprep.mubr.bf16.mxu0 0
      %2035 = vmatmul.mubr.bf16.gmra.mrb[0].mxu0 %v1814
      %v2036 = vpop.f32.mrb[0].mxu0
      %v2037 = vadd.f32 0.0, %v2036
      %v2038 = vpop.f32.mrb[0].mxu0
      %v2039 = vpop.f32.mrb[0].mxu0
      %v2040 = vadd.f32 0.0, %v2039
      %v2041 = vpop.f32.mrb[0].mxu0
      %2042 = vmatprep.mubr.bf16.mxu0 0
      %2043 = vmatmul.mubr.bf16.gmra.mrb[0].mxu0 %v1823
      %v2044 = vpop.f32.mrb[0].mxu0
      %v2045 = vadd.f32 0.0, %v2044
      %v2046 = vpop.f32.mrb[0].mxu0
      %v2047 = vpop.f32.mrb[0].mxu0
      %v2048 = vadd.f32 0.0, %v2047
      %v2049 = vpop.f32.mrb[0].mxu0
      %2050 = vmatprep.mubr.bf16.mxu0 0
      %2051 = vmatmul.mubr.bf16.gmra.mrb[0].mxu0 %v1832
      %v2052 = vpop.f32.mrb[0].mxu0
      %v2053 = vadd.f32 0.0, %v2052
      %v2054 = vpop.f32.mrb[0].mxu0
      %v2055 = vpop.f32.mrb[0].mxu0
      %v2056 = vadd.f32 0.0, %v2055
      %v2057 = vpop.f32.mrb[0].mxu0
      %2058 = vmatprep.mubr.bf16.mxu0 0
      %2059 = vmatmul.mubr.bf16.gmra.mrb[0].mxu0 %v1841
      %v2060 = vpop.f32.mrb[0].mxu0
      %v2061 = vadd.f32 0.0, %v2060
      %v2062 = vpop.f32.mrb[0].mxu0
      %v2063 = vpop.f32.mrb[0].mxu0
      %v2064 = vadd.f32 0.0, %v2063
      %v2065 = vpop.f32.mrb[0].mxu0
      %2066 = vdwg.mxu0
      %v2067 = vadd.f32 %v1636, %v1941
      %v2068 = vadd.f32 %v1637, %v1944
      %v2069 = vadd.f32 %v1638, %v1949
      %v2070 = vadd.f32 %v1639, %v1952
      %v2071 = vadd.f32 %v1640, %v1957
      %v2072 = vadd.f32 %v1641, %v1960
      %v2073 = vadd.f32 %v1642, %v1965
      %v2074 = vadd.f32 %v1643, %v1968
      %v2075 = vadd.f32 %v1644, %v1973
      %v2076 = vadd.f32 %v1645, %v1976
      %v2077 = vadd.f32 %v1646, %v1981
      %v2078 = vadd.f32 %v1647, %v1984
      %v2079 = vadd.f32 %v1648, %v1989
      %v2080 = vadd.f32 %v1649, %v1992
      %v2081 = vadd.f32 %v1650, %v1997
      %v2082 = vadd.f32 %v1651, %v2000
      %v2083 = vadd.f32 %v1652, %v2005
      %v2084 = vadd.f32 %v1653, %v2008
      %v2085 = vadd.f32 %v1654, %v2013
      %v2086 = vadd.f32 %v1655, %v2016
      %v2087 = vadd.f32 %v1656, %v2021
      %v2088 = vadd.f32 %v1657, %v2024
      %v2089 = vadd.f32 %v1658, %v2029
      %v2090 = vadd.f32 %v1659, %v2032
      %v2091 = vadd.f32 %v1660, %v2037
      %v2092 = vadd.f32 %v1661, %v2040
      %v2093 = vadd.f32 %v1662, %v2045
      %v2094 = vadd.f32 %v1663, %v2048
      %v2095 = vadd.f32 %v1664, %v2053
      %v2096 = vadd.f32 %v1665, %v2056
      %v2097 = vadd.f32 %v1666, %v2061
      %v2098 = vadd.f32 %v1667, %v2064
      %v2099 = vld [vmem:[%s192 + $0x8] sm:$0xc]
      %s2100 = scalar_lea.vmem %s1, 320
      %v2101 = vld [vmem:[%s2100] sm:$0xf]
      %v2102 = vld [vmem:[%s2100 + $0x4] sm:$0xf]
      %v2103 = vld [vmem:[%s2100 + $0x8] sm:$0xf]
      %v2104 = vld [vmem:[%s2100 + $0xc] sm:$0xf]
      %v2105 = vld [vmem:[%s2100 + $0x10] sm:$0xf]
      %v2106 = vld [vmem:[%s2100 + $0x14] sm:$0xf]
      %v2107 = vld [vmem:[%s2100 + $0x18] sm:$0xf]
      %v2108 = vld [vmem:[%s2100 + $0x1c] sm:$0xf]
      %v2109 = vld [vmem:[%s2100 + $0x20] sm:$0xf]
      %v2110 = vld [vmem:[%s2100 + $0x24] sm:$0xf]
      %v2111 = vld [vmem:[%s2100 + $0x28] sm:$0xf]
      %v2112 = vld [vmem:[%s2100 + $0x2c] sm:$0xf]
      %v2113 = vld [vmem:[%s2100 + $0x30] sm:$0xf]
      %v2114 = vld [vmem:[%s2100 + $0x34] sm:$0xf]
      %v2115 = vld [vmem:[%s2100 + $0x38] sm:$0xf]
      %v2116 = vld [vmem:[%s2100 + $0x3c] sm:$0xf]
      %v2118 = vunpack.c.l.b16 %v2099
      %v2119 = vpack.c.b16 %v1329, %v2118
      %vm2120 = vcmask 1045504
      %v2121 = vrot.slane %v2119, 2
      %v2122 = vrot.slane %v1362, 2
      %v2123 = vsel %vm2120, %v2121, %v2122
      %v2124 = vrot.slane %v1363, 2
      %v2125 = vsel %vm2120, %v2122, %v2124
      %v2126 = vrot.slane %v1364, 2
      %v2127 = vsel %vm2120, %v2124, %v2126
      %v2128 = vrot.slane %v1365, 2
      %v2129 = vsel %vm2120, %v2126, %v2128
      %v2130 = vrot.slane %v1366, 2
      %v2131 = vsel %vm2120, %v2128, %v2130
      %v2132 = vrot.slane %v1367, 2
      %v2133 = vsel %vm2120, %v2130, %v2132
      %v2134 = vrot.slane %v1368, 2
      %v2135 = vsel %vm2120, %v2132, %v2134
      %v2136 = vrot.slane %v1369, 2
      %v2137 = vsel %vm2120, %v2134, %v2136
      %v2138 = vrot.slane %v1370, 2
      %v2139 = vsel %vm2120, %v2136, %v2138
      %v2140 = vrot.slane %v1371, 2
      %v2141 = vsel %vm2120, %v2138, %v2140
      %v2142 = vrot.slane %v1372, 2
      %v2143 = vsel %vm2120, %v2140, %v2142
      %v2144 = vrot.slane %v1373, 2
      %v2145 = vsel %vm2120, %v2142, %v2144
      %v2146 = vrot.slane %v1374, 2
      %v2147 = vsel %vm2120, %v2144, %v2146
      %v2148 = vrot.slane %v1375, 2
      %v2149 = vsel %vm2120, %v2146, %v2148
      %v2150 = vrot.slane %v1376, 2
      %v2151 = vsel %vm2120, %v2148, %v2150
      %v2152 = vrot.slane %v1688, 2
      %v2153 = vsel %vm2120, %v2150, %v2152
      %v2186 = vunpack.c.l.b16 %v2101
      %v2187 = vunpack.c.l.b16 %v2102
      %v2188 = vunpack.c.l.b16 %v2103
      %v2189 = vunpack.c.l.b16 %v2104
      %v2190 = vunpack.c.l.b16 %v2105
      %v2191 = vunpack.c.l.b16 %v2106
      %v2192 = vunpack.c.l.b16 %v2107
      %v2193 = vunpack.c.l.b16 %v2108
      %v2194 = vunpack.c.l.b16 %v2109
      %v2195 = vunpack.c.l.b16 %v2110
      %v2196 = vunpack.c.l.b16 %v2111
      %v2197 = vunpack.c.l.b16 %v2112
      %v2198 = vunpack.c.l.b16 %v2113
      %v2199 = vunpack.c.l.b16 %v2114
      %v2200 = vunpack.c.l.b16 %v2115
      %v2201 = vunpack.c.l.b16 %v2116
      %v2202 = vpack.c.b16 %v2187, %v2186
      %v2203 = vpack.c.b16 %v2189, %v2188
      %v2204 = vpack.c.b16 %v2191, %v2190
      %v2205 = vpack.c.b16 %v2193, %v2192
      %v2206 = vpack.c.b16 %v2195, %v2194
      %v2207 = vpack.c.b16 %v2197, %v2196
      %v2208 = vpack.c.b16 %v2199, %v2198
      %v2209 = vpack.c.b16 %v2201, %v2200
      %2218 = vmatprep.subr.bf16.mxu0 0
      %2219 = vmatpush1.bf16.msra.mxu0 %v2202
      %2220 = vmatprep.subr.bf16.mxu0 0
      %2221 = vmatpush1.bf16.msra.mxu0 %v2203
      %2222 = vmatprep.subr.bf16.mxu0 0
      %2223 = vmatpush1.bf16.msra.mxu0 %v2204
      %2224 = vmatprep.subr.bf16.mxu0 0
      %2225 = vmatpush1.bf16.msra.mxu0 %v2205
      %2226 = vmatprep.subr.bf16.mxu0 0
      %2227 = vmatpush1.bf16.msra.mxu0 %v2206
      %2228 = vmatprep.subr.bf16.mxu0 0
      %2229 = vmatpush1.bf16.msra.mxu0 %v2207
      %2230 = vmatprep.subr.bf16.mxu0 0
      %2231 = vmatpush1.bf16.msra.mxu0 %v2208
      %2232 = vmatprep.subr.bf16.mxu0 0
      %2233 = vmatpush1.bf16.msra.mxu0 %v2209
      %2234 = vmatprep.subr.bf16.mxu0 0
      %2235 = vmatpush1.bf16.msra.mxu0 0
      %2236 = vmatprep.subr.bf16.mxu0 0
      %2237 = vmatpush1.bf16.msra.mxu0 0
      %2238 = vmatprep.subr.bf16.mxu0 0
      %2239 = vmatpush1.bf16.msra.mxu0 0
      %2240 = vmatprep.subr.bf16.mxu0 0
      %2241 = vmatpush1.bf16.msra.mxu0 0
      %2242 = vmatprep.subr.bf16.mxu0 0
      %2243 = vmatpush1.bf16.msra.mxu0 0
      %2244 = vmatprep.subr.bf16.mxu0 0
      %2245 = vmatpush1.bf16.msra.mxu0 0
      %2246 = vmatprep.subr.bf16.mxu0 0
      %2247 = vmatpush1.bf16.msra.mxu0 0
      %2248 = vmatprep.subr.bf16.mxu0 0
      %2249 = vmatpush1.bf16.msra.mxu0 0
      %2250 = vmatprep.mubr.bf16.mxu0 0
      %2251 = vmatmul.mubr.bf16.gmra.mrb[0].mxu0 %v2123
      %v2252 = vpop.f32.mrb[0].mxu0
      %v2253 = vadd.f32 0.0, %v2252
      %v2254 = vpop.f32.mrb[0].mxu0
      %v2255 = vpop.f32.mrb[0].mxu0
      %v2256 = vadd.f32 0.0, %v2255
      %v2257 = vpop.f32.mrb[0].mxu0
      %2258 = vmatprep.mubr.bf16.mxu0 0
      %2259 = vmatmul.mubr.bf16.gmra.mrb[0].mxu0 %v2125
      %v2260 = vpop.f32.mrb[0].mxu0
      %v2261 = vadd.f32 0.0, %v2260
      %v2262 = vpop.f32.mrb[0].mxu0
      %v2263 = vpop.f32.mrb[0].mxu0
      %v2264 = vadd.f32 0.0, %v2263
      %v2265 = vpop.f32.mrb[0].mxu0
      %2266 = vmatprep.mubr.bf16.mxu0 0
      %2267 = vmatmul.mubr.bf16.gmra.mrb[0].mxu0 %v2127
      %v2268 = vpop.f32.mrb[0].mxu0
      %v2269 = vadd.f32 0.0, %v2268
      %v2270 = vpop.f32.mrb[0].mxu0
      %v2271 = vpop.f32.mrb[0].mxu0
      %v2272 = vadd.f32 0.0, %v2271
      %v2273 = vpop.f32.mrb[0].mxu0
      %2274 = vmatprep.mubr.bf16.mxu0 0
      %2275 = vmatmul.mubr.bf16.gmra.mrb[0].mxu0 %v2129
      %v2276 = vpop.f32.mrb[0].mxu0
      %v2277 = vadd.f32 0.0, %v2276
      %v2278 = vpop.f32.mrb[0].mxu0
      %v2279 = vpop.f32.mrb[0].mxu0
      %v2280 = vadd.f32 0.0, %v2279
      %v2281 = vpop.f32.mrb[0].mxu0
      %2282 = vmatprep.mubr.bf16.mxu0 0
      %2283 = vmatmul.mubr.bf16.gmra.mrb[0].mxu0 %v2131
      %v2284 = vpop.f32.mrb[0].mxu0
      %v2285 = vadd.f32 0.0, %v2284
      %v2286 = vpop.f32.mrb[0].mxu0
      %v2287 = vpop.f32.mrb[0].mxu0
      %v2288 = vadd.f32 0.0, %v2287
      %v2289 = vpop.f32.mrb[0].mxu0
      %2290 = vmatprep.mubr.bf16.mxu0 0
      %2291 = vmatmul.mubr.bf16.gmra.mrb[0].mxu0 %v2133
      %v2292 = vpop.f32.mrb[0].mxu0
      %v2293 = vadd.f32 0.0, %v2292
      %v2294 = vpop.f32.mrb[0].mxu0
      %v2295 = vpop.f32.mrb[0].mxu0
      %v2296 = vadd.f32 0.0, %v2295
      %v2297 = vpop.f32.mrb[0].mxu0
      %2298 = vmatprep.mubr.bf16.mxu0 0
      %2299 = vmatmul.mubr.bf16.gmra.mrb[0].mxu0 %v2135
      %v2300 = vpop.f32.mrb[0].mxu0
      %v2301 = vadd.f32 0.0, %v2300
      %v2302 = vpop.f32.mrb[0].mxu0
      %v2303 = vpop.f32.mrb[0].mxu0
      %v2304 = vadd.f32 0.0, %v2303
      %v2305 = vpop.f32.mrb[0].mxu0
      %2306 = vmatprep.mubr.bf16.mxu0 0
      %2307 = vmatmul.mubr.bf16.gmra.mrb[0].mxu0 %v2137
      %v2308 = vpop.f32.mrb[0].mxu0
      %v2309 = vadd.f32 0.0, %v2308
      %v2310 = vpop.f32.mrb[0].mxu0
      %v2311 = vpop.f32.mrb[0].mxu0
      %v2312 = vadd.f32 0.0, %v2311
      %v2313 = vpop.f32.mrb[0].mxu0
      %2314 = vmatprep.mubr.bf16.mxu0 0
      %2315 = vmatmul.mubr.bf16.gmra.mrb[0].mxu0 %v2139
      %v2316 = vpop.f32.mrb[0].mxu0
      %v2317 = vadd.f32 0.0, %v2316
      %v2318 = vpop.f32.mrb[0].mxu0
      %v2319 = vpop.f32.mrb[0].mxu0
      %v2320 = vadd.f32 0.0, %v2319
      %v2321 = vpop.f32.mrb[0].mxu0
      %2322 = vmatprep.mubr.bf16.mxu0 0
      %2323 = vmatmul.mubr.bf16.gmra.mrb[0].mxu0 %v2141
      %v2324 = vpop.f32.mrb[0].mxu0
      %v2325 = vadd.f32 0.0, %v2324
      %v2326 = vpop.f32.mrb[0].mxu0
      %v2327 = vpop.f32.mrb[0].mxu0
      %v2328 = vadd.f32 0.0, %v2327
      %v2329 = vpop.f32.mrb[0].mxu0
      %2330 = vmatprep.mubr.bf16.mxu0 0
      %2331 = vmatmul.mubr.bf16.gmra.mrb[0].mxu0 %v2143
      %v2332 = vpop.f32.mrb[0].mxu0
      %v2333 = vadd.f32 0.0, %v2332
      %v2334 = vpop.f32.mrb[0].mxu0
      %v2335 = vpop.f32.mrb[0].mxu0
      %v2336 = vadd.f32 0.0, %v2335
      %v2337 = vpop.f32.mrb[0].mxu0
      %2338 = vmatprep.mubr.bf16.mxu0 0
      %2339 = vmatmul.mubr.bf16.gmra.mrb[0].mxu0 %v2145
      %v2340 = vpop.f32.mrb[0].mxu0
      %v2341 = vadd.f32 0.0, %v2340
      %v2342 = vpop.f32.mrb[0].mxu0
      %v2343 = vpop.f32.mrb[0].mxu0
      %v2344 = vadd.f32 0.0, %v2343
      %v2345 = vpop.f32.mrb[0].mxu0
      %2346 = vmatprep.mubr.bf16.mxu0 0
      %2347 = vmatmul.mubr.bf16.gmra.mrb[0].mxu0 %v2147
      %v2348 = vpop.f32.mrb[0].mxu0
      %v2349 = vadd.f32 0.0, %v2348
      %v2350 = vpop.f32.mrb[0].mxu0
      %v2351 = vpop.f32.mrb[0].mxu0
      %v2352 = vadd.f32 0.0, %v2351
      %v2353 = vpop.f32.mrb[0].mxu0
      %2354 = vmatprep.mubr.bf16.mxu0 0
      %2355 = vmatmul.mubr.bf16.gmra.mrb[0].mxu0 %v2149
      %v2356 = vpop.f32.mrb[0].mxu0
      %v2357 = vadd.f32 0.0, %v2356
      %v2358 = vpop.f32.mrb[0].mxu0
      %v2359 = vpop.f32.mrb[0].mxu0
      %v2360 = vadd.f32 0.0, %v2359
      %v2361 = vpop.f32.mrb[0].mxu0
      %2362 = vmatprep.mubr.bf16.mxu0 0
      %2363 = vmatmul.mubr.bf16.gmra.mrb[0].mxu0 %v2151
      %v2364 = vpop.f32.mrb[0].mxu0
      %v2365 = vadd.f32 0.0, %v2364
      %v2366 = vpop.f32.mrb[0].mxu0
      %v2367 = vpop.f32.mrb[0].mxu0
      %v2368 = vadd.f32 0.0, %v2367
      %v2369 = vpop.f32.mrb[0].mxu0
      %2370 = vmatprep.mubr.bf16.mxu0 0
      %2371 = vmatmul.mubr.bf16.gmra.mrb[0].mxu0 %v2153
      %v2372 = vpop.f32.mrb[0].mxu0
      %v2373 = vadd.f32 0.0, %v2372
      %v2374 = vpop.f32.mrb[0].mxu0
      %v2375 = vpop.f32.mrb[0].mxu0
      %v2376 = vadd.f32 0.0, %v2375
      %v2377 = vpop.f32.mrb[0].mxu0
      %2378 = vdwg.mxu0
      %v2379 = vadd.f32 %v2067, %v2253
      %v2380 = vadd.f32 %v2068, %v2256
      %v2381 = vadd.f32 %v2069, %v2261
      %v2382 = vadd.f32 %v2070, %v2264
      %v2383 = vadd.f32 %v2071, %v2269
      %v2384 = vadd.f32 %v2072, %v2272
      %v2385 = vadd.f32 %v2073, %v2277
      %v2386 = vadd.f32 %v2074, %v2280
      %v2387 = vadd.f32 %v2075, %v2285
      %v2388 = vadd.f32 %v2076, %v2288
      %v2389 = vadd.f32 %v2077, %v2293
      %v2390 = vadd.f32 %v2078, %v2296
      %v2391 = vadd.f32 %v2079, %v2301
      %v2392 = vadd.f32 %v2080, %v2304
      %v2393 = vadd.f32 %v2081, %v2309
      %v2394 = vadd.f32 %v2082, %v2312
      %v2395 = vadd.f32 %v2083, %v2317
      %v2396 = vadd.f32 %v2084, %v2320
      %v2397 = vadd.f32 %v2085, %v2325
      %v2398 = vadd.f32 %v2086, %v2328
      %v2399 = vadd.f32 %v2087, %v2333
      %v2400 = vadd.f32 %v2088, %v2336
      %v2401 = vadd.f32 %v2089, %v2341
      %v2402 = vadd.f32 %v2090, %v2344
      %v2403 = vadd.f32 %v2091, %v2349
      %v2404 = vadd.f32 %v2092, %v2352
      %v2405 = vadd.f32 %v2093, %v2357
      %v2406 = vadd.f32 %v2094, %v2360
      %v2407 = vadd.f32 %v2095, %v2365
      %v2408 = vadd.f32 %v2096, %v2368
      %v2409 = vadd.f32 %v2097, %v2373
      %v2410 = vadd.f32 %v2098, %v2376
      %v2411 = vld [vmem:[%s192 + $0x10] sm:$0xc]
      %v2412 = vld [vmem:[%s192 + $0x14] sm:$0xf]
      %v2413 = vld [vmem:[%s192 + $0x18] sm:$0xf]
      %v2414 = vld [vmem:[%s192 + $0x1c] sm:$0xf]
      %v2415 = vld [vmem:[%s192 + $0x20] sm:$0xf]
      %v2416 = vld [vmem:[%s192 + $0x24] sm:$0xf]
      %v2417 = vld [vmem:[%s192 + $0x28] sm:$0xf]
      %v2418 = vld [vmem:[%s192 + $0x2c] sm:$0xf]
      %v2419 = vld [vmem:[%s192 + $0x30] sm:$0xf]
      %v2420 = vld [vmem:[%s192 + $0x34] sm:$0xf]
      %v2421 = vld [vmem:[%s192 + $0x38] sm:$0xf]
      %v2422 = vld [vmem:[%s192 + $0x3c] sm:$0xf]
      %v2423 = vld [vmem:[%s192 + $0x40] sm:$0xf]
      %v2424 = vld [vmem:[%s192 + $0x44] sm:$0xf]
      %v2425 = vld [vmem:[%s192 + $0x48] sm:$0xf]
      %v2426 = vld [vmem:[%s192 + $0x4c] sm:$0xf]
      %v2427 = vld [vmem:[%s192 + $0x50] sm:$0xf]
      %v2428 = vld [vmem:[%s192 + $0x54] sm:$0xf]
      %v2429 = vld [vmem:[%s192 + $0x58] sm:$0xf]
      %v2430 = vld [vmem:[%s192 + $0x5c] sm:$0xf]
      %v2431 = vld [vmem:[%s192 + $0x60] sm:$0xf]
      %v2432 = vld [vmem:[%s192 + $0x64] sm:$0xf]
      %v2433 = vld [vmem:[%s192 + $0x68] sm:$0xf]
      %v2434 = vld [vmem:[%s192 + $0x6c] sm:$0xf]
      %v2435 = vld [vmem:[%s192 + $0x70] sm:$0xf]
      %v2436 = vld [vmem:[%s192 + $0x74] sm:$0xf]
      %v2437 = vld [vmem:[%s192 + $0x78] sm:$0xf]
      %v2438 = vld [vmem:[%s192 + $0x7c] sm:$0xf]
      %v2439 = vld [vmem:[%s192 + $0x80] sm:$0xf]
      %v2440 = vld [vmem:[%s192 + $0x84] sm:$0xf]
      %v2441 = vld [vmem:[%s192 + $0x88] sm:$0xf]
      %v2442 = vld [vmem:[%s192 + $0x8c] sm:$0xf]
      %v2443 = vld [vmem:[%s192 + $0x90] sm:$0x3]
      %s2444 = scalar_lea.vmem %s1, 384
      %v2445 = vld [vmem:[%s2444] sm:$0xf]
      %v2446 = vld [vmem:[%s2444 + $0x4] sm:$0xf]
      %v2447 = vld [vmem:[%s2444 + $0x8] sm:$0xf]
      %v2448 = vld [vmem:[%s2444 + $0xc] sm:$0xf]
      %v2449 = vld [vmem:[%s2444 + $0x10] sm:$0xf]
      %v2450 = vld [vmem:[%s2444 + $0x14] sm:$0xf]
      %v2451 = vld [vmem:[%s2444 + $0x18] sm:$0xf]
      %v2452 = vld [vmem:[%s2444 + $0x1c] sm:$0xf]
      %v2453 = vld [vmem:[%s2444 + $0x20] sm:$0xf]
      %v2454 = vld [vmem:[%s2444 + $0x24] sm:$0xf]
      %v2455 = vld [vmem:[%s2444 + $0x28] sm:$0xf]
      %v2456 = vld [vmem:[%s2444 + $0x2c] sm:$0xf]
      %v2457 = vld [vmem:[%s2444 + $0x30] sm:$0xf]
      %v2458 = vld [vmem:[%s2444 + $0x34] sm:$0xf]
      %v2459 = vld [vmem:[%s2444 + $0x38] sm:$0xf]
      %v2460 = vld [vmem:[%s2444 + $0x3c] sm:$0xf]
      %v2494 = vunpack.c.l.b16 %v2411
      %v2495 = vunpack.c.l.b16 %v2412
      %v2496 = vunpack.c.l.b16 %v2413
      %v2497 = vunpack.c.l.b16 %v2414
      %v2498 = vunpack.c.l.b16 %v2415
      %v2499 = vunpack.c.l.b16 %v2416
      %v2500 = vunpack.c.l.b16 %v2417
      %v2501 = vunpack.c.l.b16 %v2418
      %v2502 = vunpack.c.l.b16 %v2419
      %v2503 = vunpack.c.l.b16 %v2420
      %v2504 = vunpack.c.l.b16 %v2421
      %v2505 = vunpack.c.l.b16 %v2422
      %v2506 = vunpack.c.l.b16 %v2423
      %v2507 = vunpack.c.l.b16 %v2424
      %v2508 = vunpack.c.l.b16 %v2425
      %v2509 = vunpack.c.l.b16 %v2426
      %v2510 = vunpack.c.l.b16 %v2427
      %v2511 = vunpack.c.l.b16 %v2428
      %v2512 = vunpack.c.l.b16 %v2429
      %v2513 = vunpack.c.l.b16 %v2430
      %v2514 = vunpack.c.l.b16 %v2431
      %v2515 = vunpack.c.l.b16 %v2432
      %v2516 = vunpack.c.l.b16 %v2433
      %v2517 = vunpack.c.l.b16 %v2434
      %v2518 = vunpack.c.l.b16 %v2435
      %v2519 = vunpack.c.l.b16 %v2436
      %v2520 = vunpack.c.l.b16 %v2437
      %v2521 = vunpack.c.l.b16 %v2438
      %v2522 = vunpack.c.l.b16 %v2439
      %v2523 = vunpack.c.l.b16 %v2440
      %v2524 = vunpack.c.l.b16 %v2441
      %v2525 = vunpack.c.l.b16 %v2442
      %v2526 = vunpack.c.l.b16 %v2443
      %v2527 = vpack.c.b16 %v2495, %v2494
      %v2528 = vpack.c.b16 %v2497, %v2496
      %v2529 = vpack.c.b16 %v2499, %v2498
      %v2530 = vpack.c.b16 %v2501, %v2500
      %v2531 = vpack.c.b16 %v2503, %v2502
      %v2532 = vpack.c.b16 %v2505, %v2504
      %v2533 = vpack.c.b16 %v2507, %v2506
      %v2534 = vpack.c.b16 %v2509, %v2508
      %v2535 = vpack.c.b16 %v2511, %v2510
      %v2536 = vpack.c.b16 %v2513, %v2512
      %v2537 = vpack.c.b16 %v2515, %v2514
      %v2538 = vpack.c.b16 %v2517, %v2516
      %v2539 = vpack.c.b16 %v2519, %v2518
      %v2540 = vpack.c.b16 %v2521, %v2520
      %v2541 = vpack.c.b16 %v2523, %v2522
      %v2542 = vpack.c.b16 %v2525, %v2524
      %v2543 = vpack.c.b16 %v2526, %v2526
      %v2544 = vrot.slane %v2527, 2
      %v2545 = vrot.slane %v2528, 2
      %v2546 = vsel %vm2120, %v2544, %v2545
      %v2547 = vrot.slane %v2529, 2
      %v2548 = vsel %vm2120, %v2545, %v2547
      %v2549 = vrot.slane %v2530, 2
      %v2550 = vsel %vm2120, %v2547, %v2549
      %v2551 = vrot.slane %v2531, 2
      %v2552 = vsel %vm2120, %v2549, %v2551
      %v2553 = vrot.slane %v2532, 2
      %v2554 = vsel %vm2120, %v2551, %v2553
      %v2555 = vrot.slane %v2533, 2
      %v2556 = vsel %vm2120, %v2553, %v2555
      %v2557 = vrot.slane %v2534, 2
      %v2558 = vsel %vm2120, %v2555, %v2557
      %v2559 = vrot.slane %v2535, 2
      %v2560 = vsel %vm2120, %v2557, %v2559
      %v2561 = vrot.slane %v2536, 2
      %v2562 = vsel %vm2120, %v2559, %v2561
      %v2563 = vrot.slane %v2537, 2
      %v2564 = vsel %vm2120, %v2561, %v2563
      %v2565 = vrot.slane %v2538, 2
      %v2566 = vsel %vm2120, %v2563, %v2565
      %v2567 = vrot.slane %v2539, 2
      %v2568 = vsel %vm2120, %v2565, %v2567
      %v2569 = vrot.slane %v2540, 2
      %v2570 = vsel %vm2120, %v2567, %v2569
      %v2571 = vrot.slane %v2541, 2
      %v2572 = vsel %vm2120, %v2569, %v2571
      %v2573 = vrot.slane %v2542, 2
      %v2574 = vsel %vm2120, %v2571, %v2573
      %v2575 = vrot.slane %v2543, 2
      %v2576 = vsel %vm2120, %v2573, %v2575
      %v2609 = vunpack.c.l.b16 %v2445
      %v2610 = vunpack.c.l.b16 %v2446
      %v2611 = vunpack.c.l.b16 %v2447
      %v2612 = vunpack.c.l.b16 %v2448
      %v2613 = vunpack.c.l.b16 %v2449
      %v2614 = vunpack.c.l.b16 %v2450
      %v2615 = vunpack.c.l.b16 %v2451
      %v2616 = vunpack.c.l.b16 %v2452
      %v2617 = vunpack.c.l.b16 %v2453
      %v2618 = vunpack.c.l.b16 %v2454
      %v2619 = vunpack.c.l.b16 %v2455
      %v2620 = vunpack.c.l.b16 %v2456
      %v2621 = vunpack.c.l.b16 %v2457
      %v2622 = vunpack.c.l.b16 %v2458
      %v2623 = vunpack.c.l.b16 %v2459
      %v2624 = vunpack.c.l.b16 %v2460
      %v2625 = vpack.c.b16 %v2610, %v2609
      %v2626 = vpack.c.b16 %v2612, %v2611
      %v2627 = vpack.c.b16 %v2614, %v2613
      %v2628 = vpack.c.b16 %v2616, %v2615
      %v2629 = vpack.c.b16 %v2618, %v2617
      %v2630 = vpack.c.b16 %v2620, %v2619
      %v2631 = vpack.c.b16 %v2622, %v2621
      %v2632 = vpack.c.b16 %v2624, %v2623
      %2641 = vmatprep.subr.bf16.mxu0 0
      %2642 = vmatpush1.bf16.msra.mxu0 %v2625
      %2643 = vmatprep.subr.bf16.mxu0 0
      %2644 = vmatpush1.bf16.msra.mxu0 %v2626
      %2645 = vmatprep.subr.bf16.mxu0 0
      %2646 = vmatpush1.bf16.msra.mxu0 %v2627
      %2647 = vmatprep.subr.bf16.mxu0 0
      %2648 = vmatpush1.bf16.msra.mxu0 %v2628
      %2649 = vmatprep.subr.bf16.mxu0 0
      %2650 = vmatpush1.bf16.msra.mxu0 %v2629
      %2651 = vmatprep.subr.bf16.mxu0 0
      %2652 = vmatpush1.bf16.msra.mxu0 %v2630
      %2653 = vmatprep.subr.bf16.mxu0 0
      %2654 = vmatpush1.bf16.msra.mxu0 %v2631
      %2655 = vmatprep.subr.bf16.mxu0 0
      %2656 = vmatpush1.bf16.msra.mxu0 %v2632
      %2657 = vmatprep.subr.bf16.mxu0 0
      %2658 = vmatpush1.bf16.msra.mxu0 0
      %2659 = vmatprep.subr.bf16.mxu0 0
      %2660 = vmatpush1.bf16.msra.mxu0 0
      %2661 = vmatprep.subr.bf16.mxu0 0
      %2662 = vmatpush1.bf16.msra.mxu0 0
      %2663 = vmatprep.subr.bf16.mxu0 0
      %2664 = vmatpush1.bf16.msra.mxu0 0
      %2665 = vmatprep.subr.bf16.mxu0 0
      %2666 = vmatpush1.bf16.msra.mxu0 0
      %2667 = vmatprep.subr.bf16.mxu0 0
      %2668 = vmatpush1.bf16.msra.mxu0 0
      %2669 = vmatprep.subr.bf16.mxu0 0
      %2670 = vmatpush1.bf16.msra.mxu0 0
      %2671 = vmatprep.subr.bf16.mxu0 0
      %2672 = vmatpush1.bf16.msra.mxu0 0
      %2673 = vmatprep.mubr.bf16.mxu0 0
      %2674 = vmatmul.mubr.bf16.gmra.mrb[0].mxu0 %v2546
      %v2675 = vpop.f32.mrb[0].mxu0
      %v2676 = vadd.f32 0.0, %v2675
      %v2677 = vpop.f32.mrb[0].mxu0
      %v2678 = vpop.f32.mrb[0].mxu0
      %v2679 = vadd.f32 0.0, %v2678
      %v2680 = vpop.f32.mrb[0].mxu0
      %2681 = vmatprep.mubr.bf16.mxu0 0
      %2682 = vmatmul.mubr.bf16.gmra.mrb[0].mxu0 %v2548
      %v2683 = vpop.f32.mrb[0].mxu0
      %v2684 = vadd.f32 0.0, %v2683
      %v2685 = vpop.f32.mrb[0].mxu0
      %v2686 = vpop.f32.mrb[0].mxu0
      %v2687 = vadd.f32 0.0, %v2686
      %v2688 = vpop.f32.mrb[0].mxu0
      %2689 = vmatprep.mubr.bf16.mxu0 0
      %2690 = vmatmul.mubr.bf16.gmra.mrb[0].mxu0 %v2550
      %v2691 = vpop.f32.mrb[0].mxu0
      %v2692 = vadd.f32 0.0, %v2691
      %v2693 = vpop.f32.mrb[0].mxu0
      %v2694 = vpop.f32.mrb[0].mxu0
      %v2695 = vadd.f32 0.0, %v2694
      %v2696 = vpop.f32.mrb[0].mxu0
      %2697 = vmatprep.mubr.bf16.mxu0 0
      %2698 = vmatmul.mubr.bf16.gmra.mrb[0].mxu0 %v2552
      %v2699 = vpop.f32.mrb[0].mxu0
      %v2700 = vadd.f32 0.0, %v2699
      %v2701 = vpop.f32.mrb[0].mxu0
      %v2702 = vpop.f32.mrb[0].mxu0
      %v2703 = vadd.f32 0.0, %v2702
      %v2704 = vpop.f32.mrb[0].mxu0
      %2705 = vmatprep.mubr.bf16.mxu0 0
      %2706 = vmatmul.mubr.bf16.gmra.mrb[0].mxu0 %v2554
      %v2707 = vpop.f32.mrb[0].mxu0
      %v2708 = vadd.f32 0.0, %v2707
      %v2709 = vpop.f32.mrb[0].mxu0
      %v2710 = vpop.f32.mrb[0].mxu0
      %v2711 = vadd.f32 0.0, %v2710
      %v2712 = vpop.f32.mrb[0].mxu0
      %2713 = vmatprep.mubr.bf16.mxu0 0
      %2714 = vmatmul.mubr.bf16.gmra.mrb[0].mxu0 %v2556
      %v2715 = vpop.f32.mrb[0].mxu0
      %v2716 = vadd.f32 0.0, %v2715
      %v2717 = vpop.f32.mrb[0].mxu0
      %v2718 = vpop.f32.mrb[0].mxu0
      %v2719 = vadd.f32 0.0, %v2718
      %v2720 = vpop.f32.mrb[0].mxu0
      %2721 = vmatprep.mubr.bf16.mxu0 0
      %2722 = vmatmul.mubr.bf16.gmra.mrb[0].mxu0 %v2558
      %v2723 = vpop.f32.mrb[0].mxu0
      %v2724 = vadd.f32 0.0, %v2723
      %v2725 = vpop.f32.mrb[0].mxu0
      %v2726 = vpop.f32.mrb[0].mxu0
      %v2727 = vadd.f32 0.0, %v2726
      %v2728 = vpop.f32.mrb[0].mxu0
      %2729 = vmatprep.mubr.bf16.mxu0 0
      %2730 = vmatmul.mubr.bf16.gmra.mrb[0].mxu0 %v2560
      %v2731 = vpop.f32.mrb[0].mxu0
      %v2732 = vadd.f32 0.0, %v2731
      %v2733 = vpop.f32.mrb[0].mxu0
      %v2734 = vpop.f32.mrb[0].mxu0
      %v2735 = vadd.f32 0.0, %v2734
      %v2736 = vpop.f32.mrb[0].mxu0
      %2737 = vmatprep.mubr.bf16.mxu0 0
      %2738 = vmatmul.mubr.bf16.gmra.mrb[0].mxu0 %v2562
      %v2739 = vpop.f32.mrb[0].mxu0
      %v2740 = vadd.f32 0.0, %v2739
      %v2741 = vpop.f32.mrb[0].mxu0
      %v2742 = vpop.f32.mrb[0].mxu0
      %v2743 = vadd.f32 0.0, %v2742
      %v2744 = vpop.f32.mrb[0].mxu0
      %2745 = vmatprep.mubr.bf16.mxu0 0
      %2746 = vmatmul.mubr.bf16.gmra.mrb[0].mxu0 %v2564
      %v2747 = vpop.f32.mrb[0].mxu0
      %v2748 = vadd.f32 0.0, %v2747
      %v2749 = vpop.f32.mrb[0].mxu0
      %v2750 = vpop.f32.mrb[0].mxu0
      %v2751 = vadd.f32 0.0, %v2750
      %v2752 = vpop.f32.mrb[0].mxu0
      %2753 = vmatprep.mubr.bf16.mxu0 0
      %2754 = vmatmul.mubr.bf16.gmra.mrb[0].mxu0 %v2566
      %v2755 = vpop.f32.mrb[0].mxu0
      %v2756 = vadd.f32 0.0, %v2755
      %v2757 = vpop.f32.mrb[0].mxu0
      %v2758 = vpop.f32.mrb[0].mxu0
      %v2759 = vadd.f32 0.0, %v2758
      %v2760 = vpop.f32.mrb[0].mxu0
      %2761 = vmatprep.mubr.bf16.mxu0 0
      %2762 = vmatmul.mubr.bf16.gmra.mrb[0].mxu0 %v2568
      %v2763 = vpop.f32.mrb[0].mxu0
      %v2764 = vadd.f32 0.0, %v2763
      %v2765 = vpop.f32.mrb[0].mxu0
      %v2766 = vpop.f32.mrb[0].mxu0
      %v2767 = vadd.f32 0.0, %v2766
      %v2768 = vpop.f32.mrb[0].mxu0
      %2769 = vmatprep.mubr.bf16.mxu0 0
      %2770 = vmatmul.mubr.bf16.gmra.mrb[0].mxu0 %v2570
      %v2771 = vpop.f32.mrb[0].mxu0
      %v2772 = vadd.f32 0.0, %v2771
      %v2773 = vpop.f32.mrb[0].mxu0
      %v2774 = vpop.f32.mrb[0].mxu0
      %v2775 = vadd.f32 0.0, %v2774
      %v2776 = vpop.f32.mrb[0].mxu0
      %2777 = vmatprep.mubr.bf16.mxu0 0
      %2778 = vmatmul.mubr.bf16.gmra.mrb[0].mxu0 %v2572
      %v2779 = vpop.f32.mrb[0].mxu0
      %v2780 = vadd.f32 0.0, %v2779
      %v2781 = vpop.f32.mrb[0].mxu0
      %v2782 = vpop.f32.mrb[0].mxu0
      %v2783 = vadd.f32 0.0, %v2782
      %v2784 = vpop.f32.mrb[0].mxu0
      %2785 = vmatprep.mubr.bf16.mxu0 0
      %2786 = vmatmul.mubr.bf16.gmra.mrb[0].mxu0 %v2574
      %v2787 = vpop.f32.mrb[0].mxu0
      %v2788 = vadd.f32 0.0, %v2787
      %v2789 = vpop.f32.mrb[0].mxu0
      %v2790 = vpop.f32.mrb[0].mxu0
      %v2791 = vadd.f32 0.0, %v2790
      %v2792 = vpop.f32.mrb[0].mxu0
      %2793 = vmatprep.mubr.bf16.mxu0 0
      %2794 = vmatmul.mubr.bf16.gmra.mrb[0].mxu0 %v2576
      %v2795 = vpop.f32.mrb[0].mxu0
      %v2796 = vadd.f32 0.0, %v2795
      %v2797 = vpop.f32.mrb[0].mxu0
      %v2798 = vpop.f32.mrb[0].mxu0
      %v2799 = vadd.f32 0.0, %v2798
      %v2800 = vpop.f32.mrb[0].mxu0
      %2801 = vdwg.mxu0
      %v2802 = vadd.f32 %v2379, %v2676
      %v2803 = vadd.f32 %v2380, %v2679
      %v2804 = vadd.f32 %v2381, %v2684
      %v2805 = vadd.f32 %v2382, %v2687
      %v2806 = vadd.f32 %v2383, %v2692
      %v2807 = vadd.f32 %v2384, %v2695
      %v2808 = vadd.f32 %v2385, %v2700
      %v2809 = vadd.f32 %v2386, %v2703
      %v2810 = vadd.f32 %v2387, %v2708
      %v2811 = vadd.f32 %v2388, %v2711
      %v2812 = vadd.f32 %v2389, %v2716
      %v2813 = vadd.f32 %v2390, %v2719
      %v2814 = vadd.f32 %v2391, %v2724
      %v2815 = vadd.f32 %v2392, %v2727
      %v2816 = vadd.f32 %v2393, %v2732
      %v2817 = vadd.f32 %v2394, %v2735
      %v2818 = vadd.f32 %v2395, %v2740
      %v2819 = vadd.f32 %v2396, %v2743
      %v2820 = vadd.f32 %v2397, %v2748
      %v2821 = vadd.f32 %v2398, %v2751
      %v2822 = vadd.f32 %v2399, %v2756
      %v2823 = vadd.f32 %v2400, %v2759
      %v2824 = vadd.f32 %v2401, %v2764
      %v2825 = vadd.f32 %v2402, %v2767
      %v2826 = vadd.f32 %v2403, %v2772
      %v2827 = vadd.f32 %v2404, %v2775
      %v2828 = vadd.f32 %v2405, %v2780
      %v2829 = vadd.f32 %v2406, %v2783
      %v2830 = vadd.f32 %v2407, %v2788
      %v2831 = vadd.f32 %v2408, %v2791
      %v2832 = vadd.f32 %v2409, %v2796
      %v2833 = vadd.f32 %v2410, %v2799
      %v2834 = vld [vmem:[%s192 + $0x90] sm:$0x7]
      %s2835 = scalar_lea.vmem %s1, 448
      %v2836 = vld [vmem:[%s2835] sm:$0xf]
      %v2837 = vld [vmem:[%s2835 + $0x4] sm:$0xf]
      %v2838 = vld [vmem:[%s2835 + $0x8] sm:$0xf]
      %v2839 = vld [vmem:[%s2835 + $0xc] sm:$0xf]
      %v2840 = vld [vmem:[%s2835 + $0x10] sm:$0xf]
      %v2841 = vld [vmem:[%s2835 + $0x14] sm:$0xf]
      %v2842 = vld [vmem:[%s2835 + $0x18] sm:$0xf]
      %v2843 = vld [vmem:[%s2835 + $0x1c] sm:$0xf]
      %v2844 = vld [vmem:[%s2835 + $0x20] sm:$0xf]
      %v2845 = vld [vmem:[%s2835 + $0x24] sm:$0xf]
      %v2846 = vld [vmem:[%s2835 + $0x28] sm:$0xf]
      %v2847 = vld [vmem:[%s2835 + $0x2c] sm:$0xf]
      %v2848 = vld [vmem:[%s2835 + $0x30] sm:$0xf]
      %v2849 = vld [vmem:[%s2835 + $0x34] sm:$0xf]
      %v2850 = vld [vmem:[%s2835 + $0x38] sm:$0xf]
      %v2851 = vld [vmem:[%s2835 + $0x3c] sm:$0xf]
      %v2853 = vunpack.c.l.b16 %v2834
      %v2854 = vpack.c.b16 %v2853, %v2853
      %vm2855 = vsmask.f32 5376
      %v2857 = vshrl.u32 %v2527, 16
      %v2859 = vrot.slane %v2857, 2
      %v2860 = vshll.u32 %v2527, 16
      %v2862 = vrot.slane %v2860, 3
      %v2863 = vor.u32 %v2859, %v2862
      %v2865 = vshrl.u32 %v2528, 16
      %v2867 = vrot.slane %v2865, 2
      %v2868 = vshll.u32 %v2528, 16
      %v2870 = vrot.slane %v2868, 3
      %v2871 = vor.u32 %v2867, %v2870
      %v2872 = vsel %vm2855, %v2863, %v2871
      %v2874 = vshrl.u32 %v2529, 16
      %v2876 = vrot.slane %v2874, 2
      %v2877 = vshll.u32 %v2529, 16
      %v2879 = vrot.slane %v2877, 3
      %v2880 = vor.u32 %v2876, %v2879
      %v2881 = vsel %vm2855, %v2871, %v2880
      %v2883 = vshrl.u32 %v2530, 16
      %v2885 = vrot.slane %v2883, 2
      %v2886 = vshll.u32 %v2530, 16
      %v2888 = vrot.slane %v2886, 3
      %v2889 = vor.u32 %v2885, %v2888
      %v2890 = vsel %vm2855, %v2880, %v2889
      %v2892 = vshrl.u32 %v2531, 16
      %v2894 = vrot.slane %v2892, 2
      %v2895 = vshll.u32 %v2531, 16
      %v2897 = vrot.slane %v2895, 3
      %v2898 = vor.u32 %v2894, %v2897
      %v2899 = vsel %vm2855, %v2889, %v2898
      %v2901 = vshrl.u32 %v2532, 16
      %v2903 = vrot.slane %v2901, 2
      %v2904 = vshll.u32 %v2532, 16
      %v2906 = vrot.slane %v2904, 3
      %v2907 = vor.u32 %v2903, %v2906
      %v2908 = vsel %vm2855, %v2898, %v2907
      %v2910 = vshrl.u32 %v2533, 16
      %v2912 = vrot.slane %v2910, 2
      %v2913 = vshll.u32 %v2533, 16
      %v2915 = vrot.slane %v2913, 3
      %v2916 = vor.u32 %v2912, %v2915
      %v2917 = vsel %vm2855, %v2907, %v2916
      %v2919 = vshrl.u32 %v2534, 16
      %v2921 = vrot.slane %v2919, 2
      %v2922 = vshll.u32 %v2534, 16
      %v2924 = vrot.slane %v2922, 3
      %v2925 = vor.u32 %v2921, %v2924
      %v2926 = vsel %vm2855, %v2916, %v2925
      %v2928 = vshrl.u32 %v2535, 16
      %v2930 = vrot.slane %v2928, 2
      %v2931 = vshll.u32 %v2535, 16
      %v2933 = vrot.slane %v2931, 3
      %v2934 = vor.u32 %v2930, %v2933
      %v2935 = vsel %vm2855, %v2925, %v2934
      %v2937 = vshrl.u32 %v2536, 16
      %v2939 = vrot.slane %v2937, 2
      %v2940 = vshll.u32 %v2536, 16
      %v2942 = vrot.slane %v2940, 3
      %v2943 = vor.u32 %v2939, %v2942
      %v2944 = vsel %vm2855, %v2934, %v2943
      %v2946 = vshrl.u32 %v2537, 16
      %v2948 = vrot.slane %v2946, 2
      %v2949 = vshll.u32 %v2537, 16
      %v2951 = vrot.slane %v2949, 3
      %v2952 = vor.u32 %v2948, %v2951
      %v2953 = vsel %vm2855, %v2943, %v2952
      %v2955 = vshrl.u32 %v2538, 16
      %v2957 = vrot.slane %v2955, 2
      %v2958 = vshll.u32 %v2538, 16
      %v2960 = vrot.slane %v2958, 3
      %v2961 = vor.u32 %v2957, %v2960
      %v2962 = vsel %vm2855, %v2952, %v2961
      %v2964 = vshrl.u32 %v2539, 16
      %v2966 = vrot.slane %v2964, 2
      %v2967 = vshll.u32 %v2539, 16
      %v2969 = vrot.slane %v2967, 3
      %v2970 = vor.u32 %v2966, %v2969
      %v2971 = vsel %vm2855, %v2961, %v2970
      %v2973 = vshrl.u32 %v2540, 16
      %v2975 = vrot.slane %v2973, 2
      %v2976 = vshll.u32 %v2540, 16
      %v2978 = vrot.slane %v2976, 3
      %v2979 = vor.u32 %v2975, %v2978
      %v2980 = vsel %vm2855, %v2970, %v2979
      %v2982 = vshrl.u32 %v2541, 16
      %v2984 = vrot.slane %v2982, 2
      %v2985 = vshll.u32 %v2541, 16
      %v2987 = vrot.slane %v2985, 3
      %v2988 = vor.u32 %v2984, %v2987
      %v2989 = vsel %vm2855, %v2979, %v2988
      %v2991 = vshrl.u32 %v2542, 16
      %v2993 = vrot.slane %v2991, 2
      %v2994 = vshll.u32 %v2542, 16
      %v2996 = vrot.slane %v2994, 3
      %v2997 = vor.u32 %v2993, %v2996
      %v2998 = vsel %vm2855, %v2988, %v2997
      %v3000 = vshrl.u32 %v2854, 16
      %v3002 = vrot.slane %v3000, 2
      %v3003 = vshll.u32 %v2854, 16
      %v3005 = vrot.slane %v3003, 3
      %v3006 = vor.u32 %v3002, %v3005
      %v3007 = vsel %vm2855, %v2997, %v3006
      %v3040 = vunpack.c.l.b16 %v2836
      %v3041 = vunpack.c.l.b16 %v2837
      %v3042 = vunpack.c.l.b16 %v2838
      %v3043 = vunpack.c.l.b16 %v2839
      %v3044 = vunpack.c.l.b16 %v2840
      %v3045 = vunpack.c.l.b16 %v2841
      %v3046 = vunpack.c.l.b16 %v2842
      %v3047 = vunpack.c.l.b16 %v2843
      %v3048 = vunpack.c.l.b16 %v2844
      %v3049 = vunpack.c.l.b16 %v2845
      %v3050 = vunpack.c.l.b16 %v2846
      %v3051 = vunpack.c.l.b16 %v2847
      %v3052 = vunpack.c.l.b16 %v2848
      %v3053 = vunpack.c.l.b16 %v2849
      %v3054 = vunpack.c.l.b16 %v2850
      %v3055 = vunpack.c.l.b16 %v2851
      %v3056 = vpack.c.b16 %v3041, %v3040
      %v3057 = vpack.c.b16 %v3043, %v3042
      %v3058 = vpack.c.b16 %v3045, %v3044
      %v3059 = vpack.c.b16 %v3047, %v3046
      %v3060 = vpack.c.b16 %v3049, %v3048
      %v3061 = vpack.c.b16 %v3051, %v3050
      %v3062 = vpack.c.b16 %v3053, %v3052
      %v3063 = vpack.c.b16 %v3055, %v3054
      %3072 = vmatprep.subr.bf16.mxu0 0
      %3073 = vmatpush1.bf16.msra.mxu0 %v3056
      %3074 = vmatprep.subr.bf16.mxu0 0
      %3075 = vmatpush1.bf16.msra.mxu0 %v3057
      %3076 = vmatprep.subr.bf16.mxu0 0
      %3077 = vmatpush1.bf16.msra.mxu0 %v3058
      %3078 = vmatprep.subr.bf16.mxu0 0
      %3079 = vmatpush1.bf16.msra.mxu0 %v3059
      %3080 = vmatprep.subr.bf16.mxu0 0
      %3081 = vmatpush1.bf16.msra.mxu0 %v3060
      %3082 = vmatprep.subr.bf16.mxu0 0
      %3083 = vmatpush1.bf16.msra.mxu0 %v3061
      %3084 = vmatprep.subr.bf16.mxu0 0
      %3085 = vmatpush1.bf16.msra.mxu0 %v3062
      %3086 = vmatprep.subr.bf16.mxu0 0
      %3087 = vmatpush1.bf16.msra.mxu0 %v3063
      %3088 = vmatprep.subr.bf16.mxu0 0
      %3089 = vmatpush1.bf16.msra.mxu0 0
      %3090 = vmatprep.subr.bf16.mxu0 0
      %3091 = vmatpush1.bf16.msra.mxu0 0
      %3092 = vmatprep.subr.bf16.mxu0 0
      %3093 = vmatpush1.bf16.msra.mxu0 0
      %3094 = vmatprep.subr.bf16.mxu0 0
      %3095 = vmatpush1.bf16.msra.mxu0 0
      %3096 = vmatprep.subr.bf16.mxu0 0
      %3097 = vmatpush1.bf16.msra.mxu0 0
      %3098 = vmatprep.subr.bf16.mxu0 0
      %3099 = vmatpush1.bf16.msra.mxu0 0
      %3100 = vmatprep.subr.bf16.mxu0 0
      %3101 = vmatpush1.bf16.msra.mxu0 0
      %3102 = vmatprep.subr.bf16.mxu0 0
      %3103 = vmatpush1.bf16.msra.mxu0 0
      %3104 = vmatprep.mubr.bf16.mxu0 0
      %3105 = vmatmul.mubr.bf16.gmra.mrb[0].mxu0 %v2872
      %v3106 = vpop.f32.mrb[0].mxu0
      %v3107 = vadd.f32 0.0, %v3106
      %v3108 = vpop.f32.mrb[0].mxu0
      %v3109 = vpop.f32.mrb[0].mxu0
      %v3110 = vadd.f32 0.0, %v3109
      %v3111 = vpop.f32.mrb[0].mxu0
      %3112 = vmatprep.mubr.bf16.mxu0 0
      %3113 = vmatmul.mubr.bf16.gmra.mrb[0].mxu0 %v2881
      %v3114 = vpop.f32.mrb[0].mxu0
      %v3115 = vadd.f32 0.0, %v3114
      %v3116 = vpop.f32.mrb[0].mxu0
      %v3117 = vpop.f32.mrb[0].mxu0
      %v3118 = vadd.f32 0.0, %v3117
      %v3119 = vpop.f32.mrb[0].mxu0
      %3120 = vmatprep.mubr.bf16.mxu0 0
      %3121 = vmatmul.mubr.bf16.gmra.mrb[0].mxu0 %v2890
      %v3122 = vpop.f32.mrb[0].mxu0
      %v3123 = vadd.f32 0.0, %v3122
      %v3124 = vpop.f32.mrb[0].mxu0
      %v3125 = vpop.f32.mrb[0].mxu0
      %v3126 = vadd.f32 0.0, %v3125
      %v3127 = vpop.f32.mrb[0].mxu0
      %3128 = vmatprep.mubr.bf16.mxu0 0
      %3129 = vmatmul.mubr.bf16.gmra.mrb[0].mxu0 %v2899
      %v3130 = vpop.f32.mrb[0].mxu0
      %v3131 = vadd.f32 0.0, %v3130
      %v3132 = vpop.f32.mrb[0].mxu0
      %v3133 = vpop.f32.mrb[0].mxu0
      %v3134 = vadd.f32 0.0, %v3133
      %v3135 = vpop.f32.mrb[0].mxu0
      %3136 = vmatprep.mubr.bf16.mxu0 0
      %3137 = vmatmul.mubr.bf16.gmra.mrb[0].mxu0 %v2908
      %v3138 = vpop.f32.mrb[0].mxu0
      %v3139 = vadd.f32 0.0, %v3138
      %v3140 = vpop.f32.mrb[0].mxu0
      %v3141 = vpop.f32.mrb[0].mxu0
      %v3142 = vadd.f32 0.0, %v3141
      %v3143 = vpop.f32.mrb[0].mxu0
      %3144 = vmatprep.mubr.bf16.mxu0 0
      %3145 = vmatmul.mubr.bf16.gmra.mrb[0].mxu0 %v2917
      %v3146 = vpop.f32.mrb[0].mxu0
      %v3147 = vadd.f32 0.0, %v3146
      %v3148 = vpop.f32.mrb[0].mxu0
      %v3149 = vpop.f32.mrb[0].mxu0
      %v3150 = vadd.f32 0.0, %v3149
      %v3151 = vpop.f32.mrb[0].mxu0
      %3152 = vmatprep.mubr.bf16.mxu0 0
      %3153 = vmatmul.mubr.bf16.gmra.mrb[0].mxu0 %v2926
      %v3154 = vpop.f32.mrb[0].mxu0
      %v3155 = vadd.f32 0.0, %v3154
      %v3156 = vpop.f32.mrb[0].mxu0
      %v3157 = vpop.f32.mrb[0].mxu0
      %v3158 = vadd.f32 0.0, %v3157
      %v3159 = vpop.f32.mrb[0].mxu0
      %3160 = vmatprep.mubr.bf16.mxu0 0
      %3161 = vmatmul.mubr.bf16.gmra.mrb[0].mxu0 %v2935
      %v3162 = vpop.f32.mrb[0].mxu0
      %v3163 = vadd.f32 0.0, %v3162
      %v3164 = vpop.f32.mrb[0].mxu0
      %v3165 = vpop.f32.mrb[0].mxu0
      %v3166 = vadd.f32 0.0, %v3165
      %v3167 = vpop.f32.mrb[0].mxu0
      %3168 = vmatprep.mubr.bf16.mxu0 0
      %3169 = vmatmul.mubr.bf16.gmra.mrb[0].mxu0 %v2944
      %v3170 = vpop.f32.mrb[0].mxu0
      %v3171 = vadd.f32 0.0, %v3170
      %v3172 = vpop.f32.mrb[0].mxu0
      %v3173 = vpop.f32.mrb[0].mxu0
      %v3174 = vadd.f32 0.0, %v3173
      %v3175 = vpop.f32.mrb[0].mxu0
      %3176 = vmatprep.mubr.bf16.mxu0 0
      %3177 = vmatmul.mubr.bf16.gmra.mrb[0].mxu0 %v2953
      %v3178 = vpop.f32.mrb[0].mxu0
      %v3179 = vadd.f32 0.0, %v3178
      %v3180 = vpop.f32.mrb[0].mxu0
      %v3181 = vpop.f32.mrb[0].mxu0
      %v3182 = vadd.f32 0.0, %v3181
      %v3183 = vpop.f32.mrb[0].mxu0
      %3184 = vmatprep.mubr.bf16.mxu0 0
      %3185 = vmatmul.mubr.bf16.gmra.mrb[0].mxu0 %v2962
      %v3186 = vpop.f32.mrb[0].mxu0
      %v3187 = vadd.f32 0.0, %v3186
      %v3188 = vpop.f32.mrb[0].mxu0
      %v3189 = vpop.f32.mrb[0].mxu0
      %v3190 = vadd.f32 0.0, %v3189
      %v3191 = vpop.f32.mrb[0].mxu0
      %3192 = vmatprep.mubr.bf16.mxu0 0
      %3193 = vmatmul.mubr.bf16.gmra.mrb[0].mxu0 %v2971
      %v3194 = vpop.f32.mrb[0].mxu0
      %v3195 = vadd.f32 0.0, %v3194
      %v3196 = vpop.f32.mrb[0].mxu0
      %v3197 = vpop.f32.mrb[0].mxu0
      %v3198 = vadd.f32 0.0, %v3197
      %v3199 = vpop.f32.mrb[0].mxu0
      %3200 = vmatprep.mubr.bf16.mxu0 0
      %3201 = vmatmul.mubr.bf16.gmra.mrb[0].mxu0 %v2980
      %v3202 = vpop.f32.mrb[0].mxu0
      %v3203 = vadd.f32 0.0, %v3202
      %v3204 = vpop.f32.mrb[0].mxu0
      %v3205 = vpop.f32.mrb[0].mxu0
      %v3206 = vadd.f32 0.0, %v3205
      %v3207 = vpop.f32.mrb[0].mxu0
      %3208 = vmatprep.mubr.bf16.mxu0 0
      %3209 = vmatmul.mubr.bf16.gmra.mrb[0].mxu0 %v2989
      %v3210 = vpop.f32.mrb[0].mxu0
      %v3211 = vadd.f32 0.0, %v3210
      %v3212 = vpop.f32.mrb[0].mxu0
      %v3213 = vpop.f32.mrb[0].mxu0
      %v3214 = vadd.f32 0.0, %v3213
      %v3215 = vpop.f32.mrb[0].mxu0
      %3216 = vmatprep.mubr.bf16.mxu0 0
      %3217 = vmatmul.mubr.bf16.gmra.mrb[0].mxu0 %v2998
      %v3218 = vpop.f32.mrb[0].mxu0
      %v3219 = vadd.f32 0.0, %v3218
      %v3220 = vpop.f32.mrb[0].mxu0
      %v3221 = vpop.f32.mrb[0].mxu0
      %v3222 = vadd.f32 0.0, %v3221
      %v3223 = vpop.f32.mrb[0].mxu0
      %3224 = vmatprep.mubr.bf16.mxu0 0
      %3225 = vmatmul.mubr.bf16.gmra.mrb[0].mxu0 %v3007
      %v3226 = vpop.f32.mrb[0].mxu0
      %v3227 = vadd.f32 0.0, %v3226
      %v3228 = vpop.f32.mrb[0].mxu0
      %v3229 = vpop.f32.mrb[0].mxu0
      %v3230 = vadd.f32 0.0, %v3229
      %v3231 = vpop.f32.mrb[0].mxu0
      %3232 = vdwg.mxu0
      %v3233 = vadd.f32 %v2802, %v3107
      %v3234 = vadd.f32 %v2803, %v3110
      %v3235 = vadd.f32 %v2804, %v3115
      %v3236 = vadd.f32 %v2805, %v3118
      %v3237 = vadd.f32 %v2806, %v3123
      %v3238 = vadd.f32 %v2807, %v3126
      %v3239 = vadd.f32 %v2808, %v3131
      %v3240 = vadd.f32 %v2809, %v3134
      %v3241 = vadd.f32 %v2810, %v3139
      %v3242 = vadd.f32 %v2811, %v3142
      %v3243 = vadd.f32 %v2812, %v3147
      %v3244 = vadd.f32 %v2813, %v3150
      %v3245 = vadd.f32 %v2814, %v3155
      %v3246 = vadd.f32 %v2815, %v3158
      %v3247 = vadd.f32 %v2816, %v3163
      %v3248 = vadd.f32 %v2817, %v3166
      %v3249 = vadd.f32 %v2818, %v3171
      %v3250 = vadd.f32 %v2819, %v3174
      %v3251 = vadd.f32 %v2820, %v3179
      %v3252 = vadd.f32 %v2821, %v3182
      %v3253 = vadd.f32 %v2822, %v3187
      %v3254 = vadd.f32 %v2823, %v3190
      %v3255 = vadd.f32 %v2824, %v3195
      %v3256 = vadd.f32 %v2825, %v3198
      %v3257 = vadd.f32 %v2826, %v3203
      %v3258 = vadd.f32 %v2827, %v3206
      %v3259 = vadd.f32 %v2828, %v3211
      %v3260 = vadd.f32 %v2829, %v3214
      %v3261 = vadd.f32 %v2830, %v3219
      %v3262 = vadd.f32 %v2831, %v3222
      %v3263 = vadd.f32 %v2832, %v3227
      %v3264 = vadd.f32 %v2833, %v3230
      %v3265 = vld [vmem:[%s192 + $0x10] sm:$0x8]
      %s3266 = scalar_lea.vmem %s1, 512
      %v3267 = vld [vmem:[%s3266] sm:$0xf]
      %v3268 = vld [vmem:[%s3266 + $0x4] sm:$0xf]
      %v3269 = vld [vmem:[%s3266 + $0x8] sm:$0xf]
      %v3270 = vld [vmem:[%s3266 + $0xc] sm:$0xf]
      %v3271 = vld [vmem:[%s3266 + $0x10] sm:$0xf]
      %v3272 = vld [vmem:[%s3266 + $0x14] sm:$0xf]
      %v3273 = vld [vmem:[%s3266 + $0x18] sm:$0xf]
      %v3274 = vld [vmem:[%s3266 + $0x1c] sm:$0xf]
      %v3275 = vld [vmem:[%s3266 + $0x20] sm:$0xf]
      %v3276 = vld [vmem:[%s3266 + $0x24] sm:$0xf]
      %v3277 = vld [vmem:[%s3266 + $0x28] sm:$0xf]
      %v3278 = vld [vmem:[%s3266 + $0x2c] sm:$0xf]
      %v3279 = vld [vmem:[%s3266 + $0x30] sm:$0xf]
      %v3280 = vld [vmem:[%s3266 + $0x34] sm:$0xf]
      %v3281 = vld [vmem:[%s3266 + $0x38] sm:$0xf]
      %v3282 = vld [vmem:[%s3266 + $0x3c] sm:$0xf]
      %v3284 = vunpack.c.l.b16 %v3265
      %v3285 = vpack.c.b16 %v2495, %v3284
      %vm3286 = vcmask 1044480
      %v3287 = vrot.slane %v3285, 3
      %v3288 = vrot.slane %v2528, 3
      %v3289 = vsel %vm3286, %v3287, %v3288
      %v3290 = vrot.slane %v2529, 3
      %v3291 = vsel %vm3286, %v3288, %v3290
      %v3292 = vrot.slane %v2530, 3
      %v3293 = vsel %vm3286, %v3290, %v3292
      %v3294 = vrot.slane %v2531, 3
      %v3295 = vsel %vm3286, %v3292, %v3294
      %v3296 = vrot.slane %v2532, 3
      %v3297 = vsel %vm3286, %v3294, %v3296
      %v3298 = vrot.slane %v2533, 3
      %v3299 = vsel %vm3286, %v3296, %v3298
      %v3300 = vrot.slane %v2534, 3
      %v3301 = vsel %vm3286, %v3298, %v3300
      %v3302 = vrot.slane %v2535, 3
      %v3303 = vsel %vm3286, %v3300, %v3302
      %v3304 = vrot.slane %v2536, 3
      %v3305 = vsel %vm3286, %v3302, %v3304
      %v3306 = vrot.slane %v2537, 3
      %v3307 = vsel %vm3286, %v3304, %v3306
      %v3308 = vrot.slane %v2538, 3
      %v3309 = vsel %vm3286, %v3306, %v3308
      %v3310 = vrot.slane %v2539, 3
      %v3311 = vsel %vm3286, %v3308, %v3310
      %v3312 = vrot.slane %v2540, 3
      %v3313 = vsel %vm3286, %v3310, %v3312
      %v3314 = vrot.slane %v2541, 3
      %v3315 = vsel %vm3286, %v3312, %v3314
      %v3316 = vrot.slane %v2542, 3
      %v3317 = vsel %vm3286, %v3314, %v3316
      %v3318 = vrot.slane %v2854, 3
      %v3319 = vsel %vm3286, %v3316, %v3318
      %v3352 = vunpack.c.l.b16 %v3267
      %v3353 = vunpack.c.l.b16 %v3268
      %v3354 = vunpack.c.l.b16 %v3269
      %v3355 = vunpack.c.l.b16 %v3270
      %v3356 = vunpack.c.l.b16 %v3271
      %v3357 = vunpack.c.l.b16 %v3272
      %v3358 = vunpack.c.l.b16 %v3273
      %v3359 = vunpack.c.l.b16 %v3274
      %v3360 = vunpack.c.l.b16 %v3275
      %v3361 = vunpack.c.l.b16 %v3276
      %v3362 = vunpack.c.l.b16 %v3277
      %v3363 = vunpack.c.l.b16 %v3278
      %v3364 = vunpack.c.l.b16 %v3279
      %v3365 = vunpack.c.l.b16 %v3280
      %v3366 = vunpack.c.l.b16 %v3281
      %v3367 = vunpack.c.l.b16 %v3282
      %v3368 = vpack.c.b16 %v3353, %v3352
      %v3369 = vpack.c.b16 %v3355, %v3354
      %v3370 = vpack.c.b16 %v3357, %v3356
      %v3371 = vpack.c.b16 %v3359, %v3358
      %v3372 = vpack.c.b16 %v3361, %v3360
      %v3373 = vpack.c.b16 %v3363, %v3362
      %v3374 = vpack.c.b16 %v3365, %v3364
      %v3375 = vpack.c.b16 %v3367, %v3366
      %3384 = vmatprep.subr.bf16.mxu0 0
      %3385 = vmatpush1.bf16.msra.mxu0 %v3368
      %3386 = vmatprep.subr.bf16.mxu0 0
      %3387 = vmatpush1.bf16.msra.mxu0 %v3369
      %3388 = vmatprep.subr.bf16.mxu0 0
      %3389 = vmatpush1.bf16.msra.mxu0 %v3370
      %3390 = vmatprep.subr.bf16.mxu0 0
      %3391 = vmatpush1.bf16.msra.mxu0 %v3371
      %3392 = vmatprep.subr.bf16.mxu0 0
      %3393 = vmatpush1.bf16.msra.mxu0 %v3372
      %3394 = vmatprep.subr.bf16.mxu0 0
      %3395 = vmatpush1.bf16.msra.mxu0 %v3373
      %3396 = vmatprep.subr.bf16.mxu0 0
      %3397 = vmatpush1.bf16.msra.mxu0 %v3374
      %3398 = vmatprep.subr.bf16.mxu0 0
      %3399 = vmatpush1.bf16.msra.mxu0 %v3375
      %3400 = vmatprep.subr.bf16.mxu0 0
      %3401 = vmatpush1.bf16.msra.mxu0 0
      %3402 = vmatprep.subr.bf16.mxu0 0
      %3403 = vmatpush1.bf16.msra.mxu0 0
      %3404 = vmatprep.subr.bf16.mxu0 0
      %3405 = vmatpush1.bf16.msra.mxu0 0
      %3406 = vmatprep.subr.bf16.mxu0 0
      %3407 = vmatpush1.bf16.msra.mxu0 0
      %3408 = vmatprep.subr.bf16.mxu0 0
      %3409 = vmatpush1.bf16.msra.mxu0 0
      %3410 = vmatprep.subr.bf16.mxu0 0
      %3411 = vmatpush1.bf16.msra.mxu0 0
      %3412 = vmatprep.subr.bf16.mxu0 0
      %3413 = vmatpush1.bf16.msra.mxu0 0
      %3414 = vmatprep.subr.bf16.mxu0 0
      %3415 = vmatpush1.bf16.msra.mxu0 0
      %3416 = vmatprep.mubr.bf16.mxu0 0
      %3417 = vmatmul.mubr.bf16.gmra.mrb[0].mxu0 %v3289
      %v3418 = vpop.f32.mrb[0].mxu0
      %v3419 = vadd.f32 0.0, %v3418
      %v3420 = vpop.f32.mrb[0].mxu0
      %v3421 = vpop.f32.mrb[0].mxu0
      %v3422 = vadd.f32 0.0, %v3421
      %v3423 = vpop.f32.mrb[0].mxu0
      %3424 = vmatprep.mubr.bf16.mxu0 0
      %3425 = vmatmul.mubr.bf16.gmra.mrb[0].mxu0 %v3291
      %v3426 = vpop.f32.mrb[0].mxu0
      %v3427 = vadd.f32 0.0, %v3426
      %v3428 = vpop.f32.mrb[0].mxu0
      %v3429 = vpop.f32.mrb[0].mxu0
      %v3430 = vadd.f32 0.0, %v3429
      %v3431 = vpop.f32.mrb[0].mxu0
      %3432 = vmatprep.mubr.bf16.mxu0 0
      %3433 = vmatmul.mubr.bf16.gmra.mrb[0].mxu0 %v3293
      %v3434 = vpop.f32.mrb[0].mxu0
      %v3435 = vadd.f32 0.0, %v3434
      %v3436 = vpop.f32.mrb[0].mxu0
      %v3437 = vpop.f32.mrb[0].mxu0
      %v3438 = vadd.f32 0.0, %v3437
      %v3439 = vpop.f32.mrb[0].mxu0
      %3440 = vmatprep.mubr.bf16.mxu0 0
      %3441 = vmatmul.mubr.bf16.gmra.mrb[0].mxu0 %v3295
      %v3442 = vpop.f32.mrb[0].mxu0
      %v3443 = vadd.f32 0.0, %v3442
      %v3444 = vpop.f32.mrb[0].mxu0
      %v3445 = vpop.f32.mrb[0].mxu0
      %v3446 = vadd.f32 0.0, %v3445
      %v3447 = vpop.f32.mrb[0].mxu0
      %3448 = vmatprep.mubr.bf16.mxu0 0
      %3449 = vmatmul.mubr.bf16.gmra.mrb[0].mxu0 %v3297
      %v3450 = vpop.f32.mrb[0].mxu0
      %v3451 = vadd.f32 0.0, %v3450
      %v3452 = vpop.f32.mrb[0].mxu0
      %v3453 = vpop.f32.mrb[0].mxu0
      %v3454 = vadd.f32 0.0, %v3453
      %v3455 = vpop.f32.mrb[0].mxu0
      %3456 = vmatprep.mubr.bf16.mxu0 0
      %3457 = vmatmul.mubr.bf16.gmra.mrb[0].mxu0 %v3299
      %v3458 = vpop.f32.mrb[0].mxu0
      %v3459 = vadd.f32 0.0, %v3458
      %v3460 = vpop.f32.mrb[0].mxu0
      %v3461 = vpop.f32.mrb[0].mxu0
      %v3462 = vadd.f32 0.0, %v3461
      %v3463 = vpop.f32.mrb[0].mxu0
      %3464 = vmatprep.mubr.bf16.mxu0 0
      %3465 = vmatmul.mubr.bf16.gmra.mrb[0].mxu0 %v3301
      %v3466 = vpop.f32.mrb[0].mxu0
      %v3467 = vadd.f32 0.0, %v3466
      %v3468 = vpop.f32.mrb[0].mxu0
      %v3469 = vpop.f32.mrb[0].mxu0
      %v3470 = vadd.f32 0.0, %v3469
      %v3471 = vpop.f32.mrb[0].mxu0
      %3472 = vmatprep.mubr.bf16.mxu0 0
      %3473 = vmatmul.mubr.bf16.gmra.mrb[0].mxu0 %v3303
      %v3474 = vpop.f32.mrb[0].mxu0
      %v3475 = vadd.f32 0.0, %v3474
      %v3476 = vpop.f32.mrb[0].mxu0
      %v3477 = vpop.f32.mrb[0].mxu0
      %v3478 = vadd.f32 0.0, %v3477
      %v3479 = vpop.f32.mrb[0].mxu0
      %3480 = vmatprep.mubr.bf16.mxu0 0
      %3481 = vmatmul.mubr.bf16.gmra.mrb[0].mxu0 %v3305
      %v3482 = vpop.f32.mrb[0].mxu0
      %v3483 = vadd.f32 0.0, %v3482
      %v3484 = vpop.f32.mrb[0].mxu0
      %v3485 = vpop.f32.mrb[0].mxu0
      %v3486 = vadd.f32 0.0, %v3485
      %v3487 = vpop.f32.mrb[0].mxu0
      %3488 = vmatprep.mubr.bf16.mxu0 0
      %3489 = vmatmul.mubr.bf16.gmra.mrb[0].mxu0 %v3307
      %v3490 = vpop.f32.mrb[0].mxu0
      %v3491 = vadd.f32 0.0, %v3490
      %v3492 = vpop.f32.mrb[0].mxu0
      %v3493 = vpop.f32.mrb[0].mxu0
      %v3494 = vadd.f32 0.0, %v3493
      %v3495 = vpop.f32.mrb[0].mxu0
      %3496 = vmatprep.mubr.bf16.mxu0 0
      %3497 = vmatmul.mubr.bf16.gmra.mrb[0].mxu0 %v3309
      %v3498 = vpop.f32.mrb[0].mxu0
      %v3499 = vadd.f32 0.0, %v3498
      %v3500 = vpop.f32.mrb[0].mxu0
      %v3501 = vpop.f32.mrb[0].mxu0
      %v3502 = vadd.f32 0.0, %v3501
      %v3503 = vpop.f32.mrb[0].mxu0
      %3504 = vmatprep.mubr.bf16.mxu0 0
      %3505 = vmatmul.mubr.bf16.gmra.mrb[0].mxu0 %v3311
      %v3506 = vpop.f32.mrb[0].mxu0
      %v3507 = vadd.f32 0.0, %v3506
      %v3508 = vpop.f32.mrb[0].mxu0
      %v3509 = vpop.f32.mrb[0].mxu0
      %v3510 = vadd.f32 0.0, %v3509
      %v3511 = vpop.f32.mrb[0].mxu0
      %3512 = vmatprep.mubr.bf16.mxu0 0
      %3513 = vmatmul.mubr.bf16.gmra.mrb[0].mxu0 %v3313
      %v3514 = vpop.f32.mrb[0].mxu0
      %v3515 = vadd.f32 0.0, %v3514
      %v3516 = vpop.f32.mrb[0].mxu0
      %v3517 = vpop.f32.mrb[0].mxu0
      %v3518 = vadd.f32 0.0, %v3517
      %v3519 = vpop.f32.mrb[0].mxu0
      %3520 = vmatprep.mubr.bf16.mxu0 0
      %3521 = vmatmul.mubr.bf16.gmra.mrb[0].mxu0 %v3315
      %v3522 = vpop.f32.mrb[0].mxu0
      %v3523 = vadd.f32 0.0, %v3522
      %v3524 = vpop.f32.mrb[0].mxu0
      %v3525 = vpop.f32.mrb[0].mxu0
      %v3526 = vadd.f32 0.0, %v3525
      %v3527 = vpop.f32.mrb[0].mxu0
      %3528 = vmatprep.mubr.bf16.mxu0 0
      %3529 = vmatmul.mubr.bf16.gmra.mrb[0].mxu0 %v3317
      %v3530 = vpop.f32.mrb[0].mxu0
      %v3531 = vadd.f32 0.0, %v3530
      %v3532 = vpop.f32.mrb[0].mxu0
      %v3533 = vpop.f32.mrb[0].mxu0
      %v3534 = vadd.f32 0.0, %v3533
      %v3535 = vpop.f32.mrb[0].mxu0
      %3536 = vmatprep.mubr.bf16.mxu0 0
      %3537 = vmatmul.mubr.bf16.gmra.mrb[0].mxu0 %v3319
      %v3538 = vpop.f32.mrb[0].mxu0
      %v3539 = vadd.f32 0.0, %v3538
      %v3540 = vpop.f32.mrb[0].mxu0
      %v3541 = vpop.f32.mrb[0].mxu0
      %v3542 = vadd.f32 0.0, %v3541
      %v3543 = vpop.f32.mrb[0].mxu0
      %3544 = vdwg.mxu0
      %v3545 = vadd.f32 %v3233, %v3419
      %v3546 = vadd.f32 %v3234, %v3422
      %v3547 = vadd.f32 %v3235, %v3427
      %v3548 = vadd.f32 %v3236, %v3430
      %v3549 = vadd.f32 %v3237, %v3435
      %v3550 = vadd.f32 %v3238, %v3438
      %v3551 = vadd.f32 %v3239, %v3443
      %v3552 = vadd.f32 %v3240, %v3446
      %v3553 = vadd.f32 %v3241, %v3451
      %v3554 = vadd.f32 %v3242, %v3454
      %v3555 = vadd.f32 %v3243, %v3459
      %v3556 = vadd.f32 %v3244, %v3462
      %v3557 = vadd.f32 %v3245, %v3467
      %v3558 = vadd.f32 %v3246, %v3470
      %v3559 = vadd.f32 %v3247, %v3475
      %v3560 = vadd.f32 %v3248, %v3478
      %v3561 = vadd.f32 %v3249, %v3483
      %v3562 = vadd.f32 %v3250, %v3486
      %v3563 = vadd.f32 %v3251, %v3491
      %v3564 = vadd.f32 %v3252, %v3494
      %v3565 = vadd.f32 %v3253, %v3499
      %v3566 = vadd.f32 %v3254, %v3502
      %v3567 = vadd.f32 %v3255, %v3507
      %v3568 = vadd.f32 %v3256, %v3510
      %v3569 = vadd.f32 %v3257, %v3515
      %v3570 = vadd.f32 %v3258, %v3518
      %v3571 = vadd.f32 %v3259, %v3523
      %v3572 = vadd.f32 %v3260, %v3526
      %v3573 = vadd.f32 %v3261, %v3531
      %v3574 = vadd.f32 %v3262, %v3534
      %v3575 = vadd.f32 %v3263, %v3539
      %v3576 = vadd.f32 %v3264, %v3542
      %v3578 = vlaneseq
      %v3579 = vshrl.u32 %v3578, 7
      %v3580 = vsub.s32 0, %v3579
      %v3581 = vrot.slane %v199, %v3580
      %v3583 = vmul.f32 %v3545, %v3581
      %v3584 = vmul.f32 %v3546, %v3581
      %v3585 = vmul.f32 %v3547, %v3581
      %v3586 = vmul.f32 %v3548, %v3581
      %v3587 = vmul.f32 %v3549, %v3581
      %v3588 = vmul.f32 %v3550, %v3581
      %v3589 = vmul.f32 %v3551, %v3581
      %v3590 = vmul.f32 %v3552, %v3581
      %v3591 = vmul.f32 %v3553, %v3581
      %v3592 = vmul.f32 %v3554, %v3581
      %v3593 = vmul.f32 %v3555, %v3581
      %v3594 = vmul.f32 %v3556, %v3581
      %v3595 = vmul.f32 %v3557, %v3581
      %v3596 = vmul.f32 %v3558, %v3581
      %v3597 = vmul.f32 %v3559, %v3581
      %v3598 = vmul.f32 %v3560, %v3581
      %v3599 = vmul.f32 %v3561, %v3581
      %v3600 = vmul.f32 %v3562, %v3581
      %v3601 = vmul.f32 %v3563, %v3581
      %v3602 = vmul.f32 %v3564, %v3581
      %v3603 = vmul.f32 %v3565, %v3581
      %v3604 = vmul.f32 %v3566, %v3581
      %v3605 = vmul.f32 %v3567, %v3581
      %v3606 = vmul.f32 %v3568, %v3581
      %v3607 = vmul.f32 %v3569, %v3581
      %v3608 = vmul.f32 %v3570, %v3581
      %v3609 = vmul.f32 %v3571, %v3581
      %v3610 = vmul.f32 %v3572, %v3581
      %v3611 = vmul.f32 %v3573, %v3581
      %v3612 = vmul.f32 %v3574, %v3581
      %v3613 = vmul.f32 %v3575, %v3581
      %v3614 = vmul.f32 %v3576, %v3581
      %v3616 = vlaneseq
      %v3617 = vshrl.u32 %v3616, 7
      %v3618 = vsub.s32 0, %v3617
      %v3619 = vrot.slane %v200, %v3618
      %v3621 = vadd.f32 %v3583, %v3619
      %v3622 = vadd.f32 %v3584, %v3619
      %v3623 = vadd.f32 %v3585, %v3619
      %v3624 = vadd.f32 %v3586, %v3619
      %v3625 = vadd.f32 %v3587, %v3619
      %v3626 = vadd.f32 %v3588, %v3619
      %v3627 = vadd.f32 %v3589, %v3619
      %v3628 = vadd.f32 %v3590, %v3619
      %v3629 = vadd.f32 %v3591, %v3619
      %v3630 = vadd.f32 %v3592, %v3619
      %v3631 = vadd.f32 %v3593, %v3619
      %v3632 = vadd.f32 %v3594, %v3619
      %v3633 = vadd.f32 %v3595, %v3619
      %v3634 = vadd.f32 %v3596, %v3619
      %v3635 = vadd.f32 %v3597, %v3619
      %v3636 = vadd.f32 %v3598, %v3619
      %v3637 = vadd.f32 %v3599, %v3619
      %v3638 = vadd.f32 %v3600, %v3619
      %v3639 = vadd.f32 %v3601, %v3619
      %v3640 = vadd.f32 %v3602, %v3619
      %v3641 = vadd.f32 %v3603, %v3619
      %v3642 = vadd.f32 %v3604, %v3619
      %v3643 = vadd.f32 %v3605, %v3619
      %v3644 = vadd.f32 %v3606, %v3619
      %v3645 = vadd.f32 %v3607, %v3619
      %v3646 = vadd.f32 %v3608, %v3619
      %v3647 = vadd.f32 %v3609, %v3619
      %v3648 = vadd.f32 %v3610, %v3619
      %v3649 = vadd.f32 %v3611, %v3619
      %v3650 = vadd.f32 %v3612, %v3619
      %v3651 = vadd.f32 %v3613, %v3619
      %v3652 = vadd.f32 %v3614, %v3619
      %v3653 = vmax.f32 %v3621, 0.0
      %v3654 = vmax.f32 %v3622, 0.0
      %v3655 = vmax.f32 %v3623, 0.0
      %v3656 = vmax.f32 %v3624, 0.0
      %v3657 = vmax.f32 %v3625, 0.0
      %v3658 = vmax.f32 %v3626, 0.0
      %v3659 = vmax.f32 %v3627, 0.0
      %v3660 = vmax.f32 %v3628, 0.0
      %v3661 = vmax.f32 %v3629, 0.0
      %v3662 = vmax.f32 %v3630, 0.0
      %v3663 = vmax.f32 %v3631, 0.0
      %v3664 = vmax.f32 %v3632, 0.0
      %v3665 = vmax.f32 %v3633, 0.0
      %v3666 = vmax.f32 %v3634, 0.0
      %v3667 = vmax.f32 %v3635, 0.0
      %v3668 = vmax.f32 %v3636, 0.0
      %v3669 = vmax.f32 %v3637, 0.0
      %v3670 = vmax.f32 %v3638, 0.0
      %v3671 = vmax.f32 %v3639, 0.0
      %v3672 = vmax.f32 %v3640, 0.0
      %v3673 = vmax.f32 %v3641, 0.0
      %v3674 = vmax.f32 %v3642, 0.0
      %v3675 = vmax.f32 %v3643, 0.0
      %v3676 = vmax.f32 %v3644, 0.0
      %v3677 = vmax.f32 %v3645, 0.0
      %v3678 = vmax.f32 %v3646, 0.0
      %v3679 = vmax.f32 %v3647, 0.0
      %v3680 = vmax.f32 %v3648, 0.0
      %v3681 = vmax.f32 %v3649, 0.0
      %v3682 = vmax.f32 %v3650, 0.0
      %v3683 = vmax.f32 %v3651, 0.0
      %v3684 = vmax.f32 %v3652, 0.0
      %v3685 = vpack.c.bf16 %v3654, %v3653
      %v3686 = vpack.c.bf16 %v3656, %v3655
      %v3687 = vpack.c.bf16 %v3658, %v3657
      %v3688 = vpack.c.bf16 %v3660, %v3659
      %v3689 = vpack.c.bf16 %v3662, %v3661
      %v3690 = vpack.c.bf16 %v3664, %v3663
      %v3691 = vpack.c.bf16 %v3666, %v3665
      %v3692 = vpack.c.bf16 %v3668, %v3667
      %v3693 = vpack.c.bf16 %v3670, %v3669
      %v3694 = vpack.c.bf16 %v3672, %v3671
      %v3695 = vpack.c.bf16 %v3674, %v3673
      %v3696 = vpack.c.bf16 %v3676, %v3675
      %v3697 = vpack.c.bf16 %v3678, %v3677
      %v3698 = vpack.c.bf16 %v3680, %v3679
      %v3699 = vpack.c.bf16 %v3682, %v3681
      %v3700 = vpack.c.bf16 %v3684, %v3683
      %v3717 = vunpack.c.l.b16 %v3685
      %v3718 = vunpack.c.h.b16 %v3685
      %v3719 = vunpack.c.l.b16 %v3686
      %v3720 = vunpack.c.h.b16 %v3686
      %v3721 = vunpack.c.l.b16 %v3687
      %v3722 = vunpack.c.h.b16 %v3687
      %v3723 = vunpack.c.l.b16 %v3688
      %v3724 = vunpack.c.h.b16 %v3688
      %v3725 = vunpack.c.l.b16 %v3689
      %v3726 = vunpack.c.h.b16 %v3689
      %v3727 = vunpack.c.l.b16 %v3690
      %v3728 = vunpack.c.h.b16 %v3690
      %v3729 = vunpack.c.l.b16 %v3691
      %v3730 = vunpack.c.h.b16 %v3691
      %v3731 = vunpack.c.l.b16 %v3692
      %v3732 = vunpack.c.h.b16 %v3692
      %v3733 = vunpack.c.l.b16 %v3693
      %v3734 = vunpack.c.h.b16 %v3693
      %v3735 = vunpack.c.l.b16 %v3694
      %v3736 = vunpack.c.h.b16 %v3694
      %v3737 = vunpack.c.l.b16 %v3695
      %v3738 = vunpack.c.h.b16 %v3695
      %v3739 = vunpack.c.l.b16 %v3696
      %v3740 = vunpack.c.h.b16 %v3696
      %v3741 = vunpack.c.l.b16 %v3697
      %v3742 = vunpack.c.h.b16 %v3697
      %v3743 = vunpack.c.l.b16 %v3698
      %v3744 = vunpack.c.h.b16 %v3698
      %v3745 = vunpack.c.l.b16 %v3699
      %v3746 = vunpack.c.h.b16 %v3699
      %v3747 = vunpack.c.l.b16 %v3700
      %v3748 = vunpack.c.h.b16 %v3700
      %v3749 = vpack.c.b16 %v3717, %v3717
      %v3750 = vpack.c.b16 %v3718, %v3718
      %v3751 = vpack.c.b16 %v3719, %v3719
      %v3752 = vpack.c.b16 %v3720, %v3720
      %v3753 = vpack.c.b16 %v3721, %v3721
      %v3754 = vpack.c.b16 %v3722, %v3722
      %v3755 = vpack.c.b16 %v3723, %v3723
      %v3756 = vpack.c.b16 %v3724, %v3724
      %v3757 = vpack.c.b16 %v3725, %v3725
      %v3758 = vpack.c.b16 %v3726, %v3726
      %v3759 = vpack.c.b16 %v3727, %v3727
      %v3760 = vpack.c.b16 %v3728, %v3728
      %v3761 = vpack.c.b16 %v3729, %v3729
      %v3762 = vpack.c.b16 %v3730, %v3730
      %v3763 = vpack.c.b16 %v3731, %v3731
      %v3764 = vpack.c.b16 %v3732, %v3732
      %v3765 = vpack.c.b16 %v3733, %v3733
      %v3766 = vpack.c.b16 %v3734, %v3734
      %v3767 = vpack.c.b16 %v3735, %v3735
      %v3768 = vpack.c.b16 %v3736, %v3736
      %v3769 = vpack.c.b16 %v3737, %v3737
      %v3770 = vpack.c.b16 %v3738, %v3738
      %v3771 = vpack.c.b16 %v3739, %v3739
      %v3772 = vpack.c.b16 %v3740, %v3740
      %v3773 = vpack.c.b16 %v3741, %v3741
      %v3774 = vpack.c.b16 %v3742, %v3742
      %v3775 = vpack.c.b16 %v3743, %v3743
      %v3776 = vpack.c.b16 %v3744, %v3744
      %v3777 = vpack.c.b16 %v3745, %v3745
      %v3778 = vpack.c.b16 %v3746, %v3746
      %v3779 = vpack.c.b16 %v3747, %v3747
      %v3780 = vpack.c.b16 %v3748, %v3748
      %3813 = vst [vmem:[%s197] sm:$0xf] %v3749
      %3814 = vst [vmem:[%s197 + $0x4] sm:$0xf] %v3750
      %3815 = vst [vmem:[%s197 + $0x8] sm:$0xf] %v3751
      %3816 = vst [vmem:[%s197 + $0xc] sm:$0xf] %v3752
      %3817 = vst [vmem:[%s197 + $0x10] sm:$0xf] %v3753
      %3818 = vst [vmem:[%s197 + $0x14] sm:$0xf] %v3754
      %3819 = vst [vmem:[%s197 + $0x18] sm:$0xf] %v3755
      %3820 = vst [vmem:[%s197 + $0x1c] sm:$0xf] %v3756
      %3821 = vst [vmem:[%s197 + $0x20] sm:$0xf] %v3757
      %3822 = vst [vmem:[%s197 + $0x24] sm:$0xf] %v3758
      %3823 = vst [vmem:[%s197 + $0x28] sm:$0xf] %v3759
      %3824 = vst [vmem:[%s197 + $0x2c] sm:$0xf] %v3760
      %3825 = vst [vmem:[%s197 + $0x30] sm:$0xf] %v3761
      %3826 = vst [vmem:[%s197 + $0x34] sm:$0xf] %v3762
      %3827 = vst [vmem:[%s197 + $0x38] sm:$0xf] %v3763
      %3828 = vst [vmem:[%s197 + $0x3c] sm:$0xf] %v3764
      %3829 = vst [vmem:[%s197 + $0x40] sm:$0xf] %v3765
      %3830 = vst [vmem:[%s197 + $0x44] sm:$0xf] %v3766
      %3831 = vst [vmem:[%s197 + $0x48] sm:$0xf] %v3767
      %3832 = vst [vmem:[%s197 + $0x4c] sm:$0xf] %v3768
      %3833 = vst [vmem:[%s197 + $0x50] sm:$0xf] %v3769
      %3834 = vst [vmem:[%s197 + $0x54] sm:$0xf] %v3770
      %3835 = vst [vmem:[%s197 + $0x58] sm:$0xf] %v3771
      %3836 = vst [vmem:[%s197 + $0x5c] sm:$0xf] %v3772
      %3837 = vst [vmem:[%s197 + $0x60] sm:$0xf] %v3773
      %3838 = vst [vmem:[%s197 + $0x64] sm:$0xf] %v3774
      %3839 = vst [vmem:[%s197 + $0x68] sm:$0xf] %v3775
      %3840 = vst [vmem:[%s197 + $0x6c] sm:$0xf] %v3776
      %3841 = vst [vmem:[%s197 + $0x70] sm:$0xf] %v3777
      %3842 = vst [vmem:[%s197 + $0x74] sm:$0xf] %v3778
      %3843 = vst [vmem:[%s197 + $0x78] sm:$0xf] %v3779
      %3844 = vst [vmem:[%s197 + $0x7c] sm:$0xf] %v3780
      %v3845 = vld [vmem:[%s192 + $0x80] sm:$0xf]
      %v3846 = vld [vmem:[%s192 + $0x84] sm:$0xf]
      %v3847 = vld [vmem:[%s192 + $0x88] sm:$0xf]
      %v3848 = vld [vmem:[%s192 + $0x8c] sm:$0xf]
      %v3849 = vld [vmem:[%s192 + $0x90] sm:$0xf]
      %v3850 = vld [vmem:[%s192 + $0x94] sm:$0xf]
      %v3851 = vld [vmem:[%s192 + $0x98] sm:$0xf]
      %v3852 = vld [vmem:[%s192 + $0x9c] sm:$0xf]
      %v3853 = vld [vmem:[%s192 + $0xa0] sm:$0xf]
      %v3854 = vld [vmem:[%s192 + $0xa4] sm:$0xf]
      %v3855 = vld [vmem:[%s1] sm:$0xf]
      %v3856 = vld [vmem:[%s1 + $0x4] sm:$0xf]
      %v3857 = vld [vmem:[%s1 + $0x8] sm:$0xf]
      %v3858 = vld [vmem:[%s1 + $0xc] sm:$0xf]
      %v3859 = vld [vmem:[%s1 + $0x10] sm:$0xf]
      %v3860 = vld [vmem:[%s1 + $0x14] sm:$0xf]
      %v3861 = vld [vmem:[%s1 + $0x18] sm:$0xf]
      %v3862 = vld [vmem:[%s1 + $0x1c] sm:$0xf]
      %v3863 = vld [vmem:[%s1 + $0x20] sm:$0xf]
      %v3864 = vld [vmem:[%s1 + $0x24] sm:$0xf]
      %v3865 = vld [vmem:[%s1 + $0x28] sm:$0xf]
      %v3866 = vld [vmem:[%s1 + $0x2c] sm:$0xf]
      %v3867 = vld [vmem:[%s1 + $0x30] sm:$0xf]
      %v3868 = vld [vmem:[%s1 + $0x34] sm:$0xf]
      %v3869 = vld [vmem:[%s1 + $0x38] sm:$0xf]
      %v3870 = vld [vmem:[%s1 + $0x3c] sm:$0xf]
      %v3871 = vld [vmem:[%s192 + $0xa8] sm:$0x1]
      %v3872 = vld [vmem:[%s250] sm:$0xf]
      %v3873 = vld [vmem:[%s250 + $0x4] sm:$0xf]
      %v3874 = vld [vmem:[%s250 + $0x8] sm:$0xf]
      %v3875 = vld [vmem:[%s250 + $0xc] sm:$0xf]
      %v3876 = vld [vmem:[%s250 + $0x10] sm:$0xf]
      %v3877 = vld [vmem:[%s250 + $0x14] sm:$0xf]
      %v3878 = vld [vmem:[%s250 + $0x18] sm:$0xf]
      %v3879 = vld [vmem:[%s250 + $0x1c] sm:$0xf]
      %v3880 = vld [vmem:[%s250 + $0x20] sm:$0xf]
      %v3881 = vld [vmem:[%s250 + $0x24] sm:$0xf]
      %v3882 = vld [vmem:[%s250 + $0x28] sm:$0xf]
      %v3883 = vld [vmem:[%s250 + $0x2c] sm:$0xf]
      %v3884 = vld [vmem:[%s250 + $0x30] sm:$0xf]
      %v3885 = vld [vmem:[%s250 + $0x34] sm:$0xf]
      %v3886 = vld [vmem:[%s250 + $0x38] sm:$0xf]
      %v3887 = vld [vmem:[%s250 + $0x3c] sm:$0xf]
      %v3899 = vunpack.c.l.b16 %v3845
      %v3900 = vunpack.c.l.b16 %v3846
      %v3901 = vunpack.c.l.b16 %v3847
      %v3902 = vunpack.c.l.b16 %v3848
      %v3903 = vunpack.c.l.b16 %v3849
      %v3904 = vunpack.c.l.b16 %v3850
      %v3905 = vunpack.c.l.b16 %v3851
      %v3906 = vunpack.c.l.b16 %v3852
      %v3907 = vunpack.c.l.b16 %v3853
      %v3908 = vunpack.c.l.b16 %v3854
      %v3909 = vunpack.c.l.b16 %v3871
      %v3910 = vpack.c.b16 %v3900, %v3899
      %v3911 = vpack.c.b16 %v3902, %v3901
      %v3912 = vpack.c.b16 %v3904, %v3903
      %v3913 = vpack.c.b16 %v3906, %v3905
      %v3914 = vpack.c.b16 %v3908, %v3907
      %v3915 = vpack.c.b16 %v3909, %v3909
      %v3917 = vshrl.u32 %v3910, 16
      %v3919 = vshll.u32 %v3910, 16
      %v3921 = vrot.slane %v3919, 1
      %v3922 = vor.u32 %v3917, %v3921
      %v3924 = vshll.u32 %v3911, 16
      %v3926 = vrot.slane %v3924, 1
      %v3927 = vsel %vm350, %v3922, %v3926
      %v3928 = vshrl.u32 %v3911, 16
      %v3930 = vor.u32 %v3928, %v3926
      %v3932 = vshll.u32 %v3912, 16
      %v3934 = vrot.slane %v3932, 1
      %v3935 = vsel %vm350, %v3930, %v3934
      %v3936 = vshrl.u32 %v3912, 16
      %v3938 = vor.u32 %v3936, %v3934
      %v3940 = vshll.u32 %v3913, 16
      %v3942 = vrot.slane %v3940, 1
      %v3943 = vsel %vm350, %v3938, %v3942
      %v3944 = vshrl.u32 %v3913, 16
      %v3946 = vor.u32 %v3944, %v3942
      %v3948 = vshll.u32 %v3914, 16
      %v3950 = vrot.slane %v3948, 1
      %v3951 = vsel %vm350, %v3946, %v3950
      %v3952 = vshrl.u32 %v3914, 16
      %v3954 = vor.u32 %v3952, %v3950
      %v3956 = vshll.u32 %v3915, 16
      %v3958 = vrot.slane %v3956, 1
      %v3959 = vsel %vm350, %v3954, %v3958
      %v3981 = vunpack.c.l.b16 %v3872
      %v3982 = vunpack.c.l.b16 %v3873
      %v3983 = vunpack.c.l.b16 %v3874
      %v3984 = vunpack.c.l.b16 %v3875
      %v3985 = vunpack.c.l.b16 %v3876
      %v3986 = vunpack.c.l.b16 %v3877
      %v3987 = vunpack.c.l.b16 %v3878
      %v3988 = vunpack.c.l.b16 %v3879
      %v3989 = vunpack.c.l.b16 %v3880
      %v3990 = vunpack.c.l.b16 %v3881
      %v3991 = vunpack.c.l.b16 %v3882
      %v3992 = vunpack.c.l.b16 %v3883
      %v3993 = vunpack.c.l.b16 %v3884
      %v3994 = vunpack.c.l.b16 %v3885
      %v3995 = vunpack.c.l.b16 %v3886
      %v3996 = vunpack.c.l.b16 %v3887
      %v3997 = vpack.c.b16 %v3982, %v3981
      %v3998 = vpack.c.b16 %v3984, %v3983
      %v3999 = vpack.c.b16 %v3986, %v3985
      %v4000 = vpack.c.b16 %v3988, %v3987
      %v4001 = vpack.c.b16 %v3990, %v3989
      %v4002 = vpack.c.b16 %v3992, %v3991
      %v4003 = vpack.c.b16 %v3994, %v3993
      %v4004 = vpack.c.b16 %v3996, %v3995
      %4013 = vmatprep.subr.bf16.mxu0 0
      %4014 = vmatpush1.bf16.msra.mxu0 %v3997
      %4015 = vmatprep.subr.bf16.mxu0 0
      %4016 = vmatpush1.bf16.msra.mxu0 %v3998
      %4017 = vmatprep.subr.bf16.mxu0 0
      %4018 = vmatpush1.bf16.msra.mxu0 %v3999
      %4019 = vmatprep.subr.bf16.mxu0 0
      %4020 = vmatpush1.bf16.msra.mxu0 %v4000
      %4021 = vmatprep.subr.bf16.mxu0 0
      %4022 = vmatpush1.bf16.msra.mxu0 %v4001
      %4023 = vmatprep.subr.bf16.mxu0 0
      %4024 = vmatpush1.bf16.msra.mxu0 %v4002
      %4025 = vmatprep.subr.bf16.mxu0 0
      %4026 = vmatpush1.bf16.msra.mxu0 %v4003
      %4027 = vmatprep.subr.bf16.mxu0 0
      %4028 = vmatpush1.bf16.msra.mxu0 %v4004
      %4029 = vmatprep.subr.bf16.mxu0 0
      %4030 = vmatpush1.bf16.msra.mxu0 0
      %4031 = vmatprep.subr.bf16.mxu0 0
      %4032 = vmatpush1.bf16.msra.mxu0 0
      %4033 = vmatprep.subr.bf16.mxu0 0
      %4034 = vmatpush1.bf16.msra.mxu0 0
      %4035 = vmatprep.subr.bf16.mxu0 0
      %4036 = vmatpush1.bf16.msra.mxu0 0
      %4037 = vmatprep.subr.bf16.mxu0 0
      %4038 = vmatpush1.bf16.msra.mxu0 0
      %4039 = vmatprep.subr.bf16.mxu0 0
      %4040 = vmatpush1.bf16.msra.mxu0 0
      %4041 = vmatprep.subr.bf16.mxu0 0
      %4042 = vmatpush1.bf16.msra.mxu0 0
      %4043 = vmatprep.subr.bf16.mxu0 0
      %4044 = vmatpush1.bf16.msra.mxu0 0
      %4045 = vmatprep.mubr.bf16.mxu0 0
      %4046 = vmatmul.mubr.bf16.gmra.mrb[0].mxu0 %v3927
      %v4047 = vpop.f32.mrb[0].mxu0
      %v4048 = vadd.f32 0.0, %v4047
      %v4049 = vpop.f32.mrb[0].mxu0
      %v4050 = vpop.f32.mrb[0].mxu0
      %v4051 = vadd.f32 0.0, %v4050
      %v4052 = vpop.f32.mrb[0].mxu0
      %4053 = vmatprep.mubr.bf16.mxu0 0
      %4054 = vmatmul.mubr.bf16.gmra.mrb[0].mxu0 %v3935
      %v4055 = vpop.f32.mrb[0].mxu0
      %v4056 = vadd.f32 0.0, %v4055
      %v4057 = vpop.f32.mrb[0].mxu0
      %v4058 = vpop.f32.mrb[0].mxu0
      %v4059 = vadd.f32 0.0, %v4058
      %v4060 = vpop.f32.mrb[0].mxu0
      %4061 = vmatprep.mubr.bf16.mxu0 0
      %4062 = vmatmul.mubr.bf16.gmra.mrb[0].mxu0 %v3943
      %v4063 = vpop.f32.mrb[0].mxu0
      %v4064 = vadd.f32 0.0, %v4063
      %v4065 = vpop.f32.mrb[0].mxu0
      %v4066 = vpop.f32.mrb[0].mxu0
      %v4067 = vadd.f32 0.0, %v4066
      %v4068 = vpop.f32.mrb[0].mxu0
      %4069 = vmatprep.mubr.bf16.mxu0 0
      %4070 = vmatmul.mubr.bf16.gmra.mrb[0].mxu0 %v3951
      %v4071 = vpop.f32.mrb[0].mxu0
      %v4072 = vadd.f32 0.0, %v4071
      %v4073 = vpop.f32.mrb[0].mxu0
      %v4074 = vpop.f32.mrb[0].mxu0
      %v4075 = vadd.f32 0.0, %v4074
      %v4076 = vpop.f32.mrb[0].mxu0
      %4077 = vmatprep.mubr.bf16.mxu0 0
      %4078 = vmatmul.mubr.bf16.gmra.mrb[0].mxu0 %v3959
      %v4079 = vpop.f32.mrb[0].mxu0
      %v4080 = vadd.f32 0.0, %v4079
      %v4081 = vpop.f32.mrb[0].mxu0
      %v4082 = vpop.f32.mrb[0].mxu0
      %v4083 = vadd.f32 0.0, %v4082
      %v4084 = vpop.f32.mrb[0].mxu0
      %4085 = vdwg.mxu0
      %v4107 = vunpack.c.l.b16 %v3855
      %v4108 = vunpack.c.l.b16 %v3856
      %v4109 = vunpack.c.l.b16 %v3857
      %v4110 = vunpack.c.l.b16 %v3858
      %v4111 = vunpack.c.l.b16 %v3859
      %v4112 = vunpack.c.l.b16 %v3860
      %v4113 = vunpack.c.l.b16 %v3861
      %v4114 = vunpack.c.l.b16 %v3862
      %v4115 = vunpack.c.l.b16 %v3863
      %v4116 = vunpack.c.l.b16 %v3864
      %v4117 = vunpack.c.l.b16 %v3865
      %v4118 = vunpack.c.l.b16 %v3866
      %v4119 = vunpack.c.l.b16 %v3867
      %v4120 = vunpack.c.l.b16 %v3868
      %v4121 = vunpack.c.l.b16 %v3869
      %v4122 = vunpack.c.l.b16 %v3870
      %v4123 = vpack.c.b16 %v4108, %v4107
      %v4124 = vpack.c.b16 %v4110, %v4109
      %v4125 = vpack.c.b16 %v4112, %v4111
      %v4126 = vpack.c.b16 %v4114, %v4113
      %v4127 = vpack.c.b16 %v4116, %v4115
      %v4128 = vpack.c.b16 %v4118, %v4117
      %v4129 = vpack.c.b16 %v4120, %v4119
      %v4130 = vpack.c.b16 %v4122, %v4121
      %4139 = vmatprep.subr.bf16.mxu0 0
      %4140 = vmatpush1.bf16.msra.mxu0 %v4123
      %4141 = vmatprep.subr.bf16.mxu0 0
      %4142 = vmatpush1.bf16.msra.mxu0 %v4124
      %4143 = vmatprep.subr.bf16.mxu0 0
      %4144 = vmatpush1.bf16.msra.mxu0 %v4125
      %4145 = vmatprep.subr.bf16.mxu0 0
      %4146 = vmatpush1.bf16.msra.mxu0 %v4126
      %4147 = vmatprep.subr.bf16.mxu0 0
      %4148 = vmatpush1.bf16.msra.mxu0 %v4127
      %4149 = vmatprep.subr.bf16.mxu0 0
      %4150 = vmatpush1.bf16.msra.mxu0 %v4128
      %4151 = vmatprep.subr.bf16.mxu0 0
      %4152 = vmatpush1.bf16.msra.mxu0 %v4129
      %4153 = vmatprep.subr.bf16.mxu0 0
      %4154 = vmatpush1.bf16.msra.mxu0 %v4130
      %4155 = vmatprep.subr.bf16.mxu0 0
      %4156 = vmatpush1.bf16.msra.mxu0 0
      %4157 = vmatprep.subr.bf16.mxu0 0
      %4158 = vmatpush1.bf16.msra.mxu0 0
      %4159 = vmatprep.subr.bf16.mxu0 0
      %4160 = vmatpush1.bf16.msra.mxu0 0
      %4161 = vmatprep.subr.bf16.mxu0 0
      %4162 = vmatpush1.bf16.msra.mxu0 0
      %4163 = vmatprep.subr.bf16.mxu0 0
      %4164 = vmatpush1.bf16.msra.mxu0 0
      %4165 = vmatprep.subr.bf16.mxu0 0
      %4166 = vmatpush1.bf16.msra.mxu0 0
      %4167 = vmatprep.subr.bf16.mxu0 0
      %4168 = vmatpush1.bf16.msra.mxu0 0
      %4169 = vmatprep.subr.bf16.mxu0 0
      %4170 = vmatpush1.bf16.msra.mxu0 0
      %4171 = vmatprep.mubr.bf16.mxu0 0
      %4172 = vmatmul.mubr.bf16.gmra.mrb[0].mxu0 %v3910
      %v4173 = vpop.f32.mrb[0].mxu0
      %v4174 = vadd.f32 %v4048, %v4173
      %v4175 = vpop.f32.mrb[0].mxu0
      %v4176 = vpop.f32.mrb[0].mxu0
      %v4177 = vadd.f32 %v4051, %v4176
      %v4178 = vpop.f32.mrb[0].mxu0
      %4179 = vmatprep.mubr.bf16.mxu0 0
      %4180 = vmatmul.mubr.bf16.gmra.mrb[0].mxu0 %v3911
      %v4181 = vpop.f32.mrb[0].mxu0
      %v4182 = vadd.f32 %v4056, %v4181
      %v4183 = vpop.f32.mrb[0].mxu0
      %v4184 = vpop.f32.mrb[0].mxu0
      %v4185 = vadd.f32 %v4059, %v4184
      %v4186 = vpop.f32.mrb[0].mxu0
      %4187 = vmatprep.mubr.bf16.mxu0 0
      %4188 = vmatmul.mubr.bf16.gmra.mrb[0].mxu0 %v3912
      %v4189 = vpop.f32.mrb[0].mxu0
      %v4190 = vadd.f32 %v4064, %v4189
      %v4191 = vpop.f32.mrb[0].mxu0
      %v4192 = vpop.f32.mrb[0].mxu0
      %v4193 = vadd.f32 %v4067, %v4192
      %v4194 = vpop.f32.mrb[0].mxu0
      %4195 = vmatprep.mubr.bf16.mxu0 0
      %4196 = vmatmul.mubr.bf16.gmra.mrb[0].mxu0 %v3913
      %v4197 = vpop.f32.mrb[0].mxu0
      %v4198 = vadd.f32 %v4072, %v4197
      %v4199 = vpop.f32.mrb[0].mxu0
      %v4200 = vpop.f32.mrb[0].mxu0
      %v4201 = vadd.f32 %v4075, %v4200
      %v4202 = vpop.f32.mrb[0].mxu0
      %4203 = vmatprep.mubr.bf16.mxu0 0
      %4204 = vmatmul.mubr.bf16.gmra.mrb[0].mxu0 %v3914
      %v4205 = vpop.f32.mrb[0].mxu0
      %v4206 = vadd.f32 %v4080, %v4205
      %v4207 = vpop.f32.mrb[0].mxu0
      %v4208 = vpop.f32.mrb[0].mxu0
      %v4209 = vadd.f32 %v4083, %v4208
      %v4210 = vpop.f32.mrb[0].mxu0
      %4211 = vdwg.mxu0
      %v4212 = vld [vmem:[%s192 + $0x80] sm:$0xe]
      %v4213 = vld [vmem:[%s934] sm:$0xf]
      %v4214 = vld [vmem:[%s934 + $0x4] sm:$0xf]
      %v4215 = vld [vmem:[%s934 + $0x8] sm:$0xf]
      %v4216 = vld [vmem:[%s934 + $0xc] sm:$0xf]
      %v4217 = vld [vmem:[%s934 + $0x10] sm:$0xf]
      %v4218 = vld [vmem:[%s934 + $0x14] sm:$0xf]
      %v4219 = vld [vmem:[%s934 + $0x18] sm:$0xf]
      %v4220 = vld [vmem:[%s934 + $0x1c] sm:$0xf]
      %v4221 = vld [vmem:[%s934 + $0x20] sm:$0xf]
      %v4222 = vld [vmem:[%s934 + $0x24] sm:$0xf]
      %v4223 = vld [vmem:[%s934 + $0x28] sm:$0xf]
      %v4224 = vld [vmem:[%s934 + $0x2c] sm:$0xf]
      %v4225 = vld [vmem:[%s934 + $0x30] sm:$0xf]
      %v4226 = vld [vmem:[%s934 + $0x34] sm:$0xf]
      %v4227 = vld [vmem:[%s934 + $0x38] sm:$0xf]
      %v4228 = vld [vmem:[%s934 + $0x3c] sm:$0xf]
      %v4230 = vunpack.c.l.b16 %v4212
      %v4231 = vpack.c.b16 %v3900, %v4230
      %v4232 = vrot.slane %v4231, 1
      %v4233 = vrot.slane %v3911, 1
      %v4234 = vsel %vm954, %v4232, %v4233
      %v4235 = vrot.slane %v3912, 1
      %v4236 = vsel %vm954, %v4233, %v4235
      %v4237 = vrot.slane %v3913, 1
      %v4238 = vsel %vm954, %v4235, %v4237
      %v4239 = vrot.slane %v3914, 1
      %v4240 = vsel %vm954, %v4237, %v4239
      %v4241 = vrot.slane %v3915, 1
      %v4242 = vsel %vm954, %v4239, %v4241
      %v4264 = vunpack.c.l.b16 %v4213
      %v4265 = vunpack.c.l.b16 %v4214
      %v4266 = vunpack.c.l.b16 %v4215
      %v4267 = vunpack.c.l.b16 %v4216
      %v4268 = vunpack.c.l.b16 %v4217
      %v4269 = vunpack.c.l.b16 %v4218
      %v4270 = vunpack.c.l.b16 %v4219
      %v4271 = vunpack.c.l.b16 %v4220
      %v4272 = vunpack.c.l.b16 %v4221
      %v4273 = vunpack.c.l.b16 %v4222
      %v4274 = vunpack.c.l.b16 %v4223
      %v4275 = vunpack.c.l.b16 %v4224
      %v4276 = vunpack.c.l.b16 %v4225
      %v4277 = vunpack.c.l.b16 %v4226
      %v4278 = vunpack.c.l.b16 %v4227
      %v4279 = vunpack.c.l.b16 %v4228
      %v4280 = vpack.c.b16 %v4265, %v4264
      %v4281 = vpack.c.b16 %v4267, %v4266
      %v4282 = vpack.c.b16 %v4269, %v4268
      %v4283 = vpack.c.b16 %v4271, %v4270
      %v4284 = vpack.c.b16 %v4273, %v4272
      %v4285 = vpack.c.b16 %v4275, %v4274
      %v4286 = vpack.c.b16 %v4277, %v4276
      %v4287 = vpack.c.b16 %v4279, %v4278
      %4296 = vmatprep.subr.bf16.mxu0 0
      %4297 = vmatpush1.bf16.msra.mxu0 %v4280
      %4298 = vmatprep.subr.bf16.mxu0 0
      %4299 = vmatpush1.bf16.msra.mxu0 %v4281
      %4300 = vmatprep.subr.bf16.mxu0 0
      %4301 = vmatpush1.bf16.msra.mxu0 %v4282
      %4302 = vmatprep.subr.bf16.mxu0 0
      %4303 = vmatpush1.bf16.msra.mxu0 %v4283
      %4304 = vmatprep.subr.bf16.mxu0 0
      %4305 = vmatpush1.bf16.msra.mxu0 %v4284
      %4306 = vmatprep.subr.bf16.mxu0 0
      %4307 = vmatpush1.bf16.msra.mxu0 %v4285
      %4308 = vmatprep.subr.bf16.mxu0 0
      %4309 = vmatpush1.bf16.msra.mxu0 %v4286
      %4310 = vmatprep.subr.bf16.mxu0 0
      %4311 = vmatpush1.bf16.msra.mxu0 %v4287
      %4312 = vmatprep.subr.bf16.mxu0 0
      %4313 = vmatpush1.bf16.msra.mxu0 0
      %4314 = vmatprep.subr.bf16.mxu0 0
      %4315 = vmatpush1.bf16.msra.mxu0 0
      %4316 = vmatprep.subr.bf16.mxu0 0
      %4317 = vmatpush1.bf16.msra.mxu0 0
      %4318 = vmatprep.subr.bf16.mxu0 0
      %4319 = vmatpush1.bf16.msra.mxu0 0
      %4320 = vmatprep.subr.bf16.mxu0 0
      %4321 = vmatpush1.bf16.msra.mxu0 0
      %4322 = vmatprep.subr.bf16.mxu0 0
      %4323 = vmatpush1.bf16.msra.mxu0 0
      %4324 = vmatprep.subr.bf16.mxu0 0
      %4325 = vmatpush1.bf16.msra.mxu0 0
      %4326 = vmatprep.subr.bf16.mxu0 0
      %4327 = vmatpush1.bf16.msra.mxu0 0
      %4328 = vmatprep.mubr.bf16.mxu0 0
      %4329 = vmatmul.mubr.bf16.gmra.mrb[0].mxu0 %v4234
      %v4330 = vpop.f32.mrb[0].mxu0
      %v4331 = vadd.f32 0.0, %v4330
      %v4332 = vpop.f32.mrb[0].mxu0
      %v4333 = vpop.f32.mrb[0].mxu0
      %v4334 = vadd.f32 0.0, %v4333
      %v4335 = vpop.f32.mrb[0].mxu0
      %4336 = vmatprep.mubr.bf16.mxu0 0
      %4337 = vmatmul.mubr.bf16.gmra.mrb[0].mxu0 %v4236
      %v4338 = vpop.f32.mrb[0].mxu0
      %v4339 = vadd.f32 0.0, %v4338
      %v4340 = vpop.f32.mrb[0].mxu0
      %v4341 = vpop.f32.mrb[0].mxu0
      %v4342 = vadd.f32 0.0, %v4341
      %v4343 = vpop.f32.mrb[0].mxu0
      %4344 = vmatprep.mubr.bf16.mxu0 0
      %4345 = vmatmul.mubr.bf16.gmra.mrb[0].mxu0 %v4238
      %v4346 = vpop.f32.mrb[0].mxu0
      %v4347 = vadd.f32 0.0, %v4346
      %v4348 = vpop.f32.mrb[0].mxu0
      %v4349 = vpop.f32.mrb[0].mxu0
      %v4350 = vadd.f32 0.0, %v4349
      %v4351 = vpop.f32.mrb[0].mxu0
      %4352 = vmatprep.mubr.bf16.mxu0 0
      %4353 = vmatmul.mubr.bf16.gmra.mrb[0].mxu0 %v4240
      %v4354 = vpop.f32.mrb[0].mxu0
      %v4355 = vadd.f32 0.0, %v4354
      %v4356 = vpop.f32.mrb[0].mxu0
      %v4357 = vpop.f32.mrb[0].mxu0
      %v4358 = vadd.f32 0.0, %v4357
      %v4359 = vpop.f32.mrb[0].mxu0
      %4360 = vmatprep.mubr.bf16.mxu0 0
      %4361 = vmatmul.mubr.bf16.gmra.mrb[0].mxu0 %v4242
      %v4362 = vpop.f32.mrb[0].mxu0
      %v4363 = vadd.f32 0.0, %v4362
      %v4364 = vpop.f32.mrb[0].mxu0
      %v4365 = vpop.f32.mrb[0].mxu0
      %v4366 = vadd.f32 0.0, %v4365
      %v4367 = vpop.f32.mrb[0].mxu0
      %4368 = vdwg.mxu0
      %v4369 = vadd.f32 %v4174, %v4331
      %v4370 = vadd.f32 %v4177, %v4334
      %v4371 = vadd.f32 %v4182, %v4339
      %v4372 = vadd.f32 %v4185, %v4342
      %v4373 = vadd.f32 %v4190, %v4347
      %v4374 = vadd.f32 %v4193, %v4350
      %v4375 = vadd.f32 %v4198, %v4355
      %v4376 = vadd.f32 %v4201, %v4358
      %v4377 = vadd.f32 %v4206, %v4363
      %v4378 = vadd.f32 %v4209, %v4366
      %v4379 = vld [vmem:[%s192 + $0x88] sm:$0xe]
      %v4380 = vld [vmem:[%s192 + $0x8c] sm:$0xf]
      %v4381 = vld [vmem:[%s192 + $0x90] sm:$0xf]
      %v4382 = vld [vmem:[%s192 + $0x94] sm:$0xf]
      %v4383 = vld [vmem:[%s192 + $0x98] sm:$0xf]
      %v4384 = vld [vmem:[%s192 + $0x9c] sm:$0xf]
      %v4385 = vld [vmem:[%s192 + $0xa0] sm:$0xf]
      %v4386 = vld [vmem:[%s192 + $0xa4] sm:$0xf]
      %v4387 = vld [vmem:[%s192 + $0xa8] sm:$0xf]
      %v4388 = vld [vmem:[%s192 + $0xac] sm:$0xf]
      %v4389 = vld [vmem:[%s192 + $0xb0] sm:$0x1]
      %v4390 = vld [vmem:[%s1278] sm:$0xf]
      %v4391 = vld [vmem:[%s1278 + $0x4] sm:$0xf]
      %v4392 = vld [vmem:[%s1278 + $0x8] sm:$0xf]
      %v4393 = vld [vmem:[%s1278 + $0xc] sm:$0xf]
      %v4394 = vld [vmem:[%s1278 + $0x10] sm:$0xf]
      %v4395 = vld [vmem:[%s1278 + $0x14] sm:$0xf]
      %v4396 = vld [vmem:[%s1278 + $0x18] sm:$0xf]
      %v4397 = vld [vmem:[%s1278 + $0x1c] sm:$0xf]
      %v4398 = vld [vmem:[%s1278 + $0x20] sm:$0xf]
      %v4399 = vld [vmem:[%s1278 + $0x24] sm:$0xf]
      %v4400 = vld [vmem:[%s1278 + $0x28] sm:$0xf]
      %v4401 = vld [vmem:[%s1278 + $0x2c] sm:$0xf]
      %v4402 = vld [vmem:[%s1278 + $0x30] sm:$0xf]
      %v4403 = vld [vmem:[%s1278 + $0x34] sm:$0xf]
      %v4404 = vld [vmem:[%s1278 + $0x38] sm:$0xf]
      %v4405 = vld [vmem:[%s1278 + $0x3c] sm:$0xf]
      %v4417 = vunpack.c.l.b16 %v4379
      %v4418 = vunpack.c.l.b16 %v4380
      %v4419 = vunpack.c.l.b16 %v4381
      %v4420 = vunpack.c.l.b16 %v4382
      %v4421 = vunpack.c.l.b16 %v4383
      %v4422 = vunpack.c.l.b16 %v4384
      %v4423 = vunpack.c.l.b16 %v4385
      %v4424 = vunpack.c.l.b16 %v4386
      %v4425 = vunpack.c.l.b16 %v4387
      %v4426 = vunpack.c.l.b16 %v4388
      %v4427 = vunpack.c.l.b16 %v4389
      %v4428 = vpack.c.b16 %v4418, %v4417
      %v4429 = vpack.c.b16 %v4420, %v4419
      %v4430 = vpack.c.b16 %v4422, %v4421
      %v4431 = vpack.c.b16 %v4424, %v4423
      %v4432 = vpack.c.b16 %v4426, %v4425
      %v4433 = vpack.c.b16 %v4427, %v4427
      %v4434 = vrot.slane %v4428, 1
      %v4435 = vrot.slane %v4429, 1
      %v4436 = vsel %vm954, %v4434, %v4435
      %v4437 = vrot.slane %v4430, 1
      %v4438 = vsel %vm954, %v4435, %v4437
      %v4439 = vrot.slane %v4431, 1
      %v4440 = vsel %vm954, %v4437, %v4439
      %v4441 = vrot.slane %v4432, 1
      %v4442 = vsel %vm954, %v4439, %v4441
      %v4443 = vrot.slane %v4433, 1
      %v4444 = vsel %vm954, %v4441, %v4443
      %v4466 = vunpack.c.l.b16 %v4390
      %v4467 = vunpack.c.l.b16 %v4391
      %v4468 = vunpack.c.l.b16 %v4392
      %v4469 = vunpack.c.l.b16 %v4393
      %v4470 = vunpack.c.l.b16 %v4394
      %v4471 = vunpack.c.l.b16 %v4395
      %v4472 = vunpack.c.l.b16 %v4396
      %v4473 = vunpack.c.l.b16 %v4397
      %v4474 = vunpack.c.l.b16 %v4398
      %v4475 = vunpack.c.l.b16 %v4399
      %v4476 = vunpack.c.l.b16 %v4400
      %v4477 = vunpack.c.l.b16 %v4401
      %v4478 = vunpack.c.l.b16 %v4402
      %v4479 = vunpack.c.l.b16 %v4403
      %v4480 = vunpack.c.l.b16 %v4404
      %v4481 = vunpack.c.l.b16 %v4405
      %v4482 = vpack.c.b16 %v4467, %v4466
      %v4483 = vpack.c.b16 %v4469, %v4468
      %v4484 = vpack.c.b16 %v4471, %v4470
      %v4485 = vpack.c.b16 %v4473, %v4472
      %v4486 = vpack.c.b16 %v4475, %v4474
      %v4487 = vpack.c.b16 %v4477, %v4476
      %v4488 = vpack.c.b16 %v4479, %v4478
      %v4489 = vpack.c.b16 %v4481, %v4480
      %4498 = vmatprep.subr.bf16.mxu0 0
      %4499 = vmatpush1.bf16.msra.mxu0 %v4482
      %4500 = vmatprep.subr.bf16.mxu0 0
      %4501 = vmatpush1.bf16.msra.mxu0 %v4483
      %4502 = vmatprep.subr.bf16.mxu0 0
      %4503 = vmatpush1.bf16.msra.mxu0 %v4484
      %4504 = vmatprep.subr.bf16.mxu0 0
      %4505 = vmatpush1.bf16.msra.mxu0 %v4485
      %4506 = vmatprep.subr.bf16.mxu0 0
      %4507 = vmatpush1.bf16.msra.mxu0 %v4486
      %4508 = vmatprep.subr.bf16.mxu0 0
      %4509 = vmatpush1.bf16.msra.mxu0 %v4487
      %4510 = vmatprep.subr.bf16.mxu0 0
      %4511 = vmatpush1.bf16.msra.mxu0 %v4488
      %4512 = vmatprep.subr.bf16.mxu0 0
      %4513 = vmatpush1.bf16.msra.mxu0 %v4489
      %4514 = vmatprep.subr.bf16.mxu0 0
      %4515 = vmatpush1.bf16.msra.mxu0 0
      %4516 = vmatprep.subr.bf16.mxu0 0
      %4517 = vmatpush1.bf16.msra.mxu0 0
      %4518 = vmatprep.subr.bf16.mxu0 0
      %4519 = vmatpush1.bf16.msra.mxu0 0
      %4520 = vmatprep.subr.bf16.mxu0 0
      %4521 = vmatpush1.bf16.msra.mxu0 0
      %4522 = vmatprep.subr.bf16.mxu0 0
      %4523 = vmatpush1.bf16.msra.mxu0 0
      %4524 = vmatprep.subr.bf16.mxu0 0
      %4525 = vmatpush1.bf16.msra.mxu0 0
      %4526 = vmatprep.subr.bf16.mxu0 0
      %4527 = vmatpush1.bf16.msra.mxu0 0
      %4528 = vmatprep.subr.bf16.mxu0 0
      %4529 = vmatpush1.bf16.msra.mxu0 0
      %4530 = vmatprep.mubr.bf16.mxu0 0
      %4531 = vmatmul.mubr.bf16.gmra.mrb[0].mxu0 %v4436
      %v4532 = vpop.f32.mrb[0].mxu0
      %v4533 = vadd.f32 0.0, %v4532
      %v4534 = vpop.f32.mrb[0].mxu0
      %v4535 = vpop.f32.mrb[0].mxu0
      %v4536 = vadd.f32 0.0, %v4535
      %v4537 = vpop.f32.mrb[0].mxu0
      %4538 = vmatprep.mubr.bf16.mxu0 0
      %4539 = vmatmul.mubr.bf16.gmra.mrb[0].mxu0 %v4438
      %v4540 = vpop.f32.mrb[0].mxu0
      %v4541 = vadd.f32 0.0, %v4540
      %v4542 = vpop.f32.mrb[0].mxu0
      %v4543 = vpop.f32.mrb[0].mxu0
      %v4544 = vadd.f32 0.0, %v4543
      %v4545 = vpop.f32.mrb[0].mxu0
      %4546 = vmatprep.mubr.bf16.mxu0 0
      %4547 = vmatmul.mubr.bf16.gmra.mrb[0].mxu0 %v4440
      %v4548 = vpop.f32.mrb[0].mxu0
      %v4549 = vadd.f32 0.0, %v4548
      %v4550 = vpop.f32.mrb[0].mxu0
      %v4551 = vpop.f32.mrb[0].mxu0
      %v4552 = vadd.f32 0.0, %v4551
      %v4553 = vpop.f32.mrb[0].mxu0
      %4554 = vmatprep.mubr.bf16.mxu0 0
      %4555 = vmatmul.mubr.bf16.gmra.mrb[0].mxu0 %v4442
      %v4556 = vpop.f32.mrb[0].mxu0
      %v4557 = vadd.f32 0.0, %v4556
      %v4558 = vpop.f32.mrb[0].mxu0
      %v4559 = vpop.f32.mrb[0].mxu0
      %v4560 = vadd.f32 0.0, %v4559
      %v4561 = vpop.f32.mrb[0].mxu0
      %4562 = vmatprep.mubr.bf16.mxu0 0
      %4563 = vmatmul.mubr.bf16.gmra.mrb[0].mxu0 %v4444
      %v4564 = vpop.f32.mrb[0].mxu0
      %v4565 = vadd.f32 0.0, %v4564
      %v4566 = vpop.f32.mrb[0].mxu0
      %v4567 = vpop.f32.mrb[0].mxu0
      %v4568 = vadd.f32 0.0, %v4567
      %v4569 = vpop.f32.mrb[0].mxu0
      %4570 = vdwg.mxu0
      %v4571 = vadd.f32 %v4369, %v4533
      %v4572 = vadd.f32 %v4370, %v4536
      %v4573 = vadd.f32 %v4371, %v4541
      %v4574 = vadd.f32 %v4372, %v4544
      %v4575 = vadd.f32 %v4373, %v4549
      %v4576 = vadd.f32 %v4374, %v4552
      %v4577 = vadd.f32 %v4375, %v4557
      %v4578 = vadd.f32 %v4376, %v4560
      %v4579 = vadd.f32 %v4377, %v4565
      %v4580 = vadd.f32 %v4378, %v4568
      %v4581 = vld [vmem:[%s192 + $0xb0] sm:$0x3]
      %v4582 = vld [vmem:[%s1669] sm:$0xf]
      %v4583 = vld [vmem:[%s1669 + $0x4] sm:$0xf]
      %v4584 = vld [vmem:[%s1669 + $0x8] sm:$0xf]
      %v4585 = vld [vmem:[%s1669 + $0xc] sm:$0xf]
      %v4586 = vld [vmem:[%s1669 + $0x10] sm:$0xf]
      %v4587 = vld [vmem:[%s1669 + $0x14] sm:$0xf]
      %v4588 = vld [vmem:[%s1669 + $0x18] sm:$0xf]
      %v4589 = vld [vmem:[%s1669 + $0x1c] sm:$0xf]
      %v4590 = vld [vmem:[%s1669 + $0x20] sm:$0xf]
      %v4591 = vld [vmem:[%s1669 + $0x24] sm:$0xf]
      %v4592 = vld [vmem:[%s1669 + $0x28] sm:$0xf]
      %v4593 = vld [vmem:[%s1669 + $0x2c] sm:$0xf]
      %v4594 = vld [vmem:[%s1669 + $0x30] sm:$0xf]
      %v4595 = vld [vmem:[%s1669 + $0x34] sm:$0xf]
      %v4596 = vld [vmem:[%s1669 + $0x38] sm:$0xf]
      %v4597 = vld [vmem:[%s1669 + $0x3c] sm:$0xf]
      %v4599 = vunpack.c.l.b16 %v4581
      %v4600 = vpack.c.b16 %v4599, %v4599
      %v4602 = vshrl.u32 %v4428, 16
      %v4604 = vrot.slane %v4602, 1
      %v4605 = vshll.u32 %v4428, 16
      %v4607 = vrot.slane %v4605, 2
      %v4608 = vor.u32 %v4604, %v4607
      %v4610 = vshrl.u32 %v4429, 16
      %v4612 = vrot.slane %v4610, 1
      %v4613 = vshll.u32 %v4429, 16
      %v4615 = vrot.slane %v4613, 2
      %v4616 = vor.u32 %v4612, %v4615
      %v4617 = vsel %vm1689, %v4608, %v4616
      %v4619 = vshrl.u32 %v4430, 16
      %v4621 = vrot.slane %v4619, 1
      %v4622 = vshll.u32 %v4430, 16
      %v4624 = vrot.slane %v4622, 2
      %v4625 = vor.u32 %v4621, %v4624
      %v4626 = vsel %vm1689, %v4616, %v4625
      %v4628 = vshrl.u32 %v4431, 16
      %v4630 = vrot.slane %v4628, 1
      %v4631 = vshll.u32 %v4431, 16
      %v4633 = vrot.slane %v4631, 2
      %v4634 = vor.u32 %v4630, %v4633
      %v4635 = vsel %vm1689, %v4625, %v4634
      %v4637 = vshrl.u32 %v4432, 16
      %v4639 = vrot.slane %v4637, 1
      %v4640 = vshll.u32 %v4432, 16
      %v4642 = vrot.slane %v4640, 2
      %v4643 = vor.u32 %v4639, %v4642
      %v4644 = vsel %vm1689, %v4634, %v4643
      %v4646 = vshrl.u32 %v4600, 16
      %v4648 = vrot.slane %v4646, 1
      %v4649 = vshll.u32 %v4600, 16
      %v4651 = vrot.slane %v4649, 2
      %v4652 = vor.u32 %v4648, %v4651
      %v4653 = vsel %vm1689, %v4643, %v4652
      %v4675 = vunpack.c.l.b16 %v4582
      %v4676 = vunpack.c.l.b16 %v4583
      %v4677 = vunpack.c.l.b16 %v4584
      %v4678 = vunpack.c.l.b16 %v4585
      %v4679 = vunpack.c.l.b16 %v4586
      %v4680 = vunpack.c.l.b16 %v4587
      %v4681 = vunpack.c.l.b16 %v4588
      %v4682 = vunpack.c.l.b16 %v4589
      %v4683 = vunpack.c.l.b16 %v4590
      %v4684 = vunpack.c.l.b16 %v4591
      %v4685 = vunpack.c.l.b16 %v4592
      %v4686 = vunpack.c.l.b16 %v4593
      %v4687 = vunpack.c.l.b16 %v4594
      %v4688 = vunpack.c.l.b16 %v4595
      %v4689 = vunpack.c.l.b16 %v4596
      %v4690 = vunpack.c.l.b16 %v4597
      %v4691 = vpack.c.b16 %v4676, %v4675
      %v4692 = vpack.c.b16 %v4678, %v4677
      %v4693 = vpack.c.b16 %v4680, %v4679
      %v4694 = vpack.c.b16 %v4682, %v4681
      %v4695 = vpack.c.b16 %v4684, %v4683
      %v4696 = vpack.c.b16 %v4686, %v4685
      %v4697 = vpack.c.b16 %v4688, %v4687
      %v4698 = vpack.c.b16 %v4690, %v4689
      %4707 = vmatprep.subr.bf16.mxu0 0
      %4708 = vmatpush1.bf16.msra.mxu0 %v4691
      %4709 = vmatprep.subr.bf16.mxu0 0
      %4710 = vmatpush1.bf16.msra.mxu0 %v4692
      %4711 = vmatprep.subr.bf16.mxu0 0
      %4712 = vmatpush1.bf16.msra.mxu0 %v4693
      %4713 = vmatprep.subr.bf16.mxu0 0
      %4714 = vmatpush1.bf16.msra.mxu0 %v4694
      %4715 = vmatprep.subr.bf16.mxu0 0
      %4716 = vmatpush1.bf16.msra.mxu0 %v4695
      %4717 = vmatprep.subr.bf16.mxu0 0
      %4718 = vmatpush1.bf16.msra.mxu0 %v4696
      %4719 = vmatprep.subr.bf16.mxu0 0
      %4720 = vmatpush1.bf16.msra.mxu0 %v4697
      %4721 = vmatprep.subr.bf16.mxu0 0
      %4722 = vmatpush1.bf16.msra.mxu0 %v4698
      %4723 = vmatprep.subr.bf16.mxu0 0
      %4724 = vmatpush1.bf16.msra.mxu0 0
      %4725 = vmatprep.subr.bf16.mxu0 0
      %4726 = vmatpush1.bf16.msra.mxu0 0
      %4727 = vmatprep.subr.bf16.mxu0 0
      %4728 = vmatpush1.bf16.msra.mxu0 0
      %4729 = vmatprep.subr.bf16.mxu0 0
      %4730 = vmatpush1.bf16.msra.mxu0 0
      %4731 = vmatprep.subr.bf16.mxu0 0
      %4732 = vmatpush1.bf16.msra.mxu0 0
      %4733 = vmatprep.subr.bf16.mxu0 0
      %4734 = vmatpush1.bf16.msra.mxu0 0
      %4735 = vmatprep.subr.bf16.mxu0 0
      %4736 = vmatpush1.bf16.msra.mxu0 0
      %4737 = vmatprep.subr.bf16.mxu0 0
      %4738 = vmatpush1.bf16.msra.mxu0 0
      %4739 = vmatprep.mubr.bf16.mxu0 0
      %4740 = vmatmul.mubr.bf16.gmra.mrb[0].mxu0 %v4617
      %v4741 = vpop.f32.mrb[0].mxu0
      %v4742 = vadd.f32 0.0, %v4741
      %v4743 = vpop.f32.mrb[0].mxu0
      %v4744 = vpop.f32.mrb[0].mxu0
      %v4745 = vadd.f32 0.0, %v4744
      %v4746 = vpop.f32.mrb[0].mxu0
      %4747 = vmatprep.mubr.bf16.mxu0 0
      %4748 = vmatmul.mubr.bf16.gmra.mrb[0].mxu0 %v4626
      %v4749 = vpop.f32.mrb[0].mxu0
      %v4750 = vadd.f32 0.0, %v4749
      %v4751 = vpop.f32.mrb[0].mxu0
      %v4752 = vpop.f32.mrb[0].mxu0
      %v4753 = vadd.f32 0.0, %v4752
      %v4754 = vpop.f32.mrb[0].mxu0
      %4755 = vmatprep.mubr.bf16.mxu0 0
      %4756 = vmatmul.mubr.bf16.gmra.mrb[0].mxu0 %v4635
      %v4757 = vpop.f32.mrb[0].mxu0
      %v4758 = vadd.f32 0.0, %v4757
      %v4759 = vpop.f32.mrb[0].mxu0
      %v4760 = vpop.f32.mrb[0].mxu0
      %v4761 = vadd.f32 0.0, %v4760
      %v4762 = vpop.f32.mrb[0].mxu0
      %4763 = vmatprep.mubr.bf16.mxu0 0
      %4764 = vmatmul.mubr.bf16.gmra.mrb[0].mxu0 %v4644
      %v4765 = vpop.f32.mrb[0].mxu0
      %v4766 = vadd.f32 0.0, %v4765
      %v4767 = vpop.f32.mrb[0].mxu0
      %v4768 = vpop.f32.mrb[0].mxu0
      %v4769 = vadd.f32 0.0, %v4768
      %v4770 = vpop.f32.mrb[0].mxu0
      %4771 = vmatprep.mubr.bf16.mxu0 0
      %4772 = vmatmul.mubr.bf16.gmra.mrb[0].mxu0 %v4653
      %v4773 = vpop.f32.mrb[0].mxu0
      %v4774 = vadd.f32 0.0, %v4773
      %v4775 = vpop.f32.mrb[0].mxu0
      %v4776 = vpop.f32.mrb[0].mxu0
      %v4777 = vadd.f32 0.0, %v4776
      %v4778 = vpop.f32.mrb[0].mxu0
      %4779 = vdwg.mxu0
      %v4780 = vadd.f32 %v4571, %v4742
      %v4781 = vadd.f32 %v4572, %v4745
      %v4782 = vadd.f32 %v4573, %v4750
      %v4783 = vadd.f32 %v4574, %v4753
      %v4784 = vadd.f32 %v4575, %v4758
      %v4785 = vadd.f32 %v4576, %v4761
      %v4786 = vadd.f32 %v4577, %v4766
      %v4787 = vadd.f32 %v4578, %v4769
      %v4788 = vadd.f32 %v4579, %v4774
      %v4789 = vadd.f32 %v4580, %v4777
      %v4790 = vld [vmem:[%s192 + $0x88] sm:$0xc]
      %v4791 = vld [vmem:[%s2100] sm:$0xf]
      %v4792 = vld [vmem:[%s2100 + $0x4] sm:$0xf]
      %v4793 = vld [vmem:[%s2100 + $0x8] sm:$0xf]
      %v4794 = vld [vmem:[%s2100 + $0xc] sm:$0xf]
      %v4795 = vld [vmem:[%s2100 + $0x10] sm:$0xf]
      %v4796 = vld [vmem:[%s2100 + $0x14] sm:$0xf]
      %v4797 = vld [vmem:[%s2100 + $0x18] sm:$0xf]
      %v4798 = vld [vmem:[%s2100 + $0x1c] sm:$0xf]
      %v4799 = vld [vmem:[%s2100 + $0x20] sm:$0xf]
      %v4800 = vld [vmem:[%s2100 + $0x24] sm:$0xf]
      %v4801 = vld [vmem:[%s2100 + $0x28] sm:$0xf]
      %v4802 = vld [vmem:[%s2100 + $0x2c] sm:$0xf]
      %v4803 = vld [vmem:[%s2100 + $0x30] sm:$0xf]
      %v4804 = vld [vmem:[%s2100 + $0x34] sm:$0xf]
      %v4805 = vld [vmem:[%s2100 + $0x38] sm:$0xf]
      %v4806 = vld [vmem:[%s2100 + $0x3c] sm:$0xf]
      %v4808 = vunpack.c.l.b16 %v4790
      %v4809 = vpack.c.b16 %v4418, %v4808
      %v4810 = vrot.slane %v4809, 2
      %v4811 = vrot.slane %v4429, 2
      %v4812 = vsel %vm2120, %v4810, %v4811
      %v4813 = vrot.slane %v4430, 2
      %v4814 = vsel %vm2120, %v4811, %v4813
      %v4815 = vrot.slane %v4431, 2
      %v4816 = vsel %vm2120, %v4813, %v4815
      %v4817 = vrot.slane %v4432, 2
      %v4818 = vsel %vm2120, %v4815, %v4817
      %v4819 = vrot.slane %v4600, 2
      %v4820 = vsel %vm2120, %v4817, %v4819
      %v4842 = vunpack.c.l.b16 %v4791
      %v4843 = vunpack.c.l.b16 %v4792
      %v4844 = vunpack.c.l.b16 %v4793
      %v4845 = vunpack.c.l.b16 %v4794
      %v4846 = vunpack.c.l.b16 %v4795
      %v4847 = vunpack.c.l.b16 %v4796
      %v4848 = vunpack.c.l.b16 %v4797
      %v4849 = vunpack.c.l.b16 %v4798
      %v4850 = vunpack.c.l.b16 %v4799
      %v4851 = vunpack.c.l.b16 %v4800
      %v4852 = vunpack.c.l.b16 %v4801
      %v4853 = vunpack.c.l.b16 %v4802
      %v4854 = vunpack.c.l.b16 %v4803
      %v4855 = vunpack.c.l.b16 %v4804
      %v4856 = vunpack.c.l.b16 %v4805
      %v4857 = vunpack.c.l.b16 %v4806
      %v4858 = vpack.c.b16 %v4843, %v4842
      %v4859 = vpack.c.b16 %v4845, %v4844
      %v4860 = vpack.c.b16 %v4847, %v4846
      %v4861 = vpack.c.b16 %v4849, %v4848
      %v4862 = vpack.c.b16 %v4851, %v4850
      %v4863 = vpack.c.b16 %v4853, %v4852
      %v4864 = vpack.c.b16 %v4855, %v4854
      %v4865 = vpack.c.b16 %v4857, %v4856
      %4874 = vmatprep.subr.bf16.mxu0 0
      %4875 = vmatpush1.bf16.msra.mxu0 %v4858
      %4876 = vmatprep.subr.bf16.mxu0 0
      %4877 = vmatpush1.bf16.msra.mxu0 %v4859
      %4878 = vmatprep.subr.bf16.mxu0 0
      %4879 = vmatpush1.bf16.msra.mxu0 %v4860
      %4880 = vmatprep.subr.bf16.mxu0 0
      %4881 = vmatpush1.bf16.msra.mxu0 %v4861
      %4882 = vmatprep.subr.bf16.mxu0 0
      %4883 = vmatpush1.bf16.msra.mxu0 %v4862
      %4884 = vmatprep.subr.bf16.mxu0 0
      %4885 = vmatpush1.bf16.msra.mxu0 %v4863
      %4886 = vmatprep.subr.bf16.mxu0 0
      %4887 = vmatpush1.bf16.msra.mxu0 %v4864
      %4888 = vmatprep.subr.bf16.mxu0 0
      %4889 = vmatpush1.bf16.msra.mxu0 %v4865
      %4890 = vmatprep.subr.bf16.mxu0 0
      %4891 = vmatpush1.bf16.msra.mxu0 0
      %4892 = vmatprep.subr.bf16.mxu0 0
      %4893 = vmatpush1.bf16.msra.mxu0 0
      %4894 = vmatprep.subr.bf16.mxu0 0
      %4895 = vmatpush1.bf16.msra.mxu0 0
      %4896 = vmatprep.subr.bf16.mxu0 0
      %4897 = vmatpush1.bf16.msra.mxu0 0
      %4898 = vmatprep.subr.bf16.mxu0 0
      %4899 = vmatpush1.bf16.msra.mxu0 0
      %4900 = vmatprep.subr.bf16.mxu0 0
      %4901 = vmatpush1.bf16.msra.mxu0 0
      %4902 = vmatprep.subr.bf16.mxu0 0
      %4903 = vmatpush1.bf16.msra.mxu0 0
      %4904 = vmatprep.subr.bf16.mxu0 0
      %4905 = vmatpush1.bf16.msra.mxu0 0
      %4906 = vmatprep.mubr.bf16.mxu0 0
      %4907 = vmatmul.mubr.bf16.gmra.mrb[0].mxu0 %v4812
      %v4908 = vpop.f32.mrb[0].mxu0
      %v4909 = vadd.f32 0.0, %v4908
      %v4910 = vpop.f32.mrb[0].mxu0
      %v4911 = vpop.f32.mrb[0].mxu0
      %v4912 = vadd.f32 0.0, %v4911
      %v4913 = vpop.f32.mrb[0].mxu0
      %4914 = vmatprep.mubr.bf16.mxu0 0
      %4915 = vmatmul.mubr.bf16.gmra.mrb[0].mxu0 %v4814
      %v4916 = vpop.f32.mrb[0].mxu0
      %v4917 = vadd.f32 0.0, %v4916
      %v4918 = vpop.f32.mrb[0].mxu0
      %v4919 = vpop.f32.mrb[0].mxu0
      %v4920 = vadd.f32 0.0, %v4919
      %v4921 = vpop.f32.mrb[0].mxu0
      %4922 = vmatprep.mubr.bf16.mxu0 0
      %4923 = vmatmul.mubr.bf16.gmra.mrb[0].mxu0 %v4816
      %v4924 = vpop.f32.mrb[0].mxu0
      %v4925 = vadd.f32 0.0, %v4924
      %v4926 = vpop.f32.mrb[0].mxu0
      %v4927 = vpop.f32.mrb[0].mxu0
      %v4928 = vadd.f32 0.0, %v4927
      %v4929 = vpop.f32.mrb[0].mxu0
      %4930 = vmatprep.mubr.bf16.mxu0 0
      %4931 = vmatmul.mubr.bf16.gmra.mrb[0].mxu0 %v4818
      %v4932 = vpop.f32.mrb[0].mxu0
      %v4933 = vadd.f32 0.0, %v4932
      %v4934 = vpop.f32.mrb[0].mxu0
      %v4935 = vpop.f32.mrb[0].mxu0
      %v4936 = vadd.f32 0.0, %v4935
      %v4937 = vpop.f32.mrb[0].mxu0
      %4938 = vmatprep.mubr.bf16.mxu0 0
      %4939 = vmatmul.mubr.bf16.gmra.mrb[0].mxu0 %v4820
      %v4940 = vpop.f32.mrb[0].mxu0
      %v4941 = vadd.f32 0.0, %v4940
      %v4942 = vpop.f32.mrb[0].mxu0
      %v4943 = vpop.f32.mrb[0].mxu0
      %v4944 = vadd.f32 0.0, %v4943
      %v4945 = vpop.f32.mrb[0].mxu0
      %4946 = vdwg.mxu0
      %v4947 = vadd.f32 %v4780, %v4909
      %v4948 = vadd.f32 %v4781, %v4912
      %v4949 = vadd.f32 %v4782, %v4917
      %v4950 = vadd.f32 %v4783, %v4920
      %v4951 = vadd.f32 %v4784, %v4925
      %v4952 = vadd.f32 %v4785, %v4928
      %v4953 = vadd.f32 %v4786, %v4933
      %v4954 = vadd.f32 %v4787, %v4936
      %v4955 = vadd.f32 %v4788, %v4941
      %v4956 = vadd.f32 %v4789, %v4944
      %v4957 = vld [vmem:[%s192 + $0x90] sm:$0xc]
      %v4958 = vld [vmem:[%s192 + $0x94] sm:$0xf]
      %v4959 = vld [vmem:[%s192 + $0x98] sm:$0xf]
      %v4960 = vld [vmem:[%s192 + $0x9c] sm:$0xf]
      %v4961 = vld [vmem:[%s192 + $0xa0] sm:$0xf]
      %v4962 = vld [vmem:[%s192 + $0xa4] sm:$0xf]
      %v4963 = vld [vmem:[%s192 + $0xa8] sm:$0xf]
      %v4964 = vld [vmem:[%s192 + $0xac] sm:$0xf]
      %v4965 = vld [vmem:[%s192 + $0xb0] sm:$0xf]
      %v4966 = vld [vmem:[%s192 + $0xb4] sm:$0xf]
      %v4967 = vld [vmem:[%s192 + $0xb8] sm:$0x3]
      %v4968 = vld [vmem:[%s2444] sm:$0xf]
      %v4969 = vld [vmem:[%s2444 + $0x4] sm:$0xf]
      %v4970 = vld [vmem:[%s2444 + $0x8] sm:$0xf]
      %v4971 = vld [vmem:[%s2444 + $0xc] sm:$0xf]
      %v4972 = vld [vmem:[%s2444 + $0x10] sm:$0xf]
      %v4973 = vld [vmem:[%s2444 + $0x14] sm:$0xf]
      %v4974 = vld [vmem:[%s2444 + $0x18] sm:$0xf]
      %v4975 = vld [vmem:[%s2444 + $0x1c] sm:$0xf]
      %v4976 = vld [vmem:[%s2444 + $0x20] sm:$0xf]
      %v4977 = vld [vmem:[%s2444 + $0x24] sm:$0xf]
      %v4978 = vld [vmem:[%s2444 + $0x28] sm:$0xf]
      %v4979 = vld [vmem:[%s2444 + $0x2c] sm:$0xf]
      %v4980 = vld [vmem:[%s2444 + $0x30] sm:$0xf]
      %v4981 = vld [vmem:[%s2444 + $0x34] sm:$0xf]
      %v4982 = vld [vmem:[%s2444 + $0x38] sm:$0xf]
      %v4983 = vld [vmem:[%s2444 + $0x3c] sm:$0xf]
      %v4995 = vunpack.c.l.b16 %v4957
      %v4996 = vunpack.c.l.b16 %v4958
      %v4997 = vunpack.c.l.b16 %v4959
      %v4998 = vunpack.c.l.b16 %v4960
      %v4999 = vunpack.c.l.b16 %v4961
      %v5000 = vunpack.c.l.b16 %v4962
      %v5001 = vunpack.c.l.b16 %v4963
      %v5002 = vunpack.c.l.b16 %v4964
      %v5003 = vunpack.c.l.b16 %v4965
      %v5004 = vunpack.c.l.b16 %v4966
      %v5005 = vunpack.c.l.b16 %v4967
      %v5006 = vpack.c.b16 %v4996, %v4995
      %v5007 = vpack.c.b16 %v4998, %v4997
      %v5008 = vpack.c.b16 %v5000, %v4999
      %v5009 = vpack.c.b16 %v5002, %v5001
      %v5010 = vpack.c.b16 %v5004, %v5003
      %v5011 = vpack.c.b16 %v5005, %v5005
      %v5012 = vrot.slane %v5006, 2
      %v5013 = vrot.slane %v5007, 2
      %v5014 = vsel %vm2120, %v5012, %v5013
      %v5015 = vrot.slane %v5008, 2
      %v5016 = vsel %vm2120, %v5013, %v5015
      %v5017 = vrot.slane %v5009, 2
      %v5018 = vsel %vm2120, %v5015, %v5017
      %v5019 = vrot.slane %v5010, 2
      %v5020 = vsel %vm2120, %v5017, %v5019
      %v5021 = vrot.slane %v5011, 2
      %v5022 = vsel %vm2120, %v5019, %v5021
      %v5044 = vunpack.c.l.b16 %v4968
      %v5045 = vunpack.c.l.b16 %v4969
      %v5046 = vunpack.c.l.b16 %v4970
      %v5047 = vunpack.c.l.b16 %v4971
      %v5048 = vunpack.c.l.b16 %v4972
      %v5049 = vunpack.c.l.b16 %v4973
      %v5050 = vunpack.c.l.b16 %v4974
      %v5051 = vunpack.c.l.b16 %v4975
      %v5052 = vunpack.c.l.b16 %v4976
      %v5053 = vunpack.c.l.b16 %v4977
      %v5054 = vunpack.c.l.b16 %v4978
      %v5055 = vunpack.c.l.b16 %v4979
      %v5056 = vunpack.c.l.b16 %v4980
      %v5057 = vunpack.c.l.b16 %v4981
      %v5058 = vunpack.c.l.b16 %v4982
      %v5059 = vunpack.c.l.b16 %v4983
      %v5060 = vpack.c.b16 %v5045, %v5044
      %v5061 = vpack.c.b16 %v5047, %v5046
      %v5062 = vpack.c.b16 %v5049, %v5048
      %v5063 = vpack.c.b16 %v5051, %v5050
      %v5064 = vpack.c.b16 %v5053, %v5052
      %v5065 = vpack.c.b16 %v5055, %v5054
      %v5066 = vpack.c.b16 %v5057, %v5056
      %v5067 = vpack.c.b16 %v5059, %v5058
      %5076 = vmatprep.subr.bf16.mxu0 0
      %5077 = vmatpush1.bf16.msra.mxu0 %v5060
      %5078 = vmatprep.subr.bf16.mxu0 0
      %5079 = vmatpush1.bf16.msra.mxu0 %v5061
      %5080 = vmatprep.subr.bf16.mxu0 0
      %5081 = vmatpush1.bf16.msra.mxu0 %v5062
      %5082 = vmatprep.subr.bf16.mxu0 0
      %5083 = vmatpush1.bf16.msra.mxu0 %v5063
      %5084 = vmatprep.subr.bf16.mxu0 0
      %5085 = vmatpush1.bf16.msra.mxu0 %v5064
      %5086 = vmatprep.subr.bf16.mxu0 0
      %5087 = vmatpush1.bf16.msra.mxu0 %v5065
      %5088 = vmatprep.subr.bf16.mxu0 0
      %5089 = vmatpush1.bf16.msra.mxu0 %v5066
      %5090 = vmatprep.subr.bf16.mxu0 0
      %5091 = vmatpush1.bf16.msra.mxu0 %v5067
      %5092 = vmatprep.subr.bf16.mxu0 0
      %5093 = vmatpush1.bf16.msra.mxu0 0
      %5094 = vmatprep.subr.bf16.mxu0 0
      %5095 = vmatpush1.bf16.msra.mxu0 0
      %5096 = vmatprep.subr.bf16.mxu0 0
      %5097 = vmatpush1.bf16.msra.mxu0 0
      %5098 = vmatprep.subr.bf16.mxu0 0
      %5099 = vmatpush1.bf16.msra.mxu0 0
      %5100 = vmatprep.subr.bf16.mxu0 0
      %5101 = vmatpush1.bf16.msra.mxu0 0
      %5102 = vmatprep.subr.bf16.mxu0 0
      %5103 = vmatpush1.bf16.msra.mxu0 0
      %5104 = vmatprep.subr.bf16.mxu0 0
      %5105 = vmatpush1.bf16.msra.mxu0 0
      %5106 = vmatprep.subr.bf16.mxu0 0
      %5107 = vmatpush1.bf16.msra.mxu0 0
      %5108 = vmatprep.mubr.bf16.mxu0 0
      %5109 = vmatmul.mubr.bf16.gmra.mrb[0].mxu0 %v5014
      %v5110 = vpop.f32.mrb[0].mxu0
      %v5111 = vadd.f32 0.0, %v5110
      %v5112 = vpop.f32.mrb[0].mxu0
      %v5113 = vpop.f32.mrb[0].mxu0
      %v5114 = vadd.f32 0.0, %v5113
      %v5115 = vpop.f32.mrb[0].mxu0
      %5116 = vmatprep.mubr.bf16.mxu0 0
      %5117 = vmatmul.mubr.bf16.gmra.mrb[0].mxu0 %v5016
      %v5118 = vpop.f32.mrb[0].mxu0
      %v5119 = vadd.f32 0.0, %v5118
      %v5120 = vpop.f32.mrb[0].mxu0
      %v5121 = vpop.f32.mrb[0].mxu0
      %v5122 = vadd.f32 0.0, %v5121
      %v5123 = vpop.f32.mrb[0].mxu0
      %5124 = vmatprep.mubr.bf16.mxu0 0
      %5125 = vmatmul.mubr.bf16.gmra.mrb[0].mxu0 %v5018
      %v5126 = vpop.f32.mrb[0].mxu0
      %v5127 = vadd.f32 0.0, %v5126
      %v5128 = vpop.f32.mrb[0].mxu0
      %v5129 = vpop.f32.mrb[0].mxu0
      %v5130 = vadd.f32 0.0, %v5129
      %v5131 = vpop.f32.mrb[0].mxu0
      %5132 = vmatprep.mubr.bf16.mxu0 0
      %5133 = vmatmul.mubr.bf16.gmra.mrb[0].mxu0 %v5020
      %v5134 = vpop.f32.mrb[0].mxu0
      %v5135 = vadd.f32 0.0, %v5134
      %v5136 = vpop.f32.mrb[0].mxu0
      %v5137 = vpop.f32.mrb[0].mxu0
      %v5138 = vadd.f32 0.0, %v5137
      %v5139 = vpop.f32.mrb[0].mxu0
      %5140 = vmatprep.mubr.bf16.mxu0 0
      %5141 = vmatmul.mubr.bf16.gmra.mrb[0].mxu0 %v5022
      %v5142 = vpop.f32.mrb[0].mxu0
      %v5143 = vadd.f32 0.0, %v5142
      %v5144 = vpop.f32.mrb[0].mxu0
      %v5145 = vpop.f32.mrb[0].mxu0
      %v5146 = vadd.f32 0.0, %v5145
      %v5147 = vpop.f32.mrb[0].mxu0
      %5148 = vdwg.mxu0
      %v5149 = vadd.f32 %v4947, %v5111
      %v5150 = vadd.f32 %v4948, %v5114
      %v5151 = vadd.f32 %v4949, %v5119
      %v5152 = vadd.f32 %v4950, %v5122
      %v5153 = vadd.f32 %v4951, %v5127
      %v5154 = vadd.f32 %v4952, %v5130
      %v5155 = vadd.f32 %v4953, %v5135
      %v5156 = vadd.f32 %v4954, %v5138
      %v5157 = vadd.f32 %v4955, %v5143
      %v5158 = vadd.f32 %v4956, %v5146
      %v5159 = vld [vmem:[%s192 + $0xb8] sm:$0x7]
      %v5160 = vld [vmem:[%s2835] sm:$0xf]
      %v5161 = vld [vmem:[%s2835 + $0x4] sm:$0xf]
      %v5162 = vld [vmem:[%s2835 + $0x8] sm:$0xf]
      %v5163 = vld [vmem:[%s2835 + $0xc] sm:$0xf]
      %v5164 = vld [vmem:[%s2835 + $0x10] sm:$0xf]
      %v5165 = vld [vmem:[%s2835 + $0x14] sm:$0xf]
      %v5166 = vld [vmem:[%s2835 + $0x18] sm:$0xf]
      %v5167 = vld [vmem:[%s2835 + $0x1c] sm:$0xf]
      %v5168 = vld [vmem:[%s2835 + $0x20] sm:$0xf]
      %v5169 = vld [vmem:[%s2835 + $0x24] sm:$0xf]
      %v5170 = vld [vmem:[%s2835 + $0x28] sm:$0xf]
      %v5171 = vld [vmem:[%s2835 + $0x2c] sm:$0xf]
      %v5172 = vld [vmem:[%s2835 + $0x30] sm:$0xf]
      %v5173 = vld [vmem:[%s2835 + $0x34] sm:$0xf]
      %v5174 = vld [vmem:[%s2835 + $0x38] sm:$0xf]
      %v5175 = vld [vmem:[%s2835 + $0x3c] sm:$0xf]
      %v5177 = vunpack.c.l.b16 %v5159
      %v5178 = vpack.c.b16 %v5177, %v5177
      %v5180 = vshrl.u32 %v5006, 16
      %v5182 = vrot.slane %v5180, 2
      %v5183 = vshll.u32 %v5006, 16
      %v5185 = vrot.slane %v5183, 3
      %v5186 = vor.u32 %v5182, %v5185
      %v5188 = vshrl.u32 %v5007, 16
      %v5190 = vrot.slane %v5188, 2
      %v5191 = vshll.u32 %v5007, 16
      %v5193 = vrot.slane %v5191, 3
      %v5194 = vor.u32 %v5190, %v5193
      %v5195 = vsel %vm2855, %v5186, %v5194
      %v5197 = vshrl.u32 %v5008, 16
      %v5199 = vrot.slane %v5197, 2
      %v5200 = vshll.u32 %v5008, 16
      %v5202 = vrot.slane %v5200, 3
      %v5203 = vor.u32 %v5199, %v5202
      %v5204 = vsel %vm2855, %v5194, %v5203
      %v5206 = vshrl.u32 %v5009, 16
      %v5208 = vrot.slane %v5206, 2
      %v5209 = vshll.u32 %v5009, 16
      %v5211 = vrot.slane %v5209, 3
      %v5212 = vor.u32 %v5208, %v5211
      %v5213 = vsel %vm2855, %v5203, %v5212
      %v5215 = vshrl.u32 %v5010, 16
      %v5217 = vrot.slane %v5215, 2
      %v5218 = vshll.u32 %v5010, 16
      %v5220 = vrot.slane %v5218, 3
      %v5221 = vor.u32 %v5217, %v5220
      %v5222 = vsel %vm2855, %v5212, %v5221
      %v5224 = vshrl.u32 %v5178, 16
      %v5226 = vrot.slane %v5224, 2
      %v5227 = vshll.u32 %v5178, 16
      %v5229 = vrot.slane %v5227, 3
      %v5230 = vor.u32 %v5226, %v5229
      %v5231 = vsel %vm2855, %v5221, %v5230
      %v5253 = vunpack.c.l.b16 %v5160
      %v5254 = vunpack.c.l.b16 %v5161
      %v5255 = vunpack.c.l.b16 %v5162
      %v5256 = vunpack.c.l.b16 %v5163
      %v5257 = vunpack.c.l.b16 %v5164
      %v5258 = vunpack.c.l.b16 %v5165
      %v5259 = vunpack.c.l.b16 %v5166
      %v5260 = vunpack.c.l.b16 %v5167
      %v5261 = vunpack.c.l.b16 %v5168
      %v5262 = vunpack.c.l.b16 %v5169
      %v5263 = vunpack.c.l.b16 %v5170
      %v5264 = vunpack.c.l.b16 %v5171
      %v5265 = vunpack.c.l.b16 %v5172
      %v5266 = vunpack.c.l.b16 %v5173
      %v5267 = vunpack.c.l.b16 %v5174
      %v5268 = vunpack.c.l.b16 %v5175
      %v5269 = vpack.c.b16 %v5254, %v5253
      %v5270 = vpack.c.b16 %v5256, %v5255
      %v5271 = vpack.c.b16 %v5258, %v5257
      %v5272 = vpack.c.b16 %v5260, %v5259
      %v5273 = vpack.c.b16 %v5262, %v5261
      %v5274 = vpack.c.b16 %v5264, %v5263
      %v5275 = vpack.c.b16 %v5266, %v5265
      %v5276 = vpack.c.b16 %v5268, %v5267
      %5285 = vmatprep.subr.bf16.mxu0 0
      %5286 = vmatpush1.bf16.msra.mxu0 %v5269
      %5287 = vmatprep.subr.bf16.mxu0 0
      %5288 = vmatpush1.bf16.msra.mxu0 %v5270
      %5289 = vmatprep.subr.bf16.mxu0 0
      %5290 = vmatpush1.bf16.msra.mxu0 %v5271
      %5291 = vmatprep.subr.bf16.mxu0 0
      %5292 = vmatpush1.bf16.msra.mxu0 %v5272
      %5293 = vmatprep.subr.bf16.mxu0 0
      %5294 = vmatpush1.bf16.msra.mxu0 %v5273
      %5295 = vmatprep.subr.bf16.mxu0 0
      %5296 = vmatpush1.bf16.msra.mxu0 %v5274
      %5297 = vmatprep.subr.bf16.mxu0 0
      %5298 = vmatpush1.bf16.msra.mxu0 %v5275
      %5299 = vmatprep.subr.bf16.mxu0 0
      %5300 = vmatpush1.bf16.msra.mxu0 %v5276
      %5301 = vmatprep.subr.bf16.mxu0 0
      %5302 = vmatpush1.bf16.msra.mxu0 0
      %5303 = vmatprep.subr.bf16.mxu0 0
      %5304 = vmatpush1.bf16.msra.mxu0 0
      %5305 = vmatprep.subr.bf16.mxu0 0
      %5306 = vmatpush1.bf16.msra.mxu0 0
      %5307 = vmatprep.subr.bf16.mxu0 0
      %5308 = vmatpush1.bf16.msra.mxu0 0
      %5309 = vmatprep.subr.bf16.mxu0 0
      %5310 = vmatpush1.bf16.msra.mxu0 0
      %5311 = vmatprep.subr.bf16.mxu0 0
      %5312 = vmatpush1.bf16.msra.mxu0 0
      %5313 = vmatprep.subr.bf16.mxu0 0
      %5314 = vmatpush1.bf16.msra.mxu0 0
      %5315 = vmatprep.subr.bf16.mxu0 0
      %5316 = vmatpush1.bf16.msra.mxu0 0
      %5317 = vmatprep.mubr.bf16.mxu0 0
      %5318 = vmatmul.mubr.bf16.gmra.mrb[0].mxu0 %v5195
      %v5319 = vpop.f32.mrb[0].mxu0
      %v5320 = vadd.f32 0.0, %v5319
      %v5321 = vpop.f32.mrb[0].mxu0
      %v5322 = vpop.f32.mrb[0].mxu0
      %v5323 = vadd.f32 0.0, %v5322
      %v5324 = vpop.f32.mrb[0].mxu0
      %5325 = vmatprep.mubr.bf16.mxu0 0
      %5326 = vmatmul.mubr.bf16.gmra.mrb[0].mxu0 %v5204
      %v5327 = vpop.f32.mrb[0].mxu0
      %v5328 = vadd.f32 0.0, %v5327
      %v5329 = vpop.f32.mrb[0].mxu0
      %v5330 = vpop.f32.mrb[0].mxu0
      %v5331 = vadd.f32 0.0, %v5330
      %v5332 = vpop.f32.mrb[0].mxu0
      %5333 = vmatprep.mubr.bf16.mxu0 0
      %5334 = vmatmul.mubr.bf16.gmra.mrb[0].mxu0 %v5213
      %v5335 = vpop.f32.mrb[0].mxu0
      %v5336 = vadd.f32 0.0, %v5335
      %v5337 = vpop.f32.mrb[0].mxu0
      %v5338 = vpop.f32.mrb[0].mxu0
      %v5339 = vadd.f32 0.0, %v5338
      %v5340 = vpop.f32.mrb[0].mxu0
      %5341 = vmatprep.mubr.bf16.mxu0 0
      %5342 = vmatmul.mubr.bf16.gmra.mrb[0].mxu0 %v5222
      %v5343 = vpop.f32.mrb[0].mxu0
      %v5344 = vadd.f32 0.0, %v5343
      %v5345 = vpop.f32.mrb[0].mxu0
      %v5346 = vpop.f32.mrb[0].mxu0
      %v5347 = vadd.f32 0.0, %v5346
      %v5348 = vpop.f32.mrb[0].mxu0
      %5349 = vmatprep.mubr.bf16.mxu0 0
      %5350 = vmatmul.mubr.bf16.gmra.mrb[0].mxu0 %v5231
      %v5351 = vpop.f32.mrb[0].mxu0
      %v5352 = vadd.f32 0.0, %v5351
      %v5353 = vpop.f32.mrb[0].mxu0
      %v5354 = vpop.f32.mrb[0].mxu0
      %v5355 = vadd.f32 0.0, %v5354
      %v5356 = vpop.f32.mrb[0].mxu0
      %5357 = vdwg.mxu0
      %v5358 = vadd.f32 %v5149, %v5320
      %v5359 = vadd.f32 %v5150, %v5323
      %v5360 = vadd.f32 %v5151, %v5328
      %v5361 = vadd.f32 %v5152, %v5331
      %v5362 = vadd.f32 %v5153, %v5336
      %v5363 = vadd.f32 %v5154, %v5339
      %v5364 = vadd.f32 %v5155, %v5344
      %v5365 = vadd.f32 %v5156, %v5347
      %v5366 = vadd.f32 %v5157, %v5352
      %v5367 = vadd.f32 %v5158, %v5355
      %v5368 = vld [vmem:[%s192 + $0x90] sm:$0x8]
      %v5369 = vld [vmem:[%s3266] sm:$0xf]
      %v5370 = vld [vmem:[%s3266 + $0x4] sm:$0xf]
      %v5371 = vld [vmem:[%s3266 + $0x8] sm:$0xf]
      %v5372 = vld [vmem:[%s3266 + $0xc] sm:$0xf]
      %v5373 = vld [vmem:[%s3266 + $0x10] sm:$0xf]
      %v5374 = vld [vmem:[%s3266 + $0x14] sm:$0xf]
      %v5375 = vld [vmem:[%s3266 + $0x18] sm:$0xf]
      %v5376 = vld [vmem:[%s3266 + $0x1c] sm:$0xf]
      %v5377 = vld [vmem:[%s3266 + $0x20] sm:$0xf]
      %v5378 = vld [vmem:[%s3266 + $0x24] sm:$0xf]
      %v5379 = vld [vmem:[%s3266 + $0x28] sm:$0xf]
      %v5380 = vld [vmem:[%s3266 + $0x2c] sm:$0xf]
      %v5381 = vld [vmem:[%s3266 + $0x30] sm:$0xf]
      %v5382 = vld [vmem:[%s3266 + $0x34] sm:$0xf]
      %v5383 = vld [vmem:[%s3266 + $0x38] sm:$0xf]
      %v5384 = vld [vmem:[%s3266 + $0x3c] sm:$0xf]
      %v5386 = vunpack.c.l.b16 %v5368
      %v5387 = vpack.c.b16 %v4996, %v5386
      %v5388 = vrot.slane %v5387, 3
      %v5389 = vrot.slane %v5007, 3
      %v5390 = vsel %vm3286, %v5388, %v5389
      %v5391 = vrot.slane %v5008, 3
      %v5392 = vsel %vm3286, %v5389, %v5391
      %v5393 = vrot.slane %v5009, 3
      %v5394 = vsel %vm3286, %v5391, %v5393
      %v5395 = vrot.slane %v5010, 3
      %v5396 = vsel %vm3286, %v5393, %v5395
      %v5397 = vrot.slane %v5178, 3
      %v5398 = vsel %vm3286, %v5395, %v5397
      %v5420 = vunpack.c.l.b16 %v5369
      %v5421 = vunpack.c.l.b16 %v5370
      %v5422 = vunpack.c.l.b16 %v5371
      %v5423 = vunpack.c.l.b16 %v5372
      %v5424 = vunpack.c.l.b16 %v5373
      %v5425 = vunpack.c.l.b16 %v5374
      %v5426 = vunpack.c.l.b16 %v5375
      %v5427 = vunpack.c.l.b16 %v5376
      %v5428 = vunpack.c.l.b16 %v5377
      %v5429 = vunpack.c.l.b16 %v5378
      %v5430 = vunpack.c.l.b16 %v5379
      %v5431 = vunpack.c.l.b16 %v5380
      %v5432 = vunpack.c.l.b16 %v5381
      %v5433 = vunpack.c.l.b16 %v5382
      %v5434 = vunpack.c.l.b16 %v5383
      %v5435 = vunpack.c.l.b16 %v5384
      %v5436 = vpack.c.b16 %v5421, %v5420
      %v5437 = vpack.c.b16 %v5423, %v5422
      %v5438 = vpack.c.b16 %v5425, %v5424
      %v5439 = vpack.c.b16 %v5427, %v5426
      %v5440 = vpack.c.b16 %v5429, %v5428
      %v5441 = vpack.c.b16 %v5431, %v5430
      %v5442 = vpack.c.b16 %v5433, %v5432
      %v5443 = vpack.c.b16 %v5435, %v5434
      %5452 = vmatprep.subr.bf16.mxu0 0
      %5453 = vmatpush1.bf16.msra.mxu0 %v5436
      %5454 = vmatprep.subr.bf16.mxu0 0
      %5455 = vmatpush1.bf16.msra.mxu0 %v5437
      %5456 = vmatprep.subr.bf16.mxu0 0
      %5457 = vmatpush1.bf16.msra.mxu0 %v5438
      %5458 = vmatprep.subr.bf16.mxu0 0
      %5459 = vmatpush1.bf16.msra.mxu0 %v5439
      %5460 = vmatprep.subr.bf16.mxu0 0
      %5461 = vmatpush1.bf16.msra.mxu0 %v5440
      %5462 = vmatprep.subr.bf16.mxu0 0
      %5463 = vmatpush1.bf16.msra.mxu0 %v5441
      %5464 = vmatprep.subr.bf16.mxu0 0
      %5465 = vmatpush1.bf16.msra.mxu0 %v5442
      %5466 = vmatprep.subr.bf16.mxu0 0
      %5467 = vmatpush1.bf16.msra.mxu0 %v5443
      %5468 = vmatprep.subr.bf16.mxu0 0
      %5469 = vmatpush1.bf16.msra.mxu0 0
      %5470 = vmatprep.subr.bf16.mxu0 0
      %5471 = vmatpush1.bf16.msra.mxu0 0
      %5472 = vmatprep.subr.bf16.mxu0 0
      %5473 = vmatpush1.bf16.msra.mxu0 0
      %5474 = vmatprep.subr.bf16.mxu0 0
      %5475 = vmatpush1.bf16.msra.mxu0 0
      %5476 = vmatprep.subr.bf16.mxu0 0
      %5477 = vmatpush1.bf16.msra.mxu0 0
      %5478 = vmatprep.subr.bf16.mxu0 0
      %5479 = vmatpush1.bf16.msra.mxu0 0
      %5480 = vmatprep.subr.bf16.mxu0 0
      %5481 = vmatpush1.bf16.msra.mxu0 0
      %5482 = vmatprep.subr.bf16.mxu0 0
      %5483 = vmatpush1.bf16.msra.mxu0 0
      %5484 = vmatprep.mubr.bf16.mxu0 0
      %5485 = vmatmul.mubr.bf16.gmra.mrb[0].mxu0 %v5390
      %v5486 = vpop.f32.mrb[0].mxu0
      %v5487 = vadd.f32 0.0, %v5486
      %v5488 = vpop.f32.mrb[0].mxu0
      %v5489 = vpop.f32.mrb[0].mxu0
      %v5490 = vadd.f32 0.0, %v5489
      %v5491 = vpop.f32.mrb[0].mxu0
      %5492 = vmatprep.mubr.bf16.mxu0 0
      %5493 = vmatmul.mubr.bf16.gmra.mrb[0].mxu0 %v5392
      %v5494 = vpop.f32.mrb[0].mxu0
      %v5495 = vadd.f32 0.0, %v5494
      %v5496 = vpop.f32.mrb[0].mxu0
      %v5497 = vpop.f32.mrb[0].mxu0
      %v5498 = vadd.f32 0.0, %v5497
      %v5499 = vpop.f32.mrb[0].mxu0
      %5500 = vmatprep.mubr.bf16.mxu0 0
      %5501 = vmatmul.mubr.bf16.gmra.mrb[0].mxu0 %v5394
      %v5502 = vpop.f32.mrb[0].mxu0
      %v5503 = vadd.f32 0.0, %v5502
      %v5504 = vpop.f32.mrb[0].mxu0
      %v5505 = vpop.f32.mrb[0].mxu0
      %v5506 = vadd.f32 0.0, %v5505
      %v5507 = vpop.f32.mrb[0].mxu0
      %5508 = vmatprep.mubr.bf16.mxu0 0
      %5509 = vmatmul.mubr.bf16.gmra.mrb[0].mxu0 %v5396
      %v5510 = vpop.f32.mrb[0].mxu0
      %v5511 = vadd.f32 0.0, %v5510
      %v5512 = vpop.f32.mrb[0].mxu0
      %v5513 = vpop.f32.mrb[0].mxu0
      %v5514 = vadd.f32 0.0, %v5513
      %v5515 = vpop.f32.mrb[0].mxu0
      %5516 = vmatprep.mubr.bf16.mxu0 0
      %5517 = vmatmul.mubr.bf16.gmra.mrb[0].mxu0 %v5398
      %v5518 = vpop.f32.mrb[0].mxu0
      %v5519 = vadd.f32 0.0, %v5518
      %v5520 = vpop.f32.mrb[0].mxu0
      %v5521 = vpop.f32.mrb[0].mxu0
      %v5522 = vadd.f32 0.0, %v5521
      %v5523 = vpop.f32.mrb[0].mxu0
      %5524 = vdwg.mxu0
      %v5525 = vadd.f32 %v5358, %v5487
      %v5526 = vadd.f32 %v5359, %v5490
      %v5527 = vadd.f32 %v5360, %v5495
      %v5528 = vadd.f32 %v5361, %v5498
      %v5529 = vadd.f32 %v5362, %v5503
      %v5530 = vadd.f32 %v5363, %v5506
      %v5531 = vadd.f32 %v5364, %v5511
      %v5532 = vadd.f32 %v5365, %v5514
      %v5533 = vadd.f32 %v5366, %v5519
      %v5534 = vadd.f32 %v5367, %v5522
      %v5535 = vmul.f32 %v5525, %v3581
      %v5536 = vmul.f32 %v5526, %v3581
      %v5537 = vmul.f32 %v5527, %v3581
      %v5538 = vmul.f32 %v5528, %v3581
      %v5539 = vmul.f32 %v5529, %v3581
      %v5540 = vmul.f32 %v5530, %v3581
      %v5541 = vmul.f32 %v5531, %v3581
      %v5542 = vmul.f32 %v5532, %v3581
      %v5543 = vmul.f32 %v5533, %v3581
      %v5544 = vmul.f32 %v5534, %v3581
      %v5545 = vadd.f32 %v5535, %v3619
      %v5546 = vadd.f32 %v5536, %v3619
      %v5547 = vadd.f32 %v5537, %v3619
      %v5548 = vadd.f32 %v5538, %v3619
      %v5549 = vadd.f32 %v5539, %v3619
      %v5550 = vadd.f32 %v5540, %v3619
      %v5551 = vadd.f32 %v5541, %v3619
      %v5552 = vadd.f32 %v5542, %v3619
      %v5553 = vadd.f32 %v5543, %v3619
      %v5554 = vadd.f32 %v5544, %v3619
      %v5555 = vmax.f32 %v5545, 0.0
      %v5556 = vmax.f32 %v5546, 0.0
      %v5557 = vmax.f32 %v5547, 0.0
      %v5558 = vmax.f32 %v5548, 0.0
      %v5559 = vmax.f32 %v5549, 0.0
      %v5560 = vmax.f32 %v5550, 0.0
      %v5561 = vmax.f32 %v5551, 0.0
      %v5562 = vmax.f32 %v5552, 0.0
      %v5563 = vmax.f32 %v5553, 0.0
      %v5564 = vmax.f32 %v5554, 0.0
      %v5565 = vpack.c.bf16 %v5556, %v5555
      %v5566 = vpack.c.bf16 %v5558, %v5557
      %v5567 = vpack.c.bf16 %v5560, %v5559
      %v5568 = vpack.c.bf16 %v5562, %v5561
      %v5569 = vpack.c.bf16 %v5564, %v5563
      %v5575 = vunpack.c.l.b16 %v5565
      %v5576 = vunpack.c.h.b16 %v5565
      %v5577 = vunpack.c.l.b16 %v5566
      %v5578 = vunpack.c.h.b16 %v5566
      %v5579 = vunpack.c.l.b16 %v5567
      %v5580 = vunpack.c.h.b16 %v5567
      %v5581 = vunpack.c.l.b16 %v5568
      %v5582 = vunpack.c.h.b16 %v5568
      %v5583 = vunpack.c.l.b16 %v5569
      %v5584 = vunpack.c.h.b16 %v5569
      %v5585 = vpack.c.b16 %v5575, %v5575
      %v5586 = vpack.c.b16 %v5576, %v5576
      %v5587 = vpack.c.b16 %v5577, %v5577
      %v5588 = vpack.c.b16 %v5578, %v5578
      %v5589 = vpack.c.b16 %v5579, %v5579
      %v5590 = vpack.c.b16 %v5580, %v5580
      %v5591 = vpack.c.b16 %v5581, %v5581
      %v5592 = vpack.c.b16 %v5582, %v5582
      %v5593 = vpack.c.b16 %v5583, %v5583
      %v5594 = vpack.c.b16 %v5584, %v5584
      %5605 = vst [vmem:[%s197 + $0x80] sm:$0xf] %v5585
      %5606 = vst [vmem:[%s197 + $0x84] sm:$0xf] %v5586
      %5607 = vst [vmem:[%s197 + $0x88] sm:$0xf] %v5587
      %5608 = vst [vmem:[%s197 + $0x8c] sm:$0xf] %v5588
      %5609 = vst [vmem:[%s197 + $0x90] sm:$0xf] %v5589
      %5610 = vst [vmem:[%s197 + $0x94] sm:$0xf] %v5590
      %5611 = vst [vmem:[%s197 + $0x98] sm:$0xf] %v5591
      %5612 = vst [vmem:[%s197 + $0x9c] sm:$0xf] %v5592
      %5613 = vst [vmem:[%s197 + $0xa0] sm:$0xf] %v5593
      %5614 = vst [vmem:[%s197 + $0xa4] sm:$0xf] %v5594
      %p5615 = scmp.lt.s32.totalorder %s15, 1
      %s5616 = scalar_select %p5615, %s15, 1
      %s5617 = smul.addr %s5616, 42
      %s5618 = smul.addr %s5617, 4
      %s5619 = scalar_lea.vmem %s4, %s5618
      // Predicated region
      $region37: #{cnn_forward.7} parent=35 // pred_check
        %p5620 = pneg %p122
      $region38: #{cnn_forward.7} parent=35 // pred_check_branch
        %5622 = sbr.rel (%p5620) target = $region40
      $region39: #{cnn_forward.7} parent=35 // pred_region
        _
      $region40: #{cnn_forward.7} parent=35 // pred_fallthru
        _
    $region36: #{cnn_forward.7} parent=5 // pred_fallthru
      _
    %p5623 = scmp.le.s32.totalorder 2, %s10
    // Predicated region
    $region41: #{cnn_forward.7} parent=5 // pred_check
      %p5624 = pneg %p5623
    $region42: #{cnn_forward.7} parent=5 // pred_check_branch
      %5626 = sbr.rel (%p5624) target = $region44
    $region43: #{cnn_forward.7} parent=5 // pred_region
      %s5627 = ssub.s32 %s10, 2
      // Predicated region
      $region45: #{cnn_forward.7} parent=43 // pred_check
        %p5628 = pneg %p128
      $region46: #{cnn_forward.7} parent=43 // pred_check_branch
        %5630 = sbr.rel (%p5628) target = $region48
      $region47: #{cnn_forward.7} parent=43 // pred_region
        %p5631 = scmp.lt.s32.totalorder %s16, 1
        %s5632 = scalar_select %p5631, %s16, 1
        %s5633 = smul.addr %s5632, 42
        %s5634 = smul.addr %s5633, 4
        %s5635 = scalar_lea.vmem %s4, %s5634
      $region48: #{cnn_forward.7} parent=43 // pred_fallthru
        _
    $region44: #{cnn_forward.7} parent=5 // pred_fallthru
      _
  $region6: #{cnn_forward.7} parent=0 // loop_footer
    %s14 = sadd.s32 1, %s10
  $region7: #{cnn_forward.7} parent=0 // loop_footer_branch
    %9 = sbr.rel target = $region3
  $region8: #{cnn_forward.7} parent=0 // loop_exit
    _

</llo_original>
